<compile_context>
chip_gen: v6e
topology: v6e:2x2x1
jax: 0.10.0
libtpu: 0.0.40
codegen_flags: <defaults>
</compile_context>

<pallas_src>
import functools

import jax
import jax.numpy as jnp
from jax import lax
from jax.experimental import pallas as pl
from jax.experimental.pallas import tpu as pltpu


def _elu(x):
    # exp only on the non-positive branch so the discarded branch never overflows
    return jnp.where(x > 0, x, jnp.exp(jnp.minimum(x, 0.0)) - 1.0)


# vec_pack row layout (every row is a D-wide f32 vector)
(_V_B1, _V_B2, _V_BCI, _V_BCC, _V_WCA, _V_BK, _V_BM, _V_BCAT,
 _V_WRA, _V_IMEM, _V_BQP, _V_BC1, _V_BCU0) = range(13)

# wmat_pack slab layout (every slab is D rows of a [D, D] matrix)
(_M_WCI, _M_WCC_C, _M_WCC_Q, _M_WK, _M_WM, _M_WCAT_I, _M_WCAT_K,
 _M_WQP, _M_WC1_M, _M_WC1_Q, _M_WCU0) = range(11)


# ----------------------------------------------------------------------------
# Fused kernel: stem convs + BiLSTM encoder + MAC recurrence + OutputUnit
# ----------------------------------------------------------------------------
def _mac_fused_kernel(len_ref,
                      x_ref, emb2_ref,
                      stem_ref, lstm_ref, wmat_ref, vec_ref, head_ref,
                      out_ref,
                      pad_ref,
                      *, H, W, Cin, D, Hh, E, T, S, Cpad):
    f32 = jnp.float32
    bf16 = jnp.bfloat16
    HW = H * W
    P = W + 1                                  # one-sided halo rows in flat layout
    b = pl.program_id(0)
    L = len_ref[b]                             # valid question length (SMEM scalar)

    vec = vec_ref[...]                         # [12+S, D] packed row-vector params

    # ---------------- InputUnit stem: two 3x3 same-pad convs + ELU ----------
    # conv = sum over 9 taps of (row-shifted flat input) @ W[tap]; vertical
    # out-of-range rows come for free from the zero halo of the flat padded
    # scratch, horizontal wrap rows are masked.  No im2col concats.
    wcol = lax.broadcasted_iota(jnp.int32, (HW, 1), 0) % W
    m_left = wcol >= 1                         # tap dx = -1 valid
    m_right = wcol <= W - 2                    # tap dx = +1 valid

    def conv3x3(x_flat, w_base, C, bias):
        pad_ref[...] = jnp.zeros((HW + 2 * P, Cpad), f32)
        pad_ref[P:P + HW, 0:C] = x_flat
        acc = jnp.zeros((HW, D), f32)
        for t in range(9):
            dy, dx = t // 3 - 1, t % 3 - 1
            shift = dy * W + dx
            tap = pad_ref[P + shift:P + shift + HW, 0:C]
            if dx == -1:
                tap = jnp.where(m_left, tap, jnp.zeros_like(tap))
            elif dx == 1:
                tap = jnp.where(m_right, tap, jnp.zeros_like(tap))
            # bf16 x bf16 -> f32 accumulate on the MXU
            acc = acc + jnp.dot(tap.astype(bf16),
                                stem_ref[w_base + t * C:w_base + (t + 1) * C, :],
                                preferred_element_type=f32)
        return _elu(acc + bias)

    y1 = conv3x3(x_ref[0], 0, Cin, vec[_V_B1:_V_B1 + 1])          # [HW, D]
    know = conv3x3(y1, 9 * Cin, D, vec[_V_B2:_V_B2 + 1])          # [HW, D] knowledge base

    # ---------------- bidirectional LSTM encoder (fwd & bwd fused) ----------
    wih_bd = lstm_ref[0:2 * E, :]                      # block-diag input projection
    whh_bd = lstm_ref[2 * E:2 * E + D, :]              # block-diag recurrent projection
    b_lstm = lstm_ref[2 * E + D:2 * E + D + 1, :]
    # emb2 row k = [emb[k], emb[T-1-k]] -> gin row k already carries the fwd
    # gates of step k and the bwd gates of step T-1-k (one hoisted matmul).
    gin = jnp.dot(emb2_ref[0], wih_bd, preferred_element_type=f32) + b_lstm   # [T, 4D]

    lane = lax.broadcasted_iota(jnp.int32, (1, D), 1)  # fused state = [fwd | bwd]
    h = jnp.zeros((1, D), f32)
    c = jnp.zeros((1, D), f32)
    rows = []
    for k in range(T):                                 # one fused fwd+bwd step per iter
        tb = T - 1 - k
        z = jnp.dot(h, whh_bd, preferred_element_type=f32) + gin[k:k + 1, :]  # [1, 4D]
        sg = 0.5 * jnp.tanh(0.5 * z) + 0.5             # sigmoid via a single EUP tanh
        th = jnp.tanh(z)
        # gate blocks (interleaved fwd/bwd, each D wide): [i | f | g | o]
        c_new = sg[:, D:2 * D] * c + sg[:, 0:D] * th[:, 2 * D:3 * D]
        h_new = sg[:, 3 * D:4 * D] * jnp.tanh(c_new)
        # packed-sequence masking: fwd half while k < L, bwd half while tb < L
        valid = ((lane < Hh) & (k < L)) | ((lane >= Hh) & (tb < L))
        h = jnp.where(valid, h_new, h)
        c = jnp.where(valid, c_new, c)
        rows.append(jnp.where(valid, h_new, 0.0))
    qe = h                                             # [1, D] question embedding
    # contextual words: fwd half in step order, bwd half in reversed step order
    lane_t = lax.broadcasted_iota(jnp.int32, (T, D), 1)
    ctx = jnp.where(lane_t < Hh,
                    jnp.concatenate(rows, axis=0),
                    jnp.concatenate(rows[::-1], axis=0))           # [T, D]

    # ---------------- MAC recurrence (Control / Read / Write) ---------------
    def wm(i):
        return wmat_ref[i * D:(i + 1) * D, :]

    # control_input (Linear + Tanh) is step-invariant in eval mode
    q_base = jnp.tanh(jnp.dot(qe, wm(_M_WCI), preferred_element_type=f32)
                      + vec[_V_BCI:_V_BCI + 1])
    # step-invariant ReadUnit projections hoisted out of the step loop
    kproj = jnp.dot(know, wm(_M_WK), preferred_element_type=f32) + vec[_V_BK:_V_BK + 1]
    kcat = jnp.dot(kproj, wm(_M_WCAT_K), preferred_element_type=f32)
    w_ca = vec[_V_WCA:_V_WCA + 1]
    w_ra = vec[_V_WRA:_V_WRA + 1]
    vmask = lax.broadcasted_iota(jnp.int32, (1, T), 1) < L
    dn = (((1,), (1,)), ((), ()))                      # contract last dims

    control = qe
    memory = vec[_V_IMEM:_V_IMEM + 1]
    for step in range(S):                              # unrolled reasoning chain
        # ---------------- ControlUnit ----------------
        q_s = (jnp.dot(q_base, wm(_M_WCU0 + step), preferred_element_type=f32)
               + vec[_V_BCU0 + step:_V_BCU0 + step + 1])
        cc = jnp.tanh(jnp.dot(control, wm(_M_WCC_C), preferred_element_type=f32)
                      + jnp.dot(q_s, wm(_M_WCC_Q), preferred_element_type=f32)
                      + vec[_V_BCC:_V_BCC + 1])
        # attn bias is a uniform pre-softmax shift -> folded out
        logits = lax.dot_general(cc * w_ca, ctx, dn, preferred_element_type=f32)  # [1, T]
        logits = jnp.where(vmask, logits, -1e30)       # mask_by_length
        ce = jnp.exp(logits - jnp.max(logits, axis=1, keepdims=True))
        c_attn = ce * pl.reciprocal(jnp.sum(ce, axis=1, keepdims=True))   # exact
        control = jnp.dot(c_attn, ctx, preferred_element_type=f32)        # [1, D]

        # ---------------- ReadUnit -------------------
        mproj = (jnp.dot(memory, wm(_M_WM), preferred_element_type=f32)
                 + vec[_V_BM:_V_BM + 1])
        hkb = _elu(jnp.dot(kproj * mproj, wm(_M_WCAT_I), preferred_element_type=f32)
                   + kcat + vec[_V_BCAT:_V_BCAT + 1])  # concat Linear via split weights
        hkb = _elu(hkb * control)
        r_logits = lax.dot_general(w_ra, hkb, dn, preferred_element_type=f32)  # [1, HW]
        re = jnp.exp(r_logits - jnp.max(r_logits, axis=1, keepdims=True))
        r_attn = re * pl.reciprocal(jnp.sum(re, axis=1, keepdims=True))

        # ---------------- WriteUnit (rtom=True) ------
        memory = jnp.dot(r_attn, know, preferred_element_type=f32)        # [1, D]

    # ---------------- OutputUnit --------------------------------------------
    qp = jnp.dot(qe, wm(_M_WQP), preferred_element_type=f32) + vec[_V_BQP:_V_BQP + 1]
    oh = _elu(jnp.dot(memory, wm(_M_WC1_M), preferred_element_type=f32)
              + jnp.dot(qp, wm(_M_WC1_Q), preferred_element_type=f32)
              + vec[_V_BC1:_V_BC1 + 1])
    out_ref[0] = (jnp.dot(oh, head_ref[0:D, :], preferred_element_type=f32)
                  + head_ref[D:D + 1, :])              # lane-dense [1, A_pad]


# ----------------------------------------------------------------------------
# Full MACNetwork forward (eval mode; dropout == identity)
# ----------------------------------------------------------------------------
def mac_network_forward(params, image_nchw, question, question_len, *, max_step=4):
    p = params
    B, Cin, H, W = image_nchw.shape
    T = question.shape[1]
    E = p['embed'].shape[1]
    D = p['conv1_w'].shape[-1]
    Hh = p['whh_f'].shape[0]
    assert D == 2 * Hh, "bidirectional LSTM: module_dim == 2 * per-direction hidden"
    S = max_step
    A = p['w_c2'].shape[1]
    A_pad = ((A + 127) // 128) * 128
    HW = H * W
    Cpad = max(Cin, D)

    # image: NCHW -> flat [B, H*W, Cin] with row index h*W + w
    x_flat = (jnp.transpose(image_nchw, (0, 2, 3, 1))
              .reshape(B, HW, Cin).astype(jnp.float32))
    # Embedding lookup (tiny gather, left to XLA) + pre-reversed copy for the bwd LSTM
    emb = jnp.take(p['embed'], question, axis=0)                   # [B, T, E]
    emb2 = jnp.concatenate([emb, jnp.flip(emb, axis=1)], axis=-1)  # [B, T, 2E]

    # ---- parameter packing: a few big slabs instead of ~30 tiny DMAs -------
    def interleave(wf, wb):
        # per-gate (fwd, bwd) interleaving -> fused gate blocks [i|f|g|o], each 2*Hh wide
        n = wf.shape[0]
        return jnp.stack([wf.reshape(n, 4, Hh), wb.reshape(n, 4, Hh)],
                         axis=2).reshape(n, 8 * Hh)

    z_ih = jnp.zeros_like(p['wih_f'])
    z_hh = jnp.zeros_like(p['whh_f'])
    lstm_pack = jnp.concatenate([
        jnp.concatenate([interleave(p['wih_f'], z_ih),        # rows 0:E  -> fwd gates
                         interleave(z_ih, p['wih_b'])], 0),   # rows E:2E -> bwd gates
        jnp.concatenate([interleave(p['whh_f'], z_hh),        # hf rows   -> fwd gates
                         interleave(z_hh, p['whh_b'])], 0),   # hb rows   -> bwd gates
        interleave(p['b_f'], p['b_b']),                       # fused gate bias
    ], axis=0).astype(jnp.float32)                            # [2E + D + 1, 4D]

    stem_pack = jnp.concatenate([p['conv1_w'].reshape(9 * Cin, D),
                                 p['conv2_w'].reshape(9 * D, D)],
                                axis=0).astype(jnp.bfloat16)  # bf16 MXU operands (f32 acc)

    wmat_pack = jnp.concatenate([
        p['w_ci'], p['w_cc'][:D], p['w_cc'][D:], p['w_k'], p['w_m'],
        p['w_cat'][:D], p['w_cat'][D:], p['w_qp'], p['w_c1'][:D], p['w_c1'][D:],
        p['w_cu'].reshape(S * D, D),
    ], axis=0).astype(jnp.float32)                            # [(10+S)*D, D]

    # attn biases b_ca / b_ra are uniform pre-softmax shifts -> folded out (no-op)
    vec_pack = jnp.concatenate([
        p['conv1_b'].reshape(1, D), p['conv2_b'].reshape(1, D),
        p['b_ci'], p['b_cc'], p['w_ca'], p['b_k'], p['b_m'], p['b_cat'],
        p['w_ra'], p['init_mem'], p['b_qp'], p['b_c1'],
        p['b_cu'].reshape(S, D),
    ], axis=0).astype(jnp.float32)                            # [12+S, D]

    head_pack = jnp.concatenate([
        jnp.zeros((D, A_pad), jnp.float32).at[:, :A].set(p['w_c2']),
        jnp.zeros((1, A_pad), jnp.float32).at[:, :A].set(p['b_c2']),
    ], axis=0)                                                # [D+1, A_pad] lane-dense head

    kernel = functools.partial(_mac_fused_kernel, H=H, W=W, Cin=Cin, D=D,
                               Hh=Hh, E=E, T=T, S=S, Cpad=Cpad)

    out = pl.pallas_call(
        kernel,
        out_shape=jax.ShapeDtypeStruct((B, 1, A_pad), jnp.float32),
        grid_spec=pltpu.PrefetchScalarGridSpec(
            num_scalar_prefetch=1,                     # question lengths in SMEM
            grid=(B,),
            in_specs=[
                pl.BlockSpec((1, HW, Cin), lambda b, lens: (b, 0, 0)),
                pl.BlockSpec((1, T, 2 * E), lambda b, lens: (b, 0, 0)),
                pl.BlockSpec(stem_pack.shape, lambda b, lens: (0, 0)),
                pl.BlockSpec(lstm_pack.shape, lambda b, lens: (0, 0)),
                pl.BlockSpec(wmat_pack.shape, lambda b, lens: (0, 0)),
                pl.BlockSpec(vec_pack.shape, lambda b, lens: (0, 0)),
                pl.BlockSpec(head_pack.shape, lambda b, lens: (0, 0)),
            ],
            out_specs=pl.BlockSpec((1, 1, A_pad), lambda b, lens: (b, 0, 0)),
            # flat zero-haloed conv scratch (reused by both convs)
            scratch_shapes=[pltpu.VMEM((HW + 2 * (W + 1), Cpad), jnp.float32)],
        ),
        compiler_params=pltpu.CompilerParams(dimension_semantics=("parallel",)),
    )(question_len.astype(jnp.int32), x_flat, emb2,
      stem_pack, lstm_pack, wmat_pack, vec_pack, head_pack)
    return out[:, 0, :A]


# ----------------------------------------------------------------------------
# Deterministic parameter construction
# ----------------------------------------------------------------------------
def make_params(key, *, vocab, E, D, Cin, Hh, A, S):
    keys = iter(jax.random.split(key, 64))

    def nrm(shape, scale=0.1):
        return (scale * jax.random.normal(next(keys), shape)).astype(jnp.float32)

    p = {}
    p['embed'] = jax.random.uniform(next(keys), (vocab, E), jnp.float32, -1.0, 1.0)
    # stem convs (HWIO)
    p['conv1_w'] = nrm((3, 3, Cin, D))
    p['conv1_b'] = nrm((D,))
    p['conv2_w'] = nrm((3, 3, D, D))
    p['conv2_b'] = nrm((D,))
    # LSTM (bias = b_ih + b_hh pre-summed), gate order i, f, g, o
    p['wih_f'] = nrm((E, 4 * Hh))
    p['whh_f'] = nrm((Hh, 4 * Hh))
    p['b_f'] = nrm((1, 4 * Hh))
    p['wih_b'] = nrm((E, 4 * Hh))
    p['whh_b'] = nrm((Hh, 4 * Hh))
    p['b_b'] = nrm((1, 4 * Hh))
    # ControlUnit
    p['w_ci'] = nrm((D, D))
    p['b_ci'] = nrm((1, D))
    p['w_cu'] = nrm((S, D, D))
    p['b_cu'] = nrm((S, 1, D))
    p['w_cc'] = nrm((2 * D, D))
    p['b_cc'] = nrm((1, D))
    p['w_ca'] = nrm((1, D))
    p['b_ca'] = nrm((1, 1))          # folded out (softmax-shift invariant)
    # ReadUnit
    p['w_k'] = nrm((D, D))
    p['b_k'] = nrm((1, D))
    p['w_m'] = nrm((D, D))
    p['b_m'] = nrm((1, D))
    p['w_cat'] = nrm((2 * D, D))
    p['b_cat'] = nrm((1, D))
    p['w_ra'] = nrm((1, D))
    p['b_ra'] = nrm((1, 1))          # folded out (softmax-shift invariant)
    # MACUnit initial memory (init_mem='random' -> normal)
    p['init_mem'] = nrm((1, D), scale=1.0)
    # OutputUnit
    p['w_qp'] = nrm((D, D))
    p['b_qp'] = nrm((1, D))
    p['w_c1'] = nrm((2 * D, D))
    p['b_c1'] = nrm((1, D))
    p['w_c2'] = nrm((D, A))
    p['b_c2'] = nrm((1, A))
    return p


# TODO(synk): training-mode dropout / variational dropout masks are not implemented
# (eval-mode identity), matching inference semantics of the PyTorch module.
# TODO(synk): only the stem conv matmuls use bf16 operands (f32 accumulation); the serial
# LSTM/MAC matmuls stay f32 to keep reference numerics. On 1-TC v5e/v6e a batch-folded
# grid=(1,) layout would further cut the serial chain; grid=(B,) "parallel" is kept for v7x.

if __name__ == "__main__":
    B, Cin, Himg, Wimg = 2, 16, 8, 8        # image: [B, in_channels, H, W] (NCHW)
    D = 32                                   # module_dim == rnn_dim
    Hh = D // 2                              # per-direction LSTM hidden (bidirectional)
    E = 16                                   # wordvec_dim
    T = 8                                    # question length (max)
    vocab = 50
    A = 28                                   # num_answers
    S = 4                                    # max_step

    root = jax.random.PRNGKey(0)
    kp, kimg, kq = jax.random.split(root, 3)
    params = make_params(kp, vocab=vocab, E=E, D=D, Cin=Cin, Hh=Hh, A=A, S=S)

    image = jax.random.normal(kimg, (B, Cin, Himg, Wimg), jnp.float32)
    question = jax.random.randint(kq, (B, T), 0, vocab, dtype=jnp.int32)
    # pack_padded_sequence(enforce_sorted=True) => lengths sorted descending
    question_len = jnp.array([8, 6], dtype=jnp.int32)

    fwd = jax.jit(functools.partial(mac_network_forward, max_step=S))
    out = fwd(params, image, question, question_len)
    jax.block_until_ready(out)
    assert out.shape == (B, A) and out.dtype == jnp.float32
    assert bool(jnp.all(jnp.isfinite(out)))
    print("KERNEL_OK")
</pallas_src>

<mosaic_0001>
module attributes {stable_mosaic.version = 11 : i64} {
  func.func @_mac_fused_kernel(%arg0: i32, %arg1: memref<2xi32, #tpu.memory_space<smem>>, %arg2: memref<1x64x16xf32, #tpu.memory_space<vmem>>, %arg3: memref<1x8x32xf32, #tpu.memory_space<vmem>>, %arg4: memref<432x32xbf16, #tpu.memory_space<vmem>>, %arg5: memref<65x128xf32, #tpu.memory_space<vmem>>, %arg6: memref<448x32xf32, #tpu.memory_space<vmem>>, %arg7: memref<16x32xf32, #tpu.memory_space<vmem>>, %arg8: memref<33x128xf32, #tpu.memory_space<vmem>>, %arg9: memref<1x1x128xf32, #tpu.memory_space<vmem>>, %arg10: memref<82x32xf32, #tpu.memory_space<vmem>>) attributes {dimension_semantics = [#tpu.dimension_semantics<parallel>], iteration_bounds = array<i64: 2>, scalar_prefetch = 1 : i64, scratch_operands = 1 : i64, tpu.core_type = #tpu.core_type<tc>, window_params = [{transform_indices = @transform_0, window_bounds = array<i64: 1, 64, 16>}, {transform_indices = @transform_1, window_bounds = array<i64: 1, 8, 32>}, {pipeline_mode = #tpu.pipeline_mode<synchronous>, transform_indices = @transform_2, window_bounds = array<i64: 432, 32>}, {pipeline_mode = #tpu.pipeline_mode<synchronous>, transform_indices = @transform_3, window_bounds = array<i64: 65, 128>}, {pipeline_mode = #tpu.pipeline_mode<synchronous>, transform_indices = @transform_4, window_bounds = array<i64: 448, 32>}, {pipeline_mode = #tpu.pipeline_mode<synchronous>, transform_indices = @transform_5, window_bounds = array<i64: 16, 32>}, {pipeline_mode = #tpu.pipeline_mode<synchronous>, transform_indices = @transform_6, window_bounds = array<i64: 33, 128>}, {transform_indices = @transform_7, window_bounds = array<i64: 1, 1, 128>}]} {
    %0 = arith.index_cast %arg0 : i32 to index
    %1 = memref.load %arg1[%0] : memref<2xi32, #tpu.memory_space<smem>>
    %c0 = arith.constant 0 : index
    %c0_0 = arith.constant 0 : index
    %2 = vector.load %arg7[%c0, %c0_0] : memref<16x32xf32, #tpu.memory_space<vmem>>, vector<16x32xf32>
    %3 = tpu.iota {dimensions = array<i32: 0>} : vector<64x1xi32>
    %c8_i32 = arith.constant 8 : i32
    %c0_i32 = arith.constant 0 : i32
    %4 = arith.cmpi eq, %c8_i32, %c0_i32 : i32
    %c1_i32 = arith.constant 1 : i32
    %5 = arith.select %4, %c1_i32, %c8_i32 : i32
    %6 = vector.broadcast %5 : i32 to vector<64x1xi32>
    %7 = arith.remsi %3, %6 : vector<64x1xi32>
    %c0_i32_1 = arith.constant 0 : i32
    %8 = vector.broadcast %c0_i32_1 : i32 to vector<64x1xi32>
    %9 = arith.cmpi ne, %7, %8 : vector<64x1xi32>
    %c0_i32_2 = arith.constant 0 : i32
    %10 = vector.broadcast %c0_i32_2 : i32 to vector<64x1xi32>
    %11 = arith.cmpi slt, %7, %10 : vector<64x1xi32>
    %c0_i32_3 = arith.constant 0 : i32
    %12 = arith.cmpi slt, %5, %c0_i32_3 : i32
    %13 = vector.broadcast %12 : i1 to vector<64x1xi1>
    %14 = vector.broadcast %13 : vector<64x1xi1> to vector<64x1xi1>
    %15 = arith.xori %11, %14 : vector<64x1xi1>
    %16 = arith.andi %15, %9 : vector<64x1xi1>
    %17 = vector.broadcast %5 : i32 to vector<64x1xi32>
    %18 = arith.addi %7, %17 : vector<64x1xi32>
    %19 = arith.select %16, %18, %7 : vector<64x1xi1>, vector<64x1xi32>
    %c1_i32_4 = arith.constant 1 : i32
    %20 = vector.broadcast %c1_i32_4 : i32 to vector<64x1xi32>
    %21 = arith.cmpi sge, %19, %20 : vector<64x1xi32>
    %c6_i32 = arith.constant 6 : i32
    %22 = vector.broadcast %c6_i32 : i32 to vector<64x1xi32>
    %23 = arith.cmpi sle, %19, %22 : vector<64x1xi32>
    %c0_5 = arith.constant 0 : index
    %c0_6 = arith.constant 0 : index
    %c0_7 = arith.constant 0 : index
    %24 = vector.load %arg2[%c0_5, %c0_6, %c0_7] : memref<1x64x16xf32, #tpu.memory_space<vmem>>, vector<1x64x16xf32>
    %25 = vector.shape_cast %24 : vector<1x64x16xf32> to vector<64x16xf32>
    %26 = vector.extract_strided_slice %2 {offsets = [0, 0], sizes = [1, 32], strides = [1, 1]} : vector<16x32xf32> to vector<1x32xf32>
    %cst = arith.constant 0.000000e+00 : f32
    %27 = vector.broadcast %cst : f32 to vector<82x32xf32>
    %c0_8 = arith.constant 0 : index
    %c0_9 = arith.constant 0 : index
    %28 = vector.load %arg10[%c0_8, %c0_9] : memref<82x32xf32, #tpu.memory_space<vmem>>, vector<82x32xf32>
    tpu.vector_store %arg10[%c0_8, %c0_9], %27 {strides = array<i32>} : memref<82x32xf32, #tpu.memory_space<vmem>>, vector<82x32xf32>,
    %c9 = arith.constant 9 : index
    %c0_10 = arith.constant 0 : index
    %29 = vector.load %arg10[%c9, %c0_10] : memref<82x32xf32, #tpu.memory_space<vmem>>, vector<64x16xf32>
    tpu.vector_store %arg10[%c9, %c0_10], %25 {strides = array<i32>} : memref<82x32xf32, #tpu.memory_space<vmem>>, vector<64x16xf32>,
    %cst_11 = arith.constant 0.000000e+00 : f32
    %30 = vector.broadcast %cst_11 : f32 to vector<64x32xf32>
    %c0_12 = arith.constant 0 : index
    %c0_13 = arith.constant 0 : index
    %31 = vector.load %arg10[%c0_12, %c0_13] : memref<82x32xf32, #tpu.memory_space<vmem>>, vector<64x16xf32>
    %cst_14 = arith.constant 0.000000e+00 : f32
    %32 = vector.broadcast %cst_14 : f32 to vector<64x16xf32>
    %33 = vector.shape_cast %21 : vector<64x1xi1> to vector<64x1xi1>
    %34 = vector.broadcast %33 : vector<64x1xi1> to vector<64x16xi1>
    %35 = arith.select %34, %31, %32 : vector<64x16xi1>, vector<64x16xf32>
    %36 = arith.truncf %35 : vector<64x16xf32> to vector<64x16xbf16>
    %c0_15 = arith.constant 0 : index
    %c0_16 = arith.constant 0 : index
    %37 = vector.load %arg4[%c0_15, %c0_16] : memref<432x32xbf16, #tpu.memory_space<vmem>>, vector<16x32xbf16>
    %cst_17 = arith.constant dense<0.000000e+00> : vector<64x32xf32>
    %38 = tpu.matmul %36, %37, %cst_17 {dimension_numbers = #tpu.dot_dimension_numbers<[1], [0], [0], [1], [0, 0, 1, 1], [], []>} : vector<64x16xbf16>, vector<16x32xbf16>, vector<64x32xf32> -> vector<64x32xf32>
    %39 = arith.addf %30, %38 : vector<64x32xf32>
    %c1 = arith.constant 1 : index
    %c0_18 = arith.constant 0 : index
    %40 = vector.load %arg10[%c1, %c0_18] : memref<82x32xf32, #tpu.memory_space<vmem>>, vector<64x16xf32>
    %41 = arith.truncf %40 : vector<64x16xf32> to vector<64x16xbf16>
    %c16 = arith.constant 16 : index
    %c0_19 = arith.constant 0 : index
    %42 = vector.load %arg4[%c16, %c0_19] : memref<432x32xbf16, #tpu.memory_space<vmem>>, vector<16x32xbf16>
    %cst_20 = arith.constant dense<0.000000e+00> : vector<64x32xf32>
    %43 = tpu.matmul %41, %42, %cst_20 {dimension_numbers = #tpu.dot_dimension_numbers<[1], [0], [0], [1], [0, 0, 1, 1], [], []>} : vector<64x16xbf16>, vector<16x32xbf16>, vector<64x32xf32> -> vector<64x32xf32>
    %44 = arith.addf %39, %43 : vector<64x32xf32>
    %c2 = arith.constant 2 : index
    %c0_21 = arith.constant 0 : index
    %45 = vector.load %arg10[%c2, %c0_21] : memref<82x32xf32, #tpu.memory_space<vmem>>, vector<64x16xf32>
    %cst_22 = arith.constant 0.000000e+00 : f32
    %46 = vector.broadcast %cst_22 : f32 to vector<64x16xf32>
    %47 = vector.shape_cast %23 : vector<64x1xi1> to vector<64x1xi1>
    %48 = vector.broadcast %47 : vector<64x1xi1> to vector<64x16xi1>
    %49 = arith.select %48, %45, %46 : vector<64x16xi1>, vector<64x16xf32>
    %50 = arith.truncf %49 : vector<64x16xf32> to vector<64x16xbf16>
    %c32 = arith.constant 32 : index
    %c0_23 = arith.constant 0 : index
    %51 = vector.load %arg4[%c32, %c0_23] : memref<432x32xbf16, #tpu.memory_space<vmem>>, vector<16x32xbf16>
    %cst_24 = arith.constant dense<0.000000e+00> : vector<64x32xf32>
    %52 = tpu.matmul %50, %51, %cst_24 {dimension_numbers = #tpu.dot_dimension_numbers<[1], [0], [0], [1], [0, 0, 1, 1], [], []>} : vector<64x16xbf16>, vector<16x32xbf16>, vector<64x32xf32> -> vector<64x32xf32>
    %53 = arith.addf %44, %52 : vector<64x32xf32>
    %c8 = arith.constant 8 : index
    %c0_25 = arith.constant 0 : index
    %54 = vector.load %arg10[%c8, %c0_25] : memref<82x32xf32, #tpu.memory_space<vmem>>, vector<64x16xf32>
    %cst_26 = arith.constant 0.000000e+00 : f32
    %55 = vector.broadcast %cst_26 : f32 to vector<64x16xf32>
    %56 = vector.shape_cast %21 : vector<64x1xi1> to vector<64x1xi1>
    %57 = vector.broadcast %56 : vector<64x1xi1> to vector<64x16xi1>
    %58 = arith.select %57, %54, %55 : vector<64x16xi1>, vector<64x16xf32>
    %59 = arith.truncf %58 : vector<64x16xf32> to vector<64x16xbf16>
    %c48 = arith.constant 48 : index
    %c0_27 = arith.constant 0 : index
    %60 = vector.load %arg4[%c48, %c0_27] : memref<432x32xbf16, #tpu.memory_space<vmem>>, vector<16x32xbf16>
    %cst_28 = arith.constant dense<0.000000e+00> : vector<64x32xf32>
    %61 = tpu.matmul %59, %60, %cst_28 {dimension_numbers = #tpu.dot_dimension_numbers<[1], [0], [0], [1], [0, 0, 1, 1], [], []>} : vector<64x16xbf16>, vector<16x32xbf16>, vector<64x32xf32> -> vector<64x32xf32>
    %62 = arith.addf %53, %61 : vector<64x32xf32>
    %c9_29 = arith.constant 9 : index
    %c0_30 = arith.constant 0 : index
    %63 = vector.load %arg10[%c9_29, %c0_30] : memref<82x32xf32, #tpu.memory_space<vmem>>, vector<64x16xf32>
    %64 = arith.truncf %63 : vector<64x16xf32> to vector<64x16xbf16>
    %c64 = arith.constant 64 : index
    %c0_31 = arith.constant 0 : index
    %65 = vector.load %arg4[%c64, %c0_31] : memref<432x32xbf16, #tpu.memory_space<vmem>>, vector<16x32xbf16>
    %cst_32 = arith.constant dense<0.000000e+00> : vector<64x32xf32>
    %66 = tpu.matmul %64, %65, %cst_32 {dimension_numbers = #tpu.dot_dimension_numbers<[1], [0], [0], [1], [0, 0, 1, 1], [], []>} : vector<64x16xbf16>, vector<16x32xbf16>, vector<64x32xf32> -> vector<64x32xf32>
    %67 = arith.addf %62, %66 : vector<64x32xf32>
    %c10 = arith.constant 10 : index
    %c0_33 = arith.constant 0 : index
    %68 = vector.load %arg10[%c10, %c0_33] : memref<82x32xf32, #tpu.memory_space<vmem>>, vector<64x16xf32>
    %cst_34 = arith.constant 0.000000e+00 : f32
    %69 = vector.broadcast %cst_34 : f32 to vector<64x16xf32>
    %70 = vector.shape_cast %23 : vector<64x1xi1> to vector<64x1xi1>
    %71 = vector.broadcast %70 : vector<64x1xi1> to vector<64x16xi1>
    %72 = arith.select %71, %68, %69 : vector<64x16xi1>, vector<64x16xf32>
    %73 = arith.truncf %72 : vector<64x16xf32> to vector<64x16xbf16>
    %c80 = arith.constant 80 : index
    %c0_35 = arith.constant 0 : index
    %74 = vector.load %arg4[%c80, %c0_35] : memref<432x32xbf16, #tpu.memory_space<vmem>>, vector<16x32xbf16>
    %cst_36 = arith.constant dense<0.000000e+00> : vector<64x32xf32>
    %75 = tpu.matmul %73, %74, %cst_36 {dimension_numbers = #tpu.dot_dimension_numbers<[1], [0], [0], [1], [0, 0, 1, 1], [], []>} : vector<64x16xbf16>, vector<16x32xbf16>, vector<64x32xf32> -> vector<64x32xf32>
    %76 = arith.addf %67, %75 : vector<64x32xf32>
    %c16_37 = arith.constant 16 : index
    %c0_38 = arith.constant 0 : index
    %77 = vector.load %arg10[%c16_37, %c0_38] : memref<82x32xf32, #tpu.memory_space<vmem>>, vector<64x16xf32>
    %cst_39 = arith.constant 0.000000e+00 : f32
    %78 = vector.broadcast %cst_39 : f32 to vector<64x16xf32>
    %79 = vector.shape_cast %21 : vector<64x1xi1> to vector<64x1xi1>
    %80 = vector.broadcast %79 : vector<64x1xi1> to vector<64x16xi1>
    %81 = arith.select %80, %77, %78 : vector<64x16xi1>, vector<64x16xf32>
    %82 = arith.truncf %81 : vector<64x16xf32> to vector<64x16xbf16>
    %c96 = arith.constant 96 : index
    %c0_40 = arith.constant 0 : index
    %83 = vector.load %arg4[%c96, %c0_40] : memref<432x32xbf16, #tpu.memory_space<vmem>>, vector<16x32xbf16>
    %cst_41 = arith.constant dense<0.000000e+00> : vector<64x32xf32>
    %84 = tpu.matmul %82, %83, %cst_41 {dimension_numbers = #tpu.dot_dimension_numbers<[1], [0], [0], [1], [0, 0, 1, 1], [], []>} : vector<64x16xbf16>, vector<16x32xbf16>, vector<64x32xf32> -> vector<64x32xf32>
    %85 = arith.addf %76, %84 : vector<64x32xf32>
    %c17 = arith.constant 17 : index
    %c0_42 = arith.constant 0 : index
    %86 = vector.load %arg10[%c17, %c0_42] : memref<82x32xf32, #tpu.memory_space<vmem>>, vector<64x16xf32>
    %87 = arith.truncf %86 : vector<64x16xf32> to vector<64x16xbf16>
    %c112 = arith.constant 112 : index
    %c0_43 = arith.constant 0 : index
    %88 = vector.load %arg4[%c112, %c0_43] : memref<432x32xbf16, #tpu.memory_space<vmem>>, vector<16x32xbf16>
    %cst_44 = arith.constant dense<0.000000e+00> : vector<64x32xf32>
    %89 = tpu.matmul %87, %88, %cst_44 {dimension_numbers = #tpu.dot_dimension_numbers<[1], [0], [0], [1], [0, 0, 1, 1], [], []>} : vector<64x16xbf16>, vector<16x32xbf16>, vector<64x32xf32> -> vector<64x32xf32>
    %90 = arith.addf %85, %89 : vector<64x32xf32>
    %c18 = arith.constant 18 : index
    %c0_45 = arith.constant 0 : index
    %91 = vector.load %arg10[%c18, %c0_45] : memref<82x32xf32, #tpu.memory_space<vmem>>, vector<64x16xf32>
    %cst_46 = arith.constant 0.000000e+00 : f32
    %92 = vector.broadcast %cst_46 : f32 to vector<64x16xf32>
    %93 = vector.shape_cast %23 : vector<64x1xi1> to vector<64x1xi1>
    %94 = vector.broadcast %93 : vector<64x1xi1> to vector<64x16xi1>
    %95 = arith.select %94, %91, %92 : vector<64x16xi1>, vector<64x16xf32>
    %96 = arith.truncf %95 : vector<64x16xf32> to vector<64x16xbf16>
    %c128 = arith.constant 128 : index
    %c0_47 = arith.constant 0 : index
    %97 = vector.load %arg4[%c128, %c0_47] : memref<432x32xbf16, #tpu.memory_space<vmem>>, vector<16x32xbf16>
    %cst_48 = arith.constant dense<0.000000e+00> : vector<64x32xf32>
    %98 = tpu.matmul %96, %97, %cst_48 {dimension_numbers = #tpu.dot_dimension_numbers<[1], [0], [0], [1], [0, 0, 1, 1], [], []>} : vector<64x16xbf16>, vector<16x32xbf16>, vector<64x32xf32> -> vector<64x32xf32>
    %99 = arith.addf %90, %98 : vector<64x32xf32>
    %100 = vector.broadcast %26 : vector<1x32xf32> to vector<64x32xf32>
    %101 = arith.addf %99, %100 : vector<64x32xf32>
    %cst_49 = arith.constant 0.000000e+00 : f32
    %102 = vector.broadcast %cst_49 : f32 to vector<64x32xf32>
    %103 = arith.cmpf ogt, %101, %102 : vector<64x32xf32>
    %cst_50 = arith.constant 0.000000e+00 : f32
    %104 = vector.broadcast %cst_50 : f32 to vector<64x32xf32>
    %105 = arith.minimumf %101, %104 : vector<64x32xf32>
    %106 = math.exp %105 : vector<64x32xf32>
    %cst_51 = arith.constant 1.000000e+00 : f32
    %107 = vector.broadcast %cst_51 : f32 to vector<64x32xf32>
    %108 = arith.subf %106, %107 : vector<64x32xf32>
    %109 = arith.select %103, %101, %108 : vector<64x32xi1>, vector<64x32xf32>
    %110 = vector.extract_strided_slice %2 {offsets = [1, 0], sizes = [1, 32], strides = [1, 1]} : vector<16x32xf32> to vector<1x32xf32>
    %cst_52 = arith.constant 0.000000e+00 : f32
    %111 = vector.broadcast %cst_52 : f32 to vector<82x32xf32>
    %c0_53 = arith.constant 0 : index
    %c0_54 = arith.constant 0 : index
    %112 = vector.load %arg10[%c0_53, %c0_54] : memref<82x32xf32, #tpu.memory_space<vmem>>, vector<82x32xf32>
    tpu.vector_store %arg10[%c0_53, %c0_54], %111 {strides = array<i32>} : memref<82x32xf32, #tpu.memory_space<vmem>>, vector<82x32xf32>,
    %c9_55 = arith.constant 9 : index
    %c0_56 = arith.constant 0 : index
    %113 = vector.load %arg10[%c9_55, %c0_56] : memref<82x32xf32, #tpu.memory_space<vmem>>, vector<64x32xf32>
    tpu.vector_store %arg10[%c9_55, %c0_56], %109 {strides = array<i32>} : memref<82x32xf32, #tpu.memory_space<vmem>>, vector<64x32xf32>,
    %cst_57 = arith.constant 0.000000e+00 : f32
    %114 = vector.broadcast %cst_57 : f32 to vector<64x32xf32>
    %c0_58 = arith.constant 0 : index
    %c0_59 = arith.constant 0 : index
    %115 = vector.load %arg10[%c0_58, %c0_59] : memref<82x32xf32, #tpu.memory_space<vmem>>, vector<64x32xf32>
    %cst_60 = arith.constant 0.000000e+00 : f32
    %116 = vector.broadcast %cst_60 : f32 to vector<64x32xf32>
    %117 = vector.shape_cast %21 : vector<64x1xi1> to vector<64x1xi1>
    %118 = vector.broadcast %117 : vector<64x1xi1> to vector<64x32xi1>
    %119 = arith.select %118, %115, %116 : vector<64x32xi1>, vector<64x32xf32>
    %120 = arith.truncf %119 : vector<64x32xf32> to vector<64x32xbf16>
    %c144 = arith.constant 144 : index
    %c0_61 = arith.constant 0 : index
    %121 = vector.load %arg4[%c144, %c0_61] : memref<432x32xbf16, #tpu.memory_space<vmem>>, vector<32x32xbf16>
    %cst_62 = arith.constant dense<0.000000e+00> : vector<64x32xf32>
    %122 = tpu.matmul %120, %121, %cst_62 {dimension_numbers = #tpu.dot_dimension_numbers<[1], [0], [0], [1], [0, 0, 1, 1], [], []>} : vector<64x32xbf16>, vector<32x32xbf16>, vector<64x32xf32> -> vector<64x32xf32>
    %123 = arith.addf %114, %122 : vector<64x32xf32>
    %c1_63 = arith.constant 1 : index
    %c0_64 = arith.constant 0 : index
    %124 = vector.load %arg10[%c1_63, %c0_64] : memref<82x32xf32, #tpu.memory_space<vmem>>, vector<64x32xf32>
    %125 = arith.truncf %124 : vector<64x32xf32> to vector<64x32xbf16>
    %c176 = arith.constant 176 : index
    %c0_65 = arith.constant 0 : index
    %126 = vector.load %arg4[%c176, %c0_65] : memref<432x32xbf16, #tpu.memory_space<vmem>>, vector<32x32xbf16>
    %cst_66 = arith.constant dense<0.000000e+00> : vector<64x32xf32>
    %127 = tpu.matmul %125, %126, %cst_66 {dimension_numbers = #tpu.dot_dimension_numbers<[1], [0], [0], [1], [0, 0, 1, 1], [], []>} : vector<64x32xbf16>, vector<32x32xbf16>, vector<64x32xf32> -> vector<64x32xf32>
    %128 = arith.addf %123, %127 : vector<64x32xf32>
    %c2_67 = arith.constant 2 : index
    %c0_68 = arith.constant 0 : index
    %129 = vector.load %arg10[%c2_67, %c0_68] : memref<82x32xf32, #tpu.memory_space<vmem>>, vector<64x32xf32>
    %cst_69 = arith.constant 0.000000e+00 : f32
    %130 = vector.broadcast %cst_69 : f32 to vector<64x32xf32>
    %131 = vector.shape_cast %23 : vector<64x1xi1> to vector<64x1xi1>
    %132 = vector.broadcast %131 : vector<64x1xi1> to vector<64x32xi1>
    %133 = arith.select %132, %129, %130 : vector<64x32xi1>, vector<64x32xf32>
    %134 = arith.truncf %133 : vector<64x32xf32> to vector<64x32xbf16>
    %c208 = arith.constant 208 : index
    %c0_70 = arith.constant 0 : index
    %135 = vector.load %arg4[%c208, %c0_70] : memref<432x32xbf16, #tpu.memory_space<vmem>>, vector<32x32xbf16>
    %cst_71 = arith.constant dense<0.000000e+00> : vector<64x32xf32>
    %136 = tpu.matmul %134, %135, %cst_71 {dimension_numbers = #tpu.dot_dimension_numbers<[1], [0], [0], [1], [0, 0, 1, 1], [], []>} : vector<64x32xbf16>, vector<32x32xbf16>, vector<64x32xf32> -> vector<64x32xf32>
    %137 = arith.addf %128, %136 : vector<64x32xf32>
    %c8_72 = arith.constant 8 : index
    %c0_73 = arith.constant 0 : index
    %138 = vector.load %arg10[%c8_72, %c0_73] : memref<82x32xf32, #tpu.memory_space<vmem>>, vector<64x32xf32>
    %cst_74 = arith.constant 0.000000e+00 : f32
    %139 = vector.broadcast %cst_74 : f32 to vector<64x32xf32>
    %140 = vector.shape_cast %21 : vector<64x1xi1> to vector<64x1xi1>
    %141 = vector.broadcast %140 : vector<64x1xi1> to vector<64x32xi1>
    %142 = arith.select %141, %138, %139 : vector<64x32xi1>, vector<64x32xf32>
    %143 = arith.truncf %142 : vector<64x32xf32> to vector<64x32xbf16>
    %c240 = arith.constant 240 : index
    %c0_75 = arith.constant 0 : index
    %144 = vector.load %arg4[%c240, %c0_75] : memref<432x32xbf16, #tpu.memory_space<vmem>>, vector<32x32xbf16>
    %cst_76 = arith.constant dense<0.000000e+00> : vector<64x32xf32>
    %145 = tpu.matmul %143, %144, %cst_76 {dimension_numbers = #tpu.dot_dimension_numbers<[1], [0], [0], [1], [0, 0, 1, 1], [], []>} : vector<64x32xbf16>, vector<32x32xbf16>, vector<64x32xf32> -> vector<64x32xf32>
    %146 = arith.addf %137, %145 : vector<64x32xf32>
    %c9_77 = arith.constant 9 : index
    %c0_78 = arith.constant 0 : index
    %147 = vector.load %arg10[%c9_77, %c0_78] : memref<82x32xf32, #tpu.memory_space<vmem>>, vector<64x32xf32>
    %148 = arith.truncf %147 : vector<64x32xf32> to vector<64x32xbf16>
    %c272 = arith.constant 272 : index
    %c0_79 = arith.constant 0 : index
    %149 = vector.load %arg4[%c272, %c0_79] : memref<432x32xbf16, #tpu.memory_space<vmem>>, vector<32x32xbf16>
    %cst_80 = arith.constant dense<0.000000e+00> : vector<64x32xf32>
    %150 = tpu.matmul %148, %149, %cst_80 {dimension_numbers = #tpu.dot_dimension_numbers<[1], [0], [0], [1], [0, 0, 1, 1], [], []>} : vector<64x32xbf16>, vector<32x32xbf16>, vector<64x32xf32> -> vector<64x32xf32>
    %151 = arith.addf %146, %150 : vector<64x32xf32>
    %c10_81 = arith.constant 10 : index
    %c0_82 = arith.constant 0 : index
    %152 = vector.load %arg10[%c10_81, %c0_82] : memref<82x32xf32, #tpu.memory_space<vmem>>, vector<64x32xf32>
    %cst_83 = arith.constant 0.000000e+00 : f32
    %153 = vector.broadcast %cst_83 : f32 to vector<64x32xf32>
    %154 = vector.shape_cast %23 : vector<64x1xi1> to vector<64x1xi1>
    %155 = vector.broadcast %154 : vector<64x1xi1> to vector<64x32xi1>
    %156 = arith.select %155, %152, %153 : vector<64x32xi1>, vector<64x32xf32>
    %157 = arith.truncf %156 : vector<64x32xf32> to vector<64x32xbf16>
    %c304 = arith.constant 304 : index
    %c0_84 = arith.constant 0 : index
    %158 = vector.load %arg4[%c304, %c0_84] : memref<432x32xbf16, #tpu.memory_space<vmem>>, vector<32x32xbf16>
    %cst_85 = arith.constant dense<0.000000e+00> : vector<64x32xf32>
    %159 = tpu.matmul %157, %158, %cst_85 {dimension_numbers = #tpu.dot_dimension_numbers<[1], [0], [0], [1], [0, 0, 1, 1], [], []>} : vector<64x32xbf16>, vector<32x32xbf16>, vector<64x32xf32> -> vector<64x32xf32>
    %160 = arith.addf %151, %159 : vector<64x32xf32>
    %c16_86 = arith.constant 16 : index
    %c0_87 = arith.constant 0 : index
    %161 = vector.load %arg10[%c16_86, %c0_87] : memref<82x32xf32, #tpu.memory_space<vmem>>, vector<64x32xf32>
    %cst_88 = arith.constant 0.000000e+00 : f32
    %162 = vector.broadcast %cst_88 : f32 to vector<64x32xf32>
    %163 = vector.shape_cast %21 : vector<64x1xi1> to vector<64x1xi1>
    %164 = vector.broadcast %163 : vector<64x1xi1> to vector<64x32xi1>
    %165 = arith.select %164, %161, %162 : vector<64x32xi1>, vector<64x32xf32>
    %166 = arith.truncf %165 : vector<64x32xf32> to vector<64x32xbf16>
    %c336 = arith.constant 336 : index
    %c0_89 = arith.constant 0 : index
    %167 = vector.load %arg4[%c336, %c0_89] : memref<432x32xbf16, #tpu.memory_space<vmem>>, vector<32x32xbf16>
    %cst_90 = arith.constant dense<0.000000e+00> : vector<64x32xf32>
    %168 = tpu.matmul %166, %167, %cst_90 {dimension_numbers = #tpu.dot_dimension_numbers<[1], [0], [0], [1], [0, 0, 1, 1], [], []>} : vector<64x32xbf16>, vector<32x32xbf16>, vector<64x32xf32> -> vector<64x32xf32>
    %169 = arith.addf %160, %168 : vector<64x32xf32>
    %c17_91 = arith.constant 17 : index
    %c0_92 = arith.constant 0 : index
    %170 = vector.load %arg10[%c17_91, %c0_92] : memref<82x32xf32, #tpu.memory_space<vmem>>, vector<64x32xf32>
    %171 = arith.truncf %170 : vector<64x32xf32> to vector<64x32xbf16>
    %c368 = arith.constant 368 : index
    %c0_93 = arith.constant 0 : index
    %172 = vector.load %arg4[%c368, %c0_93] : memref<432x32xbf16, #tpu.memory_space<vmem>>, vector<32x32xbf16>
    %cst_94 = arith.constant dense<0.000000e+00> : vector<64x32xf32>
    %173 = tpu.matmul %171, %172, %cst_94 {dimension_numbers = #tpu.dot_dimension_numbers<[1], [0], [0], [1], [0, 0, 1, 1], [], []>} : vector<64x32xbf16>, vector<32x32xbf16>, vector<64x32xf32> -> vector<64x32xf32>
    %174 = arith.addf %169, %173 : vector<64x32xf32>
    %c18_95 = arith.constant 18 : index
    %c0_96 = arith.constant 0 : index
    %175 = vector.load %arg10[%c18_95, %c0_96] : memref<82x32xf32, #tpu.memory_space<vmem>>, vector<64x32xf32>
    %cst_97 = arith.constant 0.000000e+00 : f32
    %176 = vector.broadcast %cst_97 : f32 to vector<64x32xf32>
    %177 = vector.shape_cast %23 : vector<64x1xi1> to vector<64x1xi1>
    %178 = vector.broadcast %177 : vector<64x1xi1> to vector<64x32xi1>
    %179 = arith.select %178, %175, %176 : vector<64x32xi1>, vector<64x32xf32>
    %180 = arith.truncf %179 : vector<64x32xf32> to vector<64x32xbf16>
    %c400 = arith.constant 400 : index
    %c0_98 = arith.constant 0 : index
    %181 = vector.load %arg4[%c400, %c0_98] : memref<432x32xbf16, #tpu.memory_space<vmem>>, vector<32x32xbf16>
    %cst_99 = arith.constant dense<0.000000e+00> : vector<64x32xf32>
    %182 = tpu.matmul %180, %181, %cst_99 {dimension_numbers = #tpu.dot_dimension_numbers<[1], [0], [0], [1], [0, 0, 1, 1], [], []>} : vector<64x32xbf16>, vector<32x32xbf16>, vector<64x32xf32> -> vector<64x32xf32>
    %183 = arith.addf %174, %182 : vector<64x32xf32>
    %184 = vector.broadcast %110 : vector<1x32xf32> to vector<64x32xf32>
    %185 = arith.addf %183, %184 : vector<64x32xf32>
    %cst_100 = arith.constant 0.000000e+00 : f32
    %186 = vector.broadcast %cst_100 : f32 to vector<64x32xf32>
    %187 = arith.cmpf ogt, %185, %186 : vector<64x32xf32>
    %cst_101 = arith.constant 0.000000e+00 : f32
    %188 = vector.broadcast %cst_101 : f32 to vector<64x32xf32>
    %189 = arith.minimumf %185, %188 : vector<64x32xf32>
    %190 = math.exp %189 : vector<64x32xf32>
    %cst_102 = arith.constant 1.000000e+00 : f32
    %191 = vector.broadcast %cst_102 : f32 to vector<64x32xf32>
    %192 = arith.subf %190, %191 : vector<64x32xf32>
    %193 = arith.select %187, %185, %192 : vector<64x32xi1>, vector<64x32xf32>
    %c0_103 = arith.constant 0 : index
    %c0_104 = arith.constant 0 : index
    %194 = vector.load %arg5[%c0_103, %c0_104] : memref<65x128xf32, #tpu.memory_space<vmem>>, vector<32x128xf32>
    %c32_105 = arith.constant 32 : index
    %c0_106 = arith.constant 0 : index
    %195 = vector.load %arg5[%c32_105, %c0_106] : memref<65x128xf32, #tpu.memory_space<vmem>>, vector<32x128xf32>
    %c64_107 = arith.constant 64 : index
    %c0_108 = arith.constant 0 : index
    %196 = vector.load %arg5[%c64_107, %c0_108] : memref<65x128xf32, #tpu.memory_space<vmem>>, vector<1x128xf32>
    %c0_109 = arith.constant 0 : index
    %c0_110 = arith.constant 0 : index
    %c0_111 = arith.constant 0 : index
    %197 = vector.load %arg3[%c0_109, %c0_110, %c0_111] : memref<1x8x32xf32, #tpu.memory_space<vmem>>, vector<1x8x32xf32>
    %198 = vector.shape_cast %197 : vector<1x8x32xf32> to vector<8x32xf32>
    %cst_112 = arith.constant dense<0.000000e+00> : vector<8x128xf32>
    %199 = tpu.matmul %198, %194, %cst_112 {dimension_numbers = #tpu.dot_dimension_numbers<[1], [0], [0], [1], [0, 0, 1, 1], [], []>} : vector<8x32xf32>, vector<32x128xf32>, vector<8x128xf32> -> vector<8x128xf32>
    %200 = vector.broadcast %196 : vector<1x128xf32> to vector<8x128xf32>
    %201 = arith.addf %199, %200 : vector<8x128xf32>
    %202 = tpu.iota {dimensions = array<i32: 1>} : vector<1x32xi32>
    %cst_113 = arith.constant 0.000000e+00 : f32
    %203 = vector.broadcast %cst_113 : f32 to vector<1x32xf32>
    %cst_114 = arith.constant 0.000000e+00 : f32
    %204 = vector.broadcast %cst_114 : f32 to vector<1x32xf32>
    %cst_115 = arith.constant dense<0.000000e+00> : vector<1x128xf32>
    %205 = tpu.matmul %203, %195, %cst_115 {dimension_numbers = #tpu.dot_dimension_numbers<[1], [0], [0], [1], [0, 0, 1, 1], [], []>} : vector<1x32xf32>, vector<32x128xf32>, vector<1x128xf32> -> vector<1x128xf32>
    %206 = vector.extract_strided_slice %201 {offsets = [0, 0], sizes = [1, 128], strides = [1, 1]} : vector<8x128xf32> to vector<1x128xf32>
    %207 = arith.addf %205, %206 : vector<1x128xf32>
    %cst_116 = arith.constant 5.000000e-01 : f32
    %208 = vector.broadcast %cst_116 : f32 to vector<1x128xf32>
    %209 = arith.mulf %208, %207 : vector<1x128xf32>
    %210 = math.tanh %209 : vector<1x128xf32>
    %cst_117 = arith.constant 5.000000e-01 : f32
    %211 = vector.broadcast %cst_117 : f32 to vector<1x128xf32>
    %212 = arith.mulf %211, %210 : vector<1x128xf32>
    %cst_118 = arith.constant 5.000000e-01 : f32
    %213 = vector.broadcast %cst_118 : f32 to vector<1x128xf32>
    %214 = arith.addf %212, %213 : vector<1x128xf32>
    %215 = math.tanh %207 : vector<1x128xf32>
    %216 = vector.extract_strided_slice %214 {offsets = [0, 32], sizes = [1, 32], strides = [1, 1]} : vector<1x128xf32> to vector<1x32xf32>
    %217 = arith.mulf %216, %204 : vector<1x32xf32>
    %218 = vector.extract_strided_slice %214 {offsets = [0, 0], sizes = [1, 32], strides = [1, 1]} : vector<1x128xf32> to vector<1x32xf32>
    %219 = vector.extract_strided_slice %215 {offsets = [0, 64], sizes = [1, 32], strides = [1, 1]} : vector<1x128xf32> to vector<1x32xf32>
    %220 = arith.mulf %218, %219 : vector<1x32xf32>
    %221 = arith.addf %217, %220 : vector<1x32xf32>
    %222 = vector.extract_strided_slice %214 {offsets = [0, 96], sizes = [1, 32], strides = [1, 1]} : vector<1x128xf32> to vector<1x32xf32>
    %223 = math.tanh %221 : vector<1x32xf32>
    %224 = arith.mulf %222, %223 : vector<1x32xf32>
    %c16_i32 = arith.constant 16 : i32
    %225 = vector.broadcast %c16_i32 : i32 to vector<1x32xi32>
    %226 = arith.cmpi slt, %202, %225 : vector<1x32xi32>
    %c0_i32_119 = arith.constant 0 : i32
    %227 = arith.cmpi sgt, %1, %c0_i32_119 : i32
    %228 = vector.broadcast %227 : i1 to vector<1x32xi1>
    %229 = arith.andi %226, %228 : vector<1x32xi1>
    %c16_i32_120 = arith.constant 16 : i32
    %230 = vector.broadcast %c16_i32_120 : i32 to vector<1x32xi32>
    %231 = arith.cmpi sge, %202, %230 : vector<1x32xi32>
    %c7_i32 = arith.constant 7 : i32
    %232 = arith.cmpi sgt, %1, %c7_i32 : i32
    %233 = vector.broadcast %232 : i1 to vector<1x32xi1>
    %234 = arith.andi %231, %233 : vector<1x32xi1>
    %235 = arith.ori %229, %234 : vector<1x32xi1>
    %236 = arith.select %235, %224, %203 : vector<1x32xi1>, vector<1x32xf32>
    %237 = arith.select %235, %221, %204 : vector<1x32xi1>, vector<1x32xf32>
    %cst_121 = arith.constant 0.000000e+00 : f32
    %238 = vector.broadcast %cst_121 : f32 to vector<1x32xf32>
    %239 = arith.select %235, %224, %238 : vector<1x32xi1>, vector<1x32xf32>
    %cst_122 = arith.constant dense<0.000000e+00> : vector<1x128xf32>
    %240 = tpu.matmul %236, %195, %cst_122 {dimension_numbers = #tpu.dot_dimension_numbers<[1], [0], [0], [1], [0, 0, 1, 1], [], []>} : vector<1x32xf32>, vector<32x128xf32>, vector<1x128xf32> -> vector<1x128xf32>
    %241 = vector.extract_strided_slice %201 {offsets = [1, 0], sizes = [1, 128], strides = [1, 1]} : vector<8x128xf32> to vector<1x128xf32>
    %242 = arith.addf %240, %241 : vector<1x128xf32>
    %cst_123 = arith.constant 5.000000e-01 : f32
    %243 = vector.broadcast %cst_123 : f32 to vector<1x128xf32>
    %244 = arith.mulf %243, %242 : vector<1x128xf32>
    %245 = math.tanh %244 : vector<1x128xf32>
    %cst_124 = arith.constant 5.000000e-01 : f32
    %246 = vector.broadcast %cst_124 : f32 to vector<1x128xf32>
    %247 = arith.mulf %246, %245 : vector<1x128xf32>
    %cst_125 = arith.constant 5.000000e-01 : f32
    %248 = vector.broadcast %cst_125 : f32 to vector<1x128xf32>
    %249 = arith.addf %247, %248 : vector<1x128xf32>
    %250 = math.tanh %242 : vector<1x128xf32>
    %251 = vector.extract_strided_slice %249 {offsets = [0, 32], sizes = [1, 32], strides = [1, 1]} : vector<1x128xf32> to vector<1x32xf32>
    %252 = arith.mulf %251, %237 : vector<1x32xf32>
    %253 = vector.extract_strided_slice %249 {offsets = [0, 0], sizes = [1, 32], strides = [1, 1]} : vector<1x128xf32> to vector<1x32xf32>
    %254 = vector.extract_strided_slice %250 {offsets = [0, 64], sizes = [1, 32], strides = [1, 1]} : vector<1x128xf32> to vector<1x32xf32>
    %255 = arith.mulf %253, %254 : vector<1x32xf32>
    %256 = arith.addf %252, %255 : vector<1x32xf32>
    %257 = vector.extract_strided_slice %249 {offsets = [0, 96], sizes = [1, 32], strides = [1, 1]} : vector<1x128xf32> to vector<1x32xf32>
    %258 = math.tanh %256 : vector<1x32xf32>
    %259 = arith.mulf %257, %258 : vector<1x32xf32>
    %c16_i32_126 = arith.constant 16 : i32
    %260 = vector.broadcast %c16_i32_126 : i32 to vector<1x32xi32>
    %261 = arith.cmpi slt, %202, %260 : vector<1x32xi32>
    %c1_i32_127 = arith.constant 1 : i32
    %262 = arith.cmpi sgt, %1, %c1_i32_127 : i32
    %263 = vector.broadcast %262 : i1 to vector<1x32xi1>
    %264 = arith.andi %261, %263 : vector<1x32xi1>
    %c16_i32_128 = arith.constant 16 : i32
    %265 = vector.broadcast %c16_i32_128 : i32 to vector<1x32xi32>
    %266 = arith.cmpi sge, %202, %265 : vector<1x32xi32>
    %c6_i32_129 = arith.constant 6 : i32
    %267 = arith.cmpi sgt, %1, %c6_i32_129 : i32
    %268 = vector.broadcast %267 : i1 to vector<1x32xi1>
    %269 = arith.andi %266, %268 : vector<1x32xi1>
    %270 = arith.ori %264, %269 : vector<1x32xi1>
    %271 = arith.select %270, %259, %236 : vector<1x32xi1>, vector<1x32xf32>
    %272 = arith.select %270, %256, %237 : vector<1x32xi1>, vector<1x32xf32>
    %cst_130 = arith.constant 0.000000e+00 : f32
    %273 = vector.broadcast %cst_130 : f32 to vector<1x32xf32>
    %274 = arith.select %270, %259, %273 : vector<1x32xi1>, vector<1x32xf32>
    %cst_131 = arith.constant dense<0.000000e+00> : vector<1x128xf32>
    %275 = tpu.matmul %271, %195, %cst_131 {dimension_numbers = #tpu.dot_dimension_numbers<[1], [0], [0], [1], [0, 0, 1, 1], [], []>} : vector<1x32xf32>, vector<32x128xf32>, vector<1x128xf32> -> vector<1x128xf32>
    %276 = vector.extract_strided_slice %201 {offsets = [2, 0], sizes = [1, 128], strides = [1, 1]} : vector<8x128xf32> to vector<1x128xf32>
    %277 = arith.addf %275, %276 : vector<1x128xf32>
    %cst_132 = arith.constant 5.000000e-01 : f32
    %278 = vector.broadcast %cst_132 : f32 to vector<1x128xf32>
    %279 = arith.mulf %278, %277 : vector<1x128xf32>
    %280 = math.tanh %279 : vector<1x128xf32>
    %cst_133 = arith.constant 5.000000e-01 : f32
    %281 = vector.broadcast %cst_133 : f32 to vector<1x128xf32>
    %282 = arith.mulf %281, %280 : vector<1x128xf32>
    %cst_134 = arith.constant 5.000000e-01 : f32
    %283 = vector.broadcast %cst_134 : f32 to vector<1x128xf32>
    %284 = arith.addf %282, %283 : vector<1x128xf32>
    %285 = math.tanh %277 : vector<1x128xf32>
    %286 = vector.extract_strided_slice %284 {offsets = [0, 32], sizes = [1, 32], strides = [1, 1]} : vector<1x128xf32> to vector<1x32xf32>
    %287 = arith.mulf %286, %272 : vector<1x32xf32>
    %288 = vector.extract_strided_slice %284 {offsets = [0, 0], sizes = [1, 32], strides = [1, 1]} : vector<1x128xf32> to vector<1x32xf32>
    %289 = vector.extract_strided_slice %285 {offsets = [0, 64], sizes = [1, 32], strides = [1, 1]} : vector<1x128xf32> to vector<1x32xf32>
    %290 = arith.mulf %288, %289 : vector<1x32xf32>
    %291 = arith.addf %287, %290 : vector<1x32xf32>
    %292 = vector.extract_strided_slice %284 {offsets = [0, 96], sizes = [1, 32], strides = [1, 1]} : vector<1x128xf32> to vector<1x32xf32>
    %293 = math.tanh %291 : vector<1x32xf32>
    %294 = arith.mulf %292, %293 : vector<1x32xf32>
    %c16_i32_135 = arith.constant 16 : i32
    %295 = vector.broadcast %c16_i32_135 : i32 to vector<1x32xi32>
    %296 = arith.cmpi slt, %202, %295 : vector<1x32xi32>
    %c2_i32 = arith.constant 2 : i32
    %297 = arith.cmpi sgt, %1, %c2_i32 : i32
    %298 = vector.broadcast %297 : i1 to vector<1x32xi1>
    %299 = arith.andi %296, %298 : vector<1x32xi1>
    %c16_i32_136 = arith.constant 16 : i32
    %300 = vector.broadcast %c16_i32_136 : i32 to vector<1x32xi32>
    %301 = arith.cmpi sge, %202, %300 : vector<1x32xi32>
    %c5_i32 = arith.constant 5 : i32
    %302 = arith.cmpi sgt, %1, %c5_i32 : i32
    %303 = vector.broadcast %302 : i1 to vector<1x32xi1>
    %304 = arith.andi %301, %303 : vector<1x32xi1>
    %305 = arith.ori %299, %304 : vector<1x32xi1>
    %306 = arith.select %305, %294, %271 : vector<1x32xi1>, vector<1x32xf32>
    %307 = arith.select %305, %291, %272 : vector<1x32xi1>, vector<1x32xf32>
    %cst_137 = arith.constant 0.000000e+00 : f32
    %308 = vector.broadcast %cst_137 : f32 to vector<1x32xf32>
    %309 = arith.select %305, %294, %308 : vector<1x32xi1>, vector<1x32xf32>
    %cst_138 = arith.constant dense<0.000000e+00> : vector<1x128xf32>
    %310 = tpu.matmul %306, %195, %cst_138 {dimension_numbers = #tpu.dot_dimension_numbers<[1], [0], [0], [1], [0, 0, 1, 1], [], []>} : vector<1x32xf32>, vector<32x128xf32>, vector<1x128xf32> -> vector<1x128xf32>
    %311 = vector.extract_strided_slice %201 {offsets = [3, 0], sizes = [1, 128], strides = [1, 1]} : vector<8x128xf32> to vector<1x128xf32>
    %312 = arith.addf %310, %311 : vector<1x128xf32>
    %cst_139 = arith.constant 5.000000e-01 : f32
    %313 = vector.broadcast %cst_139 : f32 to vector<1x128xf32>
    %314 = arith.mulf %313, %312 : vector<1x128xf32>
    %315 = math.tanh %314 : vector<1x128xf32>
    %cst_140 = arith.constant 5.000000e-01 : f32
    %316 = vector.broadcast %cst_140 : f32 to vector<1x128xf32>
    %317 = arith.mulf %316, %315 : vector<1x128xf32>
    %cst_141 = arith.constant 5.000000e-01 : f32
    %318 = vector.broadcast %cst_141 : f32 to vector<1x128xf32>
    %319 = arith.addf %317, %318 : vector<1x128xf32>
    %320 = math.tanh %312 : vector<1x128xf32>
    %321 = vector.extract_strided_slice %319 {offsets = [0, 32], sizes = [1, 32], strides = [1, 1]} : vector<1x128xf32> to vector<1x32xf32>
    %322 = arith.mulf %321, %307 : vector<1x32xf32>
    %323 = vector.extract_strided_slice %319 {offsets = [0, 0], sizes = [1, 32], strides = [1, 1]} : vector<1x128xf32> to vector<1x32xf32>
    %324 = vector.extract_strided_slice %320 {offsets = [0, 64], sizes = [1, 32], strides = [1, 1]} : vector<1x128xf32> to vector<1x32xf32>
    %325 = arith.mulf %323, %324 : vector<1x32xf32>
    %326 = arith.addf %322, %325 : vector<1x32xf32>
    %327 = vector.extract_strided_slice %319 {offsets = [0, 96], sizes = [1, 32], strides = [1, 1]} : vector<1x128xf32> to vector<1x32xf32>
    %328 = math.tanh %326 : vector<1x32xf32>
    %329 = arith.mulf %327, %328 : vector<1x32xf32>
    %c16_i32_142 = arith.constant 16 : i32
    %330 = vector.broadcast %c16_i32_142 : i32 to vector<1x32xi32>
    %331 = arith.cmpi slt, %202, %330 : vector<1x32xi32>
    %c3_i32 = arith.constant 3 : i32
    %332 = arith.cmpi sgt, %1, %c3_i32 : i32
    %333 = vector.broadcast %332 : i1 to vector<1x32xi1>
    %334 = arith.andi %331, %333 : vector<1x32xi1>
    %c16_i32_143 = arith.constant 16 : i32
    %335 = vector.broadcast %c16_i32_143 : i32 to vector<1x32xi32>
    %336 = arith.cmpi sge, %202, %335 : vector<1x32xi32>
    %c4_i32 = arith.constant 4 : i32
    %337 = arith.cmpi sgt, %1, %c4_i32 : i32
    %338 = vector.broadcast %337 : i1 to vector<1x32xi1>
    %339 = arith.andi %336, %338 : vector<1x32xi1>
    %340 = arith.ori %334, %339 : vector<1x32xi1>
    %341 = arith.select %340, %329, %306 : vector<1x32xi1>, vector<1x32xf32>
    %342 = arith.select %340, %326, %307 : vector<1x32xi1>, vector<1x32xf32>
    %cst_144 = arith.constant 0.000000e+00 : f32
    %343 = vector.broadcast %cst_144 : f32 to vector<1x32xf32>
    %344 = arith.select %340, %329, %343 : vector<1x32xi1>, vector<1x32xf32>
    %cst_145 = arith.constant dense<0.000000e+00> : vector<1x128xf32>
    %345 = tpu.matmul %341, %195, %cst_145 {dimension_numbers = #tpu.dot_dimension_numbers<[1], [0], [0], [1], [0, 0, 1, 1], [], []>} : vector<1x32xf32>, vector<32x128xf32>, vector<1x128xf32> -> vector<1x128xf32>
    %346 = vector.extract_strided_slice %201 {offsets = [4, 0], sizes = [1, 128], strides = [1, 1]} : vector<8x128xf32> to vector<1x128xf32>
    %347 = arith.addf %345, %346 : vector<1x128xf32>
    %cst_146 = arith.constant 5.000000e-01 : f32
    %348 = vector.broadcast %cst_146 : f32 to vector<1x128xf32>
    %349 = arith.mulf %348, %347 : vector<1x128xf32>
    %350 = math.tanh %349 : vector<1x128xf32>
    %cst_147 = arith.constant 5.000000e-01 : f32
    %351 = vector.broadcast %cst_147 : f32 to vector<1x128xf32>
    %352 = arith.mulf %351, %350 : vector<1x128xf32>
    %cst_148 = arith.constant 5.000000e-01 : f32
    %353 = vector.broadcast %cst_148 : f32 to vector<1x128xf32>
    %354 = arith.addf %352, %353 : vector<1x128xf32>
    %355 = math.tanh %347 : vector<1x128xf32>
    %356 = vector.extract_strided_slice %354 {offsets = [0, 32], sizes = [1, 32], strides = [1, 1]} : vector<1x128xf32> to vector<1x32xf32>
    %357 = arith.mulf %356, %342 : vector<1x32xf32>
    %358 = vector.extract_strided_slice %354 {offsets = [0, 0], sizes = [1, 32], strides = [1, 1]} : vector<1x128xf32> to vector<1x32xf32>
    %359 = vector.extract_strided_slice %355 {offsets = [0, 64], sizes = [1, 32], strides = [1, 1]} : vector<1x128xf32> to vector<1x32xf32>
    %360 = arith.mulf %358, %359 : vector<1x32xf32>
    %361 = arith.addf %357, %360 : vector<1x32xf32>
    %362 = vector.extract_strided_slice %354 {offsets = [0, 96], sizes = [1, 32], strides = [1, 1]} : vector<1x128xf32> to vector<1x32xf32>
    %363 = math.tanh %361 : vector<1x32xf32>
    %364 = arith.mulf %362, %363 : vector<1x32xf32>
    %c16_i32_149 = arith.constant 16 : i32
    %365 = vector.broadcast %c16_i32_149 : i32 to vector<1x32xi32>
    %366 = arith.cmpi slt, %202, %365 : vector<1x32xi32>
    %c4_i32_150 = arith.constant 4 : i32
    %367 = arith.cmpi sgt, %1, %c4_i32_150 : i32
    %368 = vector.broadcast %367 : i1 to vector<1x32xi1>
    %369 = arith.andi %366, %368 : vector<1x32xi1>
    %c16_i32_151 = arith.constant 16 : i32
    %370 = vector.broadcast %c16_i32_151 : i32 to vector<1x32xi32>
    %371 = arith.cmpi sge, %202, %370 : vector<1x32xi32>
    %c3_i32_152 = arith.constant 3 : i32
    %372 = arith.cmpi sgt, %1, %c3_i32_152 : i32
    %373 = vector.broadcast %372 : i1 to vector<1x32xi1>
    %374 = arith.andi %371, %373 : vector<1x32xi1>
    %375 = arith.ori %369, %374 : vector<1x32xi1>
    %376 = arith.select %375, %364, %341 : vector<1x32xi1>, vector<1x32xf32>
    %377 = arith.select %375, %361, %342 : vector<1x32xi1>, vector<1x32xf32>
    %cst_153 = arith.constant 0.000000e+00 : f32
    %378 = vector.broadcast %cst_153 : f32 to vector<1x32xf32>
    %379 = arith.select %375, %364, %378 : vector<1x32xi1>, vector<1x32xf32>
    %cst_154 = arith.constant dense<0.000000e+00> : vector<1x128xf32>
    %380 = tpu.matmul %376, %195, %cst_154 {dimension_numbers = #tpu.dot_dimension_numbers<[1], [0], [0], [1], [0, 0, 1, 1], [], []>} : vector<1x32xf32>, vector<32x128xf32>, vector<1x128xf32> -> vector<1x128xf32>
    %381 = vector.extract_strided_slice %201 {offsets = [5, 0], sizes = [1, 128], strides = [1, 1]} : vector<8x128xf32> to vector<1x128xf32>
    %382 = arith.addf %380, %381 : vector<1x128xf32>
    %cst_155 = arith.constant 5.000000e-01 : f32
    %383 = vector.broadcast %cst_155 : f32 to vector<1x128xf32>
    %384 = arith.mulf %383, %382 : vector<1x128xf32>
    %385 = math.tanh %384 : vector<1x128xf32>
    %cst_156 = arith.constant 5.000000e-01 : f32
    %386 = vector.broadcast %cst_156 : f32 to vector<1x128xf32>
    %387 = arith.mulf %386, %385 : vector<1x128xf32>
    %cst_157 = arith.constant 5.000000e-01 : f32
    %388 = vector.broadcast %cst_157 : f32 to vector<1x128xf32>
    %389 = arith.addf %387, %388 : vector<1x128xf32>
    %390 = math.tanh %382 : vector<1x128xf32>
    %391 = vector.extract_strided_slice %389 {offsets = [0, 32], sizes = [1, 32], strides = [1, 1]} : vector<1x128xf32> to vector<1x32xf32>
    %392 = arith.mulf %391, %377 : vector<1x32xf32>
    %393 = vector.extract_strided_slice %389 {offsets = [0, 0], sizes = [1, 32], strides = [1, 1]} : vector<1x128xf32> to vector<1x32xf32>
    %394 = vector.extract_strided_slice %390 {offsets = [0, 64], sizes = [1, 32], strides = [1, 1]} : vector<1x128xf32> to vector<1x32xf32>
    %395 = arith.mulf %393, %394 : vector<1x32xf32>
    %396 = arith.addf %392, %395 : vector<1x32xf32>
    %397 = vector.extract_strided_slice %389 {offsets = [0, 96], sizes = [1, 32], strides = [1, 1]} : vector<1x128xf32> to vector<1x32xf32>
    %398 = math.tanh %396 : vector<1x32xf32>
    %399 = arith.mulf %397, %398 : vector<1x32xf32>
    %c16_i32_158 = arith.constant 16 : i32
    %400 = vector.broadcast %c16_i32_158 : i32 to vector<1x32xi32>
    %401 = arith.cmpi slt, %202, %400 : vector<1x32xi32>
    %c5_i32_159 = arith.constant 5 : i32
    %402 = arith.cmpi sgt, %1, %c5_i32_159 : i32
    %403 = vector.broadcast %402 : i1 to vector<1x32xi1>
    %404 = arith.andi %401, %403 : vector<1x32xi1>
    %c16_i32_160 = arith.constant 16 : i32
    %405 = vector.broadcast %c16_i32_160 : i32 to vector<1x32xi32>
    %406 = arith.cmpi sge, %202, %405 : vector<1x32xi32>
    %c2_i32_161 = arith.constant 2 : i32
    %407 = arith.cmpi sgt, %1, %c2_i32_161 : i32
    %408 = vector.broadcast %407 : i1 to vector<1x32xi1>
    %409 = arith.andi %406, %408 : vector<1x32xi1>
    %410 = arith.ori %404, %409 : vector<1x32xi1>
    %411 = arith.select %410, %399, %376 : vector<1x32xi1>, vector<1x32xf32>
    %412 = arith.select %410, %396, %377 : vector<1x32xi1>, vector<1x32xf32>
    %cst_162 = arith.constant 0.000000e+00 : f32
    %413 = vector.broadcast %cst_162 : f32 to vector<1x32xf32>
    %414 = arith.select %410, %399, %413 : vector<1x32xi1>, vector<1x32xf32>
    %cst_163 = arith.constant dense<0.000000e+00> : vector<1x128xf32>
    %415 = tpu.matmul %411, %195, %cst_163 {dimension_numbers = #tpu.dot_dimension_numbers<[1], [0], [0], [1], [0, 0, 1, 1], [], []>} : vector<1x32xf32>, vector<32x128xf32>, vector<1x128xf32> -> vector<1x128xf32>
    %416 = vector.extract_strided_slice %201 {offsets = [6, 0], sizes = [1, 128], strides = [1, 1]} : vector<8x128xf32> to vector<1x128xf32>
    %417 = arith.addf %415, %416 : vector<1x128xf32>
    %cst_164 = arith.constant 5.000000e-01 : f32
    %418 = vector.broadcast %cst_164 : f32 to vector<1x128xf32>
    %419 = arith.mulf %418, %417 : vector<1x128xf32>
    %420 = math.tanh %419 : vector<1x128xf32>
    %cst_165 = arith.constant 5.000000e-01 : f32
    %421 = vector.broadcast %cst_165 : f32 to vector<1x128xf32>
    %422 = arith.mulf %421, %420 : vector<1x128xf32>
    %cst_166 = arith.constant 5.000000e-01 : f32
    %423 = vector.broadcast %cst_166 : f32 to vector<1x128xf32>
    %424 = arith.addf %422, %423 : vector<1x128xf32>
    %425 = math.tanh %417 : vector<1x128xf32>
    %426 = vector.extract_strided_slice %424 {offsets = [0, 32], sizes = [1, 32], strides = [1, 1]} : vector<1x128xf32> to vector<1x32xf32>
    %427 = arith.mulf %426, %412 : vector<1x32xf32>
    %428 = vector.extract_strided_slice %424 {offsets = [0, 0], sizes = [1, 32], strides = [1, 1]} : vector<1x128xf32> to vector<1x32xf32>
    %429 = vector.extract_strided_slice %425 {offsets = [0, 64], sizes = [1, 32], strides = [1, 1]} : vector<1x128xf32> to vector<1x32xf32>
    %430 = arith.mulf %428, %429 : vector<1x32xf32>
    %431 = arith.addf %427, %430 : vector<1x32xf32>
    %432 = vector.extract_strided_slice %424 {offsets = [0, 96], sizes = [1, 32], strides = [1, 1]} : vector<1x128xf32> to vector<1x32xf32>
    %433 = math.tanh %431 : vector<1x32xf32>
    %434 = arith.mulf %432, %433 : vector<1x32xf32>
    %c16_i32_167 = arith.constant 16 : i32
    %435 = vector.broadcast %c16_i32_167 : i32 to vector<1x32xi32>
    %436 = arith.cmpi slt, %202, %435 : vector<1x32xi32>
    %c6_i32_168 = arith.constant 6 : i32
    %437 = arith.cmpi sgt, %1, %c6_i32_168 : i32
    %438 = vector.broadcast %437 : i1 to vector<1x32xi1>
    %439 = arith.andi %436, %438 : vector<1x32xi1>
    %c16_i32_169 = arith.constant 16 : i32
    %440 = vector.broadcast %c16_i32_169 : i32 to vector<1x32xi32>
    %441 = arith.cmpi sge, %202, %440 : vector<1x32xi32>
    %c1_i32_170 = arith.constant 1 : i32
    %442 = arith.cmpi sgt, %1, %c1_i32_170 : i32
    %443 = vector.broadcast %442 : i1 to vector<1x32xi1>
    %444 = arith.andi %441, %443 : vector<1x32xi1>
    %445 = arith.ori %439, %444 : vector<1x32xi1>
    %446 = arith.select %445, %434, %411 : vector<1x32xi1>, vector<1x32xf32>
    %447 = arith.select %445, %431, %412 : vector<1x32xi1>, vector<1x32xf32>
    %cst_171 = arith.constant 0.000000e+00 : f32
    %448 = vector.broadcast %cst_171 : f32 to vector<1x32xf32>
    %449 = arith.select %445, %434, %448 : vector<1x32xi1>, vector<1x32xf32>
    %cst_172 = arith.constant dense<0.000000e+00> : vector<1x128xf32>
    %450 = tpu.matmul %446, %195, %cst_172 {dimension_numbers = #tpu.dot_dimension_numbers<[1], [0], [0], [1], [0, 0, 1, 1], [], []>} : vector<1x32xf32>, vector<32x128xf32>, vector<1x128xf32> -> vector<1x128xf32>
    %451 = vector.extract_strided_slice %201 {offsets = [7, 0], sizes = [1, 128], strides = [1, 1]} : vector<8x128xf32> to vector<1x128xf32>
    %452 = arith.addf %450, %451 : vector<1x128xf32>
    %cst_173 = arith.constant 5.000000e-01 : f32
    %453 = vector.broadcast %cst_173 : f32 to vector<1x128xf32>
    %454 = arith.mulf %453, %452 : vector<1x128xf32>
    %455 = math.tanh %454 : vector<1x128xf32>
    %cst_174 = arith.constant 5.000000e-01 : f32
    %456 = vector.broadcast %cst_174 : f32 to vector<1x128xf32>
    %457 = arith.mulf %456, %455 : vector<1x128xf32>
    %cst_175 = arith.constant 5.000000e-01 : f32
    %458 = vector.broadcast %cst_175 : f32 to vector<1x128xf32>
    %459 = arith.addf %457, %458 : vector<1x128xf32>
    %460 = math.tanh %452 : vector<1x128xf32>
    %461 = vector.extract_strided_slice %459 {offsets = [0, 32], sizes = [1, 32], strides = [1, 1]} : vector<1x128xf32> to vector<1x32xf32>
    %462 = arith.mulf %461, %447 : vector<1x32xf32>
    %463 = vector.extract_strided_slice %459 {offsets = [0, 0], sizes = [1, 32], strides = [1, 1]} : vector<1x128xf32> to vector<1x32xf32>
    %464 = vector.extract_strided_slice %460 {offsets = [0, 64], sizes = [1, 32], strides = [1, 1]} : vector<1x128xf32> to vector<1x32xf32>
    %465 = arith.mulf %463, %464 : vector<1x32xf32>
    %466 = arith.addf %462, %465 : vector<1x32xf32>
    %467 = vector.extract_strided_slice %459 {offsets = [0, 96], sizes = [1, 32], strides = [1, 1]} : vector<1x128xf32> to vector<1x32xf32>
    %468 = math.tanh %466 : vector<1x32xf32>
    %469 = arith.mulf %467, %468 : vector<1x32xf32>
    %c16_i32_176 = arith.constant 16 : i32
    %470 = vector.broadcast %c16_i32_176 : i32 to vector<1x32xi32>
    %471 = arith.cmpi slt, %202, %470 : vector<1x32xi32>
    %c7_i32_177 = arith.constant 7 : i32
    %472 = arith.cmpi sgt, %1, %c7_i32_177 : i32
    %473 = vector.broadcast %472 : i1 to vector<1x32xi1>
    %474 = arith.andi %471, %473 : vector<1x32xi1>
    %c16_i32_178 = arith.constant 16 : i32
    %475 = vector.broadcast %c16_i32_178 : i32 to vector<1x32xi32>
    %476 = arith.cmpi sge, %202, %475 : vector<1x32xi32>
    %c0_i32_179 = arith.constant 0 : i32
    %477 = arith.cmpi sgt, %1, %c0_i32_179 : i32
    %478 = vector.broadcast %477 : i1 to vector<1x32xi1>
    %479 = arith.andi %476, %478 : vector<1x32xi1>
    %480 = arith.ori %474, %479 : vector<1x32xi1>
    %481 = arith.select %480, %469, %446 : vector<1x32xi1>, vector<1x32xf32>
    %cst_180 = arith.constant 0.000000e+00 : f32
    %482 = vector.broadcast %cst_180 : f32 to vector<1x32xf32>
    %483 = arith.select %480, %469, %482 : vector<1x32xi1>, vector<1x32xf32>
    %484 = tpu.iota {dimensions = array<i32: 1>} : vector<8x32xi32>
    %c16_i32_181 = arith.constant 16 : i32
    %485 = vector.broadcast %c16_i32_181 : i32 to vector<8x32xi32>
    %486 = arith.cmpi slt, %484, %485 : vector<8x32xi32>
    %487 = tpu.concatenate %239, %274, %309, %344, %379, %414, %449, %483 in 0 : vector<1x32xf32>, vector<1x32xf32>, vector<1x32xf32>, vector<1x32xf32>, vector<1x32xf32>, vector<1x32xf32>, vector<1x32xf32>, vector<1x32xf32> -> vector<8x32xf32>
    %488 = tpu.concatenate %483, %449, %414, %379, %344, %309, %274, %239 in 0 : vector<1x32xf32>, vector<1x32xf32>, vector<1x32xf32>, vector<1x32xf32>, vector<1x32xf32>, vector<1x32xf32>, vector<1x32xf32>, vector<1x32xf32> -> vector<8x32xf32>
    %489 = arith.select %486, %487, %488 : vector<8x32xi1>, vector<8x32xf32>
    %c0_182 = arith.constant 0 : index
    %c0_183 = arith.constant 0 : index
    %490 = vector.load %arg6[%c0_182, %c0_183] : memref<448x32xf32, #tpu.memory_space<vmem>>, vector<32x32xf32>
    %cst_184 = arith.constant dense<0.000000e+00> : vector<1x32xf32>
    %491 = tpu.matmul %481, %490, %cst_184 {dimension_numbers = #tpu.dot_dimension_numbers<[1], [0], [0], [1], [0, 0, 1, 1], [], []>} : vector<1x32xf32>, vector<32x32xf32>, vector<1x32xf32> -> vector<1x32xf32>
    %492 = vector.extract_strided_slice %2 {offsets = [2, 0], sizes = [1, 32], strides = [1, 1]} : vector<16x32xf32> to vector<1x32xf32>
    %493 = arith.addf %491, %492 : vector<1x32xf32>
    %494 = math.tanh %493 : vector<1x32xf32>
    %c96_185 = arith.constant 96 : index
    %c0_186 = arith.constant 0 : index
    %495 = vector.load %arg6[%c96_185, %c0_186] : memref<448x32xf32, #tpu.memory_space<vmem>>, vector<32x32xf32>
    %cst_187 = arith.constant dense<0.000000e+00> : vector<64x32xf32>
    %496 = tpu.matmul %193, %495, %cst_187 {dimension_numbers = #tpu.dot_dimension_numbers<[1], [0], [0], [1], [0, 0, 1, 1], [], []>} : vector<64x32xf32>, vector<32x32xf32>, vector<64x32xf32> -> vector<64x32xf32>
    %497 = vector.extract_strided_slice %2 {offsets = [5, 0], sizes = [1, 32], strides = [1, 1]} : vector<16x32xf32> to vector<1x32xf32>
    %498 = vector.broadcast %497 : vector<1x32xf32> to vector<64x32xf32>
    %499 = arith.addf %496, %498 : vector<64x32xf32>
    %c192 = arith.constant 192 : index
    %c0_188 = arith.constant 0 : index
    %500 = vector.load %arg6[%c192, %c0_188] : memref<448x32xf32, #tpu.memory_space<vmem>>, vector<32x32xf32>
    %cst_189 = arith.constant dense<0.000000e+00> : vector<64x32xf32>
    %501 = tpu.matmul %499, %500, %cst_189 {dimension_numbers = #tpu.dot_dimension_numbers<[1], [0], [0], [1], [0, 0, 1, 1], [], []>} : vector<64x32xf32>, vector<32x32xf32>, vector<64x32xf32> -> vector<64x32xf32>
    %502 = vector.extract_strided_slice %2 {offsets = [4, 0], sizes = [1, 32], strides = [1, 1]} : vector<16x32xf32> to vector<1x32xf32>
    %503 = vector.extract_strided_slice %2 {offsets = [8, 0], sizes = [1, 32], strides = [1, 1]} : vector<16x32xf32> to vector<1x32xf32>
    %504 = tpu.iota {dimensions = array<i32: 1>} : vector<1x8xi32>
    %505 = vector.broadcast %1 : i32 to vector<1x8xi32>
    %506 = arith.cmpi slt, %504, %505 : vector<1x8xi32>
    %507 = vector.extract_strided_slice %2 {offsets = [9, 0], sizes = [1, 32], strides = [1, 1]} : vector<16x32xf32> to vector<1x32xf32>
    %c320 = arith.constant 320 : index
    %c0_190 = arith.constant 0 : index
    %508 = vector.load %arg6[%c320, %c0_190] : memref<448x32xf32, #tpu.memory_space<vmem>>, vector<32x32xf32>
    %cst_191 = arith.constant dense<0.000000e+00> : vector<1x32xf32>
    %509 = tpu.matmul %494, %508, %cst_191 {dimension_numbers = #tpu.dot_dimension_numbers<[1], [0], [0], [1], [0, 0, 1, 1], [], []>} : vector<1x32xf32>, vector<32x32xf32>, vector<1x32xf32> -> vector<1x32xf32>
    %510 = vector.extract_strided_slice %2 {offsets = [12, 0], sizes = [1, 32], strides = [1, 1]} : vector<16x32xf32> to vector<1x32xf32>
    %511 = arith.addf %509, %510 : vector<1x32xf32>
    %c32_192 = arith.constant 32 : index
    %c0_193 = arith.constant 0 : index
    %512 = vector.load %arg6[%c32_192, %c0_193] : memref<448x32xf32, #tpu.memory_space<vmem>>, vector<32x32xf32>
    %cst_194 = arith.constant dense<0.000000e+00> : vector<1x32xf32>
    %513 = tpu.matmul %481, %512, %cst_194 {dimension_numbers = #tpu.dot_dimension_numbers<[1], [0], [0], [1], [0, 0, 1, 1], [], []>} : vector<1x32xf32>, vector<32x32xf32>, vector<1x32xf32> -> vector<1x32xf32>
    %c64_195 = arith.constant 64 : index
    %c0_196 = arith.constant 0 : index
    %514 = vector.load %arg6[%c64_195, %c0_196] : memref<448x32xf32, #tpu.memory_space<vmem>>, vector<32x32xf32>
    %cst_197 = arith.constant dense<0.000000e+00> : vector<1x32xf32>
    %515 = tpu.matmul %511, %514, %cst_197 {dimension_numbers = #tpu.dot_dimension_numbers<[1], [0], [0], [1], [0, 0, 1, 1], [], []>} : vector<1x32xf32>, vector<32x32xf32>, vector<1x32xf32> -> vector<1x32xf32>
    %516 = arith.addf %513, %515 : vector<1x32xf32>
    %517 = vector.extract_strided_slice %2 {offsets = [3, 0], sizes = [1, 32], strides = [1, 1]} : vector<16x32xf32> to vector<1x32xf32>
    %518 = arith.addf %516, %517 : vector<1x32xf32>
    %519 = math.tanh %518 : vector<1x32xf32>
    %520 = arith.mulf %519, %502 : vector<1x32xf32>
    %cst_198 = arith.constant dense<0.000000e+00> : vector<1x8xf32>
    %521 = tpu.matmul %520, %489, %cst_198 {dimension_numbers = #tpu.dot_dimension_numbers<[1], [1], [0], [0], [0, 0, 1, 0], [], []>} : vector<1x32xf32>, vector<8x32xf32>, vector<1x8xf32> -> vector<1x8xf32>
    %cst_199 = arith.constant -1.000000e+30 : f32
    %522 = vector.broadcast %cst_199 : f32 to vector<1x8xf32>
    %523 = arith.select %506, %521, %522 : vector<1x8xi1>, vector<1x8xf32>
    %cst_200 = arith.constant dense<0xFF800000> : vector<1xf32>
    %524 = vector.multi_reduction <maximumf>, %523, %cst_200 [1] : vector<1x8xf32> to vector<1xf32>
    %525 = vector.shape_cast %524 : vector<1xf32> to vector<1x1xf32>
    %526 = vector.broadcast %525 : vector<1x1xf32> to vector<1x8xf32>
    %527 = arith.subf %523, %526 : vector<1x8xf32>
    %528 = math.exp %527 : vector<1x8xf32>
    %cst_201 = arith.constant dense<0.000000e+00> : vector<1xf32>
    %529 = vector.multi_reduction <add>, %528, %cst_201 [1] : vector<1x8xf32> to vector<1xf32>
    %530 = vector.shape_cast %529 : vector<1xf32> to vector<1x1xf32>
    %531 = tpu.reciprocal %530 : vector<1x1xf32> -> vector<1x1xf32>
    %532 = vector.broadcast %531 : vector<1x1xf32> to vector<1x8xf32>
    %533 = arith.mulf %528, %532 : vector<1x8xf32>
    %cst_202 = arith.constant dense<0.000000e+00> : vector<1x32xf32>
    %534 = tpu.matmul %533, %489, %cst_202 {dimension_numbers = #tpu.dot_dimension_numbers<[1], [0], [0], [1], [0, 0, 1, 1], [], []>} : vector<1x8xf32>, vector<8x32xf32>, vector<1x32xf32> -> vector<1x32xf32>
    %c128_203 = arith.constant 128 : index
    %c0_204 = arith.constant 0 : index
    %535 = vector.load %arg6[%c128_203, %c0_204] : memref<448x32xf32, #tpu.memory_space<vmem>>, vector<32x32xf32>
    %cst_205 = arith.constant dense<0.000000e+00> : vector<1x32xf32>
    %536 = tpu.matmul %507, %535, %cst_205 {dimension_numbers = #tpu.dot_dimension_numbers<[1], [0], [0], [1], [0, 0, 1, 1], [], []>} : vector<1x32xf32>, vector<32x32xf32>, vector<1x32xf32> -> vector<1x32xf32>
    %537 = vector.extract_strided_slice %2 {offsets = [6, 0], sizes = [1, 32], strides = [1, 1]} : vector<16x32xf32> to vector<1x32xf32>
    %538 = arith.addf %536, %537 : vector<1x32xf32>
    %539 = vector.broadcast %538 : vector<1x32xf32> to vector<64x32xf32>
    %540 = arith.mulf %499, %539 : vector<64x32xf32>
    %c160 = arith.constant 160 : index
    %c0_206 = arith.constant 0 : index
    %541 = vector.load %arg6[%c160, %c0_206] : memref<448x32xf32, #tpu.memory_space<vmem>>, vector<32x32xf32>
    %cst_207 = arith.constant dense<0.000000e+00> : vector<64x32xf32>
    %542 = tpu.matmul %540, %541, %cst_207 {dimension_numbers = #tpu.dot_dimension_numbers<[1], [0], [0], [1], [0, 0, 1, 1], [], []>} : vector<64x32xf32>, vector<32x32xf32>, vector<64x32xf32> -> vector<64x32xf32>
    %543 = arith.addf %542, %501 : vector<64x32xf32>
    %544 = vector.extract_strided_slice %2 {offsets = [7, 0], sizes = [1, 32], strides = [1, 1]} : vector<16x32xf32> to vector<1x32xf32>
    %545 = vector.broadcast %544 : vector<1x32xf32> to vector<64x32xf32>
    %546 = arith.addf %543, %545 : vector<64x32xf32>
    %cst_208 = arith.constant 0.000000e+00 : f32
    %547 = vector.broadcast %cst_208 : f32 to vector<64x32xf32>
    %548 = arith.cmpf ogt, %546, %547 : vector<64x32xf32>
    %cst_209 = arith.constant 0.000000e+00 : f32
    %549 = vector.broadcast %cst_209 : f32 to vector<64x32xf32>
    %550 = arith.minimumf %546, %549 : vector<64x32xf32>
    %551 = math.exp %550 : vector<64x32xf32>
    %cst_210 = arith.constant 1.000000e+00 : f32
    %552 = vector.broadcast %cst_210 : f32 to vector<64x32xf32>
    %553 = arith.subf %551, %552 : vector<64x32xf32>
    %554 = arith.select %548, %546, %553 : vector<64x32xi1>, vector<64x32xf32>
    %555 = vector.broadcast %534 : vector<1x32xf32> to vector<64x32xf32>
    %556 = arith.mulf %554, %555 : vector<64x32xf32>
    %cst_211 = arith.constant 0.000000e+00 : f32
    %557 = vector.broadcast %cst_211 : f32 to vector<64x32xf32>
    %558 = arith.cmpf ogt, %556, %557 : vector<64x32xf32>
    %cst_212 = arith.constant 0.000000e+00 : f32
    %559 = vector.broadcast %cst_212 : f32 to vector<64x32xf32>
    %560 = arith.minimumf %556, %559 : vector<64x32xf32>
    %561 = math.exp %560 : vector<64x32xf32>
    %cst_213 = arith.constant 1.000000e+00 : f32
    %562 = vector.broadcast %cst_213 : f32 to vector<64x32xf32>
    %563 = arith.subf %561, %562 : vector<64x32xf32>
    %564 = arith.select %558, %556, %563 : vector<64x32xi1>, vector<64x32xf32>
    %cst_214 = arith.constant dense<0.000000e+00> : vector<1x64xf32>
    %565 = tpu.matmul %503, %564, %cst_214 {dimension_numbers = #tpu.dot_dimension_numbers<[1], [1], [0], [0], [0, 0, 1, 0], [], []>} : vector<1x32xf32>, vector<64x32xf32>, vector<1x64xf32> -> vector<1x64xf32>
    %cst_215 = arith.constant dense<0xFF800000> : vector<1xf32>
    %566 = vector.multi_reduction <maximumf>, %565, %cst_215 [1] : vector<1x64xf32> to vector<1xf32>
    %567 = vector.shape_cast %566 : vector<1xf32> to vector<1x1xf32>
    %568 = vector.broadcast %567 : vector<1x1xf32> to vector<1x64xf32>
    %569 = arith.subf %565, %568 : vector<1x64xf32>
    %570 = math.exp %569 : vector<1x64xf32>
    %cst_216 = arith.constant dense<0.000000e+00> : vector<1xf32>
    %571 = vector.multi_reduction <add>, %570, %cst_216 [1] : vector<1x64xf32> to vector<1xf32>
    %572 = vector.shape_cast %571 : vector<1xf32> to vector<1x1xf32>
    %573 = tpu.reciprocal %572 : vector<1x1xf32> -> vector<1x1xf32>
    %574 = vector.broadcast %573 : vector<1x1xf32> to vector<1x64xf32>
    %575 = arith.mulf %570, %574 : vector<1x64xf32>
    %cst_217 = arith.constant dense<0.000000e+00> : vector<1x32xf32>
    %576 = tpu.matmul %575, %193, %cst_217 {dimension_numbers = #tpu.dot_dimension_numbers<[1], [0], [0], [1], [0, 0, 1, 1], [], []>} : vector<1x64xf32>, vector<64x32xf32>, vector<1x32xf32> -> vector<1x32xf32>
    %c352 = arith.constant 352 : index
    %c0_218 = arith.constant 0 : index
    %577 = vector.load %arg6[%c352, %c0_218] : memref<448x32xf32, #tpu.memory_space<vmem>>, vector<32x32xf32>
    %cst_219 = arith.constant dense<0.000000e+00> : vector<1x32xf32>
    %578 = tpu.matmul %494, %577, %cst_219 {dimension_numbers = #tpu.dot_dimension_numbers<[1], [0], [0], [1], [0, 0, 1, 1], [], []>} : vector<1x32xf32>, vector<32x32xf32>, vector<1x32xf32> -> vector<1x32xf32>
    %579 = vector.extract_strided_slice %2 {offsets = [13, 0], sizes = [1, 32], strides = [1, 1]} : vector<16x32xf32> to vector<1x32xf32>
    %580 = arith.addf %578, %579 : vector<1x32xf32>
    %c32_220 = arith.constant 32 : index
    %c0_221 = arith.constant 0 : index
    %581 = vector.load %arg6[%c32_220, %c0_221] : memref<448x32xf32, #tpu.memory_space<vmem>>, vector<32x32xf32>
    %cst_222 = arith.constant dense<0.000000e+00> : vector<1x32xf32>
    %582 = tpu.matmul %534, %581, %cst_222 {dimension_numbers = #tpu.dot_dimension_numbers<[1], [0], [0], [1], [0, 0, 1, 1], [], []>} : vector<1x32xf32>, vector<32x32xf32>, vector<1x32xf32> -> vector<1x32xf32>
    %c64_223 = arith.constant 64 : index
    %c0_224 = arith.constant 0 : index
    %583 = vector.load %arg6[%c64_223, %c0_224] : memref<448x32xf32, #tpu.memory_space<vmem>>, vector<32x32xf32>
    %cst_225 = arith.constant dense<0.000000e+00> : vector<1x32xf32>
    %584 = tpu.matmul %580, %583, %cst_225 {dimension_numbers = #tpu.dot_dimension_numbers<[1], [0], [0], [1], [0, 0, 1, 1], [], []>} : vector<1x32xf32>, vector<32x32xf32>, vector<1x32xf32> -> vector<1x32xf32>
    %585 = arith.addf %582, %584 : vector<1x32xf32>
    %586 = vector.extract_strided_slice %2 {offsets = [3, 0], sizes = [1, 32], strides = [1, 1]} : vector<16x32xf32> to vector<1x32xf32>
    %587 = arith.addf %585, %586 : vector<1x32xf32>
    %588 = math.tanh %587 : vector<1x32xf32>
    %589 = arith.mulf %588, %502 : vector<1x32xf32>
    %cst_226 = arith.constant dense<0.000000e+00> : vector<1x8xf32>
    %590 = tpu.matmul %589, %489, %cst_226 {dimension_numbers = #tpu.dot_dimension_numbers<[1], [1], [0], [0], [0, 0, 1, 0], [], []>} : vector<1x32xf32>, vector<8x32xf32>, vector<1x8xf32> -> vector<1x8xf32>
    %cst_227 = arith.constant -1.000000e+30 : f32
    %591 = vector.broadcast %cst_227 : f32 to vector<1x8xf32>
    %592 = arith.select %506, %590, %591 : vector<1x8xi1>, vector<1x8xf32>
    %cst_228 = arith.constant dense<0xFF800000> : vector<1xf32>
    %593 = vector.multi_reduction <maximumf>, %592, %cst_228 [1] : vector<1x8xf32> to vector<1xf32>
    %594 = vector.shape_cast %593 : vector<1xf32> to vector<1x1xf32>
    %595 = vector.broadcast %594 : vector<1x1xf32> to vector<1x8xf32>
    %596 = arith.subf %592, %595 : vector<1x8xf32>
    %597 = math.exp %596 : vector<1x8xf32>
    %cst_229 = arith.constant dense<0.000000e+00> : vector<1xf32>
    %598 = vector.multi_reduction <add>, %597, %cst_229 [1] : vector<1x8xf32> to vector<1xf32>
    %599 = vector.shape_cast %598 : vector<1xf32> to vector<1x1xf32>
    %600 = tpu.reciprocal %599 : vector<1x1xf32> -> vector<1x1xf32>
    %601 = vector.broadcast %600 : vector<1x1xf32> to vector<1x8xf32>
    %602 = arith.mulf %597, %601 : vector<1x8xf32>
    %cst_230 = arith.constant dense<0.000000e+00> : vector<1x32xf32>
    %603 = tpu.matmul %602, %489, %cst_230 {dimension_numbers = #tpu.dot_dimension_numbers<[1], [0], [0], [1], [0, 0, 1, 1], [], []>} : vector<1x8xf32>, vector<8x32xf32>, vector<1x32xf32> -> vector<1x32xf32>
    %c128_231 = arith.constant 128 : index
    %c0_232 = arith.constant 0 : index
    %604 = vector.load %arg6[%c128_231, %c0_232] : memref<448x32xf32, #tpu.memory_space<vmem>>, vector<32x32xf32>
    %cst_233 = arith.constant dense<0.000000e+00> : vector<1x32xf32>
    %605 = tpu.matmul %576, %604, %cst_233 {dimension_numbers = #tpu.dot_dimension_numbers<[1], [0], [0], [1], [0, 0, 1, 1], [], []>} : vector<1x32xf32>, vector<32x32xf32>, vector<1x32xf32> -> vector<1x32xf32>
    %606 = vector.extract_strided_slice %2 {offsets = [6, 0], sizes = [1, 32], strides = [1, 1]} : vector<16x32xf32> to vector<1x32xf32>
    %607 = arith.addf %605, %606 : vector<1x32xf32>
    %608 = vector.broadcast %607 : vector<1x32xf32> to vector<64x32xf32>
    %609 = arith.mulf %499, %608 : vector<64x32xf32>
    %c160_234 = arith.constant 160 : index
    %c0_235 = arith.constant 0 : index
    %610 = vector.load %arg6[%c160_234, %c0_235] : memref<448x32xf32, #tpu.memory_space<vmem>>, vector<32x32xf32>
    %cst_236 = arith.constant dense<0.000000e+00> : vector<64x32xf32>
    %611 = tpu.matmul %609, %610, %cst_236 {dimension_numbers = #tpu.dot_dimension_numbers<[1], [0], [0], [1], [0, 0, 1, 1], [], []>} : vector<64x32xf32>, vector<32x32xf32>, vector<64x32xf32> -> vector<64x32xf32>
    %612 = arith.addf %611, %501 : vector<64x32xf32>
    %613 = vector.extract_strided_slice %2 {offsets = [7, 0], sizes = [1, 32], strides = [1, 1]} : vector<16x32xf32> to vector<1x32xf32>
    %614 = vector.broadcast %613 : vector<1x32xf32> to vector<64x32xf32>
    %615 = arith.addf %612, %614 : vector<64x32xf32>
    %cst_237 = arith.constant 0.000000e+00 : f32
    %616 = vector.broadcast %cst_237 : f32 to vector<64x32xf32>
    %617 = arith.cmpf ogt, %615, %616 : vector<64x32xf32>
    %cst_238 = arith.constant 0.000000e+00 : f32
    %618 = vector.broadcast %cst_238 : f32 to vector<64x32xf32>
    %619 = arith.minimumf %615, %618 : vector<64x32xf32>
    %620 = math.exp %619 : vector<64x32xf32>
    %cst_239 = arith.constant 1.000000e+00 : f32
    %621 = vector.broadcast %cst_239 : f32 to vector<64x32xf32>
    %622 = arith.subf %620, %621 : vector<64x32xf32>
    %623 = arith.select %617, %615, %622 : vector<64x32xi1>, vector<64x32xf32>
    %624 = vector.broadcast %603 : vector<1x32xf32> to vector<64x32xf32>
    %625 = arith.mulf %623, %624 : vector<64x32xf32>
    %cst_240 = arith.constant 0.000000e+00 : f32
    %626 = vector.broadcast %cst_240 : f32 to vector<64x32xf32>
    %627 = arith.cmpf ogt, %625, %626 : vector<64x32xf32>
    %cst_241 = arith.constant 0.000000e+00 : f32
    %628 = vector.broadcast %cst_241 : f32 to vector<64x32xf32>
    %629 = arith.minimumf %625, %628 : vector<64x32xf32>
    %630 = math.exp %629 : vector<64x32xf32>
    %cst_242 = arith.constant 1.000000e+00 : f32
    %631 = vector.broadcast %cst_242 : f32 to vector<64x32xf32>
    %632 = arith.subf %630, %631 : vector<64x32xf32>
    %633 = arith.select %627, %625, %632 : vector<64x32xi1>, vector<64x32xf32>
    %cst_243 = arith.constant dense<0.000000e+00> : vector<1x64xf32>
    %634 = tpu.matmul %503, %633, %cst_243 {dimension_numbers = #tpu.dot_dimension_numbers<[1], [1], [0], [0], [0, 0, 1, 0], [], []>} : vector<1x32xf32>, vector<64x32xf32>, vector<1x64xf32> -> vector<1x64xf32>
    %cst_244 = arith.constant dense<0xFF800000> : vector<1xf32>
    %635 = vector.multi_reduction <maximumf>, %634, %cst_244 [1] : vector<1x64xf32> to vector<1xf32>
    %636 = vector.shape_cast %635 : vector<1xf32> to vector<1x1xf32>
    %637 = vector.broadcast %636 : vector<1x1xf32> to vector<1x64xf32>
    %638 = arith.subf %634, %637 : vector<1x64xf32>
    %639 = math.exp %638 : vector<1x64xf32>
    %cst_245 = arith.constant dense<0.000000e+00> : vector<1xf32>
    %640 = vector.multi_reduction <add>, %639, %cst_245 [1] : vector<1x64xf32> to vector<1xf32>
    %641 = vector.shape_cast %640 : vector<1xf32> to vector<1x1xf32>
    %642 = tpu.reciprocal %641 : vector<1x1xf32> -> vector<1x1xf32>
    %643 = vector.broadcast %642 : vector<1x1xf32> to vector<1x64xf32>
    %644 = arith.mulf %639, %643 : vector<1x64xf32>
    %cst_246 = arith.constant dense<0.000000e+00> : vector<1x32xf32>
    %645 = tpu.matmul %644, %193, %cst_246 {dimension_numbers = #tpu.dot_dimension_numbers<[1], [0], [0], [1], [0, 0, 1, 1], [], []>} : vector<1x64xf32>, vector<64x32xf32>, vector<1x32xf32> -> vector<1x32xf32>
    %c384 = arith.constant 384 : index
    %c0_247 = arith.constant 0 : index
    %646 = vector.load %arg6[%c384, %c0_247] : memref<448x32xf32, #tpu.memory_space<vmem>>, vector<32x32xf32>
    %cst_248 = arith.constant dense<0.000000e+00> : vector<1x32xf32>
    %647 = tpu.matmul %494, %646, %cst_248 {dimension_numbers = #tpu.dot_dimension_numbers<[1], [0], [0], [1], [0, 0, 1, 1], [], []>} : vector<1x32xf32>, vector<32x32xf32>, vector<1x32xf32> -> vector<1x32xf32>
    %648 = vector.extract_strided_slice %2 {offsets = [14, 0], sizes = [1, 32], strides = [1, 1]} : vector<16x32xf32> to vector<1x32xf32>
    %649 = arith.addf %647, %648 : vector<1x32xf32>
    %c32_249 = arith.constant 32 : index
    %c0_250 = arith.constant 0 : index
    %650 = vector.load %arg6[%c32_249, %c0_250] : memref<448x32xf32, #tpu.memory_space<vmem>>, vector<32x32xf32>
    %cst_251 = arith.constant dense<0.000000e+00> : vector<1x32xf32>
    %651 = tpu.matmul %603, %650, %cst_251 {dimension_numbers = #tpu.dot_dimension_numbers<[1], [0], [0], [1], [0, 0, 1, 1], [], []>} : vector<1x32xf32>, vector<32x32xf32>, vector<1x32xf32> -> vector<1x32xf32>
    %c64_252 = arith.constant 64 : index
    %c0_253 = arith.constant 0 : index
    %652 = vector.load %arg6[%c64_252, %c0_253] : memref<448x32xf32, #tpu.memory_space<vmem>>, vector<32x32xf32>
    %cst_254 = arith.constant dense<0.000000e+00> : vector<1x32xf32>
    %653 = tpu.matmul %649, %652, %cst_254 {dimension_numbers = #tpu.dot_dimension_numbers<[1], [0], [0], [1], [0, 0, 1, 1], [], []>} : vector<1x32xf32>, vector<32x32xf32>, vector<1x32xf32> -> vector<1x32xf32>
    %654 = arith.addf %651, %653 : vector<1x32xf32>
    %655 = vector.extract_strided_slice %2 {offsets = [3, 0], sizes = [1, 32], strides = [1, 1]} : vector<16x32xf32> to vector<1x32xf32>
    %656 = arith.addf %654, %655 : vector<1x32xf32>
    %657 = math.tanh %656 : vector<1x32xf32>
    %658 = arith.mulf %657, %502 : vector<1x32xf32>
    %cst_255 = arith.constant dense<0.000000e+00> : vector<1x8xf32>
    %659 = tpu.matmul %658, %489, %cst_255 {dimension_numbers = #tpu.dot_dimension_numbers<[1], [1], [0], [0], [0, 0, 1, 0], [], []>} : vector<1x32xf32>, vector<8x32xf32>, vector<1x8xf32> -> vector<1x8xf32>
    %cst_256 = arith.constant -1.000000e+30 : f32
    %660 = vector.broadcast %cst_256 : f32 to vector<1x8xf32>
    %661 = arith.select %506, %659, %660 : vector<1x8xi1>, vector<1x8xf32>
    %cst_257 = arith.constant dense<0xFF800000> : vector<1xf32>
    %662 = vector.multi_reduction <maximumf>, %661, %cst_257 [1] : vector<1x8xf32> to vector<1xf32>
    %663 = vector.shape_cast %662 : vector<1xf32> to vector<1x1xf32>
    %664 = vector.broadcast %663 : vector<1x1xf32> to vector<1x8xf32>
    %665 = arith.subf %661, %664 : vector<1x8xf32>
    %666 = math.exp %665 : vector<1x8xf32>
    %cst_258 = arith.constant dense<0.000000e+00> : vector<1xf32>
    %667 = vector.multi_reduction <add>, %666, %cst_258 [1] : vector<1x8xf32> to vector<1xf32>
    %668 = vector.shape_cast %667 : vector<1xf32> to vector<1x1xf32>
    %669 = tpu.reciprocal %668 : vector<1x1xf32> -> vector<1x1xf32>
    %670 = vector.broadcast %669 : vector<1x1xf32> to vector<1x8xf32>
    %671 = arith.mulf %666, %670 : vector<1x8xf32>
    %cst_259 = arith.constant dense<0.000000e+00> : vector<1x32xf32>
    %672 = tpu.matmul %671, %489, %cst_259 {dimension_numbers = #tpu.dot_dimension_numbers<[1], [0], [0], [1], [0, 0, 1, 1], [], []>} : vector<1x8xf32>, vector<8x32xf32>, vector<1x32xf32> -> vector<1x32xf32>
    %c128_260 = arith.constant 128 : index
    %c0_261 = arith.constant 0 : index
    %673 = vector.load %arg6[%c128_260, %c0_261] : memref<448x32xf32, #tpu.memory_space<vmem>>, vector<32x32xf32>
    %cst_262 = arith.constant dense<0.000000e+00> : vector<1x32xf32>
    %674 = tpu.matmul %645, %673, %cst_262 {dimension_numbers = #tpu.dot_dimension_numbers<[1], [0], [0], [1], [0, 0, 1, 1], [], []>} : vector<1x32xf32>, vector<32x32xf32>, vector<1x32xf32> -> vector<1x32xf32>
    %675 = vector.extract_strided_slice %2 {offsets = [6, 0], sizes = [1, 32], strides = [1, 1]} : vector<16x32xf32> to vector<1x32xf32>
    %676 = arith.addf %674, %675 : vector<1x32xf32>
    %677 = vector.broadcast %676 : vector<1x32xf32> to vector<64x32xf32>
    %678 = arith.mulf %499, %677 : vector<64x32xf32>
    %c160_263 = arith.constant 160 : index
    %c0_264 = arith.constant 0 : index
    %679 = vector.load %arg6[%c160_263, %c0_264] : memref<448x32xf32, #tpu.memory_space<vmem>>, vector<32x32xf32>
    %cst_265 = arith.constant dense<0.000000e+00> : vector<64x32xf32>
    %680 = tpu.matmul %678, %679, %cst_265 {dimension_numbers = #tpu.dot_dimension_numbers<[1], [0], [0], [1], [0, 0, 1, 1], [], []>} : vector<64x32xf32>, vector<32x32xf32>, vector<64x32xf32> -> vector<64x32xf32>
    %681 = arith.addf %680, %501 : vector<64x32xf32>
    %682 = vector.extract_strided_slice %2 {offsets = [7, 0], sizes = [1, 32], strides = [1, 1]} : vector<16x32xf32> to vector<1x32xf32>
    %683 = vector.broadcast %682 : vector<1x32xf32> to vector<64x32xf32>
    %684 = arith.addf %681, %683 : vector<64x32xf32>
    %cst_266 = arith.constant 0.000000e+00 : f32
    %685 = vector.broadcast %cst_266 : f32 to vector<64x32xf32>
    %686 = arith.cmpf ogt, %684, %685 : vector<64x32xf32>
    %cst_267 = arith.constant 0.000000e+00 : f32
    %687 = vector.broadcast %cst_267 : f32 to vector<64x32xf32>
    %688 = arith.minimumf %684, %687 : vector<64x32xf32>
    %689 = math.exp %688 : vector<64x32xf32>
    %cst_268 = arith.constant 1.000000e+00 : f32
    %690 = vector.broadcast %cst_268 : f32 to vector<64x32xf32>
    %691 = arith.subf %689, %690 : vector<64x32xf32>
    %692 = arith.select %686, %684, %691 : vector<64x32xi1>, vector<64x32xf32>
    %693 = vector.broadcast %672 : vector<1x32xf32> to vector<64x32xf32>
    %694 = arith.mulf %692, %693 : vector<64x32xf32>
    %cst_269 = arith.constant 0.000000e+00 : f32
    %695 = vector.broadcast %cst_269 : f32 to vector<64x32xf32>
    %696 = arith.cmpf ogt, %694, %695 : vector<64x32xf32>
    %cst_270 = arith.constant 0.000000e+00 : f32
    %697 = vector.broadcast %cst_270 : f32 to vector<64x32xf32>
    %698 = arith.minimumf %694, %697 : vector<64x32xf32>
    %699 = math.exp %698 : vector<64x32xf32>
    %cst_271 = arith.constant 1.000000e+00 : f32
    %700 = vector.broadcast %cst_271 : f32 to vector<64x32xf32>
    %701 = arith.subf %699, %700 : vector<64x32xf32>
    %702 = arith.select %696, %694, %701 : vector<64x32xi1>, vector<64x32xf32>
    %cst_272 = arith.constant dense<0.000000e+00> : vector<1x64xf32>
    %703 = tpu.matmul %503, %702, %cst_272 {dimension_numbers = #tpu.dot_dimension_numbers<[1], [1], [0], [0], [0, 0, 1, 0], [], []>} : vector<1x32xf32>, vector<64x32xf32>, vector<1x64xf32> -> vector<1x64xf32>
    %cst_273 = arith.constant dense<0xFF800000> : vector<1xf32>
    %704 = vector.multi_reduction <maximumf>, %703, %cst_273 [1] : vector<1x64xf32> to vector<1xf32>
    %705 = vector.shape_cast %704 : vector<1xf32> to vector<1x1xf32>
    %706 = vector.broadcast %705 : vector<1x1xf32> to vector<1x64xf32>
    %707 = arith.subf %703, %706 : vector<1x64xf32>
    %708 = math.exp %707 : vector<1x64xf32>
    %cst_274 = arith.constant dense<0.000000e+00> : vector<1xf32>
    %709 = vector.multi_reduction <add>, %708, %cst_274 [1] : vector<1x64xf32> to vector<1xf32>
    %710 = vector.shape_cast %709 : vector<1xf32> to vector<1x1xf32>
    %711 = tpu.reciprocal %710 : vector<1x1xf32> -> vector<1x1xf32>
    %712 = vector.broadcast %711 : vector<1x1xf32> to vector<1x64xf32>
    %713 = arith.mulf %708, %712 : vector<1x64xf32>
    %cst_275 = arith.constant dense<0.000000e+00> : vector<1x32xf32>
    %714 = tpu.matmul %713, %193, %cst_275 {dimension_numbers = #tpu.dot_dimension_numbers<[1], [0], [0], [1], [0, 0, 1, 1], [], []>} : vector<1x64xf32>, vector<64x32xf32>, vector<1x32xf32> -> vector<1x32xf32>
    %c416 = arith.constant 416 : index
    %c0_276 = arith.constant 0 : index
    %715 = vector.load %arg6[%c416, %c0_276] : memref<448x32xf32, #tpu.memory_space<vmem>>, vector<32x32xf32>
    %cst_277 = arith.constant dense<0.000000e+00> : vector<1x32xf32>
    %716 = tpu.matmul %494, %715, %cst_277 {dimension_numbers = #tpu.dot_dimension_numbers<[1], [0], [0], [1], [0, 0, 1, 1], [], []>} : vector<1x32xf32>, vector<32x32xf32>, vector<1x32xf32> -> vector<1x32xf32>
    %717 = vector.extract_strided_slice %2 {offsets = [15, 0], sizes = [1, 32], strides = [1, 1]} : vector<16x32xf32> to vector<1x32xf32>
    %718 = arith.addf %716, %717 : vector<1x32xf32>
    %c32_278 = arith.constant 32 : index
    %c0_279 = arith.constant 0 : index
    %719 = vector.load %arg6[%c32_278, %c0_279] : memref<448x32xf32, #tpu.memory_space<vmem>>, vector<32x32xf32>
    %cst_280 = arith.constant dense<0.000000e+00> : vector<1x32xf32>
    %720 = tpu.matmul %672, %719, %cst_280 {dimension_numbers = #tpu.dot_dimension_numbers<[1], [0], [0], [1], [0, 0, 1, 1], [], []>} : vector<1x32xf32>, vector<32x32xf32>, vector<1x32xf32> -> vector<1x32xf32>
    %c64_281 = arith.constant 64 : index
    %c0_282 = arith.constant 0 : index
    %721 = vector.load %arg6[%c64_281, %c0_282] : memref<448x32xf32, #tpu.memory_space<vmem>>, vector<32x32xf32>
    %cst_283 = arith.constant dense<0.000000e+00> : vector<1x32xf32>
    %722 = tpu.matmul %718, %721, %cst_283 {dimension_numbers = #tpu.dot_dimension_numbers<[1], [0], [0], [1], [0, 0, 1, 1], [], []>} : vector<1x32xf32>, vector<32x32xf32>, vector<1x32xf32> -> vector<1x32xf32>
    %723 = arith.addf %720, %722 : vector<1x32xf32>
    %724 = vector.extract_strided_slice %2 {offsets = [3, 0], sizes = [1, 32], strides = [1, 1]} : vector<16x32xf32> to vector<1x32xf32>
    %725 = arith.addf %723, %724 : vector<1x32xf32>
    %726 = math.tanh %725 : vector<1x32xf32>
    %727 = arith.mulf %726, %502 : vector<1x32xf32>
    %cst_284 = arith.constant dense<0.000000e+00> : vector<1x8xf32>
    %728 = tpu.matmul %727, %489, %cst_284 {dimension_numbers = #tpu.dot_dimension_numbers<[1], [1], [0], [0], [0, 0, 1, 0], [], []>} : vector<1x32xf32>, vector<8x32xf32>, vector<1x8xf32> -> vector<1x8xf32>
    %cst_285 = arith.constant -1.000000e+30 : f32
    %729 = vector.broadcast %cst_285 : f32 to vector<1x8xf32>
    %730 = arith.select %506, %728, %729 : vector<1x8xi1>, vector<1x8xf32>
    %cst_286 = arith.constant dense<0xFF800000> : vector<1xf32>
    %731 = vector.multi_reduction <maximumf>, %730, %cst_286 [1] : vector<1x8xf32> to vector<1xf32>
    %732 = vector.shape_cast %731 : vector<1xf32> to vector<1x1xf32>
    %733 = vector.broadcast %732 : vector<1x1xf32> to vector<1x8xf32>
    %734 = arith.subf %730, %733 : vector<1x8xf32>
    %735 = math.exp %734 : vector<1x8xf32>
    %cst_287 = arith.constant dense<0.000000e+00> : vector<1xf32>
    %736 = vector.multi_reduction <add>, %735, %cst_287 [1] : vector<1x8xf32> to vector<1xf32>
    %737 = vector.shape_cast %736 : vector<1xf32> to vector<1x1xf32>
    %738 = tpu.reciprocal %737 : vector<1x1xf32> -> vector<1x1xf32>
    %739 = vector.broadcast %738 : vector<1x1xf32> to vector<1x8xf32>
    %740 = arith.mulf %735, %739 : vector<1x8xf32>
    %cst_288 = arith.constant dense<0.000000e+00> : vector<1x32xf32>
    %741 = tpu.matmul %740, %489, %cst_288 {dimension_numbers = #tpu.dot_dimension_numbers<[1], [0], [0], [1], [0, 0, 1, 1], [], []>} : vector<1x8xf32>, vector<8x32xf32>, vector<1x32xf32> -> vector<1x32xf32>
    %c128_289 = arith.constant 128 : index
    %c0_290 = arith.constant 0 : index
    %742 = vector.load %arg6[%c128_289, %c0_290] : memref<448x32xf32, #tpu.memory_space<vmem>>, vector<32x32xf32>
    %cst_291 = arith.constant dense<0.000000e+00> : vector<1x32xf32>
    %743 = tpu.matmul %714, %742, %cst_291 {dimension_numbers = #tpu.dot_dimension_numbers<[1], [0], [0], [1], [0, 0, 1, 1], [], []>} : vector<1x32xf32>, vector<32x32xf32>, vector<1x32xf32> -> vector<1x32xf32>
    %744 = vector.extract_strided_slice %2 {offsets = [6, 0], sizes = [1, 32], strides = [1, 1]} : vector<16x32xf32> to vector<1x32xf32>
    %745 = arith.addf %743, %744 : vector<1x32xf32>
    %746 = vector.broadcast %745 : vector<1x32xf32> to vector<64x32xf32>
    %747 = arith.mulf %499, %746 : vector<64x32xf32>
    %c160_292 = arith.constant 160 : index
    %c0_293 = arith.constant 0 : index
    %748 = vector.load %arg6[%c160_292, %c0_293] : memref<448x32xf32, #tpu.memory_space<vmem>>, vector<32x32xf32>
    %cst_294 = arith.constant dense<0.000000e+00> : vector<64x32xf32>
    %749 = tpu.matmul %747, %748, %cst_294 {dimension_numbers = #tpu.dot_dimension_numbers<[1], [0], [0], [1], [0, 0, 1, 1], [], []>} : vector<64x32xf32>, vector<32x32xf32>, vector<64x32xf32> -> vector<64x32xf32>
    %750 = arith.addf %749, %501 : vector<64x32xf32>
    %751 = vector.extract_strided_slice %2 {offsets = [7, 0], sizes = [1, 32], strides = [1, 1]} : vector<16x32xf32> to vector<1x32xf32>
    %752 = vector.broadcast %751 : vector<1x32xf32> to vector<64x32xf32>
    %753 = arith.addf %750, %752 : vector<64x32xf32>
    %cst_295 = arith.constant 0.000000e+00 : f32
    %754 = vector.broadcast %cst_295 : f32 to vector<64x32xf32>
    %755 = arith.cmpf ogt, %753, %754 : vector<64x32xf32>
    %cst_296 = arith.constant 0.000000e+00 : f32
    %756 = vector.broadcast %cst_296 : f32 to vector<64x32xf32>
    %757 = arith.minimumf %753, %756 : vector<64x32xf32>
    %758 = math.exp %757 : vector<64x32xf32>
    %cst_297 = arith.constant 1.000000e+00 : f32
    %759 = vector.broadcast %cst_297 : f32 to vector<64x32xf32>
    %760 = arith.subf %758, %759 : vector<64x32xf32>
    %761 = arith.select %755, %753, %760 : vector<64x32xi1>, vector<64x32xf32>
    %762 = vector.broadcast %741 : vector<1x32xf32> to vector<64x32xf32>
    %763 = arith.mulf %761, %762 : vector<64x32xf32>
    %cst_298 = arith.constant 0.000000e+00 : f32
    %764 = vector.broadcast %cst_298 : f32 to vector<64x32xf32>
    %765 = arith.cmpf ogt, %763, %764 : vector<64x32xf32>
    %cst_299 = arith.constant 0.000000e+00 : f32
    %766 = vector.broadcast %cst_299 : f32 to vector<64x32xf32>
    %767 = arith.minimumf %763, %766 : vector<64x32xf32>
    %768 = math.exp %767 : vector<64x32xf32>
    %cst_300 = arith.constant 1.000000e+00 : f32
    %769 = vector.broadcast %cst_300 : f32 to vector<64x32xf32>
    %770 = arith.subf %768, %769 : vector<64x32xf32>
    %771 = arith.select %765, %763, %770 : vector<64x32xi1>, vector<64x32xf32>
    %cst_301 = arith.constant dense<0.000000e+00> : vector<1x64xf32>
    %772 = tpu.matmul %503, %771, %cst_301 {dimension_numbers = #tpu.dot_dimension_numbers<[1], [1], [0], [0], [0, 0, 1, 0], [], []>} : vector<1x32xf32>, vector<64x32xf32>, vector<1x64xf32> -> vector<1x64xf32>
    %cst_302 = arith.constant dense<0xFF800000> : vector<1xf32>
    %773 = vector.multi_reduction <maximumf>, %772, %cst_302 [1] : vector<1x64xf32> to vector<1xf32>
    %774 = vector.shape_cast %773 : vector<1xf32> to vector<1x1xf32>
    %775 = vector.broadcast %774 : vector<1x1xf32> to vector<1x64xf32>
    %776 = arith.subf %772, %775 : vector<1x64xf32>
    %777 = math.exp %776 : vector<1x64xf32>
    %cst_303 = arith.constant dense<0.000000e+00> : vector<1xf32>
    %778 = vector.multi_reduction <add>, %777, %cst_303 [1] : vector<1x64xf32> to vector<1xf32>
    %779 = vector.shape_cast %778 : vector<1xf32> to vector<1x1xf32>
    %780 = tpu.reciprocal %779 : vector<1x1xf32> -> vector<1x1xf32>
    %781 = vector.broadcast %780 : vector<1x1xf32> to vector<1x64xf32>
    %782 = arith.mulf %777, %781 : vector<1x64xf32>
    %cst_304 = arith.constant dense<0.000000e+00> : vector<1x32xf32>
    %783 = tpu.matmul %782, %193, %cst_304 {dimension_numbers = #tpu.dot_dimension_numbers<[1], [0], [0], [1], [0, 0, 1, 1], [], []>} : vector<1x64xf32>, vector<64x32xf32>, vector<1x32xf32> -> vector<1x32xf32>
    %c224 = arith.constant 224 : index
    %c0_305 = arith.constant 0 : index
    %784 = vector.load %arg6[%c224, %c0_305] : memref<448x32xf32, #tpu.memory_space<vmem>>, vector<32x32xf32>
    %cst_306 = arith.constant dense<0.000000e+00> : vector<1x32xf32>
    %785 = tpu.matmul %481, %784, %cst_306 {dimension_numbers = #tpu.dot_dimension_numbers<[1], [0], [0], [1], [0, 0, 1, 1], [], []>} : vector<1x32xf32>, vector<32x32xf32>, vector<1x32xf32> -> vector<1x32xf32>
    %786 = vector.extract_strided_slice %2 {offsets = [10, 0], sizes = [1, 32], strides = [1, 1]} : vector<16x32xf32> to vector<1x32xf32>
    %787 = arith.addf %785, %786 : vector<1x32xf32>
    %c256 = arith.constant 256 : index
    %c0_307 = arith.constant 0 : index
    %788 = vector.load %arg6[%c256, %c0_307] : memref<448x32xf32, #tpu.memory_space<vmem>>, vector<32x32xf32>
    %cst_308 = arith.constant dense<0.000000e+00> : vector<1x32xf32>
    %789 = tpu.matmul %783, %788, %cst_308 {dimension_numbers = #tpu.dot_dimension_numbers<[1], [0], [0], [1], [0, 0, 1, 1], [], []>} : vector<1x32xf32>, vector<32x32xf32>, vector<1x32xf32> -> vector<1x32xf32>
    %c288 = arith.constant 288 : index
    %c0_309 = arith.constant 0 : index
    %790 = vector.load %arg6[%c288, %c0_309] : memref<448x32xf32, #tpu.memory_space<vmem>>, vector<32x32xf32>
    %cst_310 = arith.constant dense<0.000000e+00> : vector<1x32xf32>
    %791 = tpu.matmul %787, %790, %cst_310 {dimension_numbers = #tpu.dot_dimension_numbers<[1], [0], [0], [1], [0, 0, 1, 1], [], []>} : vector<1x32xf32>, vector<32x32xf32>, vector<1x32xf32> -> vector<1x32xf32>
    %792 = arith.addf %789, %791 : vector<1x32xf32>
    %793 = vector.extract_strided_slice %2 {offsets = [11, 0], sizes = [1, 32], strides = [1, 1]} : vector<16x32xf32> to vector<1x32xf32>
    %794 = arith.addf %792, %793 : vector<1x32xf32>
    %cst_311 = arith.constant 0.000000e+00 : f32
    %795 = vector.broadcast %cst_311 : f32 to vector<1x32xf32>
    %796 = arith.cmpf ogt, %794, %795 : vector<1x32xf32>
    %cst_312 = arith.constant 0.000000e+00 : f32
    %797 = vector.broadcast %cst_312 : f32 to vector<1x32xf32>
    %798 = arith.minimumf %794, %797 : vector<1x32xf32>
    %799 = math.exp %798 : vector<1x32xf32>
    %cst_313 = arith.constant 1.000000e+00 : f32
    %800 = vector.broadcast %cst_313 : f32 to vector<1x32xf32>
    %801 = arith.subf %799, %800 : vector<1x32xf32>
    %802 = arith.select %796, %794, %801 : vector<1x32xi1>, vector<1x32xf32>
    %c0_314 = arith.constant 0 : index
    %c0_315 = arith.constant 0 : index
    %803 = vector.load %arg8[%c0_314, %c0_315] : memref<33x128xf32, #tpu.memory_space<vmem>>, vector<32x128xf32>
    %cst_316 = arith.constant dense<0.000000e+00> : vector<1x128xf32>
    %804 = tpu.matmul %802, %803, %cst_316 {dimension_numbers = #tpu.dot_dimension_numbers<[1], [0], [0], [1], [0, 0, 1, 1], [], []>} : vector<1x32xf32>, vector<32x128xf32>, vector<1x128xf32> -> vector<1x128xf32>
    %c32_317 = arith.constant 32 : index
    %c0_318 = arith.constant 0 : index
    %805 = vector.load %arg8[%c32_317, %c0_318] : memref<33x128xf32, #tpu.memory_space<vmem>>, vector<1x128xf32>
    %806 = arith.addf %804, %805 : vector<1x128xf32>
    %c0_319 = arith.constant 0 : index
    %c0_320 = arith.constant 0 : index
    %c0_321 = arith.constant 0 : index
    %807 = vector.load %arg9[%c0_319, %c0_320, %c0_321] : memref<1x1x128xf32, #tpu.memory_space<vmem>>, vector<1x1x128xf32>
    %808 = vector.shape_cast %807 : vector<1x1x128xf32> to vector<1x128xf32>
    %809 = vector.shape_cast %806 : vector<1x128xf32> to vector<1x1x128xf32>
    tpu.vector_store %arg9[%c0_319, %c0_320, %c0_321], %809 {strides = array<i32>} : memref<1x1x128xf32, #tpu.memory_space<vmem>>, vector<1x1x128xf32>,
    return
  }
  func.func @transform_0(%arg0: i32, %arg1: memref<2xi32, #tpu.memory_space<smem>>) -> (i32, i32, i32) {
    %c0_i32 = arith.constant 0 : i32
    %c0_i32_0 = arith.constant 0 : i32
    %c0_i32_1 = arith.constant 0 : i32
    return %arg0, %c0_i32, %c0_i32_0 : i32, i32, i32
  }
  func.func @transform_1(%arg0: i32, %arg1: memref<2xi32, #tpu.memory_space<smem>>) -> (i32, i32, i32) {
    %c0_i32 = arith.constant 0 : i32
    %c0_i32_0 = arith.constant 0 : i32
    %c0_i32_1 = arith.constant 0 : i32
    return %arg0, %c0_i32, %c0_i32_0 : i32, i32, i32
  }
  func.func @transform_2(%arg0: i32, %arg1: memref<2xi32, #tpu.memory_space<smem>>) -> (i32, i32) {
    %c0_i32 = arith.constant 0 : i32
    %c0_i32_0 = arith.constant 0 : i32
    %c0_i32_1 = arith.constant 0 : i32
    return %c0_i32, %c0_i32_0 : i32, i32
  }
  func.func @transform_3(%arg0: i32, %arg1: memref<2xi32, #tpu.memory_space<smem>>) -> (i32, i32) {
    %c0_i32 = arith.constant 0 : i32
    %c0_i32_0 = arith.constant 0 : i32
    %c0_i32_1 = arith.constant 0 : i32
    return %c0_i32, %c0_i32_0 : i32, i32
  }
  func.func @transform_4(%arg0: i32, %arg1: memref<2xi32, #tpu.memory_space<smem>>) -> (i32, i32) {
    %c0_i32 = arith.constant 0 : i32
    %c0_i32_0 = arith.constant 0 : i32
    %c0_i32_1 = arith.constant 0 : i32
    return %c0_i32, %c0_i32_0 : i32, i32
  }
  func.func @transform_5(%arg0: i32, %arg1: memref<2xi32, #tpu.memory_space<smem>>) -> (i32, i32) {
    %c0_i32 = arith.constant 0 : i32
    %c0_i32_0 = arith.constant 0 : i32
    %c0_i32_1 = arith.constant 0 : i32
    return %c0_i32, %c0_i32_0 : i32, i32
  }
  func.func @transform_6(%arg0: i32, %arg1: memref<2xi32, #tpu.memory_space<smem>>) -> (i32, i32) {
    %c0_i32 = arith.constant 0 : i32
    %c0_i32_0 = arith.constant 0 : i32
    %c0_i32_1 = arith.constant 0 : i32
    return %c0_i32, %c0_i32_0 : i32, i32
  }
  func.func @transform_7(%arg0: i32, %arg1: memref<2xi32, #tpu.memory_space<smem>>) -> (i32, i32, i32) {
    %c0_i32 = arith.constant 0 : i32
    %c0_i32_0 = arith.constant 0 : i32
    %c0_i32_1 = arith.constant 0 : i32
    return %arg0, %c0_i32, %c0_i32_0 : i32, i32, i32
  }
}

</mosaic_0001>

<llo_original>
// kernel: mac_network_forward.1
$region0: #{mac_network_forward.1}
  #allocation0 [shape = 'u32[]', space=smem, size = 0x4, offset = 0x4, fixed_abs, tag = 'smem constant byte address 0x4 - core index']
  #allocation1 [shape = 'u32[144,128]{1,0:T(1,128)}', space=vmem, size = 0x12000, scoped, tag = 'internal scratch']
  #allocation2 [shape = 'f32[82,32]{1,0:T(8,128)}', space=vmem, size = 0xb000, scoped, tag = 'scratch operand']
  #allocation3 [shape = 's32[1]{0}', space=sflag, size = 0x4, scoped, tag = 'scoped memory for mac_network_forward.1']
  #allocation4 [shape = 'u8[512]{0}', space=smem, size = 0x200, scoped, tag = 'prefetched SMEM operand 0']
  %s0 = inlined_call_operand.vmem [shape: s32[2], index: 0, kind: input, shape index: {}]
  %s1 = inlined_call_operand.vmem [shape: f32[2,64,16], index: 1, kind: input, shape index: {}]
  %s2 = inlined_call_operand.vmem [shape: f32[2,8,32], index: 2, kind: input, shape index: {}]
  %s3 = inlined_call_operand.vmem [shape: bf16[432,32], index: 3, kind: input, shape index: {}]
  %s4 = inlined_call_operand.vmem [shape: f32[65,128], index: 4, kind: input, shape index: {}]
  %s5 = inlined_call_operand.vmem [shape: f32[448,32], index: 5, kind: input, shape index: {}]
  %s6 = inlined_call_operand.vmem [shape: f32[16,32], index: 6, kind: input, shape index: {}]
  %s7 = inlined_call_operand.vmem [shape: f32[33,128], index: 7, kind: input, shape index: {}]
  %s8 = inlined_call_operand.hbm [shape: f32[2,1,128], index: 8, kind: output, shape index: {}]
  %s9 = sld [smem:[#allocation0]]
  $region61: #{mac_network_forward.1} parent=0
    _
  %s11 = ssub.s32 1, %s9
  %s12 = scalar_select 0, %s11, %s9
  %s13 = sshll.u32 %s0, 4
  %s14 = int_to_ptr.vmem [resolvable:$true] %s13
  %16 = dma.vmem_to_smem %s14, 16, [#allocation4], [#allocation3]
  %17 = dma.done [#allocation3], 16
  %18 = sfence
  $region1: #{mac_network_forward.1} parent=0
    #allocation5 [shape = 'u8[1024]{0}', space=vmem, size = 0x400, scoped, tag = 'output window, operand 0']
    #allocation6 [shape = 's32[2]{0}', space=sflag, size = 0x8, scoped, tag = 'scoped memory for mac_network_forward.1']
    %19 = vsyncpa [#allocation6], 0
    %s20 = scalar_lea.sflag [#allocation6], 1
    %21 = vsyncpa %s20, 0
    loop: start=0, step=1, limit=4
    $region2: #{mac_network_forward.1} parent=1 // loop_pre_header
      _
    $region3: #{mac_network_forward.1} parent=1 // loop_header
      %s23 = sphi 0, %s27
      %p24 = scmp.ge.s32.totalorder %s23, 4
      %s33 = sphi 0, %s35
      %s36 = sphi 0, %s33
      %s37 = sphi 0, %s36
      %s53 = sphi 0, %s37
      %s59 = sphi 0, %s61
      %s62 = sphi 0, %s59
      %s63 = sphi 0, %s62
      %s79 = sphi 0, %s63
      %s83 = sphi 0, %s83
      %s85 = sphi 0, %s83
      %s86 = sphi 0, %s85
      %s100 = sphi 0, %s86
      %s104 = sphi 0, %s104
      %s106 = sphi 0, %s104
      %s107 = sphi 0, %s106
      %s121 = sphi 0, %s107
      %s125 = sphi 0, %s125
      %s127 = sphi 0, %s125
      %s128 = sphi 0, %s127
      %s142 = sphi 0, %s128
      %s146 = sphi 0, %s146
      %s148 = sphi 0, %s146
      %s149 = sphi 0, %s148
      %s163 = sphi 0, %s149
      %s167 = sphi 0, %s167
      %s169 = sphi 0, %s167
      %s170 = sphi 0, %s169
      %s184 = sphi 0, %s170
      %s190 = sphi 0, %s192
      %s193 = sphi 0, %s190
      %s194 = sphi 0, %s193
      %s210 = sphi 0, %s194
    $region4: #{mac_network_forward.1} parent=1 // loop_header_branch
      %26 = sbr.rel (%p24) target = $region8
    $region5: #{mac_network_forward.1} parent=1 // loop_body
      %s28 = ssub.s32 %s23, 1
      %s29 = ssub.s32 %s23, 2
      %s30 = sadd.s32 %s23, 1
      %s31 = ssub.s32 %s23, %s30
      %p32 = scmp.eq.s32.totalorder %s31, 0
      %s34 = sadd.s32 %s33, 1
      %s35 = scalar_select %p32, %s33, %s34
      %p38 = pneg %p32
      %p39 = scmp.eq.s32.totalorder %s23, 1
      %p40 = por %p38, %p39
      %p41 = scmp.ne.s32.totalorder %s33, %s36
      %p42 = scmp.eq.s32.totalorder %s23, 0
      %p43 = por %p41, %p42
      %p44 = scmp.ne.s32.totalorder %s33, %s36
      %p45 = scmp.eq.s32.totalorder %s28, 1
      %p46 = por %p44, %p45
      %p47 = scmp.ne.s32.totalorder %s36, %s37
      %p48 = scmp.eq.s32.totalorder %s28, 0
      %p49 = por %p47, %p48
      %p50 = scmp.ne.s32.totalorder %s36, %s37
      %p51 = scmp.eq.s32.totalorder %s29, 1
      %p52 = por %p50, %p51
      %p54 = scmp.ne.s32.totalorder %s37, %s53
      %p55 = scmp.eq.s32.totalorder %s29, 0
      %p56 = por %p54, %p55
      %s57 = ssub.s32 %s23, %s30
      %p58 = scmp.eq.s32.totalorder %s57, 0
      %s60 = sadd.s32 %s59, 1
      %s61 = scalar_select %p58, %s59, %s60
      %p64 = pneg %p58
      %p65 = scmp.eq.s32.totalorder %s23, 1
      %p66 = por %p64, %p65
      %p67 = scmp.ne.s32.totalorder %s59, %s62
      %p68 = scmp.eq.s32.totalorder %s23, 0
      %p69 = por %p67, %p68
      %p70 = scmp.ne.s32.totalorder %s59, %s62
      %p71 = scmp.eq.s32.totalorder %s28, 1
      %p72 = por %p70, %p71
      %p73 = scmp.ne.s32.totalorder %s62, %s63
      %p74 = scmp.eq.s32.totalorder %s28, 0
      %p75 = por %p73, %p74
      %p76 = scmp.ne.s32.totalorder %s62, %s63
      %p77 = scmp.eq.s32.totalorder %s29, 1
      %p78 = por %p76, %p77
      %p80 = scmp.ne.s32.totalorder %s63, %s79
      %p81 = scmp.eq.s32.totalorder %s29, 0
      %p82 = por %p80, %p81
      %s84 = sadd.s32 %s83, 1
      %p87 = scmp.eq.s32.totalorder %s23, 1
      %p88 = scmp.ne.s32.totalorder %s83, %s85
      %p89 = scmp.eq.s32.totalorder %s23, 0
      %p90 = por %p88, %p89
      %p91 = scmp.ne.s32.totalorder %s83, %s85
      %p92 = scmp.eq.s32.totalorder %s28, 1
      %p93 = por %p91, %p92
      %p94 = scmp.ne.s32.totalorder %s85, %s86
      %p95 = scmp.eq.s32.totalorder %s28, 0
      %p96 = por %p94, %p95
      %p97 = scmp.ne.s32.totalorder %s85, %s86
      %p98 = scmp.eq.s32.totalorder %s29, 1
      %p99 = por %p97, %p98
      %p101 = scmp.ne.s32.totalorder %s86, %s100
      %p102 = scmp.eq.s32.totalorder %s29, 0
      %p103 = por %p101, %p102
      %s105 = sadd.s32 %s104, 1
      %p108 = scmp.eq.s32.totalorder %s23, 1
      %p109 = scmp.ne.s32.totalorder %s104, %s106
      %p110 = scmp.eq.s32.totalorder %s23, 0
      %p111 = por %p109, %p110
      %p112 = scmp.ne.s32.totalorder %s104, %s106
      %p113 = scmp.eq.s32.totalorder %s28, 1
      %p114 = por %p112, %p113
      %p115 = scmp.ne.s32.totalorder %s106, %s107
      %p116 = scmp.eq.s32.totalorder %s28, 0
      %p117 = por %p115, %p116
      %p118 = scmp.ne.s32.totalorder %s106, %s107
      %p119 = scmp.eq.s32.totalorder %s29, 1
      %p120 = por %p118, %p119
      %p122 = scmp.ne.s32.totalorder %s107, %s121
      %p123 = scmp.eq.s32.totalorder %s29, 0
      %p124 = por %p122, %p123
      %s126 = sadd.s32 %s125, 1
      %p129 = scmp.eq.s32.totalorder %s23, 1
      %p130 = scmp.ne.s32.totalorder %s125, %s127
      %p131 = scmp.eq.s32.totalorder %s23, 0
      %p132 = por %p130, %p131
      %p133 = scmp.ne.s32.totalorder %s125, %s127
      %p134 = scmp.eq.s32.totalorder %s28, 1
      %p135 = por %p133, %p134
      %p136 = scmp.ne.s32.totalorder %s127, %s128
      %p137 = scmp.eq.s32.totalorder %s28, 0
      %p138 = por %p136, %p137
      %p139 = scmp.ne.s32.totalorder %s127, %s128
      %p140 = scmp.eq.s32.totalorder %s29, 1
      %p141 = por %p139, %p140
      %p143 = scmp.ne.s32.totalorder %s128, %s142
      %p144 = scmp.eq.s32.totalorder %s29, 0
      %p145 = por %p143, %p144
      %s147 = sadd.s32 %s146, 1
      %p150 = scmp.eq.s32.totalorder %s23, 1
      %p151 = scmp.ne.s32.totalorder %s146, %s148
      %p152 = scmp.eq.s32.totalorder %s23, 0
      %p153 = por %p151, %p152
      %p154 = scmp.ne.s32.totalorder %s146, %s148
      %p155 = scmp.eq.s32.totalorder %s28, 1
      %p156 = por %p154, %p155
      %p157 = scmp.ne.s32.totalorder %s148, %s149
      %p158 = scmp.eq.s32.totalorder %s28, 0
      %p159 = por %p157, %p158
      %p160 = scmp.ne.s32.totalorder %s148, %s149
      %p161 = scmp.eq.s32.totalorder %s29, 1
      %p162 = por %p160, %p161
      %p164 = scmp.ne.s32.totalorder %s149, %s163
      %p165 = scmp.eq.s32.totalorder %s29, 0
      %p166 = por %p164, %p165
      %s168 = sadd.s32 %s167, 1
      %p171 = scmp.eq.s32.totalorder %s23, 1
      %p172 = scmp.ne.s32.totalorder %s167, %s169
      %p173 = scmp.eq.s32.totalorder %s23, 0
      %p174 = por %p172, %p173
      %p175 = scmp.ne.s32.totalorder %s167, %s169
      %p176 = scmp.eq.s32.totalorder %s28, 1
      %p177 = por %p175, %p176
      %p178 = scmp.ne.s32.totalorder %s169, %s170
      %p179 = scmp.eq.s32.totalorder %s28, 0
      %p180 = por %p178, %p179
      %p181 = scmp.ne.s32.totalorder %s169, %s170
      %p182 = scmp.eq.s32.totalorder %s29, 1
      %p183 = por %p181, %p182
      %p185 = scmp.ne.s32.totalorder %s170, %s184
      %p186 = scmp.eq.s32.totalorder %s29, 0
      %p187 = por %p185, %p186
      %s188 = ssub.s32 %s23, %s30
      %p189 = scmp.eq.s32.totalorder %s188, 0
      %s191 = sadd.s32 %s190, 1
      %s192 = scalar_select %p189, %s190, %s191
      %p195 = pneg %p189
      %p196 = scmp.eq.s32.totalorder %s23, 1
      %p197 = por %p195, %p196
      %p198 = scmp.ne.s32.totalorder %s190, %s193
      %p199 = scmp.eq.s32.totalorder %s23, 0
      %p200 = por %p198, %p199
      %p201 = scmp.ne.s32.totalorder %s190, %s193
      %p202 = scmp.eq.s32.totalorder %s28, 1
      %p203 = por %p201, %p202
      %p204 = scmp.ne.s32.totalorder %s193, %s194
      %p205 = scmp.eq.s32.totalorder %s28, 0
      %p206 = por %p204, %p205
      %p207 = scmp.ne.s32.totalorder %s193, %s194
      %p208 = scmp.eq.s32.totalorder %s29, 1
      %p209 = por %p207, %p208
      %p211 = scmp.ne.s32.totalorder %s194, %s210
      %p212 = scmp.eq.s32.totalorder %s29, 0
      %p213 = por %p211, %p212
      %p214 = scmp.le.s32.totalorder 1, %s23
      %p215 = scmp.lt.s32.totalorder %s23, 3
      %p216 = pnand %p214, %p215
      %p217 = pneg %p216
      // Predicated region
      $region9: #{mac_network_forward.1} parent=5 // pred_check
        _
      $region10: #{mac_network_forward.1} parent=5 // pred_check_branch
        %219 = sbr.rel (%p216) target = $region12
      $region11: #{mac_network_forward.1} parent=5 // pred_region
        %s220 = ssub.s32 %s23, 1
        // Predicated region
        $region13: #{mac_network_forward.1} parent=11 // pred_check
          %p221 = pneg %p96
        $region14: #{mac_network_forward.1} parent=11 // pred_check_branch
          %223 = sbr.rel (%p221) target = $region16
        $region15: #{mac_network_forward.1} parent=11 // pred_region
          _
        $region16: #{mac_network_forward.1} parent=11 // pred_fallthru
          _
        // Predicated region
        $region17: #{mac_network_forward.1} parent=11 // pred_check
          %p224 = pneg %p117
        $region18: #{mac_network_forward.1} parent=11 // pred_check_branch
          %226 = sbr.rel (%p224) target = $region20
        $region19: #{mac_network_forward.1} parent=11 // pred_region
          _
        $region20: #{mac_network_forward.1} parent=11 // pred_fallthru
          _
        // Predicated region
        $region21: #{mac_network_forward.1} parent=11 // pred_check
          %p227 = pneg %p138
        $region22: #{mac_network_forward.1} parent=11 // pred_check_branch
          %229 = sbr.rel (%p227) target = $region24
        $region23: #{mac_network_forward.1} parent=11 // pred_region
          _
        $region24: #{mac_network_forward.1} parent=11 // pred_fallthru
          _
        // Predicated region
        $region25: #{mac_network_forward.1} parent=11 // pred_check
          %p230 = pneg %p159
        $region26: #{mac_network_forward.1} parent=11 // pred_check_branch
          %232 = sbr.rel (%p230) target = $region28
        $region27: #{mac_network_forward.1} parent=11 // pred_region
          _
        $region28: #{mac_network_forward.1} parent=11 // pred_fallthru
          _
        // Predicated region
        $region29: #{mac_network_forward.1} parent=11 // pred_check
          %p233 = pneg %p180
        $region30: #{mac_network_forward.1} parent=11 // pred_check_branch
          %235 = sbr.rel (%p233) target = $region32
        $region31: #{mac_network_forward.1} parent=11 // pred_region
          _
        $region32: #{mac_network_forward.1} parent=11 // pred_fallthru
          _
      $region12: #{mac_network_forward.1} parent=5 // pred_fallthru
        _
      %p236 = scmp.lt.s32.totalorder %s23, 2
      // Predicated region
      $region33: #{mac_network_forward.1} parent=5 // pred_check
        %p237 = pneg %p236
      $region34: #{mac_network_forward.1} parent=5 // pred_check_branch
        %239 = sbr.rel (%p237) target = $region36
      $region35: #{mac_network_forward.1} parent=5 // pred_region
        // Predicated region
        $region37: #{mac_network_forward.1} parent=35 // pred_check
          %p240 = pneg %p43
        $region38: #{mac_network_forward.1} parent=35 // pred_check_branch
          %242 = sbr.rel (%p240) target = $region40
        $region39: #{mac_network_forward.1} parent=35 // pred_region
          %p243 = scmp.lt.s32.totalorder %s23, 1
          %s244 = scalar_select %p243, %s23, 1
          %s245 = smul.addr %s244, 8
          %s246 = smul.addr %s245, 8
          %s247 = scalar_lea.vmem %s1, %s246
        $region40: #{mac_network_forward.1} parent=35 // pred_fallthru
          _
        // Predicated region
        $region41: #{mac_network_forward.1} parent=35 // pred_check
          %p248 = pneg %p69
        $region42: #{mac_network_forward.1} parent=35 // pred_check_branch
          %250 = sbr.rel (%p248) target = $region44
        $region43: #{mac_network_forward.1} parent=35 // pred_region
          %p251 = scmp.lt.s32.totalorder %s23, 1
          %s252 = scalar_select %p251, %s23, 1
          %s253 = smul.addr %s252, 8
          %s254 = scalar_lea.vmem %s2, %s253
        $region44: #{mac_network_forward.1} parent=35 // pred_fallthru
          _
      $region36: #{mac_network_forward.1} parent=5 // pred_fallthru
        _
      %p255 = scmp.le.s32.totalorder 1, %s23
      %p256 = scmp.lt.s32.totalorder %s23, 3
      %p257 = pnand %p255, %p256
      %p258 = pneg %p257
      // Predicated region
      $region45: #{mac_network_forward.1} parent=5 // pred_check
        _
      $region46: #{mac_network_forward.1} parent=5 // pred_check_branch
        %260 = sbr.rel (%p257) target = $region48
      $region47: #{mac_network_forward.1} parent=5 // pred_region
        %s261 = ssub.s32 %s23, 1
        %p262 = scmp.lt.s32.totalorder %s28, 1
        %s263 = scalar_select %p262, %s28, 1
        %s264 = smul.addr %s263, 8
        %s265 = smul.addr %s264, 8
        %s266 = scalar_lea.vmem %s1, %s265
        %p267 = pneg %p49
        %p268 = pneg %p46
        %p269 = scmp.lt.s32.totalorder %s28, 1
        %s270 = scalar_select %p269, %s28, 1
        %s271 = smul.addr %s270, 8
        %s272 = scalar_lea.vmem %s2, %s271
        %p273 = pneg %p75
        %p274 = pneg %p72
        %p275 = pneg %p96
        %p276 = pneg %p93
        %p277 = pneg %p117
        %p278 = pneg %p114
        %p279 = pneg %p138
        %p280 = pneg %p135
        %p281 = pneg %p159
        %p282 = pneg %p156
        %p283 = pneg %p180
        %p284 = pneg %p177
        %p285 = pneg %p206
        %p286 = pneg %p203
        %s287 = sand.u32 %s193, 1
        %s288 = scalar_lea.sflag [#allocation6], %s287
        %s289 = sand.u32 %s193, 1
        %s290 = scalar_lea.vmem [#allocation5], %s289
        %p291 = scmp.lt.s32.totalorder %s28, 1
        %s292 = scalar_select %p291, %s28, 1
        %s293 = smul.addr %s292, 8
        %s294 = smul.addr %s293, 8
        %s295 = scalar_lea.vmem %s1, %s294
        %p296 = scmp.lt.s32.totalorder %s28, 1
        %s297 = scalar_select %p296, %s28, 1
        %s298 = smul.addr %s297, 8
        %s299 = scalar_lea.vmem %s2, %s298
        %s301 = sld [smem:[#allocation4 + %s28]]
        %v302 = vld [vmem:[%s6] sm:$0xff]
        %v303 = vld [vmem:[%s6 + $0x8] sm:$0xff]
        %v304 = vlaneseq
        %v305 = vshrl.u32 %v304, 7
        %v306 = vadd.s32 %v305, 8
        %v307 = vadd.s32 %v305, 16
        %v308 = vadd.s32 %v305, 24
        %v309 = vadd.s32 %v305, 32
        %v310 = vadd.s32 %v305, 40
        %v311 = vadd.s32 %v305, 48
        %v312 = vadd.s32 %v305, 56
        %vm313 = vcmp.lt.s32.totalorder %v305, 0
        %v314 = vsub.s32 0, %v305
        %v315 = vsel %vm313, %v314, %v305
        %v316 = vshrl.u32 %v315, 3
        %v317 = vand.u32 %v315, 7
        %v318 = vsub.s32 0, %v317
        %v319 = vsel %vm313, %v318, %v317
        %vm320 = vcmp.lt.s32.totalorder %v306, 0
        %v321 = vsub.s32 0, %v306
        %v322 = vsel %vm320, %v321, %v306
        %v323 = vshrl.u32 %v322, 3
        %v324 = vand.u32 %v322, 7
        %v325 = vsub.s32 0, %v324
        %v326 = vsel %vm320, %v325, %v324
        %vm327 = vcmp.lt.s32.totalorder %v307, 0
        %v328 = vsub.s32 0, %v307
        %v329 = vsel %vm327, %v328, %v307
        %v330 = vshrl.u32 %v329, 3
        %v331 = vand.u32 %v329, 7
        %v332 = vsub.s32 0, %v331
        %v333 = vsel %vm327, %v332, %v331
        %vm334 = vcmp.lt.s32.totalorder %v308, 0
        %v335 = vsub.s32 0, %v308
        %v336 = vsel %vm334, %v335, %v308
        %v337 = vshrl.u32 %v336, 3
        %v338 = vand.u32 %v336, 7
        %v339 = vsub.s32 0, %v338
        %v340 = vsel %vm334, %v339, %v338
        %vm341 = vcmp.lt.s32.totalorder %v309, 0
        %v342 = vsub.s32 0, %v309
        %v343 = vsel %vm341, %v342, %v309
        %v344 = vshrl.u32 %v343, 3
        %v345 = vand.u32 %v343, 7
        %v346 = vsub.s32 0, %v345
        %v347 = vsel %vm341, %v346, %v345
        %vm348 = vcmp.lt.s32.totalorder %v310, 0
        %v349 = vsub.s32 0, %v310
        %v350 = vsel %vm348, %v349, %v310
        %v351 = vshrl.u32 %v350, 3
        %v352 = vand.u32 %v350, 7
        %v353 = vsub.s32 0, %v352
        %v354 = vsel %vm348, %v353, %v352
        %vm355 = vcmp.lt.s32.totalorder %v311, 0
        %v356 = vsub.s32 0, %v311
        %v357 = vsel %vm355, %v356, %v311
        %v358 = vshrl.u32 %v357, 3
        %v359 = vand.u32 %v357, 7
        %v360 = vsub.s32 0, %v359
        %v361 = vsel %vm355, %v360, %v359
        %vm362 = vcmp.lt.s32.totalorder %v312, 0
        %v363 = vsub.s32 0, %v312
        %v364 = vsel %vm362, %v363, %v312
        %v365 = vshrl.u32 %v364, 3
        %v366 = vand.u32 %v364, 7
        %v367 = vsub.s32 0, %v366
        %v368 = vsel %vm362, %v367, %v366
        %vm369 = vcmp.ne.s32.totalorder %v319, 0
        %vm370 = vcmp.ne.s32.totalorder %v326, 0
        %vm371 = vcmp.ne.s32.totalorder %v333, 0
        %vm372 = vcmp.ne.s32.totalorder %v340, 0
        %vm373 = vcmp.ne.s32.totalorder %v347, 0
        %vm374 = vcmp.ne.s32.totalorder %v354, 0
        %vm375 = vcmp.ne.s32.totalorder %v361, 0
        %vm376 = vcmp.ne.s32.totalorder %v368, 0
        %vm377 = vcmp.lt.s32.totalorder %v319, 0
        %vm378 = vcmp.lt.s32.totalorder %v326, 0
        %vm379 = vcmp.lt.s32.totalorder %v333, 0
        %vm380 = vcmp.lt.s32.totalorder %v340, 0
        %vm381 = vcmp.lt.s32.totalorder %v347, 0
        %vm382 = vcmp.lt.s32.totalorder %v354, 0
        %vm383 = vcmp.lt.s32.totalorder %v361, 0
        %vm384 = vcmp.lt.s32.totalorder %v368, 0
        %vm385 = vmand %vm377, %vm369
        %vm386 = vmand %vm378, %vm370
        %vm387 = vmand %vm379, %vm371
        %vm388 = vmand %vm380, %vm372
        %vm389 = vmand %vm381, %vm373
        %vm390 = vmand %vm382, %vm374
        %vm391 = vmand %vm383, %vm375
        %vm392 = vmand %vm384, %vm376
        %v393 = vadd.s32 %v319, 8
        %v394 = vadd.s32 %v326, 8
        %v395 = vadd.s32 %v333, 8
        %v396 = vadd.s32 %v340, 8
        %v397 = vadd.s32 %v347, 8
        %v398 = vadd.s32 %v354, 8
        %v399 = vadd.s32 %v361, 8
        %v400 = vadd.s32 %v368, 8
        %v401 = vsel %vm385, %v393, %v319
        %v402 = vsel %vm386, %v394, %v326
        %v403 = vsel %vm387, %v395, %v333
        %v404 = vsel %vm388, %v396, %v340
        %v405 = vsel %vm389, %v397, %v347
        %v406 = vsel %vm390, %v398, %v354
        %v407 = vsel %vm391, %v399, %v361
        %v408 = vsel %vm392, %v400, %v368
        %vm409 = vcmp.ge.s32.totalorder %v401, 1
        %vm410 = vcmp.ge.s32.totalorder %v402, 1
        %vm411 = vcmp.ge.s32.totalorder %v403, 1
        %vm412 = vcmp.ge.s32.totalorder %v404, 1
        %vm413 = vcmp.ge.s32.totalorder %v405, 1
        %vm414 = vcmp.ge.s32.totalorder %v406, 1
        %vm415 = vcmp.ge.s32.totalorder %v407, 1
        %vm416 = vcmp.ge.s32.totalorder %v408, 1
        %vm417 = vcmp.le.s32.totalorder %v401, 6
        %vm418 = vcmp.le.s32.totalorder %v402, 6
        %vm419 = vcmp.le.s32.totalorder %v403, 6
        %vm420 = vcmp.le.s32.totalorder %v404, 6
        %vm421 = vcmp.le.s32.totalorder %v405, 6
        %vm422 = vcmp.le.s32.totalorder %v406, 6
        %vm423 = vcmp.le.s32.totalorder %v407, 6
        %vm424 = vcmp.le.s32.totalorder %v408, 6
        %v425 = vld [vmem:[%s295] sm:$0xff]
        %v426 = vld [vmem:[%s295 + $0x8] sm:$0xff]
        %v427 = vld [vmem:[%s295 + $0x10] sm:$0xff]
        %v428 = vld [vmem:[%s295 + $0x18] sm:$0xff]
        %v429 = vld [vmem:[%s295 + $0x20] sm:$0xff]
        %v430 = vld [vmem:[%s295 + $0x28] sm:$0xff]
        %v431 = vld [vmem:[%s295 + $0x30] sm:$0xff]
        %v432 = vld [vmem:[%s295 + $0x38] sm:$0xff]
        %vm433 = vcmask 261120
        %434 = vst.msk [vmem:[#allocation2] sm:$0xff] %vm433, 0.0
        %435 = vst.msk [vmem:[#allocation2 + $0x8] sm:$0xff] %vm433, 0.0
        %436 = vst.msk [vmem:[#allocation2 + $0x10] sm:$0xff] %vm433, 0.0
        %437 = vst.msk [vmem:[#allocation2 + $0x18] sm:$0xff] %vm433, 0.0
        %438 = vst.msk [vmem:[#allocation2 + $0x20] sm:$0xff] %vm433, 0.0
        %439 = vst.msk [vmem:[#allocation2 + $0x28] sm:$0xff] %vm433, 0.0
        %440 = vst.msk [vmem:[#allocation2 + $0x30] sm:$0xff] %vm433, 0.0
        %441 = vst.msk [vmem:[#allocation2 + $0x38] sm:$0xff] %vm433, 0.0
        %442 = vst.msk [vmem:[#allocation2 + $0x40] sm:$0xff] %vm433, 0.0
        %443 = vst.msk [vmem:[#allocation2 + $0x48] sm:$0xff] %vm433, 0.0
        %vm444 = vcmask 254976
        %445 = vst.msk [vmem:[#allocation2 + $0x50] sm:$0x3] %vm444, 0.0
        %vm446 = vcmask 130048
        %447 = vst.msk [vmem:[#allocation2 + $0x9] sm:$0xff] %vm446, %v425
        %448 = vst.msk [vmem:[#allocation2 + $0x11] sm:$0xff] %vm446, %v426
        %449 = vst.msk [vmem:[#allocation2 + $0x19] sm:$0xff] %vm446, %v427
        %450 = vst.msk [vmem:[#allocation2 + $0x21] sm:$0xff] %vm446, %v428
        %451 = vst.msk [vmem:[#allocation2 + $0x29] sm:$0xff] %vm446, %v429
        %452 = vst.msk [vmem:[#allocation2 + $0x31] sm:$0xff] %vm446, %v430
        %453 = vst.msk [vmem:[#allocation2 + $0x39] sm:$0xff] %vm446, %v431
        %454 = vst.msk [vmem:[#allocation2 + $0x41] sm:$0xff] %vm446, %v432
        %v455 = vld [vmem:[#allocation2] sm:$0xff]
        %v456 = vld [vmem:[#allocation2 + $0x8] sm:$0xff]
        %v457 = vld [vmem:[#allocation2 + $0x10] sm:$0xff]
        %v458 = vld [vmem:[#allocation2 + $0x18] sm:$0xff]
        %v459 = vld [vmem:[#allocation2 + $0x20] sm:$0xff]
        %v460 = vld [vmem:[#allocation2 + $0x28] sm:$0xff]
        %v461 = vld [vmem:[#allocation2 + $0x30] sm:$0xff]
        %v462 = vld [vmem:[#allocation2 + $0x38] sm:$0xff]
        %v463 = vsel %vm409, 1, 0
        %v464 = vsel %vm410, 1, 0
        %v465 = vsel %vm411, 1, 0
        %v466 = vsel %vm412, 1, 0
        %v467 = vsel %vm413, 1, 0
        %v468 = vsel %vm414, 1, 0
        %v469 = vsel %vm415, 1, 0
        %v470 = vsel %vm416, 1, 0
        %vm471 = vcmp.eq.s32.totalorder %v463, 1
        %vm472 = vcmp.eq.s32.totalorder %v464, 1
        %vm473 = vcmp.eq.s32.totalorder %v465, 1
        %vm474 = vcmp.eq.s32.totalorder %v466, 1
        %vm475 = vcmp.eq.s32.totalorder %v467, 1
        %vm476 = vcmp.eq.s32.totalorder %v468, 1
        %vm477 = vcmp.eq.s32.totalorder %v469, 1
        %vm478 = vcmp.eq.s32.totalorder %v470, 1
        %v479 = vsel %vm471, %v455, 0.0
        %v480 = vsel %vm472, %v456, 0.0
        %v481 = vsel %vm473, %v457, 0.0
        %v482 = vsel %vm474, %v458, 0.0
        %v483 = vsel %vm475, %v459, 0.0
        %v484 = vsel %vm476, %v460, 0.0
        %v485 = vsel %vm477, %v461, 0.0
        %v486 = vsel %vm478, %v462, 0.0
        %v487 = vpack.c.bf16 %v480, %v479
        %v488 = vpack.c.bf16 %v482, %v481
        %v489 = vpack.c.bf16 %v484, %v483
        %v490 = vpack.c.bf16 %v486, %v485
        %v491 = vld [vmem:[%s3] sm:$0xf]
        %v492 = vld [vmem:[%s3 + $0x4] sm:$0xf]
        %v493 = vld [vmem:[#allocation2 + $0x1] sm:$0xff]
        %v494 = vld [vmem:[#allocation2 + $0x9] sm:$0xff]
        %v495 = vld [vmem:[#allocation2 + $0x11] sm:$0xff]
        %v496 = vld [vmem:[#allocation2 + $0x19] sm:$0xff]
        %v497 = vld [vmem:[#allocation2 + $0x21] sm:$0xff]
        %v498 = vld [vmem:[#allocation2 + $0x29] sm:$0xff]
        %v499 = vld [vmem:[#allocation2 + $0x31] sm:$0xff]
        %v500 = vld [vmem:[#allocation2 + $0x39] sm:$0xff]
        %v501 = vpack.c.bf16 %v494, %v493
        %v502 = vpack.c.bf16 %v496, %v495
        %v503 = vpack.c.bf16 %v498, %v497
        %v504 = vpack.c.bf16 %v500, %v499
        %v505 = vld [vmem:[%s3 + $0x8] sm:$0xf]
        %v506 = vld [vmem:[%s3 + $0xc] sm:$0xf]
        %v509 = vunpack.c.l.b16 %v505
        %v510 = vunpack.c.l.b16 %v506
        %v511 = vpack.c.b16 %v510, %v509
        %v514 = vsel %vm446, %v501, 0
        %v517 = vsel %vm446, %v502, 0
        %v520 = vsel %vm446, %v503, 0
        %v523 = vsel %vm446, %v504, 0
        %525 = vmatprep.subr.bf16.mxu0 0
        %526 = vmatpush1.bf16.msra.mxu0 0
        %527 = vmatprep.subr.bf16.mxu0 0
        %528 = vmatpush1.bf16.msra.mxu0 0
        %529 = vmatprep.subr.bf16.mxu0 0
        %530 = vmatpush1.bf16.msra.mxu0 0
        %531 = vmatprep.subr.bf16.mxu0 0
        %532 = vmatpush1.bf16.msra.mxu0 0
        %533 = vmatprep.subr.bf16.mxu0 0
        %534 = vmatpush1.bf16.msra.mxu0 0
        %535 = vmatprep.subr.bf16.mxu0 0
        %536 = vmatpush1.bf16.msra.mxu0 0
        %537 = vmatprep.subr.bf16.mxu0 0
        %538 = vmatpush1.bf16.msra.mxu0 0
        %539 = vmatprep.subr.bf16.mxu0 0
        %540 = vmatpush1.bf16.msra.mxu0 %v511
        %541 = vmatprep.subr.bf16.mxu0 0
        %542 = vmatpush2.bf16.msra.mxu0 0
        %543 = vmatprep.subr.bf16.mxu0 0
        %544 = vmatpush2.bf16.msra.mxu0 0
        %545 = vmatprep.subr.bf16.mxu0 0
        %546 = vmatpush2.bf16.msra.mxu0 0
        %547 = vmatprep.subr.bf16.mxu0 0
        %548 = vmatpush2.bf16.msra.mxu0 0
        %549 = vmatprep.subr.bf16.mxu0 0
        %550 = vmatpush2.bf16.msra.mxu0 0
        %551 = vmatprep.subr.bf16.mxu0 0
        %552 = vmatpush2.bf16.msra.mxu0 0
        %553 = vmatprep.subr.bf16.mxu0 0
        %554 = vmatpush2.bf16.msra.mxu0 0
        %555 = vmatprep.subr.bf16.mxu0 0
        %556 = vmatpush2.bf16.msra.mxu0 0
        %557 = vmatprep.mubr.bf16.mxu0 0
        %558 = vmatmul.mubr.bf16.gmra.mxu0 %v514
        %v559 = vpop.f32.mrf.mxu0
        %v560 = vadd.f32 0.0, %v559
        %v561 = vpop.f32.mrf.mxu0
        %v562 = vpop.f32.mrf.mxu0
        %v563 = vadd.f32 0.0, %v562
        %v564 = vpop.f32.mrf.mxu0
        %565 = vmatprep.mubr.bf16.mxu0 0
        %566 = vmatmul.mubr.bf16.gmra.mxu0 %v517
        %v567 = vpop.f32.mrf.mxu0
        %v568 = vadd.f32 0.0, %v567
        %v569 = vpop.f32.mrf.mxu0
        %v570 = vpop.f32.mrf.mxu0
        %v571 = vadd.f32 0.0, %v570
        %v572 = vpop.f32.mrf.mxu0
        %573 = vmatprep.mubr.bf16.mxu0 0
        %574 = vmatmul.mubr.bf16.gmra.mxu0 %v520
        %v575 = vpop.f32.mrf.mxu0
        %v576 = vadd.f32 0.0, %v575
        %v577 = vpop.f32.mrf.mxu0
        %v578 = vpop.f32.mrf.mxu0
        %v579 = vadd.f32 0.0, %v578
        %v580 = vpop.f32.mrf.mxu0
        %581 = vmatprep.mubr.bf16.mxu0 0
        %582 = vmatmul.mubr.bf16.gmra.mxu0 %v523
        %v583 = vpop.f32.mrf.mxu0
        %v584 = vadd.f32 0.0, %v583
        %v585 = vpop.f32.mrf.mxu0
        %v586 = vpop.f32.mrf.mxu0
        %v587 = vadd.f32 0.0, %v586
        %v588 = vpop.f32.mrf.mxu0
        %589 = vdwg.mxu0
        %v592 = vunpack.c.l.b16 %v491
        %v593 = vunpack.c.l.b16 %v492
        %v594 = vpack.c.b16 %v593, %v592
        %v597 = vsel %vm446, %v487, 0
        %v600 = vsel %vm446, %v488, 0
        %v603 = vsel %vm446, %v489, 0
        %v606 = vsel %vm446, %v490, 0
        %608 = vmatprep.subr.bf16.mxu0 0
        %609 = vmatpush1.bf16.msra.mxu0 0
        %610 = vmatprep.subr.bf16.mxu0 0
        %611 = vmatpush1.bf16.msra.mxu0 0
        %612 = vmatprep.subr.bf16.mxu0 0
        %613 = vmatpush1.bf16.msra.mxu0 0
        %614 = vmatprep.subr.bf16.mxu0 0
        %615 = vmatpush1.bf16.msra.mxu0 0
        %616 = vmatprep.subr.bf16.mxu0 0
        %617 = vmatpush1.bf16.msra.mxu0 0
        %618 = vmatprep.subr.bf16.mxu0 0
        %619 = vmatpush1.bf16.msra.mxu0 0
        %620 = vmatprep.subr.bf16.mxu0 0
        %621 = vmatpush1.bf16.msra.mxu0 0
        %622 = vmatprep.subr.bf16.mxu0 0
        %623 = vmatpush1.bf16.msra.mxu0 %v594
        %624 = vmatprep.subr.bf16.mxu0 0
        %625 = vmatpush2.bf16.msra.mxu0 0
        %626 = vmatprep.subr.bf16.mxu0 0
        %627 = vmatpush2.bf16.msra.mxu0 0
        %628 = vmatprep.subr.bf16.mxu0 0
        %629 = vmatpush2.bf16.msra.mxu0 0
        %630 = vmatprep.subr.bf16.mxu0 0
        %631 = vmatpush2.bf16.msra.mxu0 0
        %632 = vmatprep.subr.bf16.mxu0 0
        %633 = vmatpush2.bf16.msra.mxu0 0
        %634 = vmatprep.subr.bf16.mxu0 0
        %635 = vmatpush2.bf16.msra.mxu0 0
        %636 = vmatprep.subr.bf16.mxu0 0
        %637 = vmatpush2.bf16.msra.mxu0 0
        %638 = vmatprep.subr.bf16.mxu0 0
        %639 = vmatpush2.bf16.msra.mxu0 0
        %640 = vmatprep.mubr.bf16.mxu0 0
        %641 = vmatmul.mubr.bf16.gmra.mxu0 %v597
        %v642 = vpop.f32.mrf.mxu0
        %v643 = vadd.f32 %v560, %v642
        %v644 = vpop.f32.mrf.mxu0
        %v645 = vpop.f32.mrf.mxu0
        %v646 = vadd.f32 %v563, %v645
        %v647 = vpop.f32.mrf.mxu0
        %648 = vmatprep.mubr.bf16.mxu0 0
        %649 = vmatmul.mubr.bf16.gmra.mxu0 %v600
        %v650 = vpop.f32.mrf.mxu0
        %v651 = vadd.f32 %v568, %v650
        %v652 = vpop.f32.mrf.mxu0
        %v653 = vpop.f32.mrf.mxu0
        %v654 = vadd.f32 %v571, %v653
        %v655 = vpop.f32.mrf.mxu0
        %656 = vmatprep.mubr.bf16.mxu0 0
        %657 = vmatmul.mubr.bf16.gmra.mxu0 %v603
        %v658 = vpop.f32.mrf.mxu0
        %v659 = vadd.f32 %v576, %v658
        %v660 = vpop.f32.mrf.mxu0
        %v661 = vpop.f32.mrf.mxu0
        %v662 = vadd.f32 %v579, %v661
        %v663 = vpop.f32.mrf.mxu0
        %664 = vmatprep.mubr.bf16.mxu0 0
        %665 = vmatmul.mubr.bf16.gmra.mxu0 %v606
        %v666 = vpop.f32.mrf.mxu0
        %v667 = vadd.f32 %v584, %v666
        %v668 = vpop.f32.mrf.mxu0
        %v669 = vpop.f32.mrf.mxu0
        %v670 = vadd.f32 %v587, %v669
        %v671 = vpop.f32.mrf.mxu0
        %672 = vdwg.mxu0
        %v673 = vld [vmem:[#allocation2 + $0x2] sm:$0xff]
        %v674 = vld [vmem:[#allocation2 + $0xa] sm:$0xff]
        %v675 = vld [vmem:[#allocation2 + $0x12] sm:$0xff]
        %v676 = vld [vmem:[#allocation2 + $0x1a] sm:$0xff]
        %v677 = vld [vmem:[#allocation2 + $0x22] sm:$0xff]
        %v678 = vld [vmem:[#allocation2 + $0x2a] sm:$0xff]
        %v679 = vld [vmem:[#allocation2 + $0x32] sm:$0xff]
        %v680 = vld [vmem:[#allocation2 + $0x3a] sm:$0xff]
        %v681 = vsel %vm417, 1, 0
        %v682 = vsel %vm418, 1, 0
        %v683 = vsel %vm419, 1, 0
        %v684 = vsel %vm420, 1, 0
        %v685 = vsel %vm421, 1, 0
        %v686 = vsel %vm422, 1, 0
        %v687 = vsel %vm423, 1, 0
        %v688 = vsel %vm424, 1, 0
        %vm689 = vcmp.eq.s32.totalorder %v681, 1
        %vm690 = vcmp.eq.s32.totalorder %v682, 1
        %vm691 = vcmp.eq.s32.totalorder %v683, 1
        %vm692 = vcmp.eq.s32.totalorder %v684, 1
        %vm693 = vcmp.eq.s32.totalorder %v685, 1
        %vm694 = vcmp.eq.s32.totalorder %v686, 1
        %vm695 = vcmp.eq.s32.totalorder %v687, 1
        %vm696 = vcmp.eq.s32.totalorder %v688, 1
        %v697 = vsel %vm689, %v673, 0.0
        %v698 = vsel %vm690, %v674, 0.0
        %v699 = vsel %vm691, %v675, 0.0
        %v700 = vsel %vm692, %v676, 0.0
        %v701 = vsel %vm693, %v677, 0.0
        %v702 = vsel %vm694, %v678, 0.0
        %v703 = vsel %vm695, %v679, 0.0
        %v704 = vsel %vm696, %v680, 0.0
        %v705 = vpack.c.bf16 %v698, %v697
        %v706 = vpack.c.bf16 %v700, %v699
        %v707 = vpack.c.bf16 %v702, %v701
        %v708 = vpack.c.bf16 %v704, %v703
        %v709 = vld [vmem:[%s3 + $0x10] sm:$0xf]
        %v710 = vld [vmem:[%s3 + $0x14] sm:$0xf]
        %v713 = vunpack.c.l.b16 %v709
        %v714 = vunpack.c.l.b16 %v710
        %v715 = vpack.c.b16 %v714, %v713
        %v718 = vsel %vm446, %v705, 0
        %v721 = vsel %vm446, %v706, 0
        %v724 = vsel %vm446, %v707, 0
        %v727 = vsel %vm446, %v708, 0
        %729 = vmatprep.subr.bf16.mxu0 0
        %730 = vmatpush1.bf16.msra.mxu0 0
        %731 = vmatprep.subr.bf16.mxu0 0
        %732 = vmatpush1.bf16.msra.mxu0 0
        %733 = vmatprep.subr.bf16.mxu0 0
        %734 = vmatpush1.bf16.msra.mxu0 0
        %735 = vmatprep.subr.bf16.mxu0 0
        %736 = vmatpush1.bf16.msra.mxu0 0
        %737 = vmatprep.subr.bf16.mxu0 0
        %738 = vmatpush1.bf16.msra.mxu0 0
        %739 = vmatprep.subr.bf16.mxu0 0
        %740 = vmatpush1.bf16.msra.mxu0 0
        %741 = vmatprep.subr.bf16.mxu0 0
        %742 = vmatpush1.bf16.msra.mxu0 0
        %743 = vmatprep.subr.bf16.mxu0 0
        %744 = vmatpush1.bf16.msra.mxu0 %v715
        %745 = vmatprep.subr.bf16.mxu0 0
        %746 = vmatpush2.bf16.msra.mxu0 0
        %747 = vmatprep.subr.bf16.mxu0 0
        %748 = vmatpush2.bf16.msra.mxu0 0
        %749 = vmatprep.subr.bf16.mxu0 0
        %750 = vmatpush2.bf16.msra.mxu0 0
        %751 = vmatprep.subr.bf16.mxu0 0
        %752 = vmatpush2.bf16.msra.mxu0 0
        %753 = vmatprep.subr.bf16.mxu0 0
        %754 = vmatpush2.bf16.msra.mxu0 0
        %755 = vmatprep.subr.bf16.mxu0 0
        %756 = vmatpush2.bf16.msra.mxu0 0
        %757 = vmatprep.subr.bf16.mxu0 0
        %758 = vmatpush2.bf16.msra.mxu0 0
        %759 = vmatprep.subr.bf16.mxu0 0
        %760 = vmatpush2.bf16.msra.mxu0 0
        %761 = vmatprep.mubr.bf16.mxu0 0
        %762 = vmatmul.mubr.bf16.gmra.mxu0 %v718
        %v763 = vpop.f32.mrf.mxu0
        %v764 = vadd.f32 0.0, %v763
        %v765 = vpop.f32.mrf.mxu0
        %v766 = vpop.f32.mrf.mxu0
        %v767 = vadd.f32 0.0, %v766
        %v768 = vpop.f32.mrf.mxu0
        %769 = vmatprep.mubr.bf16.mxu0 0
        %770 = vmatmul.mubr.bf16.gmra.mxu0 %v721
        %v771 = vpop.f32.mrf.mxu0
        %v772 = vadd.f32 0.0, %v771
        %v773 = vpop.f32.mrf.mxu0
        %v774 = vpop.f32.mrf.mxu0
        %v775 = vadd.f32 0.0, %v774
        %v776 = vpop.f32.mrf.mxu0
        %777 = vmatprep.mubr.bf16.mxu0 0
        %778 = vmatmul.mubr.bf16.gmra.mxu0 %v724
        %v779 = vpop.f32.mrf.mxu0
        %v780 = vadd.f32 0.0, %v779
        %v781 = vpop.f32.mrf.mxu0
        %v782 = vpop.f32.mrf.mxu0
        %v783 = vadd.f32 0.0, %v782
        %v784 = vpop.f32.mrf.mxu0
        %785 = vmatprep.mubr.bf16.mxu0 0
        %786 = vmatmul.mubr.bf16.gmra.mxu0 %v727
        %v787 = vpop.f32.mrf.mxu0
        %v788 = vadd.f32 0.0, %v787
        %v789 = vpop.f32.mrf.mxu0
        %v790 = vpop.f32.mrf.mxu0
        %v791 = vadd.f32 0.0, %v790
        %v792 = vpop.f32.mrf.mxu0
        %793 = vdwg.mxu0
        %v794 = vadd.f32 %v643, %v764
        %v795 = vadd.f32 %v646, %v767
        %v796 = vadd.f32 %v651, %v772
        %v797 = vadd.f32 %v654, %v775
        %v798 = vadd.f32 %v659, %v780
        %v799 = vadd.f32 %v662, %v783
        %v800 = vadd.f32 %v667, %v788
        %v801 = vadd.f32 %v670, %v791
        %v802 = vld [vmem:[#allocation2 + $0x8] sm:$0xff]
        %v803 = vld [vmem:[#allocation2 + $0x10] sm:$0xff]
        %v804 = vld [vmem:[#allocation2 + $0x18] sm:$0xff]
        %v805 = vld [vmem:[#allocation2 + $0x20] sm:$0xff]
        %v806 = vld [vmem:[#allocation2 + $0x28] sm:$0xff]
        %v807 = vld [vmem:[#allocation2 + $0x30] sm:$0xff]
        %v808 = vld [vmem:[#allocation2 + $0x38] sm:$0xff]
        %v809 = vld [vmem:[#allocation2 + $0x40] sm:$0xff]
        %v810 = vsel %vm471, %v802, 0.0
        %v811 = vsel %vm472, %v803, 0.0
        %v812 = vsel %vm473, %v804, 0.0
        %v813 = vsel %vm474, %v805, 0.0
        %v814 = vsel %vm475, %v806, 0.0
        %v815 = vsel %vm476, %v807, 0.0
        %v816 = vsel %vm477, %v808, 0.0
        %v817 = vsel %vm478, %v809, 0.0
        %v818 = vpack.c.bf16 %v811, %v810
        %v819 = vpack.c.bf16 %v813, %v812
        %v820 = vpack.c.bf16 %v815, %v814
        %v821 = vpack.c.bf16 %v817, %v816
        %v822 = vld [vmem:[%s3 + $0x18] sm:$0xf]
        %v823 = vld [vmem:[%s3 + $0x1c] sm:$0xf]
        %v826 = vunpack.c.l.b16 %v822
        %v827 = vunpack.c.l.b16 %v823
        %v828 = vpack.c.b16 %v827, %v826
        %v831 = vsel %vm446, %v818, 0
        %v834 = vsel %vm446, %v819, 0
        %v837 = vsel %vm446, %v820, 0
        %v840 = vsel %vm446, %v821, 0
        %842 = vmatprep.subr.bf16.mxu0 0
        %843 = vmatpush1.bf16.msra.mxu0 0
        %844 = vmatprep.subr.bf16.mxu0 0
        %845 = vmatpush1.bf16.msra.mxu0 0
        %846 = vmatprep.subr.bf16.mxu0 0
        %847 = vmatpush1.bf16.msra.mxu0 0
        %848 = vmatprep.subr.bf16.mxu0 0
        %849 = vmatpush1.bf16.msra.mxu0 0
        %850 = vmatprep.subr.bf16.mxu0 0
        %851 = vmatpush1.bf16.msra.mxu0 0
        %852 = vmatprep.subr.bf16.mxu0 0
        %853 = vmatpush1.bf16.msra.mxu0 0
        %854 = vmatprep.subr.bf16.mxu0 0
        %855 = vmatpush1.bf16.msra.mxu0 0
        %856 = vmatprep.subr.bf16.mxu0 0
        %857 = vmatpush1.bf16.msra.mxu0 %v828
        %858 = vmatprep.subr.bf16.mxu0 0
        %859 = vmatpush2.bf16.msra.mxu0 0
        %860 = vmatprep.subr.bf16.mxu0 0
        %861 = vmatpush2.bf16.msra.mxu0 0
        %862 = vmatprep.subr.bf16.mxu0 0
        %863 = vmatpush2.bf16.msra.mxu0 0
        %864 = vmatprep.subr.bf16.mxu0 0
        %865 = vmatpush2.bf16.msra.mxu0 0
        %866 = vmatprep.subr.bf16.mxu0 0
        %867 = vmatpush2.bf16.msra.mxu0 0
        %868 = vmatprep.subr.bf16.mxu0 0
        %869 = vmatpush2.bf16.msra.mxu0 0
        %870 = vmatprep.subr.bf16.mxu0 0
        %871 = vmatpush2.bf16.msra.mxu0 0
        %872 = vmatprep.subr.bf16.mxu0 0
        %873 = vmatpush2.bf16.msra.mxu0 0
        %874 = vmatprep.mubr.bf16.mxu0 0
        %875 = vmatmul.mubr.bf16.gmra.mxu0 %v831
        %v876 = vpop.f32.mrf.mxu0
        %v877 = vadd.f32 0.0, %v876
        %v878 = vpop.f32.mrf.mxu0
        %v879 = vpop.f32.mrf.mxu0
        %v880 = vadd.f32 0.0, %v879
        %v881 = vpop.f32.mrf.mxu0
        %882 = vmatprep.mubr.bf16.mxu0 0
        %883 = vmatmul.mubr.bf16.gmra.mxu0 %v834
        %v884 = vpop.f32.mrf.mxu0
        %v885 = vadd.f32 0.0, %v884
        %v886 = vpop.f32.mrf.mxu0
        %v887 = vpop.f32.mrf.mxu0
        %v888 = vadd.f32 0.0, %v887
        %v889 = vpop.f32.mrf.mxu0
        %890 = vmatprep.mubr.bf16.mxu0 0
        %891 = vmatmul.mubr.bf16.gmra.mxu0 %v837
        %v892 = vpop.f32.mrf.mxu0
        %v893 = vadd.f32 0.0, %v892
        %v894 = vpop.f32.mrf.mxu0
        %v895 = vpop.f32.mrf.mxu0
        %v896 = vadd.f32 0.0, %v895
        %v897 = vpop.f32.mrf.mxu0
        %898 = vmatprep.mubr.bf16.mxu0 0
        %899 = vmatmul.mubr.bf16.gmra.mxu0 %v840
        %v900 = vpop.f32.mrf.mxu0
        %v901 = vadd.f32 0.0, %v900
        %v902 = vpop.f32.mrf.mxu0
        %v903 = vpop.f32.mrf.mxu0
        %v904 = vadd.f32 0.0, %v903
        %v905 = vpop.f32.mrf.mxu0
        %906 = vdwg.mxu0
        %v907 = vadd.f32 %v794, %v877
        %v908 = vadd.f32 %v795, %v880
        %v909 = vadd.f32 %v796, %v885
        %v910 = vadd.f32 %v797, %v888
        %v911 = vadd.f32 %v798, %v893
        %v912 = vadd.f32 %v799, %v896
        %v913 = vadd.f32 %v800, %v901
        %v914 = vadd.f32 %v801, %v904
        %v915 = vld [vmem:[#allocation2 + $0x9] sm:$0xff]
        %v916 = vld [vmem:[#allocation2 + $0x11] sm:$0xff]
        %v917 = vld [vmem:[#allocation2 + $0x19] sm:$0xff]
        %v918 = vld [vmem:[#allocation2 + $0x21] sm:$0xff]
        %v919 = vld [vmem:[#allocation2 + $0x29] sm:$0xff]
        %v920 = vld [vmem:[#allocation2 + $0x31] sm:$0xff]
        %v921 = vld [vmem:[#allocation2 + $0x39] sm:$0xff]
        %v922 = vld [vmem:[#allocation2 + $0x41] sm:$0xff]
        %v923 = vpack.c.bf16 %v916, %v915
        %v924 = vpack.c.bf16 %v918, %v917
        %v925 = vpack.c.bf16 %v920, %v919
        %v926 = vpack.c.bf16 %v922, %v921
        %v927 = vld [vmem:[%s3 + $0x20] sm:$0xf]
        %v928 = vld [vmem:[%s3 + $0x24] sm:$0xf]
        %v931 = vunpack.c.l.b16 %v927
        %v932 = vunpack.c.l.b16 %v928
        %v933 = vpack.c.b16 %v932, %v931
        %v936 = vsel %vm446, %v923, 0
        %v939 = vsel %vm446, %v924, 0
        %v942 = vsel %vm446, %v925, 0
        %v945 = vsel %vm446, %v926, 0
        %947 = vmatprep.subr.bf16.mxu0 0
        %948 = vmatpush1.bf16.msra.mxu0 0
        %949 = vmatprep.subr.bf16.mxu0 0
        %950 = vmatpush1.bf16.msra.mxu0 0
        %951 = vmatprep.subr.bf16.mxu0 0
        %952 = vmatpush1.bf16.msra.mxu0 0
        %953 = vmatprep.subr.bf16.mxu0 0
        %954 = vmatpush1.bf16.msra.mxu0 0
        %955 = vmatprep.subr.bf16.mxu0 0
        %956 = vmatpush1.bf16.msra.mxu0 0
        %957 = vmatprep.subr.bf16.mxu0 0
        %958 = vmatpush1.bf16.msra.mxu0 0
        %959 = vmatprep.subr.bf16.mxu0 0
        %960 = vmatpush1.bf16.msra.mxu0 0
        %961 = vmatprep.subr.bf16.mxu0 0
        %962 = vmatpush1.bf16.msra.mxu0 %v933
        %963 = vmatprep.subr.bf16.mxu0 0
        %964 = vmatpush2.bf16.msra.mxu0 0
        %965 = vmatprep.subr.bf16.mxu0 0
        %966 = vmatpush2.bf16.msra.mxu0 0
        %967 = vmatprep.subr.bf16.mxu0 0
        %968 = vmatpush2.bf16.msra.mxu0 0
        %969 = vmatprep.subr.bf16.mxu0 0
        %970 = vmatpush2.bf16.msra.mxu0 0
        %971 = vmatprep.subr.bf16.mxu0 0
        %972 = vmatpush2.bf16.msra.mxu0 0
        %973 = vmatprep.subr.bf16.mxu0 0
        %974 = vmatpush2.bf16.msra.mxu0 0
        %975 = vmatprep.subr.bf16.mxu0 0
        %976 = vmatpush2.bf16.msra.mxu0 0
        %977 = vmatprep.subr.bf16.mxu0 0
        %978 = vmatpush2.bf16.msra.mxu0 0
        %979 = vmatprep.mubr.bf16.mxu0 0
        %980 = vmatmul.mubr.bf16.gmra.mxu0 %v936
        %v981 = vpop.f32.mrf.mxu0
        %v982 = vadd.f32 0.0, %v981
        %v983 = vpop.f32.mrf.mxu0
        %v984 = vpop.f32.mrf.mxu0
        %v985 = vadd.f32 0.0, %v984
        %v986 = vpop.f32.mrf.mxu0
        %987 = vmatprep.mubr.bf16.mxu0 0
        %988 = vmatmul.mubr.bf16.gmra.mxu0 %v939
        %v989 = vpop.f32.mrf.mxu0
        %v990 = vadd.f32 0.0, %v989
        %v991 = vpop.f32.mrf.mxu0
        %v992 = vpop.f32.mrf.mxu0
        %v993 = vadd.f32 0.0, %v992
        %v994 = vpop.f32.mrf.mxu0
        %995 = vmatprep.mubr.bf16.mxu0 0
        %996 = vmatmul.mubr.bf16.gmra.mxu0 %v942
        %v997 = vpop.f32.mrf.mxu0
        %v998 = vadd.f32 0.0, %v997
        %v999 = vpop.f32.mrf.mxu0
        %v1000 = vpop.f32.mrf.mxu0
        %v1001 = vadd.f32 0.0, %v1000
        %v1002 = vpop.f32.mrf.mxu0
        %1003 = vmatprep.mubr.bf16.mxu0 0
        %1004 = vmatmul.mubr.bf16.gmra.mxu0 %v945
        %v1005 = vpop.f32.mrf.mxu0
        %v1006 = vadd.f32 0.0, %v1005
        %v1007 = vpop.f32.mrf.mxu0
        %v1008 = vpop.f32.mrf.mxu0
        %v1009 = vadd.f32 0.0, %v1008
        %v1010 = vpop.f32.mrf.mxu0
        %1011 = vdwg.mxu0
        %v1012 = vadd.f32 %v907, %v982
        %v1013 = vadd.f32 %v908, %v985
        %v1014 = vadd.f32 %v909, %v990
        %v1015 = vadd.f32 %v910, %v993
        %v1016 = vadd.f32 %v911, %v998
        %v1017 = vadd.f32 %v912, %v1001
        %v1018 = vadd.f32 %v913, %v1006
        %v1019 = vadd.f32 %v914, %v1009
        %v1020 = vld [vmem:[#allocation2 + $0xa] sm:$0xff]
        %v1021 = vld [vmem:[#allocation2 + $0x12] sm:$0xff]
        %v1022 = vld [vmem:[#allocation2 + $0x1a] sm:$0xff]
        %v1023 = vld [vmem:[#allocation2 + $0x22] sm:$0xff]
        %v1024 = vld [vmem:[#allocation2 + $0x2a] sm:$0xff]
        %v1025 = vld [vmem:[#allocation2 + $0x32] sm:$0xff]
        %v1026 = vld [vmem:[#allocation2 + $0x3a] sm:$0xff]
        %v1027 = vld [vmem:[#allocation2 + $0x42] sm:$0xff]
        %v1028 = vsel %vm689, %v1020, 0.0
        %v1029 = vsel %vm690, %v1021, 0.0
        %v1030 = vsel %vm691, %v1022, 0.0
        %v1031 = vsel %vm692, %v1023, 0.0
        %v1032 = vsel %vm693, %v1024, 0.0
        %v1033 = vsel %vm694, %v1025, 0.0
        %v1034 = vsel %vm695, %v1026, 0.0
        %v1035 = vsel %vm696, %v1027, 0.0
        %v1036 = vpack.c.bf16 %v1029, %v1028
        %v1037 = vpack.c.bf16 %v1031, %v1030
        %v1038 = vpack.c.bf16 %v1033, %v1032
        %v1039 = vpack.c.bf16 %v1035, %v1034
        %v1040 = vld [vmem:[%s3 + $0x28] sm:$0xf]
        %v1041 = vld [vmem:[%s3 + $0x2c] sm:$0xf]
        %v1044 = vunpack.c.l.b16 %v1040
        %v1045 = vunpack.c.l.b16 %v1041
        %v1046 = vpack.c.b16 %v1045, %v1044
        %v1049 = vsel %vm446, %v1036, 0
        %v1052 = vsel %vm446, %v1037, 0
        %v1055 = vsel %vm446, %v1038, 0
        %v1058 = vsel %vm446, %v1039, 0
        %1060 = vmatprep.subr.bf16.mxu0 0
        %1061 = vmatpush1.bf16.msra.mxu0 0
        %1062 = vmatprep.subr.bf16.mxu0 0
        %1063 = vmatpush1.bf16.msra.mxu0 0
        %1064 = vmatprep.subr.bf16.mxu0 0
        %1065 = vmatpush1.bf16.msra.mxu0 0
        %1066 = vmatprep.subr.bf16.mxu0 0
        %1067 = vmatpush1.bf16.msra.mxu0 0
        %1068 = vmatprep.subr.bf16.mxu0 0
        %1069 = vmatpush1.bf16.msra.mxu0 0
        %1070 = vmatprep.subr.bf16.mxu0 0
        %1071 = vmatpush1.bf16.msra.mxu0 0
        %1072 = vmatprep.subr.bf16.mxu0 0
        %1073 = vmatpush1.bf16.msra.mxu0 0
        %1074 = vmatprep.subr.bf16.mxu0 0
        %1075 = vmatpush1.bf16.msra.mxu0 %v1046
        %1076 = vmatprep.subr.bf16.mxu0 0
        %1077 = vmatpush2.bf16.msra.mxu0 0
        %1078 = vmatprep.subr.bf16.mxu0 0
        %1079 = vmatpush2.bf16.msra.mxu0 0
        %1080 = vmatprep.subr.bf16.mxu0 0
        %1081 = vmatpush2.bf16.msra.mxu0 0
        %1082 = vmatprep.subr.bf16.mxu0 0
        %1083 = vmatpush2.bf16.msra.mxu0 0
        %1084 = vmatprep.subr.bf16.mxu0 0
        %1085 = vmatpush2.bf16.msra.mxu0 0
        %1086 = vmatprep.subr.bf16.mxu0 0
        %1087 = vmatpush2.bf16.msra.mxu0 0
        %1088 = vmatprep.subr.bf16.mxu0 0
        %1089 = vmatpush2.bf16.msra.mxu0 0
        %1090 = vmatprep.subr.bf16.mxu0 0
        %1091 = vmatpush2.bf16.msra.mxu0 0
        %1092 = vmatprep.mubr.bf16.mxu0 0
        %1093 = vmatmul.mubr.bf16.gmra.mxu0 %v1049
        %v1094 = vpop.f32.mrf.mxu0
        %v1095 = vadd.f32 0.0, %v1094
        %v1096 = vpop.f32.mrf.mxu0
        %v1097 = vpop.f32.mrf.mxu0
        %v1098 = vadd.f32 0.0, %v1097
        %v1099 = vpop.f32.mrf.mxu0
        %1100 = vmatprep.mubr.bf16.mxu0 0
        %1101 = vmatmul.mubr.bf16.gmra.mxu0 %v1052
        %v1102 = vpop.f32.mrf.mxu0
        %v1103 = vadd.f32 0.0, %v1102
        %v1104 = vpop.f32.mrf.mxu0
        %v1105 = vpop.f32.mrf.mxu0
        %v1106 = vadd.f32 0.0, %v1105
        %v1107 = vpop.f32.mrf.mxu0
        %1108 = vmatprep.mubr.bf16.mxu0 0
        %1109 = vmatmul.mubr.bf16.gmra.mxu0 %v1055
        %v1110 = vpop.f32.mrf.mxu0
        %v1111 = vadd.f32 0.0, %v1110
        %v1112 = vpop.f32.mrf.mxu0
        %v1113 = vpop.f32.mrf.mxu0
        %v1114 = vadd.f32 0.0, %v1113
        %v1115 = vpop.f32.mrf.mxu0
        %1116 = vmatprep.mubr.bf16.mxu0 0
        %1117 = vmatmul.mubr.bf16.gmra.mxu0 %v1058
        %v1118 = vpop.f32.mrf.mxu0
        %v1119 = vadd.f32 0.0, %v1118
        %v1120 = vpop.f32.mrf.mxu0
        %v1121 = vpop.f32.mrf.mxu0
        %v1122 = vadd.f32 0.0, %v1121
        %v1123 = vpop.f32.mrf.mxu0
        %1124 = vdwg.mxu0
        %v1125 = vadd.f32 %v1012, %v1095
        %v1126 = vadd.f32 %v1013, %v1098
        %v1127 = vadd.f32 %v1014, %v1103
        %v1128 = vadd.f32 %v1015, %v1106
        %v1129 = vadd.f32 %v1016, %v1111
        %v1130 = vadd.f32 %v1017, %v1114
        %v1131 = vadd.f32 %v1018, %v1119
        %v1132 = vadd.f32 %v1019, %v1122
        %v1133 = vld [vmem:[#allocation2 + $0x10] sm:$0xff]
        %v1134 = vld [vmem:[#allocation2 + $0x18] sm:$0xff]
        %v1135 = vld [vmem:[#allocation2 + $0x20] sm:$0xff]
        %v1136 = vld [vmem:[#allocation2 + $0x28] sm:$0xff]
        %v1137 = vld [vmem:[#allocation2 + $0x30] sm:$0xff]
        %v1138 = vld [vmem:[#allocation2 + $0x38] sm:$0xff]
        %v1139 = vld [vmem:[#allocation2 + $0x40] sm:$0xff]
        %v1140 = vld [vmem:[#allocation2 + $0x48] sm:$0xff]
        %v1141 = vsel %vm471, %v1133, 0.0
        %v1142 = vsel %vm472, %v1134, 0.0
        %v1143 = vsel %vm473, %v1135, 0.0
        %v1144 = vsel %vm474, %v1136, 0.0
        %v1145 = vsel %vm475, %v1137, 0.0
        %v1146 = vsel %vm476, %v1138, 0.0
        %v1147 = vsel %vm477, %v1139, 0.0
        %v1148 = vsel %vm478, %v1140, 0.0
        %v1149 = vpack.c.bf16 %v1142, %v1141
        %v1150 = vpack.c.bf16 %v1144, %v1143
        %v1151 = vpack.c.bf16 %v1146, %v1145
        %v1152 = vpack.c.bf16 %v1148, %v1147
        %v1153 = vld [vmem:[%s3 + $0x30] sm:$0xf]
        %v1154 = vld [vmem:[%s3 + $0x34] sm:$0xf]
        %v1157 = vunpack.c.l.b16 %v1153
        %v1158 = vunpack.c.l.b16 %v1154
        %v1159 = vpack.c.b16 %v1158, %v1157
        %v1162 = vsel %vm446, %v1149, 0
        %v1165 = vsel %vm446, %v1150, 0
        %v1168 = vsel %vm446, %v1151, 0
        %v1171 = vsel %vm446, %v1152, 0
        %1173 = vmatprep.subr.bf16.mxu0 0
        %1174 = vmatpush1.bf16.msra.mxu0 0
        %1175 = vmatprep.subr.bf16.mxu0 0
        %1176 = vmatpush1.bf16.msra.mxu0 0
        %1177 = vmatprep.subr.bf16.mxu0 0
        %1178 = vmatpush1.bf16.msra.mxu0 0
        %1179 = vmatprep.subr.bf16.mxu0 0
        %1180 = vmatpush1.bf16.msra.mxu0 0
        %1181 = vmatprep.subr.bf16.mxu0 0
        %1182 = vmatpush1.bf16.msra.mxu0 0
        %1183 = vmatprep.subr.bf16.mxu0 0
        %1184 = vmatpush1.bf16.msra.mxu0 0
        %1185 = vmatprep.subr.bf16.mxu0 0
        %1186 = vmatpush1.bf16.msra.mxu0 0
        %1187 = vmatprep.subr.bf16.mxu0 0
        %1188 = vmatpush1.bf16.msra.mxu0 %v1159
        %1189 = vmatprep.subr.bf16.mxu0 0
        %1190 = vmatpush2.bf16.msra.mxu0 0
        %1191 = vmatprep.subr.bf16.mxu0 0
        %1192 = vmatpush2.bf16.msra.mxu0 0
        %1193 = vmatprep.subr.bf16.mxu0 0
        %1194 = vmatpush2.bf16.msra.mxu0 0
        %1195 = vmatprep.subr.bf16.mxu0 0
        %1196 = vmatpush2.bf16.msra.mxu0 0
        %1197 = vmatprep.subr.bf16.mxu0 0
        %1198 = vmatpush2.bf16.msra.mxu0 0
        %1199 = vmatprep.subr.bf16.mxu0 0
        %1200 = vmatpush2.bf16.msra.mxu0 0
        %1201 = vmatprep.subr.bf16.mxu0 0
        %1202 = vmatpush2.bf16.msra.mxu0 0
        %1203 = vmatprep.subr.bf16.mxu0 0
        %1204 = vmatpush2.bf16.msra.mxu0 0
        %1205 = vmatprep.mubr.bf16.mxu0 0
        %1206 = vmatmul.mubr.bf16.gmra.mxu0 %v1162
        %v1207 = vpop.f32.mrf.mxu0
        %v1208 = vadd.f32 0.0, %v1207
        %v1209 = vpop.f32.mrf.mxu0
        %v1210 = vpop.f32.mrf.mxu0
        %v1211 = vadd.f32 0.0, %v1210
        %v1212 = vpop.f32.mrf.mxu0
        %1213 = vmatprep.mubr.bf16.mxu0 0
        %1214 = vmatmul.mubr.bf16.gmra.mxu0 %v1165
        %v1215 = vpop.f32.mrf.mxu0
        %v1216 = vadd.f32 0.0, %v1215
        %v1217 = vpop.f32.mrf.mxu0
        %v1218 = vpop.f32.mrf.mxu0
        %v1219 = vadd.f32 0.0, %v1218
        %v1220 = vpop.f32.mrf.mxu0
        %1221 = vmatprep.mubr.bf16.mxu0 0
        %1222 = vmatmul.mubr.bf16.gmra.mxu0 %v1168
        %v1223 = vpop.f32.mrf.mxu0
        %v1224 = vadd.f32 0.0, %v1223
        %v1225 = vpop.f32.mrf.mxu0
        %v1226 = vpop.f32.mrf.mxu0
        %v1227 = vadd.f32 0.0, %v1226
        %v1228 = vpop.f32.mrf.mxu0
        %1229 = vmatprep.mubr.bf16.mxu0 0
        %1230 = vmatmul.mubr.bf16.gmra.mxu0 %v1171
        %v1231 = vpop.f32.mrf.mxu0
        %v1232 = vadd.f32 0.0, %v1231
        %v1233 = vpop.f32.mrf.mxu0
        %v1234 = vpop.f32.mrf.mxu0
        %v1235 = vadd.f32 0.0, %v1234
        %v1236 = vpop.f32.mrf.mxu0
        %1237 = vdwg.mxu0
        %v1238 = vadd.f32 %v1125, %v1208
        %v1239 = vadd.f32 %v1126, %v1211
        %v1240 = vadd.f32 %v1127, %v1216
        %v1241 = vadd.f32 %v1128, %v1219
        %v1242 = vadd.f32 %v1129, %v1224
        %v1243 = vadd.f32 %v1130, %v1227
        %v1244 = vadd.f32 %v1131, %v1232
        %v1245 = vadd.f32 %v1132, %v1235
        %v1246 = vld [vmem:[#allocation2 + $0x11] sm:$0xff]
        %v1247 = vld [vmem:[#allocation2 + $0x19] sm:$0xff]
        %v1248 = vld [vmem:[#allocation2 + $0x21] sm:$0xff]
        %v1249 = vld [vmem:[#allocation2 + $0x29] sm:$0xff]
        %v1250 = vld [vmem:[#allocation2 + $0x31] sm:$0xff]
        %v1251 = vld [vmem:[#allocation2 + $0x39] sm:$0xff]
        %v1252 = vld [vmem:[#allocation2 + $0x41] sm:$0xff]
        %v1253 = vld [vmem:[#allocation2 + $0x49] sm:$0xff]
        %v1254 = vpack.c.bf16 %v1247, %v1246
        %v1255 = vpack.c.bf16 %v1249, %v1248
        %v1256 = vpack.c.bf16 %v1251, %v1250
        %v1257 = vpack.c.bf16 %v1253, %v1252
        %v1258 = vld [vmem:[%s3 + $0x38] sm:$0xf]
        %v1259 = vld [vmem:[%s3 + $0x3c] sm:$0xf]
        %v1262 = vunpack.c.l.b16 %v1258
        %v1263 = vunpack.c.l.b16 %v1259
        %v1264 = vpack.c.b16 %v1263, %v1262
        %v1267 = vsel %vm446, %v1254, 0
        %v1270 = vsel %vm446, %v1255, 0
        %v1273 = vsel %vm446, %v1256, 0
        %v1276 = vsel %vm446, %v1257, 0
        %1278 = vmatprep.subr.bf16.mxu0 0
        %1279 = vmatpush1.bf16.msra.mxu0 0
        %1280 = vmatprep.subr.bf16.mxu0 0
        %1281 = vmatpush1.bf16.msra.mxu0 0
        %1282 = vmatprep.subr.bf16.mxu0 0
        %1283 = vmatpush1.bf16.msra.mxu0 0
        %1284 = vmatprep.subr.bf16.mxu0 0
        %1285 = vmatpush1.bf16.msra.mxu0 0
        %1286 = vmatprep.subr.bf16.mxu0 0
        %1287 = vmatpush1.bf16.msra.mxu0 0
        %1288 = vmatprep.subr.bf16.mxu0 0
        %1289 = vmatpush1.bf16.msra.mxu0 0
        %1290 = vmatprep.subr.bf16.mxu0 0
        %1291 = vmatpush1.bf16.msra.mxu0 0
        %1292 = vmatprep.subr.bf16.mxu0 0
        %1293 = vmatpush1.bf16.msra.mxu0 %v1264
        %1294 = vmatprep.subr.bf16.mxu0 0
        %1295 = vmatpush2.bf16.msra.mxu0 0
        %1296 = vmatprep.subr.bf16.mxu0 0
        %1297 = vmatpush2.bf16.msra.mxu0 0
        %1298 = vmatprep.subr.bf16.mxu0 0
        %1299 = vmatpush2.bf16.msra.mxu0 0
        %1300 = vmatprep.subr.bf16.mxu0 0
        %1301 = vmatpush2.bf16.msra.mxu0 0
        %1302 = vmatprep.subr.bf16.mxu0 0
        %1303 = vmatpush2.bf16.msra.mxu0 0
        %1304 = vmatprep.subr.bf16.mxu0 0
        %1305 = vmatpush2.bf16.msra.mxu0 0
        %1306 = vmatprep.subr.bf16.mxu0 0
        %1307 = vmatpush2.bf16.msra.mxu0 0
        %1308 = vmatprep.subr.bf16.mxu0 0
        %1309 = vmatpush2.bf16.msra.mxu0 0
        %1310 = vmatprep.mubr.bf16.mxu0 0
        %1311 = vmatmul.mubr.bf16.gmra.mxu0 %v1267
        %v1312 = vpop.f32.mrf.mxu0
        %v1313 = vadd.f32 0.0, %v1312
        %v1314 = vpop.f32.mrf.mxu0
        %v1315 = vpop.f32.mrf.mxu0
        %v1316 = vadd.f32 0.0, %v1315
        %v1317 = vpop.f32.mrf.mxu0
        %1318 = vmatprep.mubr.bf16.mxu0 0
        %1319 = vmatmul.mubr.bf16.gmra.mxu0 %v1270
        %v1320 = vpop.f32.mrf.mxu0
        %v1321 = vadd.f32 0.0, %v1320
        %v1322 = vpop.f32.mrf.mxu0
        %v1323 = vpop.f32.mrf.mxu0
        %v1324 = vadd.f32 0.0, %v1323
        %v1325 = vpop.f32.mrf.mxu0
        %1326 = vmatprep.mubr.bf16.mxu0 0
        %1327 = vmatmul.mubr.bf16.gmra.mxu0 %v1273
        %v1328 = vpop.f32.mrf.mxu0
        %v1329 = vadd.f32 0.0, %v1328
        %v1330 = vpop.f32.mrf.mxu0
        %v1331 = vpop.f32.mrf.mxu0
        %v1332 = vadd.f32 0.0, %v1331
        %v1333 = vpop.f32.mrf.mxu0
        %1334 = vmatprep.mubr.bf16.mxu0 0
        %1335 = vmatmul.mubr.bf16.gmra.mxu0 %v1276
        %v1336 = vpop.f32.mrf.mxu0
        %v1337 = vadd.f32 0.0, %v1336
        %v1338 = vpop.f32.mrf.mxu0
        %v1339 = vpop.f32.mrf.mxu0
        %v1340 = vadd.f32 0.0, %v1339
        %v1341 = vpop.f32.mrf.mxu0
        %1342 = vdwg.mxu0
        %v1343 = vadd.f32 %v1238, %v1313
        %v1344 = vadd.f32 %v1239, %v1316
        %v1345 = vadd.f32 %v1240, %v1321
        %v1346 = vadd.f32 %v1241, %v1324
        %v1347 = vadd.f32 %v1242, %v1329
        %v1348 = vadd.f32 %v1243, %v1332
        %v1349 = vadd.f32 %v1244, %v1337
        %v1350 = vadd.f32 %v1245, %v1340
        %v1351 = vld [vmem:[#allocation2 + $0x12] sm:$0xff]
        %v1352 = vld [vmem:[#allocation2 + $0x1a] sm:$0xff]
        %v1353 = vld [vmem:[#allocation2 + $0x22] sm:$0xff]
        %v1354 = vld [vmem:[#allocation2 + $0x2a] sm:$0xff]
        %v1355 = vld [vmem:[#allocation2 + $0x32] sm:$0xff]
        %v1356 = vld [vmem:[#allocation2 + $0x3a] sm:$0xff]
        %v1357 = vld [vmem:[#allocation2 + $0x42] sm:$0xff]
        %v1358 = vld [vmem:[#allocation2 + $0x4a] sm:$0xff]
        %v1359 = vsel %vm689, %v1351, 0.0
        %v1360 = vsel %vm690, %v1352, 0.0
        %v1361 = vsel %vm691, %v1353, 0.0
        %v1362 = vsel %vm692, %v1354, 0.0
        %v1363 = vsel %vm693, %v1355, 0.0
        %v1364 = vsel %vm694, %v1356, 0.0
        %v1365 = vsel %vm695, %v1357, 0.0
        %v1366 = vsel %vm696, %v1358, 0.0
        %v1367 = vpack.c.bf16 %v1360, %v1359
        %v1368 = vpack.c.bf16 %v1362, %v1361
        %v1369 = vpack.c.bf16 %v1364, %v1363
        %v1370 = vpack.c.bf16 %v1366, %v1365
        %v1371 = vld [vmem:[%s3 + $0x40] sm:$0xf]
        %v1372 = vld [vmem:[%s3 + $0x44] sm:$0xf]
        %v1375 = vunpack.c.l.b16 %v1371
        %v1376 = vunpack.c.l.b16 %v1372
        %v1377 = vpack.c.b16 %v1376, %v1375
        %v1380 = vsel %vm446, %v1367, 0
        %v1383 = vsel %vm446, %v1368, 0
        %v1386 = vsel %vm446, %v1369, 0
        %v1389 = vsel %vm446, %v1370, 0
        %1391 = vmatprep.subr.bf16.mxu0 0
        %1392 = vmatpush1.bf16.msra.mxu0 0
        %1393 = vmatprep.subr.bf16.mxu0 0
        %1394 = vmatpush1.bf16.msra.mxu0 0
        %1395 = vmatprep.subr.bf16.mxu0 0
        %1396 = vmatpush1.bf16.msra.mxu0 0
        %1397 = vmatprep.subr.bf16.mxu0 0
        %1398 = vmatpush1.bf16.msra.mxu0 0
        %1399 = vmatprep.subr.bf16.mxu0 0
        %1400 = vmatpush1.bf16.msra.mxu0 0
        %1401 = vmatprep.subr.bf16.mxu0 0
        %1402 = vmatpush1.bf16.msra.mxu0 0
        %1403 = vmatprep.subr.bf16.mxu0 0
        %1404 = vmatpush1.bf16.msra.mxu0 0
        %1405 = vmatprep.subr.bf16.mxu0 0
        %1406 = vmatpush1.bf16.msra.mxu0 %v1377
        %1407 = vmatprep.subr.bf16.mxu0 0
        %1408 = vmatpush2.bf16.msra.mxu0 0
        %1409 = vmatprep.subr.bf16.mxu0 0
        %1410 = vmatpush2.bf16.msra.mxu0 0
        %1411 = vmatprep.subr.bf16.mxu0 0
        %1412 = vmatpush2.bf16.msra.mxu0 0
        %1413 = vmatprep.subr.bf16.mxu0 0
        %1414 = vmatpush2.bf16.msra.mxu0 0
        %1415 = vmatprep.subr.bf16.mxu0 0
        %1416 = vmatpush2.bf16.msra.mxu0 0
        %1417 = vmatprep.subr.bf16.mxu0 0
        %1418 = vmatpush2.bf16.msra.mxu0 0
        %1419 = vmatprep.subr.bf16.mxu0 0
        %1420 = vmatpush2.bf16.msra.mxu0 0
        %1421 = vmatprep.subr.bf16.mxu0 0
        %1422 = vmatpush2.bf16.msra.mxu0 0
        %1423 = vmatprep.mubr.bf16.mxu0 0
        %1424 = vmatmul.mubr.bf16.gmra.mxu0 %v1380
        %v1425 = vpop.f32.mrf.mxu0
        %v1426 = vadd.f32 0.0, %v1425
        %v1427 = vpop.f32.mrf.mxu0
        %v1428 = vpop.f32.mrf.mxu0
        %v1429 = vadd.f32 0.0, %v1428
        %v1430 = vpop.f32.mrf.mxu0
        %1431 = vmatprep.mubr.bf16.mxu0 0
        %1432 = vmatmul.mubr.bf16.gmra.mxu0 %v1383
        %v1433 = vpop.f32.mrf.mxu0
        %v1434 = vadd.f32 0.0, %v1433
        %v1435 = vpop.f32.mrf.mxu0
        %v1436 = vpop.f32.mrf.mxu0
        %v1437 = vadd.f32 0.0, %v1436
        %v1438 = vpop.f32.mrf.mxu0
        %1439 = vmatprep.mubr.bf16.mxu0 0
        %1440 = vmatmul.mubr.bf16.gmra.mxu0 %v1386
        %v1441 = vpop.f32.mrf.mxu0
        %v1442 = vadd.f32 0.0, %v1441
        %v1443 = vpop.f32.mrf.mxu0
        %v1444 = vpop.f32.mrf.mxu0
        %v1445 = vadd.f32 0.0, %v1444
        %v1446 = vpop.f32.mrf.mxu0
        %1447 = vmatprep.mubr.bf16.mxu0 0
        %1448 = vmatmul.mubr.bf16.gmra.mxu0 %v1389
        %v1449 = vpop.f32.mrf.mxu0
        %v1450 = vadd.f32 0.0, %v1449
        %v1451 = vpop.f32.mrf.mxu0
        %v1452 = vpop.f32.mrf.mxu0
        %v1453 = vadd.f32 0.0, %v1452
        %v1454 = vpop.f32.mrf.mxu0
        %1455 = vdwg.mxu0
        %v1456 = vadd.f32 %v1343, %v1426
        %v1457 = vadd.f32 %v1344, %v1429
        %v1458 = vadd.f32 %v1345, %v1434
        %v1459 = vadd.f32 %v1346, %v1437
        %v1460 = vadd.f32 %v1347, %v1442
        %v1461 = vadd.f32 %v1348, %v1445
        %v1462 = vadd.f32 %v1349, %v1450
        %v1463 = vadd.f32 %v1350, %v1453
        %v1464 = vlaneseq
        %v1465 = vshrl.u32 %v1464, 7
        %v1466 = vsub.s32 0, %v1465
        %v1467 = vrot.slane %v302, %v1466
        %v1468 = vadd.f32 %v1456, %v1467
        %v1469 = vadd.f32 %v1457, %v1467
        %v1470 = vadd.f32 %v1458, %v1467
        %v1471 = vadd.f32 %v1459, %v1467
        %v1472 = vadd.f32 %v1460, %v1467
        %v1473 = vadd.f32 %v1461, %v1467
        %v1474 = vadd.f32 %v1462, %v1467
        %v1475 = vadd.f32 %v1463, %v1467
        %vm1476 = vcmp.gt.f32.partialorder %v1468, 0.0
        %vm1477 = vcmp.gt.f32.partialorder %v1469, 0.0
        %vm1478 = vcmp.gt.f32.partialorder %v1470, 0.0
        %vm1479 = vcmp.gt.f32.partialorder %v1471, 0.0
        %vm1480 = vcmp.gt.f32.partialorder %v1472, 0.0
        %vm1481 = vcmp.gt.f32.partialorder %v1473, 0.0
        %vm1482 = vcmp.gt.f32.partialorder %v1474, 0.0
        %vm1483 = vcmp.gt.f32.partialorder %v1475, 0.0
        %v1484 = vmin.f32 %v1468, 0.0
        %v1485 = vmin.f32 %v1469, 0.0
        %v1486 = vmin.f32 %v1470, 0.0
        %v1487 = vmin.f32 %v1471, 0.0
        %v1488 = vmin.f32 %v1472, 0.0
        %v1489 = vmin.f32 %v1473, 0.0
        %v1490 = vmin.f32 %v1474, 0.0
        %v1491 = vmin.f32 %v1475, 0.0
        %v1492 = vmul.f32 %v1484, 1.442695
        %v1493 = vpow.pop %v1492
        %v1494 = vmul.f32 %v1485, 1.442695
        %v1495 = vpow.pop %v1494
        %v1496 = vmul.f32 %v1486, 1.442695
        %v1497 = vpow.pop %v1496
        %v1498 = vmul.f32 %v1487, 1.442695
        %v1499 = vpow.pop %v1498
        %v1500 = vmul.f32 %v1488, 1.442695
        %v1501 = vpow.pop %v1500
        %v1502 = vmul.f32 %v1489, 1.442695
        %v1503 = vpow.pop %v1502
        %v1504 = vmul.f32 %v1490, 1.442695
        %v1505 = vpow.pop %v1504
        %v1506 = vmul.f32 %v1491, 1.442695
        %v1507 = vpow.pop %v1506
        %v1508 = vsub.f32 %v1493, 1.0
        %v1509 = vsub.f32 %v1495, 1.0
        %v1510 = vsub.f32 %v1497, 1.0
        %v1511 = vsub.f32 %v1499, 1.0
        %v1512 = vsub.f32 %v1501, 1.0
        %v1513 = vsub.f32 %v1503, 1.0
        %v1514 = vsub.f32 %v1505, 1.0
        %v1515 = vsub.f32 %v1507, 1.0
        %v1516 = vsel %vm1476, %v1468, %v1508
        %v1517 = vsel %vm1477, %v1469, %v1509
        %v1518 = vsel %vm1478, %v1470, %v1510
        %v1519 = vsel %vm1479, %v1471, %v1511
        %v1520 = vsel %vm1480, %v1472, %v1512
        %v1521 = vsel %vm1481, %v1473, %v1513
        %v1522 = vsel %vm1482, %v1474, %v1514
        %v1523 = vsel %vm1483, %v1475, %v1515
        %1524 = vst.msk [vmem:[#allocation2] sm:$0xff] %vm433, 0.0
        %1525 = vst.msk [vmem:[#allocation2 + $0x8] sm:$0xff] %vm433, 0.0
        %1526 = vst.msk [vmem:[#allocation2 + $0x10] sm:$0xff] %vm433, 0.0
        %1527 = vst.msk [vmem:[#allocation2 + $0x18] sm:$0xff] %vm433, 0.0
        %1528 = vst.msk [vmem:[#allocation2 + $0x20] sm:$0xff] %vm433, 0.0
        %1529 = vst.msk [vmem:[#allocation2 + $0x28] sm:$0xff] %vm433, 0.0
        %1530 = vst.msk [vmem:[#allocation2 + $0x30] sm:$0xff] %vm433, 0.0
        %1531 = vst.msk [vmem:[#allocation2 + $0x38] sm:$0xff] %vm433, 0.0
        %1532 = vst.msk [vmem:[#allocation2 + $0x40] sm:$0xff] %vm433, 0.0
        %1533 = vst.msk [vmem:[#allocation2 + $0x48] sm:$0xff] %vm433, 0.0
        %1534 = vst.msk [vmem:[#allocation2 + $0x50] sm:$0x3] %vm444, 0.0
        %1535 = vst.msk [vmem:[#allocation2 + $0x9] sm:$0xff] %vm433, %v1516
        %1536 = vst.msk [vmem:[#allocation2 + $0x11] sm:$0xff] %vm433, %v1517
        %1537 = vst.msk [vmem:[#allocation2 + $0x19] sm:$0xff] %vm433, %v1518
        %1538 = vst.msk [vmem:[#allocation2 + $0x21] sm:$0xff] %vm433, %v1519
        %1539 = vst.msk [vmem:[#allocation2 + $0x29] sm:$0xff] %vm433, %v1520
        %1540 = vst.msk [vmem:[#allocation2 + $0x31] sm:$0xff] %vm433, %v1521
        %1541 = vst.msk [vmem:[#allocation2 + $0x39] sm:$0xff] %vm433, %v1522
        %1542 = vst.msk [vmem:[#allocation2 + $0x41] sm:$0xff] %vm433, %v1523
        %v1543 = vld [vmem:[#allocation2] sm:$0xff]
        %v1544 = vld [vmem:[#allocation2 + $0x8] sm:$0xff]
        %v1545 = vld [vmem:[#allocation2 + $0x10] sm:$0xff]
        %v1546 = vld [vmem:[#allocation2 + $0x18] sm:$0xff]
        %v1547 = vld [vmem:[#allocation2 + $0x20] sm:$0xff]
        %v1548 = vld [vmem:[#allocation2 + $0x28] sm:$0xff]
        %v1549 = vld [vmem:[#allocation2 + $0x30] sm:$0xff]
        %v1550 = vld [vmem:[#allocation2 + $0x38] sm:$0xff]
        %v1551 = vsel %vm471, %v1543, 0.0
        %v1552 = vsel %vm472, %v1544, 0.0
        %v1553 = vsel %vm473, %v1545, 0.0
        %v1554 = vsel %vm474, %v1546, 0.0
        %v1555 = vsel %vm475, %v1547, 0.0
        %v1556 = vsel %vm476, %v1548, 0.0
        %v1557 = vsel %vm477, %v1549, 0.0
        %v1558 = vsel %vm478, %v1550, 0.0
        %v1559 = vpack.c.bf16 %v1552, %v1551
        %v1560 = vpack.c.bf16 %v1554, %v1553
        %v1561 = vpack.c.bf16 %v1556, %v1555
        %v1562 = vpack.c.bf16 %v1558, %v1557
        %v1563 = vld [vmem:[%s3 + $0x48] sm:$0xf]
        %v1564 = vld [vmem:[%s3 + $0x4c] sm:$0xf]
        %v1565 = vld [vmem:[%s3 + $0x50] sm:$0xf]
        %v1566 = vld [vmem:[%s3 + $0x54] sm:$0xf]
        %v1567 = vld [vmem:[#allocation2 + $0x1] sm:$0xff]
        %v1568 = vld [vmem:[#allocation2 + $0x9] sm:$0xff]
        %v1569 = vld [vmem:[#allocation2 + $0x11] sm:$0xff]
        %v1570 = vld [vmem:[#allocation2 + $0x19] sm:$0xff]
        %v1571 = vld [vmem:[#allocation2 + $0x21] sm:$0xff]
        %v1572 = vld [vmem:[#allocation2 + $0x29] sm:$0xff]
        %v1573 = vld [vmem:[#allocation2 + $0x31] sm:$0xff]
        %v1574 = vld [vmem:[#allocation2 + $0x39] sm:$0xff]
        %v1575 = vpack.c.bf16 %v1568, %v1567
        %v1576 = vpack.c.bf16 %v1570, %v1569
        %v1577 = vpack.c.bf16 %v1572, %v1571
        %v1578 = vpack.c.bf16 %v1574, %v1573
        %v1579 = vld [vmem:[%s3 + $0x58] sm:$0xf]
        %v1580 = vld [vmem:[%s3 + $0x5c] sm:$0xf]
        %v1581 = vld [vmem:[%s3 + $0x60] sm:$0xf]
        %v1582 = vld [vmem:[%s3 + $0x64] sm:$0xf]
        %v1587 = vunpack.c.l.b16 %v1579
        %v1588 = vunpack.c.l.b16 %v1580
        %v1589 = vunpack.c.l.b16 %v1581
        %v1590 = vunpack.c.l.b16 %v1582
        %v1591 = vpack.c.b16 %v1588, %v1587
        %v1592 = vpack.c.b16 %v1590, %v1589
        %v1596 = vsel %vm433, %v1575, 0
        %v1599 = vsel %vm433, %v1576, 0
        %v1602 = vsel %vm433, %v1577, 0
        %v1605 = vsel %vm433, %v1578, 0
        %1607 = vmatprep.subr.bf16.mxu0 0
        %1608 = vmatpush1.bf16.msra.mxu0 0
        %1609 = vmatprep.subr.bf16.mxu0 0
        %1610 = vmatpush1.bf16.msra.mxu0 0
        %1611 = vmatprep.subr.bf16.mxu0 0
        %1612 = vmatpush1.bf16.msra.mxu0 0
        %1613 = vmatprep.subr.bf16.mxu0 0
        %1614 = vmatpush1.bf16.msra.mxu0 0
        %1615 = vmatprep.subr.bf16.mxu0 0
        %1616 = vmatpush1.bf16.msra.mxu0 0
        %1617 = vmatprep.subr.bf16.mxu0 0
        %1618 = vmatpush1.bf16.msra.mxu0 0
        %1619 = vmatprep.subr.bf16.mxu0 0
        %1620 = vmatpush1.bf16.msra.mxu0 %v1592
        %1621 = vmatprep.subr.bf16.mxu0 0
        %1622 = vmatpush1.bf16.msra.mxu0 %v1591
        %1623 = vmatprep.subr.bf16.mxu0 0
        %1624 = vmatpush2.bf16.msra.mxu0 0
        %1625 = vmatprep.subr.bf16.mxu0 0
        %1626 = vmatpush2.bf16.msra.mxu0 0
        %1627 = vmatprep.subr.bf16.mxu0 0
        %1628 = vmatpush2.bf16.msra.mxu0 0
        %1629 = vmatprep.subr.bf16.mxu0 0
        %1630 = vmatpush2.bf16.msra.mxu0 0
        %1631 = vmatprep.subr.bf16.mxu0 0
        %1632 = vmatpush2.bf16.msra.mxu0 0
        %1633 = vmatprep.subr.bf16.mxu0 0
        %1634 = vmatpush2.bf16.msra.mxu0 0
        %1635 = vmatprep.subr.bf16.mxu0 0
        %1636 = vmatpush2.bf16.msra.mxu0 0
        %1637 = vmatprep.subr.bf16.mxu0 0
        %1638 = vmatpush2.bf16.msra.mxu0 0
        %1639 = vmatprep.mubr.bf16.mxu0 0
        %1640 = vmatmul.mubr.bf16.gmra.mxu0 %v1596
        %v1641 = vpop.f32.mrf.mxu0
        %v1642 = vadd.f32 0.0, %v1641
        %v1643 = vpop.f32.mrf.mxu0
        %v1644 = vpop.f32.mrf.mxu0
        %v1645 = vadd.f32 0.0, %v1644
        %v1646 = vpop.f32.mrf.mxu0
        %1647 = vmatprep.mubr.bf16.mxu0 0
        %1648 = vmatmul.mubr.bf16.gmra.mxu0 %v1599
        %v1649 = vpop.f32.mrf.mxu0
        %v1650 = vadd.f32 0.0, %v1649
        %v1651 = vpop.f32.mrf.mxu0
        %v1652 = vpop.f32.mrf.mxu0
        %v1653 = vadd.f32 0.0, %v1652
        %v1654 = vpop.f32.mrf.mxu0
        %1655 = vmatprep.mubr.bf16.mxu0 0
        %1656 = vmatmul.mubr.bf16.gmra.mxu0 %v1602
        %v1657 = vpop.f32.mrf.mxu0
        %v1658 = vadd.f32 0.0, %v1657
        %v1659 = vpop.f32.mrf.mxu0
        %v1660 = vpop.f32.mrf.mxu0
        %v1661 = vadd.f32 0.0, %v1660
        %v1662 = vpop.f32.mrf.mxu0
        %1663 = vmatprep.mubr.bf16.mxu0 0
        %1664 = vmatmul.mubr.bf16.gmra.mxu0 %v1605
        %v1665 = vpop.f32.mrf.mxu0
        %v1666 = vadd.f32 0.0, %v1665
        %v1667 = vpop.f32.mrf.mxu0
        %v1668 = vpop.f32.mrf.mxu0
        %v1669 = vadd.f32 0.0, %v1668
        %v1670 = vpop.f32.mrf.mxu0
        %1671 = vdwg.mxu0
        %v1676 = vunpack.c.l.b16 %v1563
        %v1677 = vunpack.c.l.b16 %v1564
        %v1678 = vunpack.c.l.b16 %v1565
        %v1679 = vunpack.c.l.b16 %v1566
        %v1680 = vpack.c.b16 %v1677, %v1676
        %v1681 = vpack.c.b16 %v1679, %v1678
        %v1685 = vsel %vm433, %v1559, 0
        %v1688 = vsel %vm433, %v1560, 0
        %v1691 = vsel %vm433, %v1561, 0
        %v1694 = vsel %vm433, %v1562, 0
        %1696 = vmatprep.subr.bf16.mxu0 0
        %1697 = vmatpush1.bf16.msra.mxu0 0
        %1698 = vmatprep.subr.bf16.mxu0 0
        %1699 = vmatpush1.bf16.msra.mxu0 0
        %1700 = vmatprep.subr.bf16.mxu0 0
        %1701 = vmatpush1.bf16.msra.mxu0 0
        %1702 = vmatprep.subr.bf16.mxu0 0
        %1703 = vmatpush1.bf16.msra.mxu0 0
        %1704 = vmatprep.subr.bf16.mxu0 0
        %1705 = vmatpush1.bf16.msra.mxu0 0
        %1706 = vmatprep.subr.bf16.mxu0 0
        %1707 = vmatpush1.bf16.msra.mxu0 0
        %1708 = vmatprep.subr.bf16.mxu0 0
        %1709 = vmatpush1.bf16.msra.mxu0 %v1681
        %1710 = vmatprep.subr.bf16.mxu0 0
        %1711 = vmatpush1.bf16.msra.mxu0 %v1680
        %1712 = vmatprep.subr.bf16.mxu0 0
        %1713 = vmatpush2.bf16.msra.mxu0 0
        %1714 = vmatprep.subr.bf16.mxu0 0
        %1715 = vmatpush2.bf16.msra.mxu0 0
        %1716 = vmatprep.subr.bf16.mxu0 0
        %1717 = vmatpush2.bf16.msra.mxu0 0
        %1718 = vmatprep.subr.bf16.mxu0 0
        %1719 = vmatpush2.bf16.msra.mxu0 0
        %1720 = vmatprep.subr.bf16.mxu0 0
        %1721 = vmatpush2.bf16.msra.mxu0 0
        %1722 = vmatprep.subr.bf16.mxu0 0
        %1723 = vmatpush2.bf16.msra.mxu0 0
        %1724 = vmatprep.subr.bf16.mxu0 0
        %1725 = vmatpush2.bf16.msra.mxu0 0
        %1726 = vmatprep.subr.bf16.mxu0 0
        %1727 = vmatpush2.bf16.msra.mxu0 0
        %1728 = vmatprep.mubr.bf16.mxu0 0
        %1729 = vmatmul.mubr.bf16.gmra.mxu0 %v1685
        %v1730 = vpop.f32.mrf.mxu0
        %v1731 = vadd.f32 %v1642, %v1730
        %v1732 = vpop.f32.mrf.mxu0
        %v1733 = vpop.f32.mrf.mxu0
        %v1734 = vadd.f32 %v1645, %v1733
        %v1735 = vpop.f32.mrf.mxu0
        %1736 = vmatprep.mubr.bf16.mxu0 0
        %1737 = vmatmul.mubr.bf16.gmra.mxu0 %v1688
        %v1738 = vpop.f32.mrf.mxu0
        %v1739 = vadd.f32 %v1650, %v1738
        %v1740 = vpop.f32.mrf.mxu0
        %v1741 = vpop.f32.mrf.mxu0
        %v1742 = vadd.f32 %v1653, %v1741
        %v1743 = vpop.f32.mrf.mxu0
        %1744 = vmatprep.mubr.bf16.mxu0 0
        %1745 = vmatmul.mubr.bf16.gmra.mxu0 %v1691
        %v1746 = vpop.f32.mrf.mxu0
        %v1747 = vadd.f32 %v1658, %v1746
        %v1748 = vpop.f32.mrf.mxu0
        %v1749 = vpop.f32.mrf.mxu0
        %v1750 = vadd.f32 %v1661, %v1749
        %v1751 = vpop.f32.mrf.mxu0
        %1752 = vmatprep.mubr.bf16.mxu0 0
        %1753 = vmatmul.mubr.bf16.gmra.mxu0 %v1694
        %v1754 = vpop.f32.mrf.mxu0
        %v1755 = vadd.f32 %v1666, %v1754
        %v1756 = vpop.f32.mrf.mxu0
        %v1757 = vpop.f32.mrf.mxu0
        %v1758 = vadd.f32 %v1669, %v1757
        %v1759 = vpop.f32.mrf.mxu0
        %1760 = vdwg.mxu0
        %v1761 = vld [vmem:[#allocation2 + $0x2] sm:$0xff]
        %v1762 = vld [vmem:[#allocation2 + $0xa] sm:$0xff]
        %v1763 = vld [vmem:[#allocation2 + $0x12] sm:$0xff]
        %v1764 = vld [vmem:[#allocation2 + $0x1a] sm:$0xff]
        %v1765 = vld [vmem:[#allocation2 + $0x22] sm:$0xff]
        %v1766 = vld [vmem:[#allocation2 + $0x2a] sm:$0xff]
        %v1767 = vld [vmem:[#allocation2 + $0x32] sm:$0xff]
        %v1768 = vld [vmem:[#allocation2 + $0x3a] sm:$0xff]
        %v1769 = vsel %vm689, %v1761, 0.0
        %v1770 = vsel %vm690, %v1762, 0.0
        %v1771 = vsel %vm691, %v1763, 0.0
        %v1772 = vsel %vm692, %v1764, 0.0
        %v1773 = vsel %vm693, %v1765, 0.0
        %v1774 = vsel %vm694, %v1766, 0.0
        %v1775 = vsel %vm695, %v1767, 0.0
        %v1776 = vsel %vm696, %v1768, 0.0
        %v1777 = vpack.c.bf16 %v1770, %v1769
        %v1778 = vpack.c.bf16 %v1772, %v1771
        %v1779 = vpack.c.bf16 %v1774, %v1773
        %v1780 = vpack.c.bf16 %v1776, %v1775
        %v1781 = vld [vmem:[%s3 + $0x68] sm:$0xf]
        %v1782 = vld [vmem:[%s3 + $0x6c] sm:$0xf]
        %v1783 = vld [vmem:[%s3 + $0x70] sm:$0xf]
        %v1784 = vld [vmem:[%s3 + $0x74] sm:$0xf]
        %v1789 = vunpack.c.l.b16 %v1781
        %v1790 = vunpack.c.l.b16 %v1782
        %v1791 = vunpack.c.l.b16 %v1783
        %v1792 = vunpack.c.l.b16 %v1784
        %v1793 = vpack.c.b16 %v1790, %v1789
        %v1794 = vpack.c.b16 %v1792, %v1791
        %v1798 = vsel %vm433, %v1777, 0
        %v1801 = vsel %vm433, %v1778, 0
        %v1804 = vsel %vm433, %v1779, 0
        %v1807 = vsel %vm433, %v1780, 0
        %1809 = vmatprep.subr.bf16.mxu0 0
        %1810 = vmatpush1.bf16.msra.mxu0 0
        %1811 = vmatprep.subr.bf16.mxu0 0
        %1812 = vmatpush1.bf16.msra.mxu0 0
        %1813 = vmatprep.subr.bf16.mxu0 0
        %1814 = vmatpush1.bf16.msra.mxu0 0
        %1815 = vmatprep.subr.bf16.mxu0 0
        %1816 = vmatpush1.bf16.msra.mxu0 0
        %1817 = vmatprep.subr.bf16.mxu0 0
        %1818 = vmatpush1.bf16.msra.mxu0 0
        %1819 = vmatprep.subr.bf16.mxu0 0
        %1820 = vmatpush1.bf16.msra.mxu0 0
        %1821 = vmatprep.subr.bf16.mxu0 0
        %1822 = vmatpush1.bf16.msra.mxu0 %v1794
        %1823 = vmatprep.subr.bf16.mxu0 0
        %1824 = vmatpush1.bf16.msra.mxu0 %v1793
        %1825 = vmatprep.subr.bf16.mxu0 0
        %1826 = vmatpush2.bf16.msra.mxu0 0
        %1827 = vmatprep.subr.bf16.mxu0 0
        %1828 = vmatpush2.bf16.msra.mxu0 0
        %1829 = vmatprep.subr.bf16.mxu0 0
        %1830 = vmatpush2.bf16.msra.mxu0 0
        %1831 = vmatprep.subr.bf16.mxu0 0
        %1832 = vmatpush2.bf16.msra.mxu0 0
        %1833 = vmatprep.subr.bf16.mxu0 0
        %1834 = vmatpush2.bf16.msra.mxu0 0
        %1835 = vmatprep.subr.bf16.mxu0 0
        %1836 = vmatpush2.bf16.msra.mxu0 0
        %1837 = vmatprep.subr.bf16.mxu0 0
        %1838 = vmatpush2.bf16.msra.mxu0 0
        %1839 = vmatprep.subr.bf16.mxu0 0
        %1840 = vmatpush2.bf16.msra.mxu0 0
        %1841 = vmatprep.mubr.bf16.mxu0 0
        %1842 = vmatmul.mubr.bf16.gmra.mxu0 %v1798
        %v1843 = vpop.f32.mrf.mxu0
        %v1844 = vadd.f32 0.0, %v1843
        %v1845 = vpop.f32.mrf.mxu0
        %v1846 = vpop.f32.mrf.mxu0
        %v1847 = vadd.f32 0.0, %v1846
        %v1848 = vpop.f32.mrf.mxu0
        %1849 = vmatprep.mubr.bf16.mxu0 0
        %1850 = vmatmul.mubr.bf16.gmra.mxu0 %v1801
        %v1851 = vpop.f32.mrf.mxu0
        %v1852 = vadd.f32 0.0, %v1851
        %v1853 = vpop.f32.mrf.mxu0
        %v1854 = vpop.f32.mrf.mxu0
        %v1855 = vadd.f32 0.0, %v1854
        %v1856 = vpop.f32.mrf.mxu0
        %1857 = vmatprep.mubr.bf16.mxu0 0
        %1858 = vmatmul.mubr.bf16.gmra.mxu0 %v1804
        %v1859 = vpop.f32.mrf.mxu0
        %v1860 = vadd.f32 0.0, %v1859
        %v1861 = vpop.f32.mrf.mxu0
        %v1862 = vpop.f32.mrf.mxu0
        %v1863 = vadd.f32 0.0, %v1862
        %v1864 = vpop.f32.mrf.mxu0
        %1865 = vmatprep.mubr.bf16.mxu0 0
        %1866 = vmatmul.mubr.bf16.gmra.mxu0 %v1807
        %v1867 = vpop.f32.mrf.mxu0
        %v1868 = vadd.f32 0.0, %v1867
        %v1869 = vpop.f32.mrf.mxu0
        %v1870 = vpop.f32.mrf.mxu0
        %v1871 = vadd.f32 0.0, %v1870
        %v1872 = vpop.f32.mrf.mxu0
        %1873 = vdwg.mxu0
        %v1874 = vadd.f32 %v1731, %v1844
        %v1875 = vadd.f32 %v1734, %v1847
        %v1876 = vadd.f32 %v1739, %v1852
        %v1877 = vadd.f32 %v1742, %v1855
        %v1878 = vadd.f32 %v1747, %v1860
        %v1879 = vadd.f32 %v1750, %v1863
        %v1880 = vadd.f32 %v1755, %v1868
        %v1881 = vadd.f32 %v1758, %v1871
        %v1882 = vld [vmem:[#allocation2 + $0x8] sm:$0xff]
        %v1883 = vld [vmem:[#allocation2 + $0x10] sm:$0xff]
        %v1884 = vld [vmem:[#allocation2 + $0x18] sm:$0xff]
        %v1885 = vld [vmem:[#allocation2 + $0x20] sm:$0xff]
        %v1886 = vld [vmem:[#allocation2 + $0x28] sm:$0xff]
        %v1887 = vld [vmem:[#allocation2 + $0x30] sm:$0xff]
        %v1888 = vld [vmem:[#allocation2 + $0x38] sm:$0xff]
        %v1889 = vld [vmem:[#allocation2 + $0x40] sm:$0xff]
        %v1890 = vsel %vm471, %v1882, 0.0
        %v1891 = vsel %vm472, %v1883, 0.0
        %v1892 = vsel %vm473, %v1884, 0.0
        %v1893 = vsel %vm474, %v1885, 0.0
        %v1894 = vsel %vm475, %v1886, 0.0
        %v1895 = vsel %vm476, %v1887, 0.0
        %v1896 = vsel %vm477, %v1888, 0.0
        %v1897 = vsel %vm478, %v1889, 0.0
        %v1898 = vpack.c.bf16 %v1891, %v1890
        %v1899 = vpack.c.bf16 %v1893, %v1892
        %v1900 = vpack.c.bf16 %v1895, %v1894
        %v1901 = vpack.c.bf16 %v1897, %v1896
        %v1902 = vld [vmem:[%s3 + $0x78] sm:$0xf]
        %v1903 = vld [vmem:[%s3 + $0x7c] sm:$0xf]
        %v1904 = vld [vmem:[%s3 + $0x80] sm:$0xf]
        %v1905 = vld [vmem:[%s3 + $0x84] sm:$0xf]
        %v1910 = vunpack.c.l.b16 %v1902
        %v1911 = vunpack.c.l.b16 %v1903
        %v1912 = vunpack.c.l.b16 %v1904
        %v1913 = vunpack.c.l.b16 %v1905
        %v1914 = vpack.c.b16 %v1911, %v1910
        %v1915 = vpack.c.b16 %v1913, %v1912
        %v1919 = vsel %vm433, %v1898, 0
        %v1922 = vsel %vm433, %v1899, 0
        %v1925 = vsel %vm433, %v1900, 0
        %v1928 = vsel %vm433, %v1901, 0
        %1930 = vmatprep.subr.bf16.mxu0 0
        %1931 = vmatpush1.bf16.msra.mxu0 0
        %1932 = vmatprep.subr.bf16.mxu0 0
        %1933 = vmatpush1.bf16.msra.mxu0 0
        %1934 = vmatprep.subr.bf16.mxu0 0
        %1935 = vmatpush1.bf16.msra.mxu0 0
        %1936 = vmatprep.subr.bf16.mxu0 0
        %1937 = vmatpush1.bf16.msra.mxu0 0
        %1938 = vmatprep.subr.bf16.mxu0 0
        %1939 = vmatpush1.bf16.msra.mxu0 0
        %1940 = vmatprep.subr.bf16.mxu0 0
        %1941 = vmatpush1.bf16.msra.mxu0 0
        %1942 = vmatprep.subr.bf16.mxu0 0
        %1943 = vmatpush1.bf16.msra.mxu0 %v1915
        %1944 = vmatprep.subr.bf16.mxu0 0
        %1945 = vmatpush1.bf16.msra.mxu0 %v1914
        %1946 = vmatprep.subr.bf16.mxu0 0
        %1947 = vmatpush2.bf16.msra.mxu0 0
        %1948 = vmatprep.subr.bf16.mxu0 0
        %1949 = vmatpush2.bf16.msra.mxu0 0
        %1950 = vmatprep.subr.bf16.mxu0 0
        %1951 = vmatpush2.bf16.msra.mxu0 0
        %1952 = vmatprep.subr.bf16.mxu0 0
        %1953 = vmatpush2.bf16.msra.mxu0 0
        %1954 = vmatprep.subr.bf16.mxu0 0
        %1955 = vmatpush2.bf16.msra.mxu0 0
        %1956 = vmatprep.subr.bf16.mxu0 0
        %1957 = vmatpush2.bf16.msra.mxu0 0
        %1958 = vmatprep.subr.bf16.mxu0 0
        %1959 = vmatpush2.bf16.msra.mxu0 0
        %1960 = vmatprep.subr.bf16.mxu0 0
        %1961 = vmatpush2.bf16.msra.mxu0 0
        %1962 = vmatprep.mubr.bf16.mxu0 0
        %1963 = vmatmul.mubr.bf16.gmra.mxu0 %v1919
        %v1964 = vpop.f32.mrf.mxu0
        %v1965 = vadd.f32 0.0, %v1964
        %v1966 = vpop.f32.mrf.mxu0
        %v1967 = vpop.f32.mrf.mxu0
        %v1968 = vadd.f32 0.0, %v1967
        %v1969 = vpop.f32.mrf.mxu0
        %1970 = vmatprep.mubr.bf16.mxu0 0
        %1971 = vmatmul.mubr.bf16.gmra.mxu0 %v1922
        %v1972 = vpop.f32.mrf.mxu0
        %v1973 = vadd.f32 0.0, %v1972
        %v1974 = vpop.f32.mrf.mxu0
        %v1975 = vpop.f32.mrf.mxu0
        %v1976 = vadd.f32 0.0, %v1975
        %v1977 = vpop.f32.mrf.mxu0
        %1978 = vmatprep.mubr.bf16.mxu0 0
        %1979 = vmatmul.mubr.bf16.gmra.mxu0 %v1925
        %v1980 = vpop.f32.mrf.mxu0
        %v1981 = vadd.f32 0.0, %v1980
        %v1982 = vpop.f32.mrf.mxu0
        %v1983 = vpop.f32.mrf.mxu0
        %v1984 = vadd.f32 0.0, %v1983
        %v1985 = vpop.f32.mrf.mxu0
        %1986 = vmatprep.mubr.bf16.mxu0 0
        %1987 = vmatmul.mubr.bf16.gmra.mxu0 %v1928
        %v1988 = vpop.f32.mrf.mxu0
        %v1989 = vadd.f32 0.0, %v1988
        %v1990 = vpop.f32.mrf.mxu0
        %v1991 = vpop.f32.mrf.mxu0
        %v1992 = vadd.f32 0.0, %v1991
        %v1993 = vpop.f32.mrf.mxu0
        %1994 = vdwg.mxu0
        %v1995 = vadd.f32 %v1874, %v1965
        %v1996 = vadd.f32 %v1875, %v1968
        %v1997 = vadd.f32 %v1876, %v1973
        %v1998 = vadd.f32 %v1877, %v1976
        %v1999 = vadd.f32 %v1878, %v1981
        %v2000 = vadd.f32 %v1879, %v1984
        %v2001 = vadd.f32 %v1880, %v1989
        %v2002 = vadd.f32 %v1881, %v1992
        %v2003 = vld [vmem:[#allocation2 + $0x9] sm:$0xff]
        %v2004 = vld [vmem:[#allocation2 + $0x11] sm:$0xff]
        %v2005 = vld [vmem:[#allocation2 + $0x19] sm:$0xff]
        %v2006 = vld [vmem:[#allocation2 + $0x21] sm:$0xff]
        %v2007 = vld [vmem:[#allocation2 + $0x29] sm:$0xff]
        %v2008 = vld [vmem:[#allocation2 + $0x31] sm:$0xff]
        %v2009 = vld [vmem:[#allocation2 + $0x39] sm:$0xff]
        %v2010 = vld [vmem:[#allocation2 + $0x41] sm:$0xff]
        %v2011 = vpack.c.bf16 %v2004, %v2003
        %v2012 = vpack.c.bf16 %v2006, %v2005
        %v2013 = vpack.c.bf16 %v2008, %v2007
        %v2014 = vpack.c.bf16 %v2010, %v2009
        %v2015 = vld [vmem:[%s3 + $0x88] sm:$0xf]
        %v2016 = vld [vmem:[%s3 + $0x8c] sm:$0xf]
        %v2017 = vld [vmem:[%s3 + $0x90] sm:$0xf]
        %v2018 = vld [vmem:[%s3 + $0x94] sm:$0xf]
        %v2023 = vunpack.c.l.b16 %v2015
        %v2024 = vunpack.c.l.b16 %v2016
        %v2025 = vunpack.c.l.b16 %v2017
        %v2026 = vunpack.c.l.b16 %v2018
        %v2027 = vpack.c.b16 %v2024, %v2023
        %v2028 = vpack.c.b16 %v2026, %v2025
        %v2032 = vsel %vm433, %v2011, 0
        %v2035 = vsel %vm433, %v2012, 0
        %v2038 = vsel %vm433, %v2013, 0
        %v2041 = vsel %vm433, %v2014, 0
        %2043 = vmatprep.subr.bf16.mxu0 0
        %2044 = vmatpush1.bf16.msra.mxu0 0
        %2045 = vmatprep.subr.bf16.mxu0 0
        %2046 = vmatpush1.bf16.msra.mxu0 0
        %2047 = vmatprep.subr.bf16.mxu0 0
        %2048 = vmatpush1.bf16.msra.mxu0 0
        %2049 = vmatprep.subr.bf16.mxu0 0
        %2050 = vmatpush1.bf16.msra.mxu0 0
        %2051 = vmatprep.subr.bf16.mxu0 0
        %2052 = vmatpush1.bf16.msra.mxu0 0
        %2053 = vmatprep.subr.bf16.mxu0 0
        %2054 = vmatpush1.bf16.msra.mxu0 0
        %2055 = vmatprep.subr.bf16.mxu0 0
        %2056 = vmatpush1.bf16.msra.mxu0 %v2028
        %2057 = vmatprep.subr.bf16.mxu0 0
        %2058 = vmatpush1.bf16.msra.mxu0 %v2027
        %2059 = vmatprep.subr.bf16.mxu0 0
        %2060 = vmatpush2.bf16.msra.mxu0 0
        %2061 = vmatprep.subr.bf16.mxu0 0
        %2062 = vmatpush2.bf16.msra.mxu0 0
        %2063 = vmatprep.subr.bf16.mxu0 0
        %2064 = vmatpush2.bf16.msra.mxu0 0
        %2065 = vmatprep.subr.bf16.mxu0 0
        %2066 = vmatpush2.bf16.msra.mxu0 0
        %2067 = vmatprep.subr.bf16.mxu0 0
        %2068 = vmatpush2.bf16.msra.mxu0 0
        %2069 = vmatprep.subr.bf16.mxu0 0
        %2070 = vmatpush2.bf16.msra.mxu0 0
        %2071 = vmatprep.subr.bf16.mxu0 0
        %2072 = vmatpush2.bf16.msra.mxu0 0
        %2073 = vmatprep.subr.bf16.mxu0 0
        %2074 = vmatpush2.bf16.msra.mxu0 0
        %2075 = vmatprep.mubr.bf16.mxu0 0
        %2076 = vmatmul.mubr.bf16.gmra.mxu0 %v2032
        %v2077 = vpop.f32.mrf.mxu0
        %v2078 = vadd.f32 0.0, %v2077
        %v2079 = vpop.f32.mrf.mxu0
        %v2080 = vpop.f32.mrf.mxu0
        %v2081 = vadd.f32 0.0, %v2080
        %v2082 = vpop.f32.mrf.mxu0
        %2083 = vmatprep.mubr.bf16.mxu0 0
        %2084 = vmatmul.mubr.bf16.gmra.mxu0 %v2035
        %v2085 = vpop.f32.mrf.mxu0
        %v2086 = vadd.f32 0.0, %v2085
        %v2087 = vpop.f32.mrf.mxu0
        %v2088 = vpop.f32.mrf.mxu0
        %v2089 = vadd.f32 0.0, %v2088
        %v2090 = vpop.f32.mrf.mxu0
        %2091 = vmatprep.mubr.bf16.mxu0 0
        %2092 = vmatmul.mubr.bf16.gmra.mxu0 %v2038
        %v2093 = vpop.f32.mrf.mxu0
        %v2094 = vadd.f32 0.0, %v2093
        %v2095 = vpop.f32.mrf.mxu0
        %v2096 = vpop.f32.mrf.mxu0
        %v2097 = vadd.f32 0.0, %v2096
        %v2098 = vpop.f32.mrf.mxu0
        %2099 = vmatprep.mubr.bf16.mxu0 0
        %2100 = vmatmul.mubr.bf16.gmra.mxu0 %v2041
        %v2101 = vpop.f32.mrf.mxu0
        %v2102 = vadd.f32 0.0, %v2101
        %v2103 = vpop.f32.mrf.mxu0
        %v2104 = vpop.f32.mrf.mxu0
        %v2105 = vadd.f32 0.0, %v2104
        %v2106 = vpop.f32.mrf.mxu0
        %2107 = vdwg.mxu0
        %v2108 = vadd.f32 %v1995, %v2078
        %v2109 = vadd.f32 %v1996, %v2081
        %v2110 = vadd.f32 %v1997, %v2086
        %v2111 = vadd.f32 %v1998, %v2089
        %v2112 = vadd.f32 %v1999, %v2094
        %v2113 = vadd.f32 %v2000, %v2097
        %v2114 = vadd.f32 %v2001, %v2102
        %v2115 = vadd.f32 %v2002, %v2105
        %v2116 = vld [vmem:[#allocation2 + $0xa] sm:$0xff]
        %v2117 = vld [vmem:[#allocation2 + $0x12] sm:$0xff]
        %v2118 = vld [vmem:[#allocation2 + $0x1a] sm:$0xff]
        %v2119 = vld [vmem:[#allocation2 + $0x22] sm:$0xff]
        %v2120 = vld [vmem:[#allocation2 + $0x2a] sm:$0xff]
        %v2121 = vld [vmem:[#allocation2 + $0x32] sm:$0xff]
        %v2122 = vld [vmem:[#allocation2 + $0x3a] sm:$0xff]
        %v2123 = vld [vmem:[#allocation2 + $0x42] sm:$0xff]
        %v2124 = vsel %vm689, %v2116, 0.0
        %v2125 = vsel %vm690, %v2117, 0.0
        %v2126 = vsel %vm691, %v2118, 0.0
        %v2127 = vsel %vm692, %v2119, 0.0
        %v2128 = vsel %vm693, %v2120, 0.0
        %v2129 = vsel %vm694, %v2121, 0.0
        %v2130 = vsel %vm695, %v2122, 0.0
        %v2131 = vsel %vm696, %v2123, 0.0
        %v2132 = vpack.c.bf16 %v2125, %v2124
        %v2133 = vpack.c.bf16 %v2127, %v2126
        %v2134 = vpack.c.bf16 %v2129, %v2128
        %v2135 = vpack.c.bf16 %v2131, %v2130
        %v2136 = vld [vmem:[%s3 + $0x98] sm:$0xf]
        %v2137 = vld [vmem:[%s3 + $0x9c] sm:$0xf]
        %v2138 = vld [vmem:[%s3 + $0xa0] sm:$0xf]
        %v2139 = vld [vmem:[%s3 + $0xa4] sm:$0xf]
        %v2144 = vunpack.c.l.b16 %v2136
        %v2145 = vunpack.c.l.b16 %v2137
        %v2146 = vunpack.c.l.b16 %v2138
        %v2147 = vunpack.c.l.b16 %v2139
        %v2148 = vpack.c.b16 %v2145, %v2144
        %v2149 = vpack.c.b16 %v2147, %v2146
        %v2153 = vsel %vm433, %v2132, 0
        %v2156 = vsel %vm433, %v2133, 0
        %v2159 = vsel %vm433, %v2134, 0
        %v2162 = vsel %vm433, %v2135, 0
        %2164 = vmatprep.subr.bf16.mxu0 0
        %2165 = vmatpush1.bf16.msra.mxu0 0
        %2166 = vmatprep.subr.bf16.mxu0 0
        %2167 = vmatpush1.bf16.msra.mxu0 0
        %2168 = vmatprep.subr.bf16.mxu0 0
        %2169 = vmatpush1.bf16.msra.mxu0 0
        %2170 = vmatprep.subr.bf16.mxu0 0
        %2171 = vmatpush1.bf16.msra.mxu0 0
        %2172 = vmatprep.subr.bf16.mxu0 0
        %2173 = vmatpush1.bf16.msra.mxu0 0
        %2174 = vmatprep.subr.bf16.mxu0 0
        %2175 = vmatpush1.bf16.msra.mxu0 0
        %2176 = vmatprep.subr.bf16.mxu0 0
        %2177 = vmatpush1.bf16.msra.mxu0 %v2149
        %2178 = vmatprep.subr.bf16.mxu0 0
        %2179 = vmatpush1.bf16.msra.mxu0 %v2148
        %2180 = vmatprep.subr.bf16.mxu0 0
        %2181 = vmatpush2.bf16.msra.mxu0 0
        %2182 = vmatprep.subr.bf16.mxu0 0
        %2183 = vmatpush2.bf16.msra.mxu0 0
        %2184 = vmatprep.subr.bf16.mxu0 0
        %2185 = vmatpush2.bf16.msra.mxu0 0
        %2186 = vmatprep.subr.bf16.mxu0 0
        %2187 = vmatpush2.bf16.msra.mxu0 0
        %2188 = vmatprep.subr.bf16.mxu0 0
        %2189 = vmatpush2.bf16.msra.mxu0 0
        %2190 = vmatprep.subr.bf16.mxu0 0
        %2191 = vmatpush2.bf16.msra.mxu0 0
        %2192 = vmatprep.subr.bf16.mxu0 0
        %2193 = vmatpush2.bf16.msra.mxu0 0
        %2194 = vmatprep.subr.bf16.mxu0 0
        %2195 = vmatpush2.bf16.msra.mxu0 0
        %2196 = vmatprep.mubr.bf16.mxu0 0
        %2197 = vmatmul.mubr.bf16.gmra.mxu0 %v2153
        %v2198 = vpop.f32.mrf.mxu0
        %v2199 = vadd.f32 0.0, %v2198
        %v2200 = vpop.f32.mrf.mxu0
        %v2201 = vpop.f32.mrf.mxu0
        %v2202 = vadd.f32 0.0, %v2201
        %v2203 = vpop.f32.mrf.mxu0
        %2204 = vmatprep.mubr.bf16.mxu0 0
        %2205 = vmatmul.mubr.bf16.gmra.mxu0 %v2156
        %v2206 = vpop.f32.mrf.mxu0
        %v2207 = vadd.f32 0.0, %v2206
        %v2208 = vpop.f32.mrf.mxu0
        %v2209 = vpop.f32.mrf.mxu0
        %v2210 = vadd.f32 0.0, %v2209
        %v2211 = vpop.f32.mrf.mxu0
        %2212 = vmatprep.mubr.bf16.mxu0 0
        %2213 = vmatmul.mubr.bf16.gmra.mxu0 %v2159
        %v2214 = vpop.f32.mrf.mxu0
        %v2215 = vadd.f32 0.0, %v2214
        %v2216 = vpop.f32.mrf.mxu0
        %v2217 = vpop.f32.mrf.mxu0
        %v2218 = vadd.f32 0.0, %v2217
        %v2219 = vpop.f32.mrf.mxu0
        %2220 = vmatprep.mubr.bf16.mxu0 0
        %2221 = vmatmul.mubr.bf16.gmra.mxu0 %v2162
        %v2222 = vpop.f32.mrf.mxu0
        %v2223 = vadd.f32 0.0, %v2222
        %v2224 = vpop.f32.mrf.mxu0
        %v2225 = vpop.f32.mrf.mxu0
        %v2226 = vadd.f32 0.0, %v2225
        %v2227 = vpop.f32.mrf.mxu0
        %2228 = vdwg.mxu0
        %v2229 = vadd.f32 %v2108, %v2199
        %v2230 = vadd.f32 %v2109, %v2202
        %v2231 = vadd.f32 %v2110, %v2207
        %v2232 = vadd.f32 %v2111, %v2210
        %v2233 = vadd.f32 %v2112, %v2215
        %v2234 = vadd.f32 %v2113, %v2218
        %v2235 = vadd.f32 %v2114, %v2223
        %v2236 = vadd.f32 %v2115, %v2226
        %v2237 = vld [vmem:[#allocation2 + $0x10] sm:$0xff]
        %v2238 = vld [vmem:[#allocation2 + $0x18] sm:$0xff]
        %v2239 = vld [vmem:[#allocation2 + $0x20] sm:$0xff]
        %v2240 = vld [vmem:[#allocation2 + $0x28] sm:$0xff]
        %v2241 = vld [vmem:[#allocation2 + $0x30] sm:$0xff]
        %v2242 = vld [vmem:[#allocation2 + $0x38] sm:$0xff]
        %v2243 = vld [vmem:[#allocation2 + $0x40] sm:$0xff]
        %v2244 = vld [vmem:[#allocation2 + $0x48] sm:$0xff]
        %v2245 = vsel %vm471, %v2237, 0.0
        %v2246 = vsel %vm472, %v2238, 0.0
        %v2247 = vsel %vm473, %v2239, 0.0
        %v2248 = vsel %vm474, %v2240, 0.0
        %v2249 = vsel %vm475, %v2241, 0.0
        %v2250 = vsel %vm476, %v2242, 0.0
        %v2251 = vsel %vm477, %v2243, 0.0
        %v2252 = vsel %vm478, %v2244, 0.0
        %v2253 = vpack.c.bf16 %v2246, %v2245
        %v2254 = vpack.c.bf16 %v2248, %v2247
        %v2255 = vpack.c.bf16 %v2250, %v2249
        %v2256 = vpack.c.bf16 %v2252, %v2251
        %v2257 = vld [vmem:[%s3 + $0xa8] sm:$0xf]
        %v2258 = vld [vmem:[%s3 + $0xac] sm:$0xf]
        %v2259 = vld [vmem:[%s3 + $0xb0] sm:$0xf]
        %v2260 = vld [vmem:[%s3 + $0xb4] sm:$0xf]
        %v2265 = vunpack.c.l.b16 %v2257
        %v2266 = vunpack.c.l.b16 %v2258
        %v2267 = vunpack.c.l.b16 %v2259
        %v2268 = vunpack.c.l.b16 %v2260
        %v2269 = vpack.c.b16 %v2266, %v2265
        %v2270 = vpack.c.b16 %v2268, %v2267
        %v2274 = vsel %vm433, %v2253, 0
        %v2277 = vsel %vm433, %v2254, 0
        %v2280 = vsel %vm433, %v2255, 0
        %v2283 = vsel %vm433, %v2256, 0
        %2285 = vmatprep.subr.bf16.mxu0 0
        %2286 = vmatpush1.bf16.msra.mxu0 0
        %2287 = vmatprep.subr.bf16.mxu0 0
        %2288 = vmatpush1.bf16.msra.mxu0 0
        %2289 = vmatprep.subr.bf16.mxu0 0
        %2290 = vmatpush1.bf16.msra.mxu0 0
        %2291 = vmatprep.subr.bf16.mxu0 0
        %2292 = vmatpush1.bf16.msra.mxu0 0
        %2293 = vmatprep.subr.bf16.mxu0 0
        %2294 = vmatpush1.bf16.msra.mxu0 0
        %2295 = vmatprep.subr.bf16.mxu0 0
        %2296 = vmatpush1.bf16.msra.mxu0 0
        %2297 = vmatprep.subr.bf16.mxu0 0
        %2298 = vmatpush1.bf16.msra.mxu0 %v2270
        %2299 = vmatprep.subr.bf16.mxu0 0
        %2300 = vmatpush1.bf16.msra.mxu0 %v2269
        %2301 = vmatprep.subr.bf16.mxu0 0
        %2302 = vmatpush2.bf16.msra.mxu0 0
        %2303 = vmatprep.subr.bf16.mxu0 0
        %2304 = vmatpush2.bf16.msra.mxu0 0
        %2305 = vmatprep.subr.bf16.mxu0 0
        %2306 = vmatpush2.bf16.msra.mxu0 0
        %2307 = vmatprep.subr.bf16.mxu0 0
        %2308 = vmatpush2.bf16.msra.mxu0 0
        %2309 = vmatprep.subr.bf16.mxu0 0
        %2310 = vmatpush2.bf16.msra.mxu0 0
        %2311 = vmatprep.subr.bf16.mxu0 0
        %2312 = vmatpush2.bf16.msra.mxu0 0
        %2313 = vmatprep.subr.bf16.mxu0 0
        %2314 = vmatpush2.bf16.msra.mxu0 0
        %2315 = vmatprep.subr.bf16.mxu0 0
        %2316 = vmatpush2.bf16.msra.mxu0 0
        %2317 = vmatprep.mubr.bf16.mxu0 0
        %2318 = vmatmul.mubr.bf16.gmra.mxu0 %v2274
        %v2319 = vpop.f32.mrf.mxu0
        %v2320 = vadd.f32 0.0, %v2319
        %v2321 = vpop.f32.mrf.mxu0
        %v2322 = vpop.f32.mrf.mxu0
        %v2323 = vadd.f32 0.0, %v2322
        %v2324 = vpop.f32.mrf.mxu0
        %2325 = vmatprep.mubr.bf16.mxu0 0
        %2326 = vmatmul.mubr.bf16.gmra.mxu0 %v2277
        %v2327 = vpop.f32.mrf.mxu0
        %v2328 = vadd.f32 0.0, %v2327
        %v2329 = vpop.f32.mrf.mxu0
        %v2330 = vpop.f32.mrf.mxu0
        %v2331 = vadd.f32 0.0, %v2330
        %v2332 = vpop.f32.mrf.mxu0
        %2333 = vmatprep.mubr.bf16.mxu0 0
        %2334 = vmatmul.mubr.bf16.gmra.mxu0 %v2280
        %v2335 = vpop.f32.mrf.mxu0
        %v2336 = vadd.f32 0.0, %v2335
        %v2337 = vpop.f32.mrf.mxu0
        %v2338 = vpop.f32.mrf.mxu0
        %v2339 = vadd.f32 0.0, %v2338
        %v2340 = vpop.f32.mrf.mxu0
        %2341 = vmatprep.mubr.bf16.mxu0 0
        %2342 = vmatmul.mubr.bf16.gmra.mxu0 %v2283
        %v2343 = vpop.f32.mrf.mxu0
        %v2344 = vadd.f32 0.0, %v2343
        %v2345 = vpop.f32.mrf.mxu0
        %v2346 = vpop.f32.mrf.mxu0
        %v2347 = vadd.f32 0.0, %v2346
        %v2348 = vpop.f32.mrf.mxu0
        %2349 = vdwg.mxu0
        %v2350 = vadd.f32 %v2229, %v2320
        %v2351 = vadd.f32 %v2230, %v2323
        %v2352 = vadd.f32 %v2231, %v2328
        %v2353 = vadd.f32 %v2232, %v2331
        %v2354 = vadd.f32 %v2233, %v2336
        %v2355 = vadd.f32 %v2234, %v2339
        %v2356 = vadd.f32 %v2235, %v2344
        %v2357 = vadd.f32 %v2236, %v2347
        %v2358 = vld [vmem:[#allocation2 + $0x11] sm:$0xff]
        %v2359 = vld [vmem:[#allocation2 + $0x19] sm:$0xff]
        %v2360 = vld [vmem:[#allocation2 + $0x21] sm:$0xff]
        %v2361 = vld [vmem:[#allocation2 + $0x29] sm:$0xff]
        %v2362 = vld [vmem:[#allocation2 + $0x31] sm:$0xff]
        %v2363 = vld [vmem:[#allocation2 + $0x39] sm:$0xff]
        %v2364 = vld [vmem:[#allocation2 + $0x41] sm:$0xff]
        %v2365 = vld [vmem:[#allocation2 + $0x49] sm:$0xff]
        %v2366 = vpack.c.bf16 %v2359, %v2358
        %v2367 = vpack.c.bf16 %v2361, %v2360
        %v2368 = vpack.c.bf16 %v2363, %v2362
        %v2369 = vpack.c.bf16 %v2365, %v2364
        %v2370 = vld [vmem:[%s3 + $0xb8] sm:$0xf]
        %v2371 = vld [vmem:[%s3 + $0xbc] sm:$0xf]
        %v2372 = vld [vmem:[%s3 + $0xc0] sm:$0xf]
        %v2373 = vld [vmem:[%s3 + $0xc4] sm:$0xf]
        %v2378 = vunpack.c.l.b16 %v2370
        %v2379 = vunpack.c.l.b16 %v2371
        %v2380 = vunpack.c.l.b16 %v2372
        %v2381 = vunpack.c.l.b16 %v2373
        %v2382 = vpack.c.b16 %v2379, %v2378
        %v2383 = vpack.c.b16 %v2381, %v2380
        %v2387 = vsel %vm433, %v2366, 0
        %v2390 = vsel %vm433, %v2367, 0
        %v2393 = vsel %vm433, %v2368, 0
        %v2396 = vsel %vm433, %v2369, 0
        %2398 = vmatprep.subr.bf16.mxu0 0
        %2399 = vmatpush1.bf16.msra.mxu0 0
        %2400 = vmatprep.subr.bf16.mxu0 0
        %2401 = vmatpush1.bf16.msra.mxu0 0
        %2402 = vmatprep.subr.bf16.mxu0 0
        %2403 = vmatpush1.bf16.msra.mxu0 0
        %2404 = vmatprep.subr.bf16.mxu0 0
        %2405 = vmatpush1.bf16.msra.mxu0 0
        %2406 = vmatprep.subr.bf16.mxu0 0
        %2407 = vmatpush1.bf16.msra.mxu0 0
        %2408 = vmatprep.subr.bf16.mxu0 0
        %2409 = vmatpush1.bf16.msra.mxu0 0
        %2410 = vmatprep.subr.bf16.mxu0 0
        %2411 = vmatpush1.bf16.msra.mxu0 %v2383
        %2412 = vmatprep.subr.bf16.mxu0 0
        %2413 = vmatpush1.bf16.msra.mxu0 %v2382
        %2414 = vmatprep.subr.bf16.mxu0 0
        %2415 = vmatpush2.bf16.msra.mxu0 0
        %2416 = vmatprep.subr.bf16.mxu0 0
        %2417 = vmatpush2.bf16.msra.mxu0 0
        %2418 = vmatprep.subr.bf16.mxu0 0
        %2419 = vmatpush2.bf16.msra.mxu0 0
        %2420 = vmatprep.subr.bf16.mxu0 0
        %2421 = vmatpush2.bf16.msra.mxu0 0
        %2422 = vmatprep.subr.bf16.mxu0 0
        %2423 = vmatpush2.bf16.msra.mxu0 0
        %2424 = vmatprep.subr.bf16.mxu0 0
        %2425 = vmatpush2.bf16.msra.mxu0 0
        %2426 = vmatprep.subr.bf16.mxu0 0
        %2427 = vmatpush2.bf16.msra.mxu0 0
        %2428 = vmatprep.subr.bf16.mxu0 0
        %2429 = vmatpush2.bf16.msra.mxu0 0
        %2430 = vmatprep.mubr.bf16.mxu0 0
        %2431 = vmatmul.mubr.bf16.gmra.mxu0 %v2387
        %v2432 = vpop.f32.mrf.mxu0
        %v2433 = vadd.f32 0.0, %v2432
        %v2434 = vpop.f32.mrf.mxu0
        %v2435 = vpop.f32.mrf.mxu0
        %v2436 = vadd.f32 0.0, %v2435
        %v2437 = vpop.f32.mrf.mxu0
        %2438 = vmatprep.mubr.bf16.mxu0 0
        %2439 = vmatmul.mubr.bf16.gmra.mxu0 %v2390
        %v2440 = vpop.f32.mrf.mxu0
        %v2441 = vadd.f32 0.0, %v2440
        %v2442 = vpop.f32.mrf.mxu0
        %v2443 = vpop.f32.mrf.mxu0
        %v2444 = vadd.f32 0.0, %v2443
        %v2445 = vpop.f32.mrf.mxu0
        %2446 = vmatprep.mubr.bf16.mxu0 0
        %2447 = vmatmul.mubr.bf16.gmra.mxu0 %v2393
        %v2448 = vpop.f32.mrf.mxu0
        %v2449 = vadd.f32 0.0, %v2448
        %v2450 = vpop.f32.mrf.mxu0
        %v2451 = vpop.f32.mrf.mxu0
        %v2452 = vadd.f32 0.0, %v2451
        %v2453 = vpop.f32.mrf.mxu0
        %2454 = vmatprep.mubr.bf16.mxu0 0
        %2455 = vmatmul.mubr.bf16.gmra.mxu0 %v2396
        %v2456 = vpop.f32.mrf.mxu0
        %v2457 = vadd.f32 0.0, %v2456
        %v2458 = vpop.f32.mrf.mxu0
        %v2459 = vpop.f32.mrf.mxu0
        %v2460 = vadd.f32 0.0, %v2459
        %v2461 = vpop.f32.mrf.mxu0
        %2462 = vdwg.mxu0
        %v2463 = vadd.f32 %v2350, %v2433
        %v2464 = vadd.f32 %v2351, %v2436
        %v2465 = vadd.f32 %v2352, %v2441
        %v2466 = vadd.f32 %v2353, %v2444
        %v2467 = vadd.f32 %v2354, %v2449
        %v2468 = vadd.f32 %v2355, %v2452
        %v2469 = vadd.f32 %v2356, %v2457
        %v2470 = vadd.f32 %v2357, %v2460
        %v2471 = vld [vmem:[#allocation2 + $0x12] sm:$0xff]
        %v2472 = vld [vmem:[#allocation2 + $0x1a] sm:$0xff]
        %v2473 = vld [vmem:[#allocation2 + $0x22] sm:$0xff]
        %v2474 = vld [vmem:[#allocation2 + $0x2a] sm:$0xff]
        %v2475 = vld [vmem:[#allocation2 + $0x32] sm:$0xff]
        %v2476 = vld [vmem:[#allocation2 + $0x3a] sm:$0xff]
        %v2477 = vld [vmem:[#allocation2 + $0x42] sm:$0xff]
        %v2478 = vld [vmem:[#allocation2 + $0x4a] sm:$0xff]
        %v2479 = vsel %vm689, %v2471, 0.0
        %v2480 = vsel %vm690, %v2472, 0.0
        %v2481 = vsel %vm691, %v2473, 0.0
        %v2482 = vsel %vm692, %v2474, 0.0
        %v2483 = vsel %vm693, %v2475, 0.0
        %v2484 = vsel %vm694, %v2476, 0.0
        %v2485 = vsel %vm695, %v2477, 0.0
        %v2486 = vsel %vm696, %v2478, 0.0
        %v2487 = vpack.c.bf16 %v2480, %v2479
        %v2488 = vpack.c.bf16 %v2482, %v2481
        %v2489 = vpack.c.bf16 %v2484, %v2483
        %v2490 = vpack.c.bf16 %v2486, %v2485
        %v2491 = vld [vmem:[%s3 + $0xc8] sm:$0xf]
        %v2492 = vld [vmem:[%s3 + $0xcc] sm:$0xf]
        %v2493 = vld [vmem:[%s3 + $0xd0] sm:$0xf]
        %v2494 = vld [vmem:[%s3 + $0xd4] sm:$0xf]
        %v2499 = vunpack.c.l.b16 %v2491
        %v2500 = vunpack.c.l.b16 %v2492
        %v2501 = vunpack.c.l.b16 %v2493
        %v2502 = vunpack.c.l.b16 %v2494
        %v2503 = vpack.c.b16 %v2500, %v2499
        %v2504 = vpack.c.b16 %v2502, %v2501
        %v2508 = vsel %vm433, %v2487, 0
        %v2511 = vsel %vm433, %v2488, 0
        %v2514 = vsel %vm433, %v2489, 0
        %v2517 = vsel %vm433, %v2490, 0
        %2519 = vmatprep.subr.bf16.mxu0 0
        %2520 = vmatpush1.bf16.msra.mxu0 0
        %2521 = vmatprep.subr.bf16.mxu0 0
        %2522 = vmatpush1.bf16.msra.mxu0 0
        %2523 = vmatprep.subr.bf16.mxu0 0
        %2524 = vmatpush1.bf16.msra.mxu0 0
        %2525 = vmatprep.subr.bf16.mxu0 0
        %2526 = vmatpush1.bf16.msra.mxu0 0
        %2527 = vmatprep.subr.bf16.mxu0 0
        %2528 = vmatpush1.bf16.msra.mxu0 0
        %2529 = vmatprep.subr.bf16.mxu0 0
        %2530 = vmatpush1.bf16.msra.mxu0 0
        %2531 = vmatprep.subr.bf16.mxu0 0
        %2532 = vmatpush1.bf16.msra.mxu0 %v2504
        %2533 = vmatprep.subr.bf16.mxu0 0
        %2534 = vmatpush1.bf16.msra.mxu0 %v2503
        %2535 = vmatprep.subr.bf16.mxu0 0
        %2536 = vmatpush2.bf16.msra.mxu0 0
        %2537 = vmatprep.subr.bf16.mxu0 0
        %2538 = vmatpush2.bf16.msra.mxu0 0
        %2539 = vmatprep.subr.bf16.mxu0 0
        %2540 = vmatpush2.bf16.msra.mxu0 0
        %2541 = vmatprep.subr.bf16.mxu0 0
        %2542 = vmatpush2.bf16.msra.mxu0 0
        %2543 = vmatprep.subr.bf16.mxu0 0
        %2544 = vmatpush2.bf16.msra.mxu0 0
        %2545 = vmatprep.subr.bf16.mxu0 0
        %2546 = vmatpush2.bf16.msra.mxu0 0
        %2547 = vmatprep.subr.bf16.mxu0 0
        %2548 = vmatpush2.bf16.msra.mxu0 0
        %2549 = vmatprep.subr.bf16.mxu0 0
        %2550 = vmatpush2.bf16.msra.mxu0 0
        %2551 = vmatprep.mubr.bf16.mxu0 0
        %2552 = vmatmul.mubr.bf16.gmra.mxu0 %v2508
        %v2553 = vpop.f32.mrf.mxu0
        %v2554 = vadd.f32 0.0, %v2553
        %v2555 = vpop.f32.mrf.mxu0
        %v2556 = vpop.f32.mrf.mxu0
        %v2557 = vadd.f32 0.0, %v2556
        %v2558 = vpop.f32.mrf.mxu0
        %2559 = vmatprep.mubr.bf16.mxu0 0
        %2560 = vmatmul.mubr.bf16.gmra.mxu0 %v2511
        %v2561 = vpop.f32.mrf.mxu0
        %v2562 = vadd.f32 0.0, %v2561
        %v2563 = vpop.f32.mrf.mxu0
        %v2564 = vpop.f32.mrf.mxu0
        %v2565 = vadd.f32 0.0, %v2564
        %v2566 = vpop.f32.mrf.mxu0
        %2567 = vmatprep.mubr.bf16.mxu0 0
        %2568 = vmatmul.mubr.bf16.gmra.mxu0 %v2514
        %v2569 = vpop.f32.mrf.mxu0
        %v2570 = vadd.f32 0.0, %v2569
        %v2571 = vpop.f32.mrf.mxu0
        %v2572 = vpop.f32.mrf.mxu0
        %v2573 = vadd.f32 0.0, %v2572
        %v2574 = vpop.f32.mrf.mxu0
        %2575 = vmatprep.mubr.bf16.mxu0 0
        %2576 = vmatmul.mubr.bf16.gmra.mxu0 %v2517
        %v2577 = vpop.f32.mrf.mxu0
        %v2578 = vadd.f32 0.0, %v2577
        %v2579 = vpop.f32.mrf.mxu0
        %v2580 = vpop.f32.mrf.mxu0
        %v2581 = vadd.f32 0.0, %v2580
        %v2582 = vpop.f32.mrf.mxu0
        %2583 = vdwg.mxu0
        %v2584 = vadd.f32 %v2463, %v2554
        %v2585 = vadd.f32 %v2464, %v2557
        %v2586 = vadd.f32 %v2465, %v2562
        %v2587 = vadd.f32 %v2466, %v2565
        %v2588 = vadd.f32 %v2467, %v2570
        %v2589 = vadd.f32 %v2468, %v2573
        %v2590 = vadd.f32 %v2469, %v2578
        %v2591 = vadd.f32 %v2470, %v2581
        %v2592 = vlaneseq
        %v2593 = vshrl.u32 %v2592, 7
        %v2594 = vsub.s32 1, %v2593
        %v2595 = vrot.slane %v302, %v2594
        %v2596 = vadd.f32 %v2584, %v2595
        %v2597 = vadd.f32 %v2585, %v2595
        %v2598 = vadd.f32 %v2586, %v2595
        %v2599 = vadd.f32 %v2587, %v2595
        %v2600 = vadd.f32 %v2588, %v2595
        %v2601 = vadd.f32 %v2589, %v2595
        %v2602 = vadd.f32 %v2590, %v2595
        %v2603 = vadd.f32 %v2591, %v2595
        %vm2604 = vcmp.gt.f32.partialorder %v2596, 0.0
        %vm2605 = vcmp.gt.f32.partialorder %v2597, 0.0
        %vm2606 = vcmp.gt.f32.partialorder %v2598, 0.0
        %vm2607 = vcmp.gt.f32.partialorder %v2599, 0.0
        %vm2608 = vcmp.gt.f32.partialorder %v2600, 0.0
        %vm2609 = vcmp.gt.f32.partialorder %v2601, 0.0
        %vm2610 = vcmp.gt.f32.partialorder %v2602, 0.0
        %vm2611 = vcmp.gt.f32.partialorder %v2603, 0.0
        %v2612 = vmin.f32 %v2596, 0.0
        %v2613 = vmin.f32 %v2597, 0.0
        %v2614 = vmin.f32 %v2598, 0.0
        %v2615 = vmin.f32 %v2599, 0.0
        %v2616 = vmin.f32 %v2600, 0.0
        %v2617 = vmin.f32 %v2601, 0.0
        %v2618 = vmin.f32 %v2602, 0.0
        %v2619 = vmin.f32 %v2603, 0.0
        %v2620 = vmul.f32 %v2612, 1.442695
        %v2621 = vpow.pop %v2620
        %v2622 = vmul.f32 %v2613, 1.442695
        %v2623 = vpow.pop %v2622
        %v2624 = vmul.f32 %v2614, 1.442695
        %v2625 = vpow.pop %v2624
        %v2626 = vmul.f32 %v2615, 1.442695
        %v2627 = vpow.pop %v2626
        %v2628 = vmul.f32 %v2616, 1.442695
        %v2629 = vpow.pop %v2628
        %v2630 = vmul.f32 %v2617, 1.442695
        %v2631 = vpow.pop %v2630
        %v2632 = vmul.f32 %v2618, 1.442695
        %v2633 = vpow.pop %v2632
        %v2634 = vmul.f32 %v2619, 1.442695
        %v2635 = vpow.pop %v2634
        %v2636 = vsub.f32 %v2621, 1.0
        %v2637 = vsub.f32 %v2623, 1.0
        %v2638 = vsub.f32 %v2625, 1.0
        %v2639 = vsub.f32 %v2627, 1.0
        %v2640 = vsub.f32 %v2629, 1.0
        %v2641 = vsub.f32 %v2631, 1.0
        %v2642 = vsub.f32 %v2633, 1.0
        %v2643 = vsub.f32 %v2635, 1.0
        %v2644 = vsel %vm2604, %v2596, %v2636
        %v2645 = vsel %vm2605, %v2597, %v2637
        %v2646 = vsel %vm2606, %v2598, %v2638
        %v2647 = vsel %vm2607, %v2599, %v2639
        %v2648 = vsel %vm2608, %v2600, %v2640
        %v2649 = vsel %vm2609, %v2601, %v2641
        %v2650 = vsel %vm2610, %v2602, %v2642
        %v2651 = vsel %vm2611, %v2603, %v2643
        %v2652 = vld [vmem:[%s4] sm:$0xff]
        %v2653 = vld [vmem:[%s4 + $0x8] sm:$0xff]
        %v2654 = vld [vmem:[%s4 + $0x10] sm:$0xff]
        %v2655 = vld [vmem:[%s4 + $0x18] sm:$0xff]
        %v2656 = vld [vmem:[%s4 + $0x20] sm:$0xff]
        %v2657 = vld [vmem:[%s4 + $0x28] sm:$0xff]
        %v2658 = vld [vmem:[%s4 + $0x30] sm:$0xff]
        %v2659 = vld [vmem:[%s4 + $0x38] sm:$0xff]
        %v2660 = vld [vmem:[%s4 + $0x40] sm:$0x1]
        %v2661 = vld [vmem:[%s299] sm:$0xff]
        %v2662 = vlaneseq
        %v2663 = vshrl.u32 %v2662, 7
        %v2664 = vsub.s32 0, %v2663
        %v2665 = vrot.slane %v2660, %v2664
        %v2667 = vsel %vm433, %v2661, 0
        %2669 = vmatprep.subr.mxu0 0.0
        %2670 = vmatpush1.msra.mxu0 0.0
        %2671 = vmatprep.subr.mxu0 0.0
        %2672 = vmatpush1.msra.mxu0 0.0
        %2673 = vmatprep.subr.mxu0 0.0
        %2674 = vmatpush1.msra.mxu0 0.0
        %2675 = vmatprep.subr.mxu0 0.0
        %2676 = vmatpush1.msra.mxu0 0.0
        %2677 = vmatprep.subr.mxu0 0.0
        %2678 = vmatpush1.msra.mxu0 0.0
        %2679 = vmatprep.subr.mxu0 0.0
        %2680 = vmatpush1.msra.mxu0 0.0
        %2681 = vmatprep.subr.mxu0 0.0
        %2682 = vmatpush1.msra.mxu0 0.0
        %2683 = vmatprep.subr.mxu0 0.0
        %2684 = vmatpush1.msra.mxu0 0.0
        %2685 = vmatprep.subr.mxu0 0.0
        %2686 = vmatpush1.msra.mxu0 0.0
        %2687 = vmatprep.subr.mxu0 0.0
        %2688 = vmatpush1.msra.mxu0 0.0
        %2689 = vmatprep.subr.mxu0 0.0
        %2690 = vmatpush1.msra.mxu0 0.0
        %2691 = vmatprep.subr.mxu0 0.0
        %2692 = vmatpush1.msra.mxu0 0.0
        %2693 = vmatprep.subr.mxu0 0.0
        %2694 = vmatpush1.msra.mxu0 %v2655
        %2695 = vmatprep.subr.mxu0 0.0
        %2696 = vmatpush1.msra.mxu0 %v2654
        %2697 = vmatprep.subr.mxu0 0.0
        %2698 = vmatpush1.msra.mxu0 %v2653
        %2699 = vmatprep.subr.mxu0 0.0
        %2700 = vmatpush1.msra.mxu0 %v2652
        %2701 = vmatprep.subr.mxu0 0.0
        %2702 = vmatpush2.msra.mxu0 0.0
        %2703 = vmatprep.subr.mxu0 0.0
        %2704 = vmatpush2.msra.mxu0 0.0
        %2705 = vmatprep.subr.mxu0 0.0
        %2706 = vmatpush2.msra.mxu0 0.0
        %2707 = vmatprep.subr.mxu0 0.0
        %2708 = vmatpush2.msra.mxu0 0.0
        %2709 = vmatprep.subr.mxu0 0.0
        %2710 = vmatpush2.msra.mxu0 0.0
        %2711 = vmatprep.subr.mxu0 0.0
        %2712 = vmatpush2.msra.mxu0 0.0
        %2713 = vmatprep.subr.mxu0 0.0
        %2714 = vmatpush2.msra.mxu0 0.0
        %2715 = vmatprep.subr.mxu0 0.0
        %2716 = vmatpush2.msra.mxu0 0.0
        %2717 = vmatprep.subr.mxu0 0.0
        %2718 = vmatpush2.msra.mxu0 0.0
        %2719 = vmatprep.subr.mxu0 0.0
        %2720 = vmatpush2.msra.mxu0 0.0
        %2721 = vmatprep.subr.mxu0 0.0
        %2722 = vmatpush2.msra.mxu0 0.0
        %2723 = vmatprep.subr.mxu0 0.0
        %2724 = vmatpush2.msra.mxu0 0.0
        %2725 = vmatprep.subr.mxu0 0.0
        %2726 = vmatpush2.msra.mxu0 0.0
        %2727 = vmatprep.subr.mxu0 0.0
        %2728 = vmatpush2.msra.mxu0 0.0
        %2729 = vmatprep.subr.mxu0 0.0
        %2730 = vmatpush2.msra.mxu0 0.0
        %2731 = vmatprep.subr.mxu0 0.0
        %2732 = vmatpush2.msra.mxu0 0.0
        %2733 = vmatprep.mubr.f32.mxu0 0.0
        %2734 = vmatmul.mubr.f32.gmra.mxu0 %v2667
        %v2735 = vpop.f32.mrf.mxu0
        %v2736 = vadd.f32 %v2665, %v2735
        %v2737 = vpop.f32.mrf.mxu0
        %2738 = vdwg.mxu0
        %v2739 = vlaneseq
        %v2740 = vand.u32 %v2739, 127
        %v2742 = vsel %vm433, 0.0, 0
        %2744 = vmatprep.subr.mxu0 0.0
        %2745 = vmatpush1.msra.mxu0 0.0
        %2746 = vmatprep.subr.mxu0 0.0
        %2747 = vmatpush1.msra.mxu0 0.0
        %2748 = vmatprep.subr.mxu0 0.0
        %2749 = vmatpush1.msra.mxu0 0.0
        %2750 = vmatprep.subr.mxu0 0.0
        %2751 = vmatpush1.msra.mxu0 0.0
        %2752 = vmatprep.subr.mxu0 0.0
        %2753 = vmatpush1.msra.mxu0 0.0
        %2754 = vmatprep.subr.mxu0 0.0
        %2755 = vmatpush1.msra.mxu0 0.0
        %2756 = vmatprep.subr.mxu0 0.0
        %2757 = vmatpush1.msra.mxu0 0.0
        %2758 = vmatprep.subr.mxu0 0.0
        %2759 = vmatpush1.msra.mxu0 0.0
        %2760 = vmatprep.subr.mxu0 0.0
        %2761 = vmatpush1.msra.mxu0 0.0
        %2762 = vmatprep.subr.mxu0 0.0
        %2763 = vmatpush1.msra.mxu0 0.0
        %2764 = vmatprep.subr.mxu0 0.0
        %2765 = vmatpush1.msra.mxu0 0.0
        %2766 = vmatprep.subr.mxu0 0.0
        %2767 = vmatpush1.msra.mxu0 0.0
        %2768 = vmatprep.subr.mxu0 0.0
        %2769 = vmatpush1.msra.mxu0 %v2659
        %2770 = vmatprep.subr.mxu0 0.0
        %2771 = vmatpush1.msra.mxu0 %v2658
        %2772 = vmatprep.subr.mxu0 0.0
        %2773 = vmatpush1.msra.mxu0 %v2657
        %2774 = vmatprep.subr.mxu0 0.0
        %2775 = vmatpush1.msra.mxu0 %v2656
        %2776 = vmatprep.subr.mxu0 0.0
        %2777 = vmatpush2.msra.mxu0 0.0
        %2778 = vmatprep.subr.mxu0 0.0
        %2779 = vmatpush2.msra.mxu0 0.0
        %2780 = vmatprep.subr.mxu0 0.0
        %2781 = vmatpush2.msra.mxu0 0.0
        %2782 = vmatprep.subr.mxu0 0.0
        %2783 = vmatpush2.msra.mxu0 0.0
        %2784 = vmatprep.subr.mxu0 0.0
        %2785 = vmatpush2.msra.mxu0 0.0
        %2786 = vmatprep.subr.mxu0 0.0
        %2787 = vmatpush2.msra.mxu0 0.0
        %2788 = vmatprep.subr.mxu0 0.0
        %2789 = vmatpush2.msra.mxu0 0.0
        %2790 = vmatprep.subr.mxu0 0.0
        %2791 = vmatpush2.msra.mxu0 0.0
        %2792 = vmatprep.subr.mxu0 0.0
        %2793 = vmatpush2.msra.mxu0 0.0
        %2794 = vmatprep.subr.mxu0 0.0
        %2795 = vmatpush2.msra.mxu0 0.0
        %2796 = vmatprep.subr.mxu0 0.0
        %2797 = vmatpush2.msra.mxu0 0.0
        %2798 = vmatprep.subr.mxu0 0.0
        %2799 = vmatpush2.msra.mxu0 0.0
        %2800 = vmatprep.subr.mxu0 0.0
        %2801 = vmatpush2.msra.mxu0 0.0
        %2802 = vmatprep.subr.mxu0 0.0
        %2803 = vmatpush2.msra.mxu0 0.0
        %2804 = vmatprep.subr.mxu0 0.0
        %2805 = vmatpush2.msra.mxu0 0.0
        %2806 = vmatprep.subr.mxu0 0.0
        %2807 = vmatpush2.msra.mxu0 0.0
        %2808 = vmatprep.mubr.f32.mxu0 0.0
        %2809 = vmatmul.mubr.f32.gmra.mxu0 %v2742
        %v2810 = vpop.f32.mrf.mxu0
        %v2811 = vadd.f32 %v2736, %v2810
        %v2812 = vpop.f32.mrf.mxu0
        %2813 = vdwg.mxu0
        %v2814 = vmul.f32 %v2811, 0.5
        %v2815 = vtanh.pop %v2814
        %v2816 = vmul.f32 %v2815, 0.5
        %v2817 = vadd.f32 %v2816, 0.5
        %v2818 = vtanh.pop %v2811
        %v2819 = vmul.f32 %v2817, 0.0
        %2821 = vrot.lane.b32.xlu0 %v2818, 64
        %v2822 = vpop.permute.xlu0 %2821
        %v2824 = vmul.f32 %v2817, %v2822
        %2826 = vrot.lane.b32.xlu0 %v2824, 32
        %v2827 = vpop.permute.xlu0 %2826
        %v2829 = vadd.f32 %v2819, %v2827
        %v2830 = vtanh.pop %v2829
        %2832 = vrot.lane.b32.xlu0 %v2830, 64
        %v2833 = vpop.permute.xlu0 %2832
        %v2835 = vmul.f32 %v2817, %v2833
        %vm2836 = vcmp.lt.s32.totalorder %v2740, 16
        %p2837 = scmp.gt.s32.totalorder %s301, 0
        %s2838 = scalar_select %p2837, 1, 0
        %v2839 = vstv %s2838
        %vm2840 = vcmp.eq.s32.totalorder %v2839, 1
        %vm2841 = vmand %vm2836, %vm2840
        %vm2842 = vcmp.ge.s32.totalorder %v2740, 16
        %p2843 = scmp.gt.s32.totalorder %s301, 7
        %s2844 = scalar_select %p2843, 1, 0
        %v2845 = vstv %s2844
        %vm2846 = vcmp.eq.s32.totalorder %v2845, 1
        %vm2847 = vmand %vm2842, %vm2846
        %vm2848 = vmor %vm2841, %vm2847
        %2850 = vrot.lane.b32.xlu0 %v2835, 32
        %v2851 = vpop.permute.xlu0 %2850
        %v2853 = vsel %vm2848, %v2851, 0.0
        %2855 = vrot.lane.b32.xlu0 %v2829, 96
        %v2856 = vpop.permute.xlu0 %2855
        %v2858 = vsel %vm2848, %v2856, 0.0
        %v2860 = vrot.slane %v2736, 1
        %v2863 = vsel %vm433, %v2853, 0
        %2865 = vmatprep.subr.mxu0 0.0
        %2866 = vmatpush1.msra.mxu0 0.0
        %2867 = vmatprep.subr.mxu0 0.0
        %2868 = vmatpush1.msra.mxu0 0.0
        %2869 = vmatprep.subr.mxu0 0.0
        %2870 = vmatpush1.msra.mxu0 0.0
        %2871 = vmatprep.subr.mxu0 0.0
        %2872 = vmatpush1.msra.mxu0 0.0
        %2873 = vmatprep.subr.mxu0 0.0
        %2874 = vmatpush1.msra.mxu0 0.0
        %2875 = vmatprep.subr.mxu0 0.0
        %2876 = vmatpush1.msra.mxu0 0.0
        %2877 = vmatprep.subr.mxu0 0.0
        %2878 = vmatpush1.msra.mxu0 0.0
        %2879 = vmatprep.subr.mxu0 0.0
        %2880 = vmatpush1.msra.mxu0 0.0
        %2881 = vmatprep.subr.mxu0 0.0
        %2882 = vmatpush1.msra.mxu0 0.0
        %2883 = vmatprep.subr.mxu0 0.0
        %2884 = vmatpush1.msra.mxu0 0.0
        %2885 = vmatprep.subr.mxu0 0.0
        %2886 = vmatpush1.msra.mxu0 0.0
        %2887 = vmatprep.subr.mxu0 0.0
        %2888 = vmatpush1.msra.mxu0 0.0
        %2889 = vmatprep.subr.mxu0 0.0
        %2890 = vmatpush1.msra.mxu0 %v2659
        %2891 = vmatprep.subr.mxu0 0.0
        %2892 = vmatpush1.msra.mxu0 %v2658
        %2893 = vmatprep.subr.mxu0 0.0
        %2894 = vmatpush1.msra.mxu0 %v2657
        %2895 = vmatprep.subr.mxu0 0.0
        %2896 = vmatpush1.msra.mxu0 %v2656
        %2897 = vmatprep.subr.mxu0 0.0
        %2898 = vmatpush2.msra.mxu0 0.0
        %2899 = vmatprep.subr.mxu0 0.0
        %2900 = vmatpush2.msra.mxu0 0.0
        %2901 = vmatprep.subr.mxu0 0.0
        %2902 = vmatpush2.msra.mxu0 0.0
        %2903 = vmatprep.subr.mxu0 0.0
        %2904 = vmatpush2.msra.mxu0 0.0
        %2905 = vmatprep.subr.mxu0 0.0
        %2906 = vmatpush2.msra.mxu0 0.0
        %2907 = vmatprep.subr.mxu0 0.0
        %2908 = vmatpush2.msra.mxu0 0.0
        %2909 = vmatprep.subr.mxu0 0.0
        %2910 = vmatpush2.msra.mxu0 0.0
        %2911 = vmatprep.subr.mxu0 0.0
        %2912 = vmatpush2.msra.mxu0 0.0
        %2913 = vmatprep.subr.mxu0 0.0
        %2914 = vmatpush2.msra.mxu0 0.0
        %2915 = vmatprep.subr.mxu0 0.0
        %2916 = vmatpush2.msra.mxu0 0.0
        %2917 = vmatprep.subr.mxu0 0.0
        %2918 = vmatpush2.msra.mxu0 0.0
        %2919 = vmatprep.subr.mxu0 0.0
        %2920 = vmatpush2.msra.mxu0 0.0
        %2921 = vmatprep.subr.mxu0 0.0
        %2922 = vmatpush2.msra.mxu0 0.0
        %2923 = vmatprep.subr.mxu0 0.0
        %2924 = vmatpush2.msra.mxu0 0.0
        %2925 = vmatprep.subr.mxu0 0.0
        %2926 = vmatpush2.msra.mxu0 0.0
        %2927 = vmatprep.subr.mxu0 0.0
        %2928 = vmatpush2.msra.mxu0 0.0
        %2929 = vmatprep.mubr.f32.mxu0 0.0
        %2930 = vmatmul.mubr.f32.gmra.mxu0 %v2863
        %v2931 = vpop.f32.mrf.mxu0
        %v2932 = vadd.f32 %v2860, %v2931
        %v2933 = vpop.f32.mrf.mxu0
        %2934 = vdwg.mxu0
        %v2935 = vmul.f32 %v2932, 0.5
        %v2936 = vtanh.pop %v2935
        %v2937 = vmul.f32 %v2936, 0.5
        %v2938 = vadd.f32 %v2937, 0.5
        %v2939 = vtanh.pop %v2932
        %2941 = vrot.lane.b32.xlu0 %v2858, 32
        %v2942 = vpop.permute.xlu0 %2941
        %v2944 = vmul.f32 %v2938, %v2942
        %2946 = vrot.lane.b32.xlu0 %v2939, 64
        %v2947 = vpop.permute.xlu0 %2946
        %v2949 = vmul.f32 %v2938, %v2947
        %2951 = vrot.lane.b32.xlu0 %v2949, 32
        %v2952 = vpop.permute.xlu0 %2951
        %v2954 = vadd.f32 %v2944, %v2952
        %v2955 = vtanh.pop %v2954
        %2957 = vrot.lane.b32.xlu0 %v2955, 64
        %v2958 = vpop.permute.xlu0 %2957
        %v2960 = vmul.f32 %v2938, %v2958
        %p2961 = scmp.gt.s32.totalorder %s301, 1
        %s2962 = scalar_select %p2961, 1, 0
        %v2963 = vstv %s2962
        %vm2964 = vcmp.eq.s32.totalorder %v2963, 1
        %vm2965 = vmand %vm2836, %vm2964
        %p2966 = scmp.gt.s32.totalorder %s301, 6
        %s2967 = scalar_select %p2966, 1, 0
        %v2968 = vstv %s2967
        %vm2969 = vcmp.eq.s32.totalorder %v2968, 1
        %vm2970 = vmand %vm2842, %vm2969
        %vm2971 = vmor %vm2965, %vm2970
        %2973 = vrot.lane.b32.xlu0 %v2960, 32
        %v2974 = vpop.permute.xlu0 %2973
        %v2976 = vsel %vm2971, %v2974, %v2853
        %2978 = vrot.lane.b32.xlu0 %v2954, 96
        %v2979 = vpop.permute.xlu0 %2978
        %v2981 = vsel %vm2971, %v2979, %v2858
        %v2982 = vsel %vm2971, %v2974, 0.0
        %v2983 = vrot.slane %v2736, 2
        %v2986 = vsel %vm433, %v2976, 0
        %2988 = vmatprep.subr.mxu0 0.0
        %2989 = vmatpush1.msra.mxu0 0.0
        %2990 = vmatprep.subr.mxu0 0.0
        %2991 = vmatpush1.msra.mxu0 0.0
        %2992 = vmatprep.subr.mxu0 0.0
        %2993 = vmatpush1.msra.mxu0 0.0
        %2994 = vmatprep.subr.mxu0 0.0
        %2995 = vmatpush1.msra.mxu0 0.0
        %2996 = vmatprep.subr.mxu0 0.0
        %2997 = vmatpush1.msra.mxu0 0.0
        %2998 = vmatprep.subr.mxu0 0.0
        %2999 = vmatpush1.msra.mxu0 0.0
        %3000 = vmatprep.subr.mxu0 0.0
        %3001 = vmatpush1.msra.mxu0 0.0
        %3002 = vmatprep.subr.mxu0 0.0
        %3003 = vmatpush1.msra.mxu0 0.0
        %3004 = vmatprep.subr.mxu0 0.0
        %3005 = vmatpush1.msra.mxu0 0.0
        %3006 = vmatprep.subr.mxu0 0.0
        %3007 = vmatpush1.msra.mxu0 0.0
        %3008 = vmatprep.subr.mxu0 0.0
        %3009 = vmatpush1.msra.mxu0 0.0
        %3010 = vmatprep.subr.mxu0 0.0
        %3011 = vmatpush1.msra.mxu0 0.0
        %3012 = vmatprep.subr.mxu0 0.0
        %3013 = vmatpush1.msra.mxu0 %v2659
        %3014 = vmatprep.subr.mxu0 0.0
        %3015 = vmatpush1.msra.mxu0 %v2658
        %3016 = vmatprep.subr.mxu0 0.0
        %3017 = vmatpush1.msra.mxu0 %v2657
        %3018 = vmatprep.subr.mxu0 0.0
        %3019 = vmatpush1.msra.mxu0 %v2656
        %3020 = vmatprep.subr.mxu0 0.0
        %3021 = vmatpush2.msra.mxu0 0.0
        %3022 = vmatprep.subr.mxu0 0.0
        %3023 = vmatpush2.msra.mxu0 0.0
        %3024 = vmatprep.subr.mxu0 0.0
        %3025 = vmatpush2.msra.mxu0 0.0
        %3026 = vmatprep.subr.mxu0 0.0
        %3027 = vmatpush2.msra.mxu0 0.0
        %3028 = vmatprep.subr.mxu0 0.0
        %3029 = vmatpush2.msra.mxu0 0.0
        %3030 = vmatprep.subr.mxu0 0.0
        %3031 = vmatpush2.msra.mxu0 0.0
        %3032 = vmatprep.subr.mxu0 0.0
        %3033 = vmatpush2.msra.mxu0 0.0
        %3034 = vmatprep.subr.mxu0 0.0
        %3035 = vmatpush2.msra.mxu0 0.0
        %3036 = vmatprep.subr.mxu0 0.0
        %3037 = vmatpush2.msra.mxu0 0.0
        %3038 = vmatprep.subr.mxu0 0.0
        %3039 = vmatpush2.msra.mxu0 0.0
        %3040 = vmatprep.subr.mxu0 0.0
        %3041 = vmatpush2.msra.mxu0 0.0
        %3042 = vmatprep.subr.mxu0 0.0
        %3043 = vmatpush2.msra.mxu0 0.0
        %3044 = vmatprep.subr.mxu0 0.0
        %3045 = vmatpush2.msra.mxu0 0.0
        %3046 = vmatprep.subr.mxu0 0.0
        %3047 = vmatpush2.msra.mxu0 0.0
        %3048 = vmatprep.subr.mxu0 0.0
        %3049 = vmatpush2.msra.mxu0 0.0
        %3050 = vmatprep.subr.mxu0 0.0
        %3051 = vmatpush2.msra.mxu0 0.0
        %3052 = vmatprep.mubr.f32.mxu0 0.0
        %3053 = vmatmul.mubr.f32.gmra.mxu0 %v2986
        %v3054 = vpop.f32.mrf.mxu0
        %v3055 = vadd.f32 %v2983, %v3054
        %v3056 = vpop.f32.mrf.mxu0
        %3057 = vdwg.mxu0
        %v3058 = vmul.f32 %v3055, 0.5
        %v3059 = vtanh.pop %v3058
        %v3060 = vmul.f32 %v3059, 0.5
        %v3061 = vadd.f32 %v3060, 0.5
        %v3062 = vtanh.pop %v3055
        %3064 = vrot.lane.b32.xlu0 %v2981, 32
        %v3065 = vpop.permute.xlu0 %3064
        %v3067 = vmul.f32 %v3061, %v3065
        %3069 = vrot.lane.b32.xlu0 %v3062, 64
        %v3070 = vpop.permute.xlu0 %3069
        %v3072 = vmul.f32 %v3061, %v3070
        %3074 = vrot.lane.b32.xlu0 %v3072, 32
        %v3075 = vpop.permute.xlu0 %3074
        %v3077 = vadd.f32 %v3067, %v3075
        %v3078 = vtanh.pop %v3077
        %3080 = vrot.lane.b32.xlu0 %v3078, 64
        %v3081 = vpop.permute.xlu0 %3080
        %v3083 = vmul.f32 %v3061, %v3081
        %p3084 = scmp.gt.s32.totalorder %s301, 2
        %s3085 = scalar_select %p3084, 1, 0
        %v3086 = vstv %s3085
        %vm3087 = vcmp.eq.s32.totalorder %v3086, 1
        %vm3088 = vmand %vm2836, %vm3087
        %p3089 = scmp.gt.s32.totalorder %s301, 5
        %s3090 = scalar_select %p3089, 1, 0
        %v3091 = vstv %s3090
        %vm3092 = vcmp.eq.s32.totalorder %v3091, 1
        %vm3093 = vmand %vm2842, %vm3092
        %vm3094 = vmor %vm3088, %vm3093
        %3096 = vrot.lane.b32.xlu0 %v3083, 32
        %v3097 = vpop.permute.xlu0 %3096
        %v3099 = vsel %vm3094, %v3097, %v2976
        %3101 = vrot.lane.b32.xlu0 %v3077, 96
        %v3102 = vpop.permute.xlu0 %3101
        %v3104 = vsel %vm3094, %v3102, %v2981
        %v3105 = vsel %vm3094, %v3097, 0.0
        %v3106 = vrot.slane %v2736, 3
        %v3109 = vsel %vm433, %v3099, 0
        %3111 = vmatprep.subr.mxu0 0.0
        %3112 = vmatpush1.msra.mxu0 0.0
        %3113 = vmatprep.subr.mxu0 0.0
        %3114 = vmatpush1.msra.mxu0 0.0
        %3115 = vmatprep.subr.mxu0 0.0
        %3116 = vmatpush1.msra.mxu0 0.0
        %3117 = vmatprep.subr.mxu0 0.0
        %3118 = vmatpush1.msra.mxu0 0.0
        %3119 = vmatprep.subr.mxu0 0.0
        %3120 = vmatpush1.msra.mxu0 0.0
        %3121 = vmatprep.subr.mxu0 0.0
        %3122 = vmatpush1.msra.mxu0 0.0
        %3123 = vmatprep.subr.mxu0 0.0
        %3124 = vmatpush1.msra.mxu0 0.0
        %3125 = vmatprep.subr.mxu0 0.0
        %3126 = vmatpush1.msra.mxu0 0.0
        %3127 = vmatprep.subr.mxu0 0.0
        %3128 = vmatpush1.msra.mxu0 0.0
        %3129 = vmatprep.subr.mxu0 0.0
        %3130 = vmatpush1.msra.mxu0 0.0
        %3131 = vmatprep.subr.mxu0 0.0
        %3132 = vmatpush1.msra.mxu0 0.0
        %3133 = vmatprep.subr.mxu0 0.0
        %3134 = vmatpush1.msra.mxu0 0.0
        %3135 = vmatprep.subr.mxu0 0.0
        %3136 = vmatpush1.msra.mxu0 %v2659
        %3137 = vmatprep.subr.mxu0 0.0
        %3138 = vmatpush1.msra.mxu0 %v2658
        %3139 = vmatprep.subr.mxu0 0.0
        %3140 = vmatpush1.msra.mxu0 %v2657
        %3141 = vmatprep.subr.mxu0 0.0
        %3142 = vmatpush1.msra.mxu0 %v2656
        %3143 = vmatprep.subr.mxu0 0.0
        %3144 = vmatpush2.msra.mxu0 0.0
        %3145 = vmatprep.subr.mxu0 0.0
        %3146 = vmatpush2.msra.mxu0 0.0
        %3147 = vmatprep.subr.mxu0 0.0
        %3148 = vmatpush2.msra.mxu0 0.0
        %3149 = vmatprep.subr.mxu0 0.0
        %3150 = vmatpush2.msra.mxu0 0.0
        %3151 = vmatprep.subr.mxu0 0.0
        %3152 = vmatpush2.msra.mxu0 0.0
        %3153 = vmatprep.subr.mxu0 0.0
        %3154 = vmatpush2.msra.mxu0 0.0
        %3155 = vmatprep.subr.mxu0 0.0
        %3156 = vmatpush2.msra.mxu0 0.0
        %3157 = vmatprep.subr.mxu0 0.0
        %3158 = vmatpush2.msra.mxu0 0.0
        %3159 = vmatprep.subr.mxu0 0.0
        %3160 = vmatpush2.msra.mxu0 0.0
        %3161 = vmatprep.subr.mxu0 0.0
        %3162 = vmatpush2.msra.mxu0 0.0
        %3163 = vmatprep.subr.mxu0 0.0
        %3164 = vmatpush2.msra.mxu0 0.0
        %3165 = vmatprep.subr.mxu0 0.0
        %3166 = vmatpush2.msra.mxu0 0.0
        %3167 = vmatprep.subr.mxu0 0.0
        %3168 = vmatpush2.msra.mxu0 0.0
        %3169 = vmatprep.subr.mxu0 0.0
        %3170 = vmatpush2.msra.mxu0 0.0
        %3171 = vmatprep.subr.mxu0 0.0
        %3172 = vmatpush2.msra.mxu0 0.0
        %3173 = vmatprep.subr.mxu0 0.0
        %3174 = vmatpush2.msra.mxu0 0.0
        %3175 = vmatprep.mubr.f32.mxu0 0.0
        %3176 = vmatmul.mubr.f32.gmra.mxu0 %v3109
        %v3177 = vpop.f32.mrf.mxu0
        %v3178 = vadd.f32 %v3106, %v3177
        %v3179 = vpop.f32.mrf.mxu0
        %3180 = vdwg.mxu0
        %v3181 = vmul.f32 %v3178, 0.5
        %v3182 = vtanh.pop %v3181
        %v3183 = vmul.f32 %v3182, 0.5
        %v3184 = vadd.f32 %v3183, 0.5
        %v3185 = vtanh.pop %v3178
        %3187 = vrot.lane.b32.xlu0 %v3104, 32
        %v3188 = vpop.permute.xlu0 %3187
        %v3190 = vmul.f32 %v3184, %v3188
        %3192 = vrot.lane.b32.xlu0 %v3185, 64
        %v3193 = vpop.permute.xlu0 %3192
        %v3195 = vmul.f32 %v3184, %v3193
        %3197 = vrot.lane.b32.xlu0 %v3195, 32
        %v3198 = vpop.permute.xlu0 %3197
        %v3200 = vadd.f32 %v3190, %v3198
        %v3201 = vtanh.pop %v3200
        %3203 = vrot.lane.b32.xlu0 %v3201, 64
        %v3204 = vpop.permute.xlu0 %3203
        %v3206 = vmul.f32 %v3184, %v3204
        %p3207 = scmp.gt.s32.totalorder %s301, 3
        %s3208 = scalar_select %p3207, 1, 0
        %v3209 = vstv %s3208
        %vm3210 = vcmp.eq.s32.totalorder %v3209, 1
        %vm3211 = vmand %vm2836, %vm3210
        %p3212 = scmp.gt.s32.totalorder %s301, 4
        %s3213 = scalar_select %p3212, 1, 0
        %v3214 = vstv %s3213
        %vm3215 = vcmp.eq.s32.totalorder %v3214, 1
        %vm3216 = vmand %vm2842, %vm3215
        %vm3217 = vmor %vm3211, %vm3216
        %3219 = vrot.lane.b32.xlu0 %v3206, 32
        %v3220 = vpop.permute.xlu0 %3219
        %v3222 = vsel %vm3217, %v3220, %v3099
        %3224 = vrot.lane.b32.xlu0 %v3200, 96
        %v3225 = vpop.permute.xlu0 %3224
        %v3227 = vsel %vm3217, %v3225, %v3104
        %v3228 = vsel %vm3217, %v3220, 0.0
        %v3229 = vrot.slane %v2736, 4
        %v3232 = vsel %vm433, %v3222, 0
        %3234 = vmatprep.subr.mxu0 0.0
        %3235 = vmatpush1.msra.mxu0 0.0
        %3236 = vmatprep.subr.mxu0 0.0
        %3237 = vmatpush1.msra.mxu0 0.0
        %3238 = vmatprep.subr.mxu0 0.0
        %3239 = vmatpush1.msra.mxu0 0.0
        %3240 = vmatprep.subr.mxu0 0.0
        %3241 = vmatpush1.msra.mxu0 0.0
        %3242 = vmatprep.subr.mxu0 0.0
        %3243 = vmatpush1.msra.mxu0 0.0
        %3244 = vmatprep.subr.mxu0 0.0
        %3245 = vmatpush1.msra.mxu0 0.0
        %3246 = vmatprep.subr.mxu0 0.0
        %3247 = vmatpush1.msra.mxu0 0.0
        %3248 = vmatprep.subr.mxu0 0.0
        %3249 = vmatpush1.msra.mxu0 0.0
        %3250 = vmatprep.subr.mxu0 0.0
        %3251 = vmatpush1.msra.mxu0 0.0
        %3252 = vmatprep.subr.mxu0 0.0
        %3253 = vmatpush1.msra.mxu0 0.0
        %3254 = vmatprep.subr.mxu0 0.0
        %3255 = vmatpush1.msra.mxu0 0.0
        %3256 = vmatprep.subr.mxu0 0.0
        %3257 = vmatpush1.msra.mxu0 0.0
        %3258 = vmatprep.subr.mxu0 0.0
        %3259 = vmatpush1.msra.mxu0 %v2659
        %3260 = vmatprep.subr.mxu0 0.0
        %3261 = vmatpush1.msra.mxu0 %v2658
        %3262 = vmatprep.subr.mxu0 0.0
        %3263 = vmatpush1.msra.mxu0 %v2657
        %3264 = vmatprep.subr.mxu0 0.0
        %3265 = vmatpush1.msra.mxu0 %v2656
        %3266 = vmatprep.subr.mxu0 0.0
        %3267 = vmatpush2.msra.mxu0 0.0
        %3268 = vmatprep.subr.mxu0 0.0
        %3269 = vmatpush2.msra.mxu0 0.0
        %3270 = vmatprep.subr.mxu0 0.0
        %3271 = vmatpush2.msra.mxu0 0.0
        %3272 = vmatprep.subr.mxu0 0.0
        %3273 = vmatpush2.msra.mxu0 0.0
        %3274 = vmatprep.subr.mxu0 0.0
        %3275 = vmatpush2.msra.mxu0 0.0
        %3276 = vmatprep.subr.mxu0 0.0
        %3277 = vmatpush2.msra.mxu0 0.0
        %3278 = vmatprep.subr.mxu0 0.0
        %3279 = vmatpush2.msra.mxu0 0.0
        %3280 = vmatprep.subr.mxu0 0.0
        %3281 = vmatpush2.msra.mxu0 0.0
        %3282 = vmatprep.subr.mxu0 0.0
        %3283 = vmatpush2.msra.mxu0 0.0
        %3284 = vmatprep.subr.mxu0 0.0
        %3285 = vmatpush2.msra.mxu0 0.0
        %3286 = vmatprep.subr.mxu0 0.0
        %3287 = vmatpush2.msra.mxu0 0.0
        %3288 = vmatprep.subr.mxu0 0.0
        %3289 = vmatpush2.msra.mxu0 0.0
        %3290 = vmatprep.subr.mxu0 0.0
        %3291 = vmatpush2.msra.mxu0 0.0
        %3292 = vmatprep.subr.mxu0 0.0
        %3293 = vmatpush2.msra.mxu0 0.0
        %3294 = vmatprep.subr.mxu0 0.0
        %3295 = vmatpush2.msra.mxu0 0.0
        %3296 = vmatprep.subr.mxu0 0.0
        %3297 = vmatpush2.msra.mxu0 0.0
        %3298 = vmatprep.mubr.f32.mxu0 0.0
        %3299 = vmatmul.mubr.f32.gmra.mxu0 %v3232
        %v3300 = vpop.f32.mrf.mxu0
        %v3301 = vadd.f32 %v3229, %v3300
        %v3302 = vpop.f32.mrf.mxu0
        %3303 = vdwg.mxu0
        %v3304 = vmul.f32 %v3301, 0.5
        %v3305 = vtanh.pop %v3304
        %v3306 = vmul.f32 %v3305, 0.5
        %v3307 = vadd.f32 %v3306, 0.5
        %v3308 = vtanh.pop %v3301
        %3310 = vrot.lane.b32.xlu0 %v3227, 32
        %v3311 = vpop.permute.xlu0 %3310
        %v3313 = vmul.f32 %v3307, %v3311
        %3315 = vrot.lane.b32.xlu0 %v3308, 64
        %v3316 = vpop.permute.xlu0 %3315
        %v3318 = vmul.f32 %v3307, %v3316
        %3320 = vrot.lane.b32.xlu0 %v3318, 32
        %v3321 = vpop.permute.xlu0 %3320
        %v3323 = vadd.f32 %v3313, %v3321
        %v3324 = vtanh.pop %v3323
        %3326 = vrot.lane.b32.xlu0 %v3324, 64
        %v3327 = vpop.permute.xlu0 %3326
        %v3329 = vmul.f32 %v3307, %v3327
        %vm3330 = vmand %vm2836, %vm3215
        %vm3331 = vmand %vm2842, %vm3210
        %vm3332 = vmor %vm3330, %vm3331
        %3334 = vrot.lane.b32.xlu0 %v3329, 32
        %v3335 = vpop.permute.xlu0 %3334
        %v3337 = vsel %vm3332, %v3335, %v3222
        %3339 = vrot.lane.b32.xlu0 %v3323, 96
        %v3340 = vpop.permute.xlu0 %3339
        %v3342 = vsel %vm3332, %v3340, %v3227
        %v3343 = vsel %vm3332, %v3335, 0.0
        %v3344 = vrot.slane %v2736, 5
        %v3347 = vsel %vm433, %v3337, 0
        %3349 = vmatprep.subr.mxu0 0.0
        %3350 = vmatpush1.msra.mxu0 0.0
        %3351 = vmatprep.subr.mxu0 0.0
        %3352 = vmatpush1.msra.mxu0 0.0
        %3353 = vmatprep.subr.mxu0 0.0
        %3354 = vmatpush1.msra.mxu0 0.0
        %3355 = vmatprep.subr.mxu0 0.0
        %3356 = vmatpush1.msra.mxu0 0.0
        %3357 = vmatprep.subr.mxu0 0.0
        %3358 = vmatpush1.msra.mxu0 0.0
        %3359 = vmatprep.subr.mxu0 0.0
        %3360 = vmatpush1.msra.mxu0 0.0
        %3361 = vmatprep.subr.mxu0 0.0
        %3362 = vmatpush1.msra.mxu0 0.0
        %3363 = vmatprep.subr.mxu0 0.0
        %3364 = vmatpush1.msra.mxu0 0.0
        %3365 = vmatprep.subr.mxu0 0.0
        %3366 = vmatpush1.msra.mxu0 0.0
        %3367 = vmatprep.subr.mxu0 0.0
        %3368 = vmatpush1.msra.mxu0 0.0
        %3369 = vmatprep.subr.mxu0 0.0
        %3370 = vmatpush1.msra.mxu0 0.0
        %3371 = vmatprep.subr.mxu0 0.0
        %3372 = vmatpush1.msra.mxu0 0.0
        %3373 = vmatprep.subr.mxu0 0.0
        %3374 = vmatpush1.msra.mxu0 %v2659
        %3375 = vmatprep.subr.mxu0 0.0
        %3376 = vmatpush1.msra.mxu0 %v2658
        %3377 = vmatprep.subr.mxu0 0.0
        %3378 = vmatpush1.msra.mxu0 %v2657
        %3379 = vmatprep.subr.mxu0 0.0
        %3380 = vmatpush1.msra.mxu0 %v2656
        %3381 = vmatprep.subr.mxu0 0.0
        %3382 = vmatpush2.msra.mxu0 0.0
        %3383 = vmatprep.subr.mxu0 0.0
        %3384 = vmatpush2.msra.mxu0 0.0
        %3385 = vmatprep.subr.mxu0 0.0
        %3386 = vmatpush2.msra.mxu0 0.0
        %3387 = vmatprep.subr.mxu0 0.0
        %3388 = vmatpush2.msra.mxu0 0.0
        %3389 = vmatprep.subr.mxu0 0.0
        %3390 = vmatpush2.msra.mxu0 0.0
        %3391 = vmatprep.subr.mxu0 0.0
        %3392 = vmatpush2.msra.mxu0 0.0
        %3393 = vmatprep.subr.mxu0 0.0
        %3394 = vmatpush2.msra.mxu0 0.0
        %3395 = vmatprep.subr.mxu0 0.0
        %3396 = vmatpush2.msra.mxu0 0.0
        %3397 = vmatprep.subr.mxu0 0.0
        %3398 = vmatpush2.msra.mxu0 0.0
        %3399 = vmatprep.subr.mxu0 0.0
        %3400 = vmatpush2.msra.mxu0 0.0
        %3401 = vmatprep.subr.mxu0 0.0
        %3402 = vmatpush2.msra.mxu0 0.0
        %3403 = vmatprep.subr.mxu0 0.0
        %3404 = vmatpush2.msra.mxu0 0.0
        %3405 = vmatprep.subr.mxu0 0.0
        %3406 = vmatpush2.msra.mxu0 0.0
        %3407 = vmatprep.subr.mxu0 0.0
        %3408 = vmatpush2.msra.mxu0 0.0
        %3409 = vmatprep.subr.mxu0 0.0
        %3410 = vmatpush2.msra.mxu0 0.0
        %3411 = vmatprep.subr.mxu0 0.0
        %3412 = vmatpush2.msra.mxu0 0.0
        %3413 = vmatprep.mubr.f32.mxu0 0.0
        %3414 = vmatmul.mubr.f32.gmra.mxu0 %v3347
        %v3415 = vpop.f32.mrf.mxu0
        %v3416 = vadd.f32 %v3344, %v3415
        %v3417 = vpop.f32.mrf.mxu0
        %3418 = vdwg.mxu0
        %v3419 = vmul.f32 %v3416, 0.5
        %v3420 = vtanh.pop %v3419
        %v3421 = vmul.f32 %v3420, 0.5
        %v3422 = vadd.f32 %v3421, 0.5
        %v3423 = vtanh.pop %v3416
        %3425 = vrot.lane.b32.xlu0 %v3342, 32
        %v3426 = vpop.permute.xlu0 %3425
        %v3428 = vmul.f32 %v3422, %v3426
        %3430 = vrot.lane.b32.xlu0 %v3423, 64
        %v3431 = vpop.permute.xlu0 %3430
        %v3433 = vmul.f32 %v3422, %v3431
        %3435 = vrot.lane.b32.xlu0 %v3433, 32
        %v3436 = vpop.permute.xlu0 %3435
        %v3438 = vadd.f32 %v3428, %v3436
        %v3439 = vtanh.pop %v3438
        %3441 = vrot.lane.b32.xlu0 %v3439, 64
        %v3442 = vpop.permute.xlu0 %3441
        %v3444 = vmul.f32 %v3422, %v3442
        %vm3445 = vmand %vm2836, %vm3092
        %vm3446 = vmand %vm2842, %vm3087
        %vm3447 = vmor %vm3445, %vm3446
        %3449 = vrot.lane.b32.xlu0 %v3444, 32
        %v3450 = vpop.permute.xlu0 %3449
        %v3452 = vsel %vm3447, %v3450, %v3337
        %3454 = vrot.lane.b32.xlu0 %v3438, 96
        %v3455 = vpop.permute.xlu0 %3454
        %v3457 = vsel %vm3447, %v3455, %v3342
        %v3458 = vsel %vm3447, %v3450, 0.0
        %v3459 = vrot.slane %v2736, 6
        %v3462 = vsel %vm433, %v3452, 0
        %3464 = vmatprep.subr.mxu0 0.0
        %3465 = vmatpush1.msra.mxu0 0.0
        %3466 = vmatprep.subr.mxu0 0.0
        %3467 = vmatpush1.msra.mxu0 0.0
        %3468 = vmatprep.subr.mxu0 0.0
        %3469 = vmatpush1.msra.mxu0 0.0
        %3470 = vmatprep.subr.mxu0 0.0
        %3471 = vmatpush1.msra.mxu0 0.0
        %3472 = vmatprep.subr.mxu0 0.0
        %3473 = vmatpush1.msra.mxu0 0.0
        %3474 = vmatprep.subr.mxu0 0.0
        %3475 = vmatpush1.msra.mxu0 0.0
        %3476 = vmatprep.subr.mxu0 0.0
        %3477 = vmatpush1.msra.mxu0 0.0
        %3478 = vmatprep.subr.mxu0 0.0
        %3479 = vmatpush1.msra.mxu0 0.0
        %3480 = vmatprep.subr.mxu0 0.0
        %3481 = vmatpush1.msra.mxu0 0.0
        %3482 = vmatprep.subr.mxu0 0.0
        %3483 = vmatpush1.msra.mxu0 0.0
        %3484 = vmatprep.subr.mxu0 0.0
        %3485 = vmatpush1.msra.mxu0 0.0
        %3486 = vmatprep.subr.mxu0 0.0
        %3487 = vmatpush1.msra.mxu0 0.0
        %3488 = vmatprep.subr.mxu0 0.0
        %3489 = vmatpush1.msra.mxu0 %v2659
        %3490 = vmatprep.subr.mxu0 0.0
        %3491 = vmatpush1.msra.mxu0 %v2658
        %3492 = vmatprep.subr.mxu0 0.0
        %3493 = vmatpush1.msra.mxu0 %v2657
        %3494 = vmatprep.subr.mxu0 0.0
        %3495 = vmatpush1.msra.mxu0 %v2656
        %3496 = vmatprep.subr.mxu0 0.0
        %3497 = vmatpush2.msra.mxu0 0.0
        %3498 = vmatprep.subr.mxu0 0.0
        %3499 = vmatpush2.msra.mxu0 0.0
        %3500 = vmatprep.subr.mxu0 0.0
        %3501 = vmatpush2.msra.mxu0 0.0
        %3502 = vmatprep.subr.mxu0 0.0
        %3503 = vmatpush2.msra.mxu0 0.0
        %3504 = vmatprep.subr.mxu0 0.0
        %3505 = vmatpush2.msra.mxu0 0.0
        %3506 = vmatprep.subr.mxu0 0.0
        %3507 = vmatpush2.msra.mxu0 0.0
        %3508 = vmatprep.subr.mxu0 0.0
        %3509 = vmatpush2.msra.mxu0 0.0
        %3510 = vmatprep.subr.mxu0 0.0
        %3511 = vmatpush2.msra.mxu0 0.0
        %3512 = vmatprep.subr.mxu0 0.0
        %3513 = vmatpush2.msra.mxu0 0.0
        %3514 = vmatprep.subr.mxu0 0.0
        %3515 = vmatpush2.msra.mxu0 0.0
        %3516 = vmatprep.subr.mxu0 0.0
        %3517 = vmatpush2.msra.mxu0 0.0
        %3518 = vmatprep.subr.mxu0 0.0
        %3519 = vmatpush2.msra.mxu0 0.0
        %3520 = vmatprep.subr.mxu0 0.0
        %3521 = vmatpush2.msra.mxu0 0.0
        %3522 = vmatprep.subr.mxu0 0.0
        %3523 = vmatpush2.msra.mxu0 0.0
        %3524 = vmatprep.subr.mxu0 0.0
        %3525 = vmatpush2.msra.mxu0 0.0
        %3526 = vmatprep.subr.mxu0 0.0
        %3527 = vmatpush2.msra.mxu0 0.0
        %3528 = vmatprep.mubr.f32.mxu0 0.0
        %3529 = vmatmul.mubr.f32.gmra.mxu0 %v3462
        %v3530 = vpop.f32.mrf.mxu0
        %v3531 = vadd.f32 %v3459, %v3530
        %v3532 = vpop.f32.mrf.mxu0
        %3533 = vdwg.mxu0
        %v3534 = vmul.f32 %v3531, 0.5
        %v3535 = vtanh.pop %v3534
        %v3536 = vmul.f32 %v3535, 0.5
        %v3537 = vadd.f32 %v3536, 0.5
        %v3538 = vtanh.pop %v3531
        %3540 = vrot.lane.b32.xlu0 %v3457, 32
        %v3541 = vpop.permute.xlu0 %3540
        %v3543 = vmul.f32 %v3537, %v3541
        %3545 = vrot.lane.b32.xlu0 %v3538, 64
        %v3546 = vpop.permute.xlu0 %3545
        %v3548 = vmul.f32 %v3537, %v3546
        %3550 = vrot.lane.b32.xlu0 %v3548, 32
        %v3551 = vpop.permute.xlu0 %3550
        %v3553 = vadd.f32 %v3543, %v3551
        %v3554 = vtanh.pop %v3553
        %3556 = vrot.lane.b32.xlu0 %v3554, 64
        %v3557 = vpop.permute.xlu0 %3556
        %v3559 = vmul.f32 %v3537, %v3557
        %vm3560 = vmand %vm2836, %vm2969
        %vm3561 = vmand %vm2842, %vm2964
        %vm3562 = vmor %vm3560, %vm3561
        %3564 = vrot.lane.b32.xlu0 %v3559, 32
        %v3565 = vpop.permute.xlu0 %3564
        %v3567 = vsel %vm3562, %v3565, %v3452
        %3569 = vrot.lane.b32.xlu0 %v3553, 96
        %v3570 = vpop.permute.xlu0 %3569
        %v3572 = vsel %vm3562, %v3570, %v3457
        %v3573 = vsel %vm3562, %v3565, 0.0
        %v3574 = vrot.slane %v2736, 7
        %v3577 = vsel %vm433, %v3567, 0
        %3579 = vmatprep.subr.mxu0 0.0
        %3580 = vmatpush1.msra.mxu0 0.0
        %3581 = vmatprep.subr.mxu0 0.0
        %3582 = vmatpush1.msra.mxu0 0.0
        %3583 = vmatprep.subr.mxu0 0.0
        %3584 = vmatpush1.msra.mxu0 0.0
        %3585 = vmatprep.subr.mxu0 0.0
        %3586 = vmatpush1.msra.mxu0 0.0
        %3587 = vmatprep.subr.mxu0 0.0
        %3588 = vmatpush1.msra.mxu0 0.0
        %3589 = vmatprep.subr.mxu0 0.0
        %3590 = vmatpush1.msra.mxu0 0.0
        %3591 = vmatprep.subr.mxu0 0.0
        %3592 = vmatpush1.msra.mxu0 0.0
        %3593 = vmatprep.subr.mxu0 0.0
        %3594 = vmatpush1.msra.mxu0 0.0
        %3595 = vmatprep.subr.mxu0 0.0
        %3596 = vmatpush1.msra.mxu0 0.0
        %3597 = vmatprep.subr.mxu0 0.0
        %3598 = vmatpush1.msra.mxu0 0.0
        %3599 = vmatprep.subr.mxu0 0.0
        %3600 = vmatpush1.msra.mxu0 0.0
        %3601 = vmatprep.subr.mxu0 0.0
        %3602 = vmatpush1.msra.mxu0 0.0
        %3603 = vmatprep.subr.mxu0 0.0
        %3604 = vmatpush1.msra.mxu0 %v2659
        %3605 = vmatprep.subr.mxu0 0.0
        %3606 = vmatpush1.msra.mxu0 %v2658
        %3607 = vmatprep.subr.mxu0 0.0
        %3608 = vmatpush1.msra.mxu0 %v2657
        %3609 = vmatprep.subr.mxu0 0.0
        %3610 = vmatpush1.msra.mxu0 %v2656
        %3611 = vmatprep.subr.mxu0 0.0
        %3612 = vmatpush2.msra.mxu0 0.0
        %3613 = vmatprep.subr.mxu0 0.0
        %3614 = vmatpush2.msra.mxu0 0.0
        %3615 = vmatprep.subr.mxu0 0.0
        %3616 = vmatpush2.msra.mxu0 0.0
        %3617 = vmatprep.subr.mxu0 0.0
        %3618 = vmatpush2.msra.mxu0 0.0
        %3619 = vmatprep.subr.mxu0 0.0
        %3620 = vmatpush2.msra.mxu0 0.0
        %3621 = vmatprep.subr.mxu0 0.0
        %3622 = vmatpush2.msra.mxu0 0.0
        %3623 = vmatprep.subr.mxu0 0.0
        %3624 = vmatpush2.msra.mxu0 0.0
        %3625 = vmatprep.subr.mxu0 0.0
        %3626 = vmatpush2.msra.mxu0 0.0
        %3627 = vmatprep.subr.mxu0 0.0
        %3628 = vmatpush2.msra.mxu0 0.0
        %3629 = vmatprep.subr.mxu0 0.0
        %3630 = vmatpush2.msra.mxu0 0.0
        %3631 = vmatprep.subr.mxu0 0.0
        %3632 = vmatpush2.msra.mxu0 0.0
        %3633 = vmatprep.subr.mxu0 0.0
        %3634 = vmatpush2.msra.mxu0 0.0
        %3635 = vmatprep.subr.mxu0 0.0
        %3636 = vmatpush2.msra.mxu0 0.0
        %3637 = vmatprep.subr.mxu0 0.0
        %3638 = vmatpush2.msra.mxu0 0.0
        %3639 = vmatprep.subr.mxu0 0.0
        %3640 = vmatpush2.msra.mxu0 0.0
        %3641 = vmatprep.subr.mxu0 0.0
        %3642 = vmatpush2.msra.mxu0 0.0
        %3643 = vmatprep.mubr.f32.mxu0 0.0
        %3644 = vmatmul.mubr.f32.gmra.mxu0 %v3577
        %v3645 = vpop.f32.mrf.mxu0
        %v3646 = vadd.f32 %v3574, %v3645
        %v3647 = vpop.f32.mrf.mxu0
        %3648 = vdwg.mxu0
        %v3649 = vmul.f32 %v3646, 0.5
        %v3650 = vtanh.pop %v3649
        %v3651 = vmul.f32 %v3650, 0.5
        %v3652 = vadd.f32 %v3651, 0.5
        %v3653 = vtanh.pop %v3646
        %3655 = vrot.lane.b32.xlu0 %v3572, 32
        %v3656 = vpop.permute.xlu0 %3655
        %v3658 = vmul.f32 %v3652, %v3656
        %3660 = vrot.lane.b32.xlu0 %v3653, 64
        %v3661 = vpop.permute.xlu0 %3660
        %v3663 = vmul.f32 %v3652, %v3661
        %3665 = vrot.lane.b32.xlu0 %v3663, 32
        %v3666 = vpop.permute.xlu0 %3665
        %v3668 = vadd.f32 %v3658, %v3666
        %v3669 = vtanh.pop %v3668
        %3671 = vrot.lane.b32.xlu0 %v3669, 64
        %v3672 = vpop.permute.xlu0 %3671
        %v3674 = vmul.f32 %v3652, %v3672
        %vm3675 = vmand %vm2836, %vm2846
        %vm3676 = vmand %vm2842, %vm2840
        %vm3677 = vmor %vm3675, %vm3676
        %3679 = vrot.lane.b32.xlu0 %v3674, 32
        %v3680 = vpop.permute.xlu0 %3679
        %v3682 = vsel %vm3677, %v3680, %v3567
        %v3683 = vsel %vm3677, %v3680, 0.0
        %v3685 = vrot.slane %v2982, 7
        %v3688 = vrot.slane %v3105, 6
        %v3691 = vrot.slane %v3228, 5
        %v3694 = vrot.slane %v3343, 4
        %v3697 = vrot.slane %v3458, 3
        %v3700 = vrot.slane %v3573, 2
        %v3703 = vrot.slane %v3683, 1
        %vm3705 = vcmask 1040384
        %v3706 = vsel %vm3705, %v2853, %v3685
        %vm3707 = vcmask 1041408
        %v3708 = vsel %vm3707, %v3706, %v3688
        %vm3709 = vcmask 1042432
        %v3710 = vsel %vm3709, %v3708, %v3691
        %vm3711 = vcmask 1043456
        %v3712 = vsel %vm3711, %v3710, %v3694
        %vm3713 = vcmask 1044480
        %v3714 = vsel %vm3713, %v3712, %v3697
        %vm3715 = vcmask 1045504
        %v3716 = vsel %vm3715, %v3714, %v3700
        %vm3717 = vcmask 1046528
        %v3718 = vsel %vm3717, %v3716, %v3703
        %v3719 = vrot.slane %v3573, 7
        %v3721 = vrot.slane %v3458, 6
        %v3723 = vrot.slane %v3343, 5
        %v3725 = vrot.slane %v3228, 4
        %v3727 = vrot.slane %v3105, 3
        %v3729 = vrot.slane %v2982, 2
        %v3731 = vrot.slane %v2853, 1
        %v3733 = vsel %vm3705, %v3683, %v3719
        %v3734 = vsel %vm3707, %v3733, %v3721
        %v3735 = vsel %vm3709, %v3734, %v3723
        %v3736 = vsel %vm3711, %v3735, %v3725
        %v3737 = vsel %vm3713, %v3736, %v3727
        %v3738 = vsel %vm3715, %v3737, %v3729
        %v3739 = vsel %vm3717, %v3738, %v3731
        %v3740 = vsel %vm2836, %v3718, %v3739
        %v3741 = vld [vmem:[%s5] sm:$0xff]
        %v3742 = vld [vmem:[%s5 + $0x8] sm:$0xff]
        %v3743 = vld [vmem:[%s5 + $0x10] sm:$0xff]
        %v3744 = vld [vmem:[%s5 + $0x18] sm:$0xff]
        %v3746 = vrot.slane %v302, 2
        %v3749 = vsel %vm433, %v3682, 0
        %3751 = vmatprep.subr.mxu0 0.0
        %3752 = vmatpush1.msra.mxu0 0.0
        %3753 = vmatprep.subr.mxu0 0.0
        %3754 = vmatpush1.msra.mxu0 0.0
        %3755 = vmatprep.subr.mxu0 0.0
        %3756 = vmatpush1.msra.mxu0 0.0
        %3757 = vmatprep.subr.mxu0 0.0
        %3758 = vmatpush1.msra.mxu0 0.0
        %3759 = vmatprep.subr.mxu0 0.0
        %3760 = vmatpush1.msra.mxu0 0.0
        %3761 = vmatprep.subr.mxu0 0.0
        %3762 = vmatpush1.msra.mxu0 0.0
        %3763 = vmatprep.subr.mxu0 0.0
        %3764 = vmatpush1.msra.mxu0 0.0
        %3765 = vmatprep.subr.mxu0 0.0
        %3766 = vmatpush1.msra.mxu0 0.0
        %3767 = vmatprep.subr.mxu0 0.0
        %3768 = vmatpush1.msra.mxu0 0.0
        %3769 = vmatprep.subr.mxu0 0.0
        %3770 = vmatpush1.msra.mxu0 0.0
        %3771 = vmatprep.subr.mxu0 0.0
        %3772 = vmatpush1.msra.mxu0 0.0
        %3773 = vmatprep.subr.mxu0 0.0
        %3774 = vmatpush1.msra.mxu0 0.0
        %3775 = vmatprep.subr.mxu0 0.0
        %3776 = vmatpush1.msra.mxu0 %v3744
        %3777 = vmatprep.subr.mxu0 0.0
        %3778 = vmatpush1.msra.mxu0 %v3743
        %3779 = vmatprep.subr.mxu0 0.0
        %3780 = vmatpush1.msra.mxu0 %v3742
        %3781 = vmatprep.subr.mxu0 0.0
        %3782 = vmatpush1.msra.mxu0 %v3741
        %3783 = vmatprep.subr.mxu0 0.0
        %3784 = vmatpush2.msra.mxu0 0.0
        %3785 = vmatprep.subr.mxu0 0.0
        %3786 = vmatpush2.msra.mxu0 0.0
        %3787 = vmatprep.subr.mxu0 0.0
        %3788 = vmatpush2.msra.mxu0 0.0
        %3789 = vmatprep.subr.mxu0 0.0
        %3790 = vmatpush2.msra.mxu0 0.0
        %3791 = vmatprep.subr.mxu0 0.0
        %3792 = vmatpush2.msra.mxu0 0.0
        %3793 = vmatprep.subr.mxu0 0.0
        %3794 = vmatpush2.msra.mxu0 0.0
        %3795 = vmatprep.subr.mxu0 0.0
        %3796 = vmatpush2.msra.mxu0 0.0
        %3797 = vmatprep.subr.mxu0 0.0
        %3798 = vmatpush2.msra.mxu0 0.0
        %3799 = vmatprep.subr.mxu0 0.0
        %3800 = vmatpush2.msra.mxu0 0.0
        %3801 = vmatprep.subr.mxu0 0.0
        %3802 = vmatpush2.msra.mxu0 0.0
        %3803 = vmatprep.subr.mxu0 0.0
        %3804 = vmatpush2.msra.mxu0 0.0
        %3805 = vmatprep.subr.mxu0 0.0
        %3806 = vmatpush2.msra.mxu0 0.0
        %3807 = vmatprep.subr.mxu0 0.0
        %3808 = vmatpush2.msra.mxu0 0.0
        %3809 = vmatprep.subr.mxu0 0.0
        %3810 = vmatpush2.msra.mxu0 0.0
        %3811 = vmatprep.subr.mxu0 0.0
        %3812 = vmatpush2.msra.mxu0 0.0
        %3813 = vmatprep.subr.mxu0 0.0
        %3814 = vmatpush2.msra.mxu0 0.0
        %3815 = vmatprep.mubr.f32.mxu0 0.0
        %3816 = vmatmul.mubr.f32.gmra.mxu0 %v3749
        %v3817 = vpop.f32.mrf.mxu0
        %v3818 = vadd.f32 %v3746, %v3817
        %v3819 = vpop.f32.mrf.mxu0
        %3820 = vdwg.mxu0
        %v3821 = vtanh.pop %v3818
        %v3822 = vld [vmem:[%s5 + $0x60] sm:$0xff]
        %v3823 = vld [vmem:[%s5 + $0x68] sm:$0xff]
        %v3824 = vld [vmem:[%s5 + $0x70] sm:$0xff]
        %v3825 = vld [vmem:[%s5 + $0x78] sm:$0xff]
        %v3826 = vlaneseq
        %v3827 = vshrl.u32 %v3826, 7
        %v3828 = vsub.s32 5, %v3827
        %v3829 = vrot.slane %v302, %v3828
        %v3831 = vsel %vm433, %v2644, 0
        %v3834 = vsel %vm433, %v2645, 0
        %v3837 = vsel %vm433, %v2646, 0
        %v3840 = vsel %vm433, %v2647, 0
        %v3843 = vsel %vm433, %v2648, 0
        %v3846 = vsel %vm433, %v2649, 0
        %v3849 = vsel %vm433, %v2650, 0
        %v3852 = vsel %vm433, %v2651, 0
        %3854 = vmatprep.subr.mxu0 0.0
        %3855 = vmatpush1.msra.mxu0 0.0
        %3856 = vmatprep.subr.mxu0 0.0
        %3857 = vmatpush1.msra.mxu0 0.0
        %3858 = vmatprep.subr.mxu0 0.0
        %3859 = vmatpush1.msra.mxu0 0.0
        %3860 = vmatprep.subr.mxu0 0.0
        %3861 = vmatpush1.msra.mxu0 0.0
        %3862 = vmatprep.subr.mxu0 0.0
        %3863 = vmatpush1.msra.mxu0 0.0
        %3864 = vmatprep.subr.mxu0 0.0
        %3865 = vmatpush1.msra.mxu0 0.0
        %3866 = vmatprep.subr.mxu0 0.0
        %3867 = vmatpush1.msra.mxu0 0.0
        %3868 = vmatprep.subr.mxu0 0.0
        %3869 = vmatpush1.msra.mxu0 0.0
        %3870 = vmatprep.subr.mxu0 0.0
        %3871 = vmatpush1.msra.mxu0 0.0
        %3872 = vmatprep.subr.mxu0 0.0
        %3873 = vmatpush1.msra.mxu0 0.0
        %3874 = vmatprep.subr.mxu0 0.0
        %3875 = vmatpush1.msra.mxu0 0.0
        %3876 = vmatprep.subr.mxu0 0.0
        %3877 = vmatpush1.msra.mxu0 0.0
        %3878 = vmatprep.subr.mxu0 0.0
        %3879 = vmatpush1.msra.mxu0 %v3825
        %3880 = vmatprep.subr.mxu0 0.0
        %3881 = vmatpush1.msra.mxu0 %v3824
        %3882 = vmatprep.subr.mxu0 0.0
        %3883 = vmatpush1.msra.mxu0 %v3823
        %3884 = vmatprep.subr.mxu0 0.0
        %3885 = vmatpush1.msra.mxu0 %v3822
        %3886 = vmatprep.subr.mxu0 0.0
        %3887 = vmatpush2.msra.mxu0 0.0
        %3888 = vmatprep.subr.mxu0 0.0
        %3889 = vmatpush2.msra.mxu0 0.0
        %3890 = vmatprep.subr.mxu0 0.0
        %3891 = vmatpush2.msra.mxu0 0.0
        %3892 = vmatprep.subr.mxu0 0.0
        %3893 = vmatpush2.msra.mxu0 0.0
        %3894 = vmatprep.subr.mxu0 0.0
        %3895 = vmatpush2.msra.mxu0 0.0
        %3896 = vmatprep.subr.mxu0 0.0
        %3897 = vmatpush2.msra.mxu0 0.0
        %3898 = vmatprep.subr.mxu0 0.0
        %3899 = vmatpush2.msra.mxu0 0.0
        %3900 = vmatprep.subr.mxu0 0.0
        %3901 = vmatpush2.msra.mxu0 0.0
        %3902 = vmatprep.subr.mxu0 0.0
        %3903 = vmatpush2.msra.mxu0 0.0
        %3904 = vmatprep.subr.mxu0 0.0
        %3905 = vmatpush2.msra.mxu0 0.0
        %3906 = vmatprep.subr.mxu0 0.0
        %3907 = vmatpush2.msra.mxu0 0.0
        %3908 = vmatprep.subr.mxu0 0.0
        %3909 = vmatpush2.msra.mxu0 0.0
        %3910 = vmatprep.subr.mxu0 0.0
        %3911 = vmatpush2.msra.mxu0 0.0
        %3912 = vmatprep.subr.mxu0 0.0
        %3913 = vmatpush2.msra.mxu0 0.0
        %3914 = vmatprep.subr.mxu0 0.0
        %3915 = vmatpush2.msra.mxu0 0.0
        %3916 = vmatprep.subr.mxu0 0.0
        %3917 = vmatpush2.msra.mxu0 0.0
        %3918 = vmatprep.mubr.f32.mxu0 0.0
        %3919 = vmatmul.mubr.f32.gmra.mxu0 %v3831
        %v3920 = vpop.f32.mrf.mxu0
        %v3921 = vadd.f32 %v3829, %v3920
        %v3922 = vpop.f32.mrf.mxu0
        %3923 = vmatprep.mubr.f32.mxu0 0.0
        %3924 = vmatmul.mubr.f32.gmra.mxu0 %v3834
        %v3925 = vpop.f32.mrf.mxu0
        %v3926 = vadd.f32 %v3829, %v3925
        %v3927 = vpop.f32.mrf.mxu0
        %3928 = vmatprep.mubr.f32.mxu0 0.0
        %3929 = vmatmul.mubr.f32.gmra.mxu0 %v3837
        %v3930 = vpop.f32.mrf.mxu0
        %v3931 = vadd.f32 %v3829, %v3930
        %v3932 = vpop.f32.mrf.mxu0
        %3933 = vmatprep.mubr.f32.mxu0 0.0
        %3934 = vmatmul.mubr.f32.gmra.mxu0 %v3840
        %v3935 = vpop.f32.mrf.mxu0
        %v3936 = vadd.f32 %v3829, %v3935
        %v3937 = vpop.f32.mrf.mxu0
        %3938 = vmatprep.mubr.f32.mxu0 0.0
        %3939 = vmatmul.mubr.f32.gmra.mxu0 %v3843
        %v3940 = vpop.f32.mrf.mxu0
        %v3941 = vadd.f32 %v3829, %v3940
        %v3942 = vpop.f32.mrf.mxu0
        %3943 = vmatprep.mubr.f32.mxu0 0.0
        %3944 = vmatmul.mubr.f32.gmra.mxu0 %v3846
        %v3945 = vpop.f32.mrf.mxu0
        %v3946 = vadd.f32 %v3829, %v3945
        %v3947 = vpop.f32.mrf.mxu0
        %3948 = vmatprep.mubr.f32.mxu0 0.0
        %3949 = vmatmul.mubr.f32.gmra.mxu0 %v3849
        %v3950 = vpop.f32.mrf.mxu0
        %v3951 = vadd.f32 %v3829, %v3950
        %v3952 = vpop.f32.mrf.mxu0
        %3953 = vmatprep.mubr.f32.mxu0 0.0
        %3954 = vmatmul.mubr.f32.gmra.mxu0 %v3852
        %v3955 = vpop.f32.mrf.mxu0
        %v3956 = vadd.f32 %v3829, %v3955
        %v3957 = vpop.f32.mrf.mxu0
        %3958 = vdwg.mxu0
        %v3959 = vld [vmem:[%s5 + $0xc0] sm:$0xff]
        %v3960 = vld [vmem:[%s5 + $0xc8] sm:$0xff]
        %v3961 = vld [vmem:[%s5 + $0xd0] sm:$0xff]
        %v3962 = vld [vmem:[%s5 + $0xd8] sm:$0xff]
        %v3964 = vsel %vm433, %v3921, 0
        %v3967 = vsel %vm433, %v3926, 0
        %v3970 = vsel %vm433, %v3931, 0
        %v3973 = vsel %vm433, %v3936, 0
        %v3976 = vsel %vm433, %v3941, 0
        %v3979 = vsel %vm433, %v3946, 0
        %v3982 = vsel %vm433, %v3951, 0
        %v3985 = vsel %vm433, %v3956, 0
        %3987 = vmatprep.subr.mxu0 0.0
        %3988 = vmatpush1.msra.mxu0 0.0
        %3989 = vmatprep.subr.mxu0 0.0
        %3990 = vmatpush1.msra.mxu0 0.0
        %3991 = vmatprep.subr.mxu0 0.0
        %3992 = vmatpush1.msra.mxu0 0.0
        %3993 = vmatprep.subr.mxu0 0.0
        %3994 = vmatpush1.msra.mxu0 0.0
        %3995 = vmatprep.subr.mxu0 0.0
        %3996 = vmatpush1.msra.mxu0 0.0
        %3997 = vmatprep.subr.mxu0 0.0
        %3998 = vmatpush1.msra.mxu0 0.0
        %3999 = vmatprep.subr.mxu0 0.0
        %4000 = vmatpush1.msra.mxu0 0.0
        %4001 = vmatprep.subr.mxu0 0.0
        %4002 = vmatpush1.msra.mxu0 0.0
        %4003 = vmatprep.subr.mxu0 0.0
        %4004 = vmatpush1.msra.mxu0 0.0
        %4005 = vmatprep.subr.mxu0 0.0
        %4006 = vmatpush1.msra.mxu0 0.0
        %4007 = vmatprep.subr.mxu0 0.0
        %4008 = vmatpush1.msra.mxu0 0.0
        %4009 = vmatprep.subr.mxu0 0.0
        %4010 = vmatpush1.msra.mxu0 0.0
        %4011 = vmatprep.subr.mxu0 0.0
        %4012 = vmatpush1.msra.mxu0 %v3962
        %4013 = vmatprep.subr.mxu0 0.0
        %4014 = vmatpush1.msra.mxu0 %v3961
        %4015 = vmatprep.subr.mxu0 0.0
        %4016 = vmatpush1.msra.mxu0 %v3960
        %4017 = vmatprep.subr.mxu0 0.0
        %4018 = vmatpush1.msra.mxu0 %v3959
        %4019 = vmatprep.subr.mxu0 0.0
        %4020 = vmatpush2.msra.mxu0 0.0
        %4021 = vmatprep.subr.mxu0 0.0
        %4022 = vmatpush2.msra.mxu0 0.0
        %4023 = vmatprep.subr.mxu0 0.0
        %4024 = vmatpush2.msra.mxu0 0.0
        %4025 = vmatprep.subr.mxu0 0.0
        %4026 = vmatpush2.msra.mxu0 0.0
        %4027 = vmatprep.subr.mxu0 0.0
        %4028 = vmatpush2.msra.mxu0 0.0
        %4029 = vmatprep.subr.mxu0 0.0
        %4030 = vmatpush2.msra.mxu0 0.0
        %4031 = vmatprep.subr.mxu0 0.0
        %4032 = vmatpush2.msra.mxu0 0.0
        %4033 = vmatprep.subr.mxu0 0.0
        %4034 = vmatpush2.msra.mxu0 0.0
        %4035 = vmatprep.subr.mxu0 0.0
        %4036 = vmatpush2.msra.mxu0 0.0
        %4037 = vmatprep.subr.mxu0 0.0
        %4038 = vmatpush2.msra.mxu0 0.0
        %4039 = vmatprep.subr.mxu0 0.0
        %4040 = vmatpush2.msra.mxu0 0.0
        %4041 = vmatprep.subr.mxu0 0.0
        %4042 = vmatpush2.msra.mxu0 0.0
        %4043 = vmatprep.subr.mxu0 0.0
        %4044 = vmatpush2.msra.mxu0 0.0
        %4045 = vmatprep.subr.mxu0 0.0
        %4046 = vmatpush2.msra.mxu0 0.0
        %4047 = vmatprep.subr.mxu0 0.0
        %4048 = vmatpush2.msra.mxu0 0.0
        %4049 = vmatprep.subr.mxu0 0.0
        %4050 = vmatpush2.msra.mxu0 0.0
        %4051 = vmatprep.mubr.f32.mxu0 0.0
        %4052 = vmatmul.mubr.f32.gmra.mxu0 %v3964
        %v4053 = vpop.f32.mrf.mxu0
        %v4054 = vadd.f32 0.0, %v4053
        %v4055 = vpop.f32.mrf.mxu0
        %4056 = vmatprep.mubr.f32.mxu0 0.0
        %4057 = vmatmul.mubr.f32.gmra.mxu0 %v3967
        %v4058 = vpop.f32.mrf.mxu0
        %v4059 = vadd.f32 0.0, %v4058
        %v4060 = vpop.f32.mrf.mxu0
        %4061 = vmatprep.mubr.f32.mxu0 0.0
        %4062 = vmatmul.mubr.f32.gmra.mxu0 %v3970
        %v4063 = vpop.f32.mrf.mxu0
        %v4064 = vadd.f32 0.0, %v4063
        %v4065 = vpop.f32.mrf.mxu0
        %4066 = vmatprep.mubr.f32.mxu0 0.0
        %4067 = vmatmul.mubr.f32.gmra.mxu0 %v3973
        %v4068 = vpop.f32.mrf.mxu0
        %v4069 = vadd.f32 0.0, %v4068
        %v4070 = vpop.f32.mrf.mxu0
        %4071 = vmatprep.mubr.f32.mxu0 0.0
        %4072 = vmatmul.mubr.f32.gmra.mxu0 %v3976
        %v4073 = vpop.f32.mrf.mxu0
        %v4074 = vadd.f32 0.0, %v4073
        %v4075 = vpop.f32.mrf.mxu0
        %4076 = vmatprep.mubr.f32.mxu0 0.0
        %4077 = vmatmul.mubr.f32.gmra.mxu0 %v3979
        %v4078 = vpop.f32.mrf.mxu0
        %v4079 = vadd.f32 0.0, %v4078
        %v4080 = vpop.f32.mrf.mxu0
        %4081 = vmatprep.mubr.f32.mxu0 0.0
        %4082 = vmatmul.mubr.f32.gmra.mxu0 %v3982
        %v4083 = vpop.f32.mrf.mxu0
        %v4084 = vadd.f32 0.0, %v4083
        %v4085 = vpop.f32.mrf.mxu0
        %4086 = vmatprep.mubr.f32.mxu0 0.0
        %4087 = vmatmul.mubr.f32.gmra.mxu0 %v3985
        %v4088 = vpop.f32.mrf.mxu0
        %v4089 = vadd.f32 0.0, %v4088
        %v4090 = vpop.f32.mrf.mxu0
        %4091 = vdwg.mxu0
        %v4092 = vstv %s301
        %vm4093 = vcmp.lt.s32.totalorder %v2740, %v4092
        %v4094 = vld [vmem:[%s5 + $0x140] sm:$0xff]
        %v4095 = vld [vmem:[%s5 + $0x148] sm:$0xff]
        %v4096 = vld [vmem:[%s5 + $0x150] sm:$0xff]
        %v4097 = vld [vmem:[%s5 + $0x158] sm:$0xff]
        %v4099 = vrot.slane %v303, 4
        %v4102 = vsel %vm433, %v3821, 0
        %4104 = vmatprep.subr.mxu0 0.0
        %4105 = vmatpush1.msra.mxu0 0.0
        %4106 = vmatprep.subr.mxu0 0.0
        %4107 = vmatpush1.msra.mxu0 0.0
        %4108 = vmatprep.subr.mxu0 0.0
        %4109 = vmatpush1.msra.mxu0 0.0
        %4110 = vmatprep.subr.mxu0 0.0
        %4111 = vmatpush1.msra.mxu0 0.0
        %4112 = vmatprep.subr.mxu0 0.0
        %4113 = vmatpush1.msra.mxu0 0.0
        %4114 = vmatprep.subr.mxu0 0.0
        %4115 = vmatpush1.msra.mxu0 0.0
        %4116 = vmatprep.subr.mxu0 0.0
        %4117 = vmatpush1.msra.mxu0 0.0
        %4118 = vmatprep.subr.mxu0 0.0
        %4119 = vmatpush1.msra.mxu0 0.0
        %4120 = vmatprep.subr.mxu0 0.0
        %4121 = vmatpush1.msra.mxu0 0.0
        %4122 = vmatprep.subr.mxu0 0.0
        %4123 = vmatpush1.msra.mxu0 0.0
        %4124 = vmatprep.subr.mxu0 0.0
        %4125 = vmatpush1.msra.mxu0 0.0
        %4126 = vmatprep.subr.mxu0 0.0
        %4127 = vmatpush1.msra.mxu0 0.0
        %4128 = vmatprep.subr.mxu0 0.0
        %4129 = vmatpush1.msra.mxu0 %v4097
        %4130 = vmatprep.subr.mxu0 0.0
        %4131 = vmatpush1.msra.mxu0 %v4096
        %4132 = vmatprep.subr.mxu0 0.0
        %4133 = vmatpush1.msra.mxu0 %v4095
        %4134 = vmatprep.subr.mxu0 0.0
        %4135 = vmatpush1.msra.mxu0 %v4094
        %4136 = vmatprep.subr.mxu0 0.0
        %4137 = vmatpush2.msra.mxu0 0.0
        %4138 = vmatprep.subr.mxu0 0.0
        %4139 = vmatpush2.msra.mxu0 0.0
        %4140 = vmatprep.subr.mxu0 0.0
        %4141 = vmatpush2.msra.mxu0 0.0
        %4142 = vmatprep.subr.mxu0 0.0
        %4143 = vmatpush2.msra.mxu0 0.0
        %4144 = vmatprep.subr.mxu0 0.0
        %4145 = vmatpush2.msra.mxu0 0.0
        %4146 = vmatprep.subr.mxu0 0.0
        %4147 = vmatpush2.msra.mxu0 0.0
        %4148 = vmatprep.subr.mxu0 0.0
        %4149 = vmatpush2.msra.mxu0 0.0
        %4150 = vmatprep.subr.mxu0 0.0
        %4151 = vmatpush2.msra.mxu0 0.0
        %4152 = vmatprep.subr.mxu0 0.0
        %4153 = vmatpush2.msra.mxu0 0.0
        %4154 = vmatprep.subr.mxu0 0.0
        %4155 = vmatpush2.msra.mxu0 0.0
        %4156 = vmatprep.subr.mxu0 0.0
        %4157 = vmatpush2.msra.mxu0 0.0
        %4158 = vmatprep.subr.mxu0 0.0
        %4159 = vmatpush2.msra.mxu0 0.0
        %4160 = vmatprep.subr.mxu0 0.0
        %4161 = vmatpush2.msra.mxu0 0.0
        %4162 = vmatprep.subr.mxu0 0.0
        %4163 = vmatpush2.msra.mxu0 0.0
        %4164 = vmatprep.subr.mxu0 0.0
        %4165 = vmatpush2.msra.mxu0 0.0
        %4166 = vmatprep.subr.mxu0 0.0
        %4167 = vmatpush2.msra.mxu0 0.0
        %4168 = vmatprep.mubr.f32.mxu0 0.0
        %4169 = vmatmul.mubr.f32.gmra.mxu0 %v4102
        %v4170 = vpop.f32.mrf.mxu0
        %v4171 = vadd.f32 %v4099, %v4170
        %v4172 = vpop.f32.mrf.mxu0
        %4173 = vdwg.mxu0
        %v4174 = vld [vmem:[%s5 + $0x20] sm:$0xff]
        %v4175 = vld [vmem:[%s5 + $0x28] sm:$0xff]
        %v4176 = vld [vmem:[%s5 + $0x30] sm:$0xff]
        %v4177 = vld [vmem:[%s5 + $0x38] sm:$0xff]
        %v4178 = vld [vmem:[%s5 + $0x40] sm:$0xff]
        %v4179 = vld [vmem:[%s5 + $0x48] sm:$0xff]
        %v4180 = vld [vmem:[%s5 + $0x50] sm:$0xff]
        %v4181 = vld [vmem:[%s5 + $0x58] sm:$0xff]
        %v4183 = vsel %vm433, %v4171, 0
        %4185 = vmatprep.subr.mxu0 0.0
        %4186 = vmatpush1.msra.mxu0 0.0
        %4187 = vmatprep.subr.mxu0 0.0
        %4188 = vmatpush1.msra.mxu0 0.0
        %4189 = vmatprep.subr.mxu0 0.0
        %4190 = vmatpush1.msra.mxu0 0.0
        %4191 = vmatprep.subr.mxu0 0.0
        %4192 = vmatpush1.msra.mxu0 0.0
        %4193 = vmatprep.subr.mxu0 0.0
        %4194 = vmatpush1.msra.mxu0 0.0
        %4195 = vmatprep.subr.mxu0 0.0
        %4196 = vmatpush1.msra.mxu0 0.0
        %4197 = vmatprep.subr.mxu0 0.0
        %4198 = vmatpush1.msra.mxu0 0.0
        %4199 = vmatprep.subr.mxu0 0.0
        %4200 = vmatpush1.msra.mxu0 0.0
        %4201 = vmatprep.subr.mxu0 0.0
        %4202 = vmatpush1.msra.mxu0 0.0
        %4203 = vmatprep.subr.mxu0 0.0
        %4204 = vmatpush1.msra.mxu0 0.0
        %4205 = vmatprep.subr.mxu0 0.0
        %4206 = vmatpush1.msra.mxu0 0.0
        %4207 = vmatprep.subr.mxu0 0.0
        %4208 = vmatpush1.msra.mxu0 0.0
        %4209 = vmatprep.subr.mxu0 0.0
        %4210 = vmatpush1.msra.mxu0 %v4181
        %4211 = vmatprep.subr.mxu0 0.0
        %4212 = vmatpush1.msra.mxu0 %v4180
        %4213 = vmatprep.subr.mxu0 0.0
        %4214 = vmatpush1.msra.mxu0 %v4179
        %4215 = vmatprep.subr.mxu0 0.0
        %4216 = vmatpush1.msra.mxu0 %v4178
        %4217 = vmatprep.subr.mxu0 0.0
        %4218 = vmatpush2.msra.mxu0 0.0
        %4219 = vmatprep.subr.mxu0 0.0
        %4220 = vmatpush2.msra.mxu0 0.0
        %4221 = vmatprep.subr.mxu0 0.0
        %4222 = vmatpush2.msra.mxu0 0.0
        %4223 = vmatprep.subr.mxu0 0.0
        %4224 = vmatpush2.msra.mxu0 0.0
        %4225 = vmatprep.subr.mxu0 0.0
        %4226 = vmatpush2.msra.mxu0 0.0
        %4227 = vmatprep.subr.mxu0 0.0
        %4228 = vmatpush2.msra.mxu0 0.0
        %4229 = vmatprep.subr.mxu0 0.0
        %4230 = vmatpush2.msra.mxu0 0.0
        %4231 = vmatprep.subr.mxu0 0.0
        %4232 = vmatpush2.msra.mxu0 0.0
        %4233 = vmatprep.subr.mxu0 0.0
        %4234 = vmatpush2.msra.mxu0 0.0
        %4235 = vmatprep.subr.mxu0 0.0
        %4236 = vmatpush2.msra.mxu0 0.0
        %4237 = vmatprep.subr.mxu0 0.0
        %4238 = vmatpush2.msra.mxu0 0.0
        %4239 = vmatprep.subr.mxu0 0.0
        %4240 = vmatpush2.msra.mxu0 0.0
        %4241 = vmatprep.subr.mxu0 0.0
        %4242 = vmatpush2.msra.mxu0 0.0
        %4243 = vmatprep.subr.mxu0 0.0
        %4244 = vmatpush2.msra.mxu0 0.0
        %4245 = vmatprep.subr.mxu0 0.0
        %4246 = vmatpush2.msra.mxu0 0.0
        %4247 = vmatprep.subr.mxu0 0.0
        %4248 = vmatpush2.msra.mxu0 0.0
        %4249 = vmatprep.mubr.f32.mxu0 0.0
        %4250 = vmatmul.mubr.f32.gmra.mxu0 %v4183
        %v4251 = vpop.f32.mrf.mxu0
        %v4252 = vadd.f32 0.0, %v4251
        %v4253 = vpop.f32.mrf.mxu0
        %4254 = vdwg.mxu0
        %4255 = vmatprep.subr.mxu0 0.0
        %4256 = vmatpush1.msra.mxu0 0.0
        %4257 = vmatprep.subr.mxu0 0.0
        %4258 = vmatpush1.msra.mxu0 0.0
        %4259 = vmatprep.subr.mxu0 0.0
        %4260 = vmatpush1.msra.mxu0 0.0
        %4261 = vmatprep.subr.mxu0 0.0
        %4262 = vmatpush1.msra.mxu0 0.0
        %4263 = vmatprep.subr.mxu0 0.0
        %4264 = vmatpush1.msra.mxu0 0.0
        %4265 = vmatprep.subr.mxu0 0.0
        %4266 = vmatpush1.msra.mxu0 0.0
        %4267 = vmatprep.subr.mxu0 0.0
        %4268 = vmatpush1.msra.mxu0 0.0
        %4269 = vmatprep.subr.mxu0 0.0
        %4270 = vmatpush1.msra.mxu0 0.0
        %4271 = vmatprep.subr.mxu0 0.0
        %4272 = vmatpush1.msra.mxu0 0.0
        %4273 = vmatprep.subr.mxu0 0.0
        %4274 = vmatpush1.msra.mxu0 0.0
        %4275 = vmatprep.subr.mxu0 0.0
        %4276 = vmatpush1.msra.mxu0 0.0
        %4277 = vmatprep.subr.mxu0 0.0
        %4278 = vmatpush1.msra.mxu0 0.0
        %4279 = vmatprep.subr.mxu0 0.0
        %4280 = vmatpush1.msra.mxu0 %v4177
        %4281 = vmatprep.subr.mxu0 0.0
        %4282 = vmatpush1.msra.mxu0 %v4176
        %4283 = vmatprep.subr.mxu0 0.0
        %4284 = vmatpush1.msra.mxu0 %v4175
        %4285 = vmatprep.subr.mxu0 0.0
        %4286 = vmatpush1.msra.mxu0 %v4174
        %4287 = vmatprep.subr.mxu0 0.0
        %4288 = vmatpush2.msra.mxu0 0.0
        %4289 = vmatprep.subr.mxu0 0.0
        %4290 = vmatpush2.msra.mxu0 0.0
        %4291 = vmatprep.subr.mxu0 0.0
        %4292 = vmatpush2.msra.mxu0 0.0
        %4293 = vmatprep.subr.mxu0 0.0
        %4294 = vmatpush2.msra.mxu0 0.0
        %4295 = vmatprep.subr.mxu0 0.0
        %4296 = vmatpush2.msra.mxu0 0.0
        %4297 = vmatprep.subr.mxu0 0.0
        %4298 = vmatpush2.msra.mxu0 0.0
        %4299 = vmatprep.subr.mxu0 0.0
        %4300 = vmatpush2.msra.mxu0 0.0
        %4301 = vmatprep.subr.mxu0 0.0
        %4302 = vmatpush2.msra.mxu0 0.0
        %4303 = vmatprep.subr.mxu0 0.0
        %4304 = vmatpush2.msra.mxu0 0.0
        %4305 = vmatprep.subr.mxu0 0.0
        %4306 = vmatpush2.msra.mxu0 0.0
        %4307 = vmatprep.subr.mxu0 0.0
        %4308 = vmatpush2.msra.mxu0 0.0
        %4309 = vmatprep.subr.mxu0 0.0
        %4310 = vmatpush2.msra.mxu0 0.0
        %4311 = vmatprep.subr.mxu0 0.0
        %4312 = vmatpush2.msra.mxu0 0.0
        %4313 = vmatprep.subr.mxu0 0.0
        %4314 = vmatpush2.msra.mxu0 0.0
        %4315 = vmatprep.subr.mxu0 0.0
        %4316 = vmatpush2.msra.mxu0 0.0
        %4317 = vmatprep.subr.mxu0 0.0
        %4318 = vmatpush2.msra.mxu0 0.0
        %4319 = vmatprep.mubr.f32.mxu0 0.0
        %4320 = vmatmul.mubr.f32.gmra.mxu0 %v3749
        %v4321 = vpop.f32.mrf.mxu0
        %v4322 = vadd.f32 %v4252, %v4321
        %v4323 = vpop.f32.mrf.mxu0
        %4324 = vdwg.mxu0
        %v4325 = vrot.slane %v302, 3
        %v4327 = vadd.f32 %v4322, %v4325
        %v4328 = vtanh.pop %v4327
        %v4329 = vrot.slane %v302, 4
        %v4331 = vmul.f32 %v4328, %v4329
        %v4333 = vsel %vm433, %v4331, 0
        %v4336 = vsel %vm433, %v3740, 0
        %4338 = vmatprep.subr.mxu0 0.0
        %4339 = vmatpush1.xpose.msra.mxu0 0.0
        %4340 = vmatprep.subr.mxu0 0.0
        %4341 = vmatpush1.xpose.msra.mxu0 0.0
        %4342 = vmatprep.subr.mxu0 0.0
        %4343 = vmatpush1.xpose.msra.mxu0 0.0
        %4344 = vmatprep.subr.mxu0 0.0
        %4345 = vmatpush1.xpose.msra.mxu0 0.0
        %4346 = vmatprep.subr.mxu0 0.0
        %4347 = vmatpush1.xpose.msra.mxu0 0.0
        %4348 = vmatprep.subr.mxu0 0.0
        %4349 = vmatpush1.xpose.msra.mxu0 0.0
        %4350 = vmatprep.subr.mxu0 0.0
        %4351 = vmatpush1.xpose.msra.mxu0 0.0
        %4352 = vmatprep.subr.mxu0 0.0
        %4353 = vmatpush1.xpose.msra.mxu0 0.0
        %4354 = vmatprep.subr.mxu0 0.0
        %4355 = vmatpush1.xpose.msra.mxu0 0.0
        %4356 = vmatprep.subr.mxu0 0.0
        %4357 = vmatpush1.xpose.msra.mxu0 0.0
        %4358 = vmatprep.subr.mxu0 0.0
        %4359 = vmatpush1.xpose.msra.mxu0 0.0
        %4360 = vmatprep.subr.mxu0 0.0
        %4361 = vmatpush1.xpose.msra.mxu0 0.0
        %4362 = vmatprep.subr.mxu0 0.0
        %4363 = vmatpush1.xpose.msra.mxu0 0.0
        %4364 = vmatprep.subr.mxu0 0.0
        %4365 = vmatpush1.xpose.msra.mxu0 0.0
        %4366 = vmatprep.subr.mxu0 0.0
        %4367 = vmatpush1.xpose.msra.mxu0 0.0
        %4368 = vmatprep.subr.mxu0 0.0
        %4369 = vmatpush1.xpose.msra.mxu0 %v4336
        %4370 = vmatprep.subr.mxu0 0.0
        %4371 = vmatpush2.xpose.msra.mxu0 0.0
        %4372 = vmatprep.subr.mxu0 0.0
        %4373 = vmatpush2.xpose.msra.mxu0 0.0
        %4374 = vmatprep.subr.mxu0 0.0
        %4375 = vmatpush2.xpose.msra.mxu0 0.0
        %4376 = vmatprep.subr.mxu0 0.0
        %4377 = vmatpush2.xpose.msra.mxu0 0.0
        %4378 = vmatprep.subr.mxu0 0.0
        %4379 = vmatpush2.xpose.msra.mxu0 0.0
        %4380 = vmatprep.subr.mxu0 0.0
        %4381 = vmatpush2.xpose.msra.mxu0 0.0
        %4382 = vmatprep.subr.mxu0 0.0
        %4383 = vmatpush2.xpose.msra.mxu0 0.0
        %4384 = vmatprep.subr.mxu0 0.0
        %4385 = vmatpush2.xpose.msra.mxu0 0.0
        %4386 = vmatprep.subr.mxu0 0.0
        %4387 = vmatpush2.xpose.msra.mxu0 0.0
        %4388 = vmatprep.subr.mxu0 0.0
        %4389 = vmatpush2.xpose.msra.mxu0 0.0
        %4390 = vmatprep.subr.mxu0 0.0
        %4391 = vmatpush2.xpose.msra.mxu0 0.0
        %4392 = vmatprep.subr.mxu0 0.0
        %4393 = vmatpush2.xpose.msra.mxu0 0.0
        %4394 = vmatprep.subr.mxu0 0.0
        %4395 = vmatpush2.xpose.msra.mxu0 0.0
        %4396 = vmatprep.subr.mxu0 0.0
        %4397 = vmatpush2.xpose.msra.mxu0 0.0
        %4398 = vmatprep.subr.mxu0 0.0
        %4399 = vmatpush2.xpose.msra.mxu0 0.0
        %4400 = vmatprep.subr.mxu0 0.0
        %4401 = vmatpush2.xpose.msra.mxu0 0.0
        %4402 = vmatprep.mubr.f32.mxu0 0.0
        %4403 = vmatmul.mubr.f32.gmra.mxu0 %v4333
        %v4404 = vpop.f32.mrf.mxu0
        %v4405 = vadd.f32 0.0, %v4404
        %v4406 = vpop.f32.mrf.mxu0
        %4407 = vdwg.mxu0
        %v4408 = vsel %vm4093, %v4405, -1e+30
        %vm4409 = vcmask 57344
        %v4410 = vsel %vm4409, %v4408, -inf
        %4411 = vmax.xlane.f32.xlu0 %v4410
        %v4412 = vpop.xlane.xlu0 %4411
        %v4413 = vsub.f32 %v4408, %v4412
        %v4414 = vmul.f32 %v4413, 1.442695
        %v4415 = vpow.pop %v4414
        %v4416 = vsel %vm4409, %v4415, 0.0
        %4417 = vadd.xlane.f32.xlu0 %v4416
        %v4418 = vpop.xlane.xlu0 %4417
        %v4419 = vrcp.pop %v4418
        %v4420 = vmul.f32 %v4415, %v4419
        %vm4421 = vcmask 64512
        %v4423 = vsel %vm4421, %v4420, 0
        %4425 = vmatprep.subr.mxu0 0.0
        %4426 = vmatpush1.msra.mxu0 0.0
        %4427 = vmatprep.subr.mxu0 0.0
        %4428 = vmatpush1.msra.mxu0 0.0
        %4429 = vmatprep.subr.mxu0 0.0
        %4430 = vmatpush1.msra.mxu0 0.0
        %4431 = vmatprep.subr.mxu0 0.0
        %4432 = vmatpush1.msra.mxu0 0.0
        %4433 = vmatprep.subr.mxu0 0.0
        %4434 = vmatpush1.msra.mxu0 0.0
        %4435 = vmatprep.subr.mxu0 0.0
        %4436 = vmatpush1.msra.mxu0 0.0
        %4437 = vmatprep.subr.mxu0 0.0
        %4438 = vmatpush1.msra.mxu0 0.0
        %4439 = vmatprep.subr.mxu0 0.0
        %4440 = vmatpush1.msra.mxu0 0.0
        %4441 = vmatprep.subr.mxu0 0.0
        %4442 = vmatpush1.msra.mxu0 0.0
        %4443 = vmatprep.subr.mxu0 0.0
        %4444 = vmatpush1.msra.mxu0 0.0
        %4445 = vmatprep.subr.mxu0 0.0
        %4446 = vmatpush1.msra.mxu0 0.0
        %4447 = vmatprep.subr.mxu0 0.0
        %4448 = vmatpush1.msra.mxu0 0.0
        %4449 = vmatprep.subr.mxu0 0.0
        %4450 = vmatpush1.msra.mxu0 0.0
        %4451 = vmatprep.subr.mxu0 0.0
        %4452 = vmatpush1.msra.mxu0 0.0
        %4453 = vmatprep.subr.mxu0 0.0
        %4454 = vmatpush1.msra.mxu0 0.0
        %4455 = vmatprep.subr.mxu0 0.0
        %4456 = vmatpush1.msra.mxu0 %v3740
        %4457 = vmatprep.subr.mxu0 0.0
        %4458 = vmatpush2.msra.mxu0 0.0
        %4459 = vmatprep.subr.mxu0 0.0
        %4460 = vmatpush2.msra.mxu0 0.0
        %4461 = vmatprep.subr.mxu0 0.0
        %4462 = vmatpush2.msra.mxu0 0.0
        %4463 = vmatprep.subr.mxu0 0.0
        %4464 = vmatpush2.msra.mxu0 0.0
        %4465 = vmatprep.subr.mxu0 0.0
        %4466 = vmatpush2.msra.mxu0 0.0
        %4467 = vmatprep.subr.mxu0 0.0
        %4468 = vmatpush2.msra.mxu0 0.0
        %4469 = vmatprep.subr.mxu0 0.0
        %4470 = vmatpush2.msra.mxu0 0.0
        %4471 = vmatprep.subr.mxu0 0.0
        %4472 = vmatpush2.msra.mxu0 0.0
        %4473 = vmatprep.subr.mxu0 0.0
        %4474 = vmatpush2.msra.mxu0 0.0
        %4475 = vmatprep.subr.mxu0 0.0
        %4476 = vmatpush2.msra.mxu0 0.0
        %4477 = vmatprep.subr.mxu0 0.0
        %4478 = vmatpush2.msra.mxu0 0.0
        %4479 = vmatprep.subr.mxu0 0.0
        %4480 = vmatpush2.msra.mxu0 0.0
        %4481 = vmatprep.subr.mxu0 0.0
        %4482 = vmatpush2.msra.mxu0 0.0
        %4483 = vmatprep.subr.mxu0 0.0
        %4484 = vmatpush2.msra.mxu0 0.0
        %4485 = vmatprep.subr.mxu0 0.0
        %4486 = vmatpush2.msra.mxu0 0.0
        %4487 = vmatprep.subr.mxu0 0.0
        %4488 = vmatpush2.msra.mxu0 0.0
        %4489 = vmatprep.mubr.f32.mxu0 0.0
        %4490 = vmatmul.mubr.f32.gmra.mxu0 %v4423
        %v4491 = vpop.f32.mrf.mxu0
        %v4492 = vadd.f32 0.0, %v4491
        %v4493 = vpop.f32.mrf.mxu0
        %4494 = vdwg.mxu0
        %v4495 = vld [vmem:[%s5 + $0x80] sm:$0xff]
        %v4496 = vld [vmem:[%s5 + $0x88] sm:$0xff]
        %v4497 = vld [vmem:[%s5 + $0x90] sm:$0xff]
        %v4498 = vld [vmem:[%s5 + $0x98] sm:$0xff]
        %v4499 = vrot.slane %v303, 1
        %v4500 = vrot.slane %v302, 6
        %v4502 = vsel %vm433, %v4499, 0
        %4504 = vmatprep.subr.mxu0 0.0
        %4505 = vmatpush1.msra.mxu0 0.0
        %4506 = vmatprep.subr.mxu0 0.0
        %4507 = vmatpush1.msra.mxu0 0.0
        %4508 = vmatprep.subr.mxu0 0.0
        %4509 = vmatpush1.msra.mxu0 0.0
        %4510 = vmatprep.subr.mxu0 0.0
        %4511 = vmatpush1.msra.mxu0 0.0
        %4512 = vmatprep.subr.mxu0 0.0
        %4513 = vmatpush1.msra.mxu0 0.0
        %4514 = vmatprep.subr.mxu0 0.0
        %4515 = vmatpush1.msra.mxu0 0.0
        %4516 = vmatprep.subr.mxu0 0.0
        %4517 = vmatpush1.msra.mxu0 0.0
        %4518 = vmatprep.subr.mxu0 0.0
        %4519 = vmatpush1.msra.mxu0 0.0
        %4520 = vmatprep.subr.mxu0 0.0
        %4521 = vmatpush1.msra.mxu0 0.0
        %4522 = vmatprep.subr.mxu0 0.0
        %4523 = vmatpush1.msra.mxu0 0.0
        %4524 = vmatprep.subr.mxu0 0.0
        %4525 = vmatpush1.msra.mxu0 0.0
        %4526 = vmatprep.subr.mxu0 0.0
        %4527 = vmatpush1.msra.mxu0 0.0
        %4528 = vmatprep.subr.mxu0 0.0
        %4529 = vmatpush1.msra.mxu0 %v4498
        %4530 = vmatprep.subr.mxu0 0.0
        %4531 = vmatpush1.msra.mxu0 %v4497
        %4532 = vmatprep.subr.mxu0 0.0
        %4533 = vmatpush1.msra.mxu0 %v4496
        %4534 = vmatprep.subr.mxu0 0.0
        %4535 = vmatpush1.msra.mxu0 %v4495
        %4536 = vmatprep.subr.mxu0 0.0
        %4537 = vmatpush2.msra.mxu0 0.0
        %4538 = vmatprep.subr.mxu0 0.0
        %4539 = vmatpush2.msra.mxu0 0.0
        %4540 = vmatprep.subr.mxu0 0.0
        %4541 = vmatpush2.msra.mxu0 0.0
        %4542 = vmatprep.subr.mxu0 0.0
        %4543 = vmatpush2.msra.mxu0 0.0
        %4544 = vmatprep.subr.mxu0 0.0
        %4545 = vmatpush2.msra.mxu0 0.0
        %4546 = vmatprep.subr.mxu0 0.0
        %4547 = vmatpush2.msra.mxu0 0.0
        %4548 = vmatprep.subr.mxu0 0.0
        %4549 = vmatpush2.msra.mxu0 0.0
        %4550 = vmatprep.subr.mxu0 0.0
        %4551 = vmatpush2.msra.mxu0 0.0
        %4552 = vmatprep.subr.mxu0 0.0
        %4553 = vmatpush2.msra.mxu0 0.0
        %4554 = vmatprep.subr.mxu0 0.0
        %4555 = vmatpush2.msra.mxu0 0.0
        %4556 = vmatprep.subr.mxu0 0.0
        %4557 = vmatpush2.msra.mxu0 0.0
        %4558 = vmatprep.subr.mxu0 0.0
        %4559 = vmatpush2.msra.mxu0 0.0
        %4560 = vmatprep.subr.mxu0 0.0
        %4561 = vmatpush2.msra.mxu0 0.0
        %4562 = vmatprep.subr.mxu0 0.0
        %4563 = vmatpush2.msra.mxu0 0.0
        %4564 = vmatprep.subr.mxu0 0.0
        %4565 = vmatpush2.msra.mxu0 0.0
        %4566 = vmatprep.subr.mxu0 0.0
        %4567 = vmatpush2.msra.mxu0 0.0
        %4568 = vmatprep.mubr.f32.mxu0 0.0
        %4569 = vmatmul.mubr.f32.gmra.mxu0 %v4502
        %v4570 = vpop.f32.mrf.mxu0
        %v4571 = vadd.f32 %v4500, %v4570
        %v4572 = vpop.f32.mrf.mxu0
        %4573 = vdwg.mxu0
        %v4574 = vlaneseq
        %v4575 = vshrl.u32 %v4574, 7
        %v4576 = vsub.s32 0, %v4575
        %v4577 = vrot.slane %v4571, %v4576
        %v4578 = vmul.f32 %v3921, %v4577
        %v4579 = vmul.f32 %v3926, %v4577
        %v4580 = vmul.f32 %v3931, %v4577
        %v4581 = vmul.f32 %v3936, %v4577
        %v4582 = vmul.f32 %v3941, %v4577
        %v4583 = vmul.f32 %v3946, %v4577
        %v4584 = vmul.f32 %v3951, %v4577
        %v4585 = vmul.f32 %v3956, %v4577
        %v4586 = vld [vmem:[%s5 + $0xa0] sm:$0xff]
        %v4587 = vld [vmem:[%s5 + $0xa8] sm:$0xff]
        %v4588 = vld [vmem:[%s5 + $0xb0] sm:$0xff]
        %v4589 = vld [vmem:[%s5 + $0xb8] sm:$0xff]
        %v4591 = vsel %vm433, %v4578, 0
        %v4594 = vsel %vm433, %v4579, 0
        %v4597 = vsel %vm433, %v4580, 0
        %v4600 = vsel %vm433, %v4581, 0
        %v4603 = vsel %vm433, %v4582, 0
        %v4606 = vsel %vm433, %v4583, 0
        %v4609 = vsel %vm433, %v4584, 0
        %v4612 = vsel %vm433, %v4585, 0
        %4614 = vmatprep.subr.mxu0 0.0
        %4615 = vmatpush1.msra.mxu0 0.0
        %4616 = vmatprep.subr.mxu0 0.0
        %4617 = vmatpush1.msra.mxu0 0.0
        %4618 = vmatprep.subr.mxu0 0.0
        %4619 = vmatpush1.msra.mxu0 0.0
        %4620 = vmatprep.subr.mxu0 0.0
        %4621 = vmatpush1.msra.mxu0 0.0
        %4622 = vmatprep.subr.mxu0 0.0
        %4623 = vmatpush1.msra.mxu0 0.0
        %4624 = vmatprep.subr.mxu0 0.0
        %4625 = vmatpush1.msra.mxu0 0.0
        %4626 = vmatprep.subr.mxu0 0.0
        %4627 = vmatpush1.msra.mxu0 0.0
        %4628 = vmatprep.subr.mxu0 0.0
        %4629 = vmatpush1.msra.mxu0 0.0
        %4630 = vmatprep.subr.mxu0 0.0
        %4631 = vmatpush1.msra.mxu0 0.0
        %4632 = vmatprep.subr.mxu0 0.0
        %4633 = vmatpush1.msra.mxu0 0.0
        %4634 = vmatprep.subr.mxu0 0.0
        %4635 = vmatpush1.msra.mxu0 0.0
        %4636 = vmatprep.subr.mxu0 0.0
        %4637 = vmatpush1.msra.mxu0 0.0
        %4638 = vmatprep.subr.mxu0 0.0
        %4639 = vmatpush1.msra.mxu0 %v4589
        %4640 = vmatprep.subr.mxu0 0.0
        %4641 = vmatpush1.msra.mxu0 %v4588
        %4642 = vmatprep.subr.mxu0 0.0
        %4643 = vmatpush1.msra.mxu0 %v4587
        %4644 = vmatprep.subr.mxu0 0.0
        %4645 = vmatpush1.msra.mxu0 %v4586
        %4646 = vmatprep.subr.mxu0 0.0
        %4647 = vmatpush2.msra.mxu0 0.0
        %4648 = vmatprep.subr.mxu0 0.0
        %4649 = vmatpush2.msra.mxu0 0.0
        %4650 = vmatprep.subr.mxu0 0.0
        %4651 = vmatpush2.msra.mxu0 0.0
        %4652 = vmatprep.subr.mxu0 0.0
        %4653 = vmatpush2.msra.mxu0 0.0
        %4654 = vmatprep.subr.mxu0 0.0
        %4655 = vmatpush2.msra.mxu0 0.0
        %4656 = vmatprep.subr.mxu0 0.0
        %4657 = vmatpush2.msra.mxu0 0.0
        %4658 = vmatprep.subr.mxu0 0.0
        %4659 = vmatpush2.msra.mxu0 0.0
        %4660 = vmatprep.subr.mxu0 0.0
        %4661 = vmatpush2.msra.mxu0 0.0
        %4662 = vmatprep.subr.mxu0 0.0
        %4663 = vmatpush2.msra.mxu0 0.0
        %4664 = vmatprep.subr.mxu0 0.0
        %4665 = vmatpush2.msra.mxu0 0.0
        %4666 = vmatprep.subr.mxu0 0.0
        %4667 = vmatpush2.msra.mxu0 0.0
        %4668 = vmatprep.subr.mxu0 0.0
        %4669 = vmatpush2.msra.mxu0 0.0
        %4670 = vmatprep.subr.mxu0 0.0
        %4671 = vmatpush2.msra.mxu0 0.0
        %4672 = vmatprep.subr.mxu0 0.0
        %4673 = vmatpush2.msra.mxu0 0.0
        %4674 = vmatprep.subr.mxu0 0.0
        %4675 = vmatpush2.msra.mxu0 0.0
        %4676 = vmatprep.subr.mxu0 0.0
        %4677 = vmatpush2.msra.mxu0 0.0
        %4678 = vmatprep.mubr.f32.mxu0 0.0
        %4679 = vmatmul.mubr.f32.gmra.mxu0 %v4591
        %v4680 = vpop.f32.mrf.mxu0
        %v4681 = vadd.f32 %v4054, %v4680
        %v4682 = vpop.f32.mrf.mxu0
        %4683 = vmatprep.mubr.f32.mxu0 0.0
        %4684 = vmatmul.mubr.f32.gmra.mxu0 %v4594
        %v4685 = vpop.f32.mrf.mxu0
        %v4686 = vadd.f32 %v4059, %v4685
        %v4687 = vpop.f32.mrf.mxu0
        %4688 = vmatprep.mubr.f32.mxu0 0.0
        %4689 = vmatmul.mubr.f32.gmra.mxu0 %v4597
        %v4690 = vpop.f32.mrf.mxu0
        %v4691 = vadd.f32 %v4064, %v4690
        %v4692 = vpop.f32.mrf.mxu0
        %4693 = vmatprep.mubr.f32.mxu0 0.0
        %4694 = vmatmul.mubr.f32.gmra.mxu0 %v4600
        %v4695 = vpop.f32.mrf.mxu0
        %v4696 = vadd.f32 %v4069, %v4695
        %v4697 = vpop.f32.mrf.mxu0
        %4698 = vmatprep.mubr.f32.mxu0 0.0
        %4699 = vmatmul.mubr.f32.gmra.mxu0 %v4603
        %v4700 = vpop.f32.mrf.mxu0
        %v4701 = vadd.f32 %v4074, %v4700
        %v4702 = vpop.f32.mrf.mxu0
        %4703 = vmatprep.mubr.f32.mxu0 0.0
        %4704 = vmatmul.mubr.f32.gmra.mxu0 %v4606
        %v4705 = vpop.f32.mrf.mxu0
        %v4706 = vadd.f32 %v4079, %v4705
        %v4707 = vpop.f32.mrf.mxu0
        %4708 = vmatprep.mubr.f32.mxu0 0.0
        %4709 = vmatmul.mubr.f32.gmra.mxu0 %v4609
        %v4710 = vpop.f32.mrf.mxu0
        %v4711 = vadd.f32 %v4084, %v4710
        %v4712 = vpop.f32.mrf.mxu0
        %4713 = vmatprep.mubr.f32.mxu0 0.0
        %4714 = vmatmul.mubr.f32.gmra.mxu0 %v4612
        %v4715 = vpop.f32.mrf.mxu0
        %v4716 = vadd.f32 %v4089, %v4715
        %v4717 = vpop.f32.mrf.mxu0
        %4718 = vdwg.mxu0
        %v4719 = vlaneseq
        %v4720 = vshrl.u32 %v4719, 7
        %v4721 = vsub.s32 7, %v4720
        %v4722 = vrot.slane %v302, %v4721
        %v4723 = vadd.f32 %v4681, %v4722
        %v4724 = vadd.f32 %v4686, %v4722
        %v4725 = vadd.f32 %v4691, %v4722
        %v4726 = vadd.f32 %v4696, %v4722
        %v4727 = vadd.f32 %v4701, %v4722
        %v4728 = vadd.f32 %v4706, %v4722
        %v4729 = vadd.f32 %v4711, %v4722
        %v4730 = vadd.f32 %v4716, %v4722
        %vm4731 = vcmp.gt.f32.partialorder %v4723, 0.0
        %vm4732 = vcmp.gt.f32.partialorder %v4724, 0.0
        %vm4733 = vcmp.gt.f32.partialorder %v4725, 0.0
        %vm4734 = vcmp.gt.f32.partialorder %v4726, 0.0
        %vm4735 = vcmp.gt.f32.partialorder %v4727, 0.0
        %vm4736 = vcmp.gt.f32.partialorder %v4728, 0.0
        %vm4737 = vcmp.gt.f32.partialorder %v4729, 0.0
        %vm4738 = vcmp.gt.f32.partialorder %v4730, 0.0
        %v4739 = vmin.f32 %v4723, 0.0
        %v4740 = vmin.f32 %v4724, 0.0
        %v4741 = vmin.f32 %v4725, 0.0
        %v4742 = vmin.f32 %v4726, 0.0
        %v4743 = vmin.f32 %v4727, 0.0
        %v4744 = vmin.f32 %v4728, 0.0
        %v4745 = vmin.f32 %v4729, 0.0
        %v4746 = vmin.f32 %v4730, 0.0
        %v4747 = vmul.f32 %v4739, 1.442695
        %v4748 = vpow.pop %v4747
        %v4749 = vmul.f32 %v4740, 1.442695
        %v4750 = vpow.pop %v4749
        %v4751 = vmul.f32 %v4741, 1.442695
        %v4752 = vpow.pop %v4751
        %v4753 = vmul.f32 %v4742, 1.442695
        %v4754 = vpow.pop %v4753
        %v4755 = vmul.f32 %v4743, 1.442695
        %v4756 = vpow.pop %v4755
        %v4757 = vmul.f32 %v4744, 1.442695
        %v4758 = vpow.pop %v4757
        %v4759 = vmul.f32 %v4745, 1.442695
        %v4760 = vpow.pop %v4759
        %v4761 = vmul.f32 %v4746, 1.442695
        %v4762 = vpow.pop %v4761
        %v4763 = vsub.f32 %v4748, 1.0
        %v4764 = vsub.f32 %v4750, 1.0
        %v4765 = vsub.f32 %v4752, 1.0
        %v4766 = vsub.f32 %v4754, 1.0
        %v4767 = vsub.f32 %v4756, 1.0
        %v4768 = vsub.f32 %v4758, 1.0
        %v4769 = vsub.f32 %v4760, 1.0
        %v4770 = vsub.f32 %v4762, 1.0
        %v4771 = vsel %vm4731, %v4723, %v4763
        %v4772 = vsel %vm4732, %v4724, %v4764
        %v4773 = vsel %vm4733, %v4725, %v4765
        %v4774 = vsel %vm4734, %v4726, %v4766
        %v4775 = vsel %vm4735, %v4727, %v4767
        %v4776 = vsel %vm4736, %v4728, %v4768
        %v4777 = vsel %vm4737, %v4729, %v4769
        %v4778 = vsel %vm4738, %v4730, %v4770
        %v4779 = vlaneseq
        %v4780 = vshrl.u32 %v4779, 7
        %v4781 = vsub.s32 0, %v4780
        %v4782 = vrot.slane %v4492, %v4781
        %v4783 = vmul.f32 %v4771, %v4782
        %v4784 = vmul.f32 %v4772, %v4782
        %v4785 = vmul.f32 %v4773, %v4782
        %v4786 = vmul.f32 %v4774, %v4782
        %v4787 = vmul.f32 %v4775, %v4782
        %v4788 = vmul.f32 %v4776, %v4782
        %v4789 = vmul.f32 %v4777, %v4782
        %v4790 = vmul.f32 %v4778, %v4782
        %vm4791 = vcmp.gt.f32.partialorder %v4783, 0.0
        %vm4792 = vcmp.gt.f32.partialorder %v4784, 0.0
        %vm4793 = vcmp.gt.f32.partialorder %v4785, 0.0
        %vm4794 = vcmp.gt.f32.partialorder %v4786, 0.0
        %vm4795 = vcmp.gt.f32.partialorder %v4787, 0.0
        %vm4796 = vcmp.gt.f32.partialorder %v4788, 0.0
        %vm4797 = vcmp.gt.f32.partialorder %v4789, 0.0
        %vm4798 = vcmp.gt.f32.partialorder %v4790, 0.0
        %v4799 = vmin.f32 %v4783, 0.0
        %v4800 = vmin.f32 %v4784, 0.0
        %v4801 = vmin.f32 %v4785, 0.0
        %v4802 = vmin.f32 %v4786, 0.0
        %v4803 = vmin.f32 %v4787, 0.0
        %v4804 = vmin.f32 %v4788, 0.0
        %v4805 = vmin.f32 %v4789, 0.0
        %v4806 = vmin.f32 %v4790, 0.0
        %v4807 = vmul.f32 %v4799, 1.442695
        %v4808 = vpow.pop %v4807
        %v4809 = vmul.f32 %v4800, 1.442695
        %v4810 = vpow.pop %v4809
        %v4811 = vmul.f32 %v4801, 1.442695
        %v4812 = vpow.pop %v4811
        %v4813 = vmul.f32 %v4802, 1.442695
        %v4814 = vpow.pop %v4813
        %v4815 = vmul.f32 %v4803, 1.442695
        %v4816 = vpow.pop %v4815
        %v4817 = vmul.f32 %v4804, 1.442695
        %v4818 = vpow.pop %v4817
        %v4819 = vmul.f32 %v4805, 1.442695
        %v4820 = vpow.pop %v4819
        %v4821 = vmul.f32 %v4806, 1.442695
        %v4822 = vpow.pop %v4821
        %v4823 = vsub.f32 %v4808, 1.0
        %v4824 = vsub.f32 %v4810, 1.0
        %v4825 = vsub.f32 %v4812, 1.0
        %v4826 = vsub.f32 %v4814, 1.0
        %v4827 = vsub.f32 %v4816, 1.0
        %v4828 = vsub.f32 %v4818, 1.0
        %v4829 = vsub.f32 %v4820, 1.0
        %v4830 = vsub.f32 %v4822, 1.0
        %v4831 = vsel %vm4791, %v4783, %v4823
        %v4832 = vsel %vm4792, %v4784, %v4824
        %v4833 = vsel %vm4793, %v4785, %v4825
        %v4834 = vsel %vm4794, %v4786, %v4826
        %v4835 = vsel %vm4795, %v4787, %v4827
        %v4836 = vsel %vm4796, %v4788, %v4828
        %v4837 = vsel %vm4797, %v4789, %v4829
        %v4838 = vsel %vm4798, %v4790, %v4830
        %v4839 = vsel %vm433, %v303, 0
        %v4842 = vsel %vm433, %v4831, 0
        %v4845 = vsel %vm433, %v4832, 0
        %v4848 = vsel %vm433, %v4833, 0
        %v4851 = vsel %vm433, %v4834, 0
        %v4854 = vsel %vm433, %v4835, 0
        %v4857 = vsel %vm433, %v4836, 0
        %v4860 = vsel %vm433, %v4837, 0
        %v4863 = vsel %vm433, %v4838, 0
        %4865 = vmatprep.subr.mxu0 0.0
        %4866 = vmatpush1.xpose.msra.mxu0 0.0
        %4867 = vmatprep.subr.mxu0 0.0
        %4868 = vmatpush1.xpose.msra.mxu0 0.0
        %4869 = vmatprep.subr.mxu0 0.0
        %4870 = vmatpush1.xpose.msra.mxu0 0.0
        %4871 = vmatprep.subr.mxu0 0.0
        %4872 = vmatpush1.xpose.msra.mxu0 0.0
        %4873 = vmatprep.subr.mxu0 0.0
        %4874 = vmatpush1.xpose.msra.mxu0 0.0
        %4875 = vmatprep.subr.mxu0 0.0
        %4876 = vmatpush1.xpose.msra.mxu0 0.0
        %4877 = vmatprep.subr.mxu0 0.0
        %4878 = vmatpush1.xpose.msra.mxu0 0.0
        %4879 = vmatprep.subr.mxu0 0.0
        %4880 = vmatpush1.xpose.msra.mxu0 0.0
        %4881 = vmatprep.subr.mxu0 0.0
        %4882 = vmatpush1.xpose.msra.mxu0 %v4863
        %4883 = vmatprep.subr.mxu0 0.0
        %4884 = vmatpush1.xpose.msra.mxu0 %v4860
        %4885 = vmatprep.subr.mxu0 0.0
        %4886 = vmatpush1.xpose.msra.mxu0 %v4857
        %4887 = vmatprep.subr.mxu0 0.0
        %4888 = vmatpush1.xpose.msra.mxu0 %v4854
        %4889 = vmatprep.subr.mxu0 0.0
        %4890 = vmatpush1.xpose.msra.mxu0 %v4851
        %4891 = vmatprep.subr.mxu0 0.0
        %4892 = vmatpush1.xpose.msra.mxu0 %v4848
        %4893 = vmatprep.subr.mxu0 0.0
        %4894 = vmatpush1.xpose.msra.mxu0 %v4845
        %4895 = vmatprep.subr.mxu0 0.0
        %4896 = vmatpush1.xpose.msra.mxu0 %v4842
        %4897 = vmatprep.subr.mxu0 0.0
        %4898 = vmatpush2.xpose.msra.mxu0 0.0
        %4899 = vmatprep.subr.mxu0 0.0
        %4900 = vmatpush2.xpose.msra.mxu0 0.0
        %4901 = vmatprep.subr.mxu0 0.0
        %4902 = vmatpush2.xpose.msra.mxu0 0.0
        %4903 = vmatprep.subr.mxu0 0.0
        %4904 = vmatpush2.xpose.msra.mxu0 0.0
        %4905 = vmatprep.subr.mxu0 0.0
        %4906 = vmatpush2.xpose.msra.mxu0 0.0
        %4907 = vmatprep.subr.mxu0 0.0
        %4908 = vmatpush2.xpose.msra.mxu0 0.0
        %4909 = vmatprep.subr.mxu0 0.0
        %4910 = vmatpush2.xpose.msra.mxu0 0.0
        %4911 = vmatprep.subr.mxu0 0.0
        %4912 = vmatpush2.xpose.msra.mxu0 0.0
        %4913 = vmatprep.subr.mxu0 0.0
        %4914 = vmatpush2.xpose.msra.mxu0 0.0
        %4915 = vmatprep.subr.mxu0 0.0
        %4916 = vmatpush2.xpose.msra.mxu0 0.0
        %4917 = vmatprep.subr.mxu0 0.0
        %4918 = vmatpush2.xpose.msra.mxu0 0.0
        %4919 = vmatprep.subr.mxu0 0.0
        %4920 = vmatpush2.xpose.msra.mxu0 0.0
        %4921 = vmatprep.subr.mxu0 0.0
        %4922 = vmatpush2.xpose.msra.mxu0 0.0
        %4923 = vmatprep.subr.mxu0 0.0
        %4924 = vmatpush2.xpose.msra.mxu0 0.0
        %4925 = vmatprep.subr.mxu0 0.0
        %4926 = vmatpush2.xpose.msra.mxu0 0.0
        %4927 = vmatprep.subr.mxu0 0.0
        %4928 = vmatpush2.xpose.msra.mxu0 0.0
        %4929 = vmatprep.mubr.f32.mxu0 0.0
        %4930 = vmatmul.mubr.f32.gmra.mxu0 %v4839
        %v4931 = vpop.f32.mrf.mxu0
        %v4932 = vadd.f32 0.0, %v4931
        %v4933 = vpop.f32.mrf.mxu0
        %4934 = vdwg.mxu0
        %vm4935 = vcmask 516096
        %v4936 = vsel %vm4935, %v4932, -inf
        %4937 = vmax.xlane.f32.xlu0 %v4936
        %v4938 = vpop.xlane.xlu0 %4937
        %v4939 = vsub.f32 %v4932, %v4938
        %v4940 = vmul.f32 %v4939, 1.442695
        %v4941 = vpow.pop %v4940
        %v4942 = vsel %vm4935, %v4941, 0.0
        %4943 = vadd.xlane.f32.xlu0 %v4942
        %v4944 = vpop.xlane.xlu0 %4943
        %v4945 = vrcp.pop %v4944
        %v4946 = vmul.f32 %v4941, %v4945
        %vm4947 = vcmask 523264
        %v4949 = vsel %vm4947, %v4946, 0
        %4951 = vmatprep.subr.mxu0 0.0
        %4952 = vmatpush1.msra.mxu0 0.0
        %4953 = vmatprep.subr.mxu0 0.0
        %4954 = vmatpush1.msra.mxu0 0.0
        %4955 = vmatprep.subr.mxu0 0.0
        %4956 = vmatpush1.msra.mxu0 0.0
        %4957 = vmatprep.subr.mxu0 0.0
        %4958 = vmatpush1.msra.mxu0 0.0
        %4959 = vmatprep.subr.mxu0 0.0
        %4960 = vmatpush1.msra.mxu0 0.0
        %4961 = vmatprep.subr.mxu0 0.0
        %4962 = vmatpush1.msra.mxu0 0.0
        %4963 = vmatprep.subr.mxu0 0.0
        %4964 = vmatpush1.msra.mxu0 0.0
        %4965 = vmatprep.subr.mxu0 0.0
        %4966 = vmatpush1.msra.mxu0 0.0
        %4967 = vmatprep.subr.mxu0 0.0
        %4968 = vmatpush1.msra.mxu0 %v2651
        %4969 = vmatprep.subr.mxu0 0.0
        %4970 = vmatpush1.msra.mxu0 %v2650
        %4971 = vmatprep.subr.mxu0 0.0
        %4972 = vmatpush1.msra.mxu0 %v2649
        %4973 = vmatprep.subr.mxu0 0.0
        %4974 = vmatpush1.msra.mxu0 %v2648
        %4975 = vmatprep.subr.mxu0 0.0
        %4976 = vmatpush1.msra.mxu0 %v2647
        %4977 = vmatprep.subr.mxu0 0.0
        %4978 = vmatpush1.msra.mxu0 %v2646
        %4979 = vmatprep.subr.mxu0 0.0
        %4980 = vmatpush1.msra.mxu0 %v2645
        %4981 = vmatprep.subr.mxu0 0.0
        %4982 = vmatpush1.msra.mxu0 %v2644
        %4983 = vmatprep.subr.mxu0 0.0
        %4984 = vmatpush2.msra.mxu0 0.0
        %4985 = vmatprep.subr.mxu0 0.0
        %4986 = vmatpush2.msra.mxu0 0.0
        %4987 = vmatprep.subr.mxu0 0.0
        %4988 = vmatpush2.msra.mxu0 0.0
        %4989 = vmatprep.subr.mxu0 0.0
        %4990 = vmatpush2.msra.mxu0 0.0
        %4991 = vmatprep.subr.mxu0 0.0
        %4992 = vmatpush2.msra.mxu0 0.0
        %4993 = vmatprep.subr.mxu0 0.0
        %4994 = vmatpush2.msra.mxu0 0.0
        %4995 = vmatprep.subr.mxu0 0.0
        %4996 = vmatpush2.msra.mxu0 0.0
        %4997 = vmatprep.subr.mxu0 0.0
        %4998 = vmatpush2.msra.mxu0 0.0
        %4999 = vmatprep.subr.mxu0 0.0
        %5000 = vmatpush2.msra.mxu0 0.0
        %5001 = vmatprep.subr.mxu0 0.0
        %5002 = vmatpush2.msra.mxu0 0.0
        %5003 = vmatprep.subr.mxu0 0.0
        %5004 = vmatpush2.msra.mxu0 0.0
        %5005 = vmatprep.subr.mxu0 0.0
        %5006 = vmatpush2.msra.mxu0 0.0
        %5007 = vmatprep.subr.mxu0 0.0
        %5008 = vmatpush2.msra.mxu0 0.0
        %5009 = vmatprep.subr.mxu0 0.0
        %5010 = vmatpush2.msra.mxu0 0.0
        %5011 = vmatprep.subr.mxu0 0.0
        %5012 = vmatpush2.msra.mxu0 0.0
        %5013 = vmatprep.subr.mxu0 0.0
        %5014 = vmatpush2.msra.mxu0 0.0
        %5015 = vmatprep.mubr.f32.mxu0 0.0
        %5016 = vmatmul.mubr.f32.gmra.mxu0 %v4949
        %v5017 = vpop.f32.mrf.mxu0
        %v5018 = vadd.f32 0.0, %v5017
        %v5019 = vpop.f32.mrf.mxu0
        %5020 = vdwg.mxu0
        %v5021 = vld [vmem:[%s5 + $0x160] sm:$0xff]
        %v5022 = vld [vmem:[%s5 + $0x168] sm:$0xff]
        %v5023 = vld [vmem:[%s5 + $0x170] sm:$0xff]
        %v5024 = vld [vmem:[%s5 + $0x178] sm:$0xff]
        %v5025 = vrot.slane %v303, 5
        %5027 = vmatprep.subr.mxu0 0.0
        %5028 = vmatpush1.msra.mxu0 0.0
        %5029 = vmatprep.subr.mxu0 0.0
        %5030 = vmatpush1.msra.mxu0 0.0
        %5031 = vmatprep.subr.mxu0 0.0
        %5032 = vmatpush1.msra.mxu0 0.0
        %5033 = vmatprep.subr.mxu0 0.0
        %5034 = vmatpush1.msra.mxu0 0.0
        %5035 = vmatprep.subr.mxu0 0.0
        %5036 = vmatpush1.msra.mxu0 0.0
        %5037 = vmatprep.subr.mxu0 0.0
        %5038 = vmatpush1.msra.mxu0 0.0
        %5039 = vmatprep.subr.mxu0 0.0
        %5040 = vmatpush1.msra.mxu0 0.0
        %5041 = vmatprep.subr.mxu0 0.0
        %5042 = vmatpush1.msra.mxu0 0.0
        %5043 = vmatprep.subr.mxu0 0.0
        %5044 = vmatpush1.msra.mxu0 0.0
        %5045 = vmatprep.subr.mxu0 0.0
        %5046 = vmatpush1.msra.mxu0 0.0
        %5047 = vmatprep.subr.mxu0 0.0
        %5048 = vmatpush1.msra.mxu0 0.0
        %5049 = vmatprep.subr.mxu0 0.0
        %5050 = vmatpush1.msra.mxu0 0.0
        %5051 = vmatprep.subr.mxu0 0.0
        %5052 = vmatpush1.msra.mxu0 %v5024
        %5053 = vmatprep.subr.mxu0 0.0
        %5054 = vmatpush1.msra.mxu0 %v5023
        %5055 = vmatprep.subr.mxu0 0.0
        %5056 = vmatpush1.msra.mxu0 %v5022
        %5057 = vmatprep.subr.mxu0 0.0
        %5058 = vmatpush1.msra.mxu0 %v5021
        %5059 = vmatprep.subr.mxu0 0.0
        %5060 = vmatpush2.msra.mxu0 0.0
        %5061 = vmatprep.subr.mxu0 0.0
        %5062 = vmatpush2.msra.mxu0 0.0
        %5063 = vmatprep.subr.mxu0 0.0
        %5064 = vmatpush2.msra.mxu0 0.0
        %5065 = vmatprep.subr.mxu0 0.0
        %5066 = vmatpush2.msra.mxu0 0.0
        %5067 = vmatprep.subr.mxu0 0.0
        %5068 = vmatpush2.msra.mxu0 0.0
        %5069 = vmatprep.subr.mxu0 0.0
        %5070 = vmatpush2.msra.mxu0 0.0
        %5071 = vmatprep.subr.mxu0 0.0
        %5072 = vmatpush2.msra.mxu0 0.0
        %5073 = vmatprep.subr.mxu0 0.0
        %5074 = vmatpush2.msra.mxu0 0.0
        %5075 = vmatprep.subr.mxu0 0.0
        %5076 = vmatpush2.msra.mxu0 0.0
        %5077 = vmatprep.subr.mxu0 0.0
        %5078 = vmatpush2.msra.mxu0 0.0
        %5079 = vmatprep.subr.mxu0 0.0
        %5080 = vmatpush2.msra.mxu0 0.0
        %5081 = vmatprep.subr.mxu0 0.0
        %5082 = vmatpush2.msra.mxu0 0.0
        %5083 = vmatprep.subr.mxu0 0.0
        %5084 = vmatpush2.msra.mxu0 0.0
        %5085 = vmatprep.subr.mxu0 0.0
        %5086 = vmatpush2.msra.mxu0 0.0
        %5087 = vmatprep.subr.mxu0 0.0
        %5088 = vmatpush2.msra.mxu0 0.0
        %5089 = vmatprep.subr.mxu0 0.0
        %5090 = vmatpush2.msra.mxu0 0.0
        %5091 = vmatprep.mubr.f32.mxu0 0.0
        %5092 = vmatmul.mubr.f32.gmra.mxu0 %v4102
        %v5093 = vpop.f32.mrf.mxu0
        %v5094 = vadd.f32 %v5025, %v5093
        %v5095 = vpop.f32.mrf.mxu0
        %5096 = vdwg.mxu0
        %v5098 = vsel %vm433, %v5094, 0
        %5100 = vmatprep.subr.mxu0 0.0
        %5101 = vmatpush1.msra.mxu0 0.0
        %5102 = vmatprep.subr.mxu0 0.0
        %5103 = vmatpush1.msra.mxu0 0.0
        %5104 = vmatprep.subr.mxu0 0.0
        %5105 = vmatpush1.msra.mxu0 0.0
        %5106 = vmatprep.subr.mxu0 0.0
        %5107 = vmatpush1.msra.mxu0 0.0
        %5108 = vmatprep.subr.mxu0 0.0
        %5109 = vmatpush1.msra.mxu0 0.0
        %5110 = vmatprep.subr.mxu0 0.0
        %5111 = vmatpush1.msra.mxu0 0.0
        %5112 = vmatprep.subr.mxu0 0.0
        %5113 = vmatpush1.msra.mxu0 0.0
        %5114 = vmatprep.subr.mxu0 0.0
        %5115 = vmatpush1.msra.mxu0 0.0
        %5116 = vmatprep.subr.mxu0 0.0
        %5117 = vmatpush1.msra.mxu0 0.0
        %5118 = vmatprep.subr.mxu0 0.0
        %5119 = vmatpush1.msra.mxu0 0.0
        %5120 = vmatprep.subr.mxu0 0.0
        %5121 = vmatpush1.msra.mxu0 0.0
        %5122 = vmatprep.subr.mxu0 0.0
        %5123 = vmatpush1.msra.mxu0 0.0
        %5124 = vmatprep.subr.mxu0 0.0
        %5125 = vmatpush1.msra.mxu0 %v4181
        %5126 = vmatprep.subr.mxu0 0.0
        %5127 = vmatpush1.msra.mxu0 %v4180
        %5128 = vmatprep.subr.mxu0 0.0
        %5129 = vmatpush1.msra.mxu0 %v4179
        %5130 = vmatprep.subr.mxu0 0.0
        %5131 = vmatpush1.msra.mxu0 %v4178
        %5132 = vmatprep.subr.mxu0 0.0
        %5133 = vmatpush2.msra.mxu0 0.0
        %5134 = vmatprep.subr.mxu0 0.0
        %5135 = vmatpush2.msra.mxu0 0.0
        %5136 = vmatprep.subr.mxu0 0.0
        %5137 = vmatpush2.msra.mxu0 0.0
        %5138 = vmatprep.subr.mxu0 0.0
        %5139 = vmatpush2.msra.mxu0 0.0
        %5140 = vmatprep.subr.mxu0 0.0
        %5141 = vmatpush2.msra.mxu0 0.0
        %5142 = vmatprep.subr.mxu0 0.0
        %5143 = vmatpush2.msra.mxu0 0.0
        %5144 = vmatprep.subr.mxu0 0.0
        %5145 = vmatpush2.msra.mxu0 0.0
        %5146 = vmatprep.subr.mxu0 0.0
        %5147 = vmatpush2.msra.mxu0 0.0
        %5148 = vmatprep.subr.mxu0 0.0
        %5149 = vmatpush2.msra.mxu0 0.0
        %5150 = vmatprep.subr.mxu0 0.0
        %5151 = vmatpush2.msra.mxu0 0.0
        %5152 = vmatprep.subr.mxu0 0.0
        %5153 = vmatpush2.msra.mxu0 0.0
        %5154 = vmatprep.subr.mxu0 0.0
        %5155 = vmatpush2.msra.mxu0 0.0
        %5156 = vmatprep.subr.mxu0 0.0
        %5157 = vmatpush2.msra.mxu0 0.0
        %5158 = vmatprep.subr.mxu0 0.0
        %5159 = vmatpush2.msra.mxu0 0.0
        %5160 = vmatprep.subr.mxu0 0.0
        %5161 = vmatpush2.msra.mxu0 0.0
        %5162 = vmatprep.subr.mxu0 0.0
        %5163 = vmatpush2.msra.mxu0 0.0
        %5164 = vmatprep.mubr.f32.mxu0 0.0
        %5165 = vmatmul.mubr.f32.gmra.mxu0 %v5098
        %v5166 = vpop.f32.mrf.mxu0
        %v5167 = vadd.f32 0.0, %v5166
        %v5168 = vpop.f32.mrf.mxu0
        %5169 = vdwg.mxu0
        %v5171 = vsel %vm433, %v4492, 0
        %5173 = vmatprep.subr.mxu0 0.0
        %5174 = vmatpush1.msra.mxu0 0.0
        %5175 = vmatprep.subr.mxu0 0.0
        %5176 = vmatpush1.msra.mxu0 0.0
        %5177 = vmatprep.subr.mxu0 0.0
        %5178 = vmatpush1.msra.mxu0 0.0
        %5179 = vmatprep.subr.mxu0 0.0
        %5180 = vmatpush1.msra.mxu0 0.0
        %5181 = vmatprep.subr.mxu0 0.0
        %5182 = vmatpush1.msra.mxu0 0.0
        %5183 = vmatprep.subr.mxu0 0.0
        %5184 = vmatpush1.msra.mxu0 0.0
        %5185 = vmatprep.subr.mxu0 0.0
        %5186 = vmatpush1.msra.mxu0 0.0
        %5187 = vmatprep.subr.mxu0 0.0
        %5188 = vmatpush1.msra.mxu0 0.0
        %5189 = vmatprep.subr.mxu0 0.0
        %5190 = vmatpush1.msra.mxu0 0.0
        %5191 = vmatprep.subr.mxu0 0.0
        %5192 = vmatpush1.msra.mxu0 0.0
        %5193 = vmatprep.subr.mxu0 0.0
        %5194 = vmatpush1.msra.mxu0 0.0
        %5195 = vmatprep.subr.mxu0 0.0
        %5196 = vmatpush1.msra.mxu0 0.0
        %5197 = vmatprep.subr.mxu0 0.0
        %5198 = vmatpush1.msra.mxu0 %v4177
        %5199 = vmatprep.subr.mxu0 0.0
        %5200 = vmatpush1.msra.mxu0 %v4176
        %5201 = vmatprep.subr.mxu0 0.0
        %5202 = vmatpush1.msra.mxu0 %v4175
        %5203 = vmatprep.subr.mxu0 0.0
        %5204 = vmatpush1.msra.mxu0 %v4174
        %5205 = vmatprep.subr.mxu0 0.0
        %5206 = vmatpush2.msra.mxu0 0.0
        %5207 = vmatprep.subr.mxu0 0.0
        %5208 = vmatpush2.msra.mxu0 0.0
        %5209 = vmatprep.subr.mxu0 0.0
        %5210 = vmatpush2.msra.mxu0 0.0
        %5211 = vmatprep.subr.mxu0 0.0
        %5212 = vmatpush2.msra.mxu0 0.0
        %5213 = vmatprep.subr.mxu0 0.0
        %5214 = vmatpush2.msra.mxu0 0.0
        %5215 = vmatprep.subr.mxu0 0.0
        %5216 = vmatpush2.msra.mxu0 0.0
        %5217 = vmatprep.subr.mxu0 0.0
        %5218 = vmatpush2.msra.mxu0 0.0
        %5219 = vmatprep.subr.mxu0 0.0
        %5220 = vmatpush2.msra.mxu0 0.0
        %5221 = vmatprep.subr.mxu0 0.0
        %5222 = vmatpush2.msra.mxu0 0.0
        %5223 = vmatprep.subr.mxu0 0.0
        %5224 = vmatpush2.msra.mxu0 0.0
        %5225 = vmatprep.subr.mxu0 0.0
        %5226 = vmatpush2.msra.mxu0 0.0
        %5227 = vmatprep.subr.mxu0 0.0
        %5228 = vmatpush2.msra.mxu0 0.0
        %5229 = vmatprep.subr.mxu0 0.0
        %5230 = vmatpush2.msra.mxu0 0.0
        %5231 = vmatprep.subr.mxu0 0.0
        %5232 = vmatpush2.msra.mxu0 0.0
        %5233 = vmatprep.subr.mxu0 0.0
        %5234 = vmatpush2.msra.mxu0 0.0
        %5235 = vmatprep.subr.mxu0 0.0
        %5236 = vmatpush2.msra.mxu0 0.0
        %5237 = vmatprep.mubr.f32.mxu0 0.0
        %5238 = vmatmul.mubr.f32.gmra.mxu0 %v5171
        %v5239 = vpop.f32.mrf.mxu0
        %v5240 = vadd.f32 %v5167, %v5239
        %v5241 = vpop.f32.mrf.mxu0
        %5242 = vdwg.mxu0
        %v5243 = vadd.f32 %v5240, %v4325
        %v5244 = vtanh.pop %v5243
        %v5245 = vmul.f32 %v5244, %v4329
        %v5247 = vsel %vm433, %v5245, 0
        %5249 = vmatprep.subr.mxu0 0.0
        %5250 = vmatpush1.xpose.msra.mxu0 0.0
        %5251 = vmatprep.subr.mxu0 0.0
        %5252 = vmatpush1.xpose.msra.mxu0 0.0
        %5253 = vmatprep.subr.mxu0 0.0
        %5254 = vmatpush1.xpose.msra.mxu0 0.0
        %5255 = vmatprep.subr.mxu0 0.0
        %5256 = vmatpush1.xpose.msra.mxu0 0.0
        %5257 = vmatprep.subr.mxu0 0.0
        %5258 = vmatpush1.xpose.msra.mxu0 0.0
        %5259 = vmatprep.subr.mxu0 0.0
        %5260 = vmatpush1.xpose.msra.mxu0 0.0
        %5261 = vmatprep.subr.mxu0 0.0
        %5262 = vmatpush1.xpose.msra.mxu0 0.0
        %5263 = vmatprep.subr.mxu0 0.0
        %5264 = vmatpush1.xpose.msra.mxu0 0.0
        %5265 = vmatprep.subr.mxu0 0.0
        %5266 = vmatpush1.xpose.msra.mxu0 0.0
        %5267 = vmatprep.subr.mxu0 0.0
        %5268 = vmatpush1.xpose.msra.mxu0 0.0
        %5269 = vmatprep.subr.mxu0 0.0
        %5270 = vmatpush1.xpose.msra.mxu0 0.0
        %5271 = vmatprep.subr.mxu0 0.0
        %5272 = vmatpush1.xpose.msra.mxu0 0.0
        %5273 = vmatprep.subr.mxu0 0.0
        %5274 = vmatpush1.xpose.msra.mxu0 0.0
        %5275 = vmatprep.subr.mxu0 0.0
        %5276 = vmatpush1.xpose.msra.mxu0 0.0
        %5277 = vmatprep.subr.mxu0 0.0
        %5278 = vmatpush1.xpose.msra.mxu0 0.0
        %5279 = vmatprep.subr.mxu0 0.0
        %5280 = vmatpush1.xpose.msra.mxu0 %v4336
        %5281 = vmatprep.subr.mxu0 0.0
        %5282 = vmatpush2.xpose.msra.mxu0 0.0
        %5283 = vmatprep.subr.mxu0 0.0
        %5284 = vmatpush2.xpose.msra.mxu0 0.0
        %5285 = vmatprep.subr.mxu0 0.0
        %5286 = vmatpush2.xpose.msra.mxu0 0.0
        %5287 = vmatprep.subr.mxu0 0.0
        %5288 = vmatpush2.xpose.msra.mxu0 0.0
        %5289 = vmatprep.subr.mxu0 0.0
        %5290 = vmatpush2.xpose.msra.mxu0 0.0
        %5291 = vmatprep.subr.mxu0 0.0
        %5292 = vmatpush2.xpose.msra.mxu0 0.0
        %5293 = vmatprep.subr.mxu0 0.0
        %5294 = vmatpush2.xpose.msra.mxu0 0.0
        %5295 = vmatprep.subr.mxu0 0.0
        %5296 = vmatpush2.xpose.msra.mxu0 0.0
        %5297 = vmatprep.subr.mxu0 0.0
        %5298 = vmatpush2.xpose.msra.mxu0 0.0
        %5299 = vmatprep.subr.mxu0 0.0
        %5300 = vmatpush2.xpose.msra.mxu0 0.0
        %5301 = vmatprep.subr.mxu0 0.0
        %5302 = vmatpush2.xpose.msra.mxu0 0.0
        %5303 = vmatprep.subr.mxu0 0.0
        %5304 = vmatpush2.xpose.msra.mxu0 0.0
        %5305 = vmatprep.subr.mxu0 0.0
        %5306 = vmatpush2.xpose.msra.mxu0 0.0
        %5307 = vmatprep.subr.mxu0 0.0
        %5308 = vmatpush2.xpose.msra.mxu0 0.0
        %5309 = vmatprep.subr.mxu0 0.0
        %5310 = vmatpush2.xpose.msra.mxu0 0.0
        %5311 = vmatprep.subr.mxu0 0.0
        %5312 = vmatpush2.xpose.msra.mxu0 0.0
        %5313 = vmatprep.mubr.f32.mxu0 0.0
        %5314 = vmatmul.mubr.f32.gmra.mxu0 %v5247
        %v5315 = vpop.f32.mrf.mxu0
        %v5316 = vadd.f32 0.0, %v5315
        %v5317 = vpop.f32.mrf.mxu0
        %5318 = vdwg.mxu0
        %v5319 = vsel %vm4093, %v5316, -1e+30
        %v5320 = vsel %vm4409, %v5319, -inf
        %5321 = vmax.xlane.f32.xlu0 %v5320
        %v5322 = vpop.xlane.xlu0 %5321
        %v5323 = vsub.f32 %v5319, %v5322
        %v5324 = vmul.f32 %v5323, 1.442695
        %v5325 = vpow.pop %v5324
        %v5326 = vsel %vm4409, %v5325, 0.0
        %5327 = vadd.xlane.f32.xlu0 %v5326
        %v5328 = vpop.xlane.xlu0 %5327
        %v5329 = vrcp.pop %v5328
        %v5330 = vmul.f32 %v5325, %v5329
        %v5332 = vsel %vm4421, %v5330, 0
        %5334 = vmatprep.subr.mxu0 0.0
        %5335 = vmatpush1.msra.mxu0 0.0
        %5336 = vmatprep.subr.mxu0 0.0
        %5337 = vmatpush1.msra.mxu0 0.0
        %5338 = vmatprep.subr.mxu0 0.0
        %5339 = vmatpush1.msra.mxu0 0.0
        %5340 = vmatprep.subr.mxu0 0.0
        %5341 = vmatpush1.msra.mxu0 0.0
        %5342 = vmatprep.subr.mxu0 0.0
        %5343 = vmatpush1.msra.mxu0 0.0
        %5344 = vmatprep.subr.mxu0 0.0
        %5345 = vmatpush1.msra.mxu0 0.0
        %5346 = vmatprep.subr.mxu0 0.0
        %5347 = vmatpush1.msra.mxu0 0.0
        %5348 = vmatprep.subr.mxu0 0.0
        %5349 = vmatpush1.msra.mxu0 0.0
        %5350 = vmatprep.subr.mxu0 0.0
        %5351 = vmatpush1.msra.mxu0 0.0
        %5352 = vmatprep.subr.mxu0 0.0
        %5353 = vmatpush1.msra.mxu0 0.0
        %5354 = vmatprep.subr.mxu0 0.0
        %5355 = vmatpush1.msra.mxu0 0.0
        %5356 = vmatprep.subr.mxu0 0.0
        %5357 = vmatpush1.msra.mxu0 0.0
        %5358 = vmatprep.subr.mxu0 0.0
        %5359 = vmatpush1.msra.mxu0 0.0
        %5360 = vmatprep.subr.mxu0 0.0
        %5361 = vmatpush1.msra.mxu0 0.0
        %5362 = vmatprep.subr.mxu0 0.0
        %5363 = vmatpush1.msra.mxu0 0.0
        %5364 = vmatprep.subr.mxu0 0.0
        %5365 = vmatpush1.msra.mxu0 %v3740
        %5366 = vmatprep.subr.mxu0 0.0
        %5367 = vmatpush2.msra.mxu0 0.0
        %5368 = vmatprep.subr.mxu0 0.0
        %5369 = vmatpush2.msra.mxu0 0.0
        %5370 = vmatprep.subr.mxu0 0.0
        %5371 = vmatpush2.msra.mxu0 0.0
        %5372 = vmatprep.subr.mxu0 0.0
        %5373 = vmatpush2.msra.mxu0 0.0
        %5374 = vmatprep.subr.mxu0 0.0
        %5375 = vmatpush2.msra.mxu0 0.0
        %5376 = vmatprep.subr.mxu0 0.0
        %5377 = vmatpush2.msra.mxu0 0.0
        %5378 = vmatprep.subr.mxu0 0.0
        %5379 = vmatpush2.msra.mxu0 0.0
        %5380 = vmatprep.subr.mxu0 0.0
        %5381 = vmatpush2.msra.mxu0 0.0
        %5382 = vmatprep.subr.mxu0 0.0
        %5383 = vmatpush2.msra.mxu0 0.0
        %5384 = vmatprep.subr.mxu0 0.0
        %5385 = vmatpush2.msra.mxu0 0.0
        %5386 = vmatprep.subr.mxu0 0.0
        %5387 = vmatpush2.msra.mxu0 0.0
        %5388 = vmatprep.subr.mxu0 0.0
        %5389 = vmatpush2.msra.mxu0 0.0
        %5390 = vmatprep.subr.mxu0 0.0
        %5391 = vmatpush2.msra.mxu0 0.0
        %5392 = vmatprep.subr.mxu0 0.0
        %5393 = vmatpush2.msra.mxu0 0.0
        %5394 = vmatprep.subr.mxu0 0.0
        %5395 = vmatpush2.msra.mxu0 0.0
        %5396 = vmatprep.subr.mxu0 0.0
        %5397 = vmatpush2.msra.mxu0 0.0
        %5398 = vmatprep.mubr.f32.mxu0 0.0
        %5399 = vmatmul.mubr.f32.gmra.mxu0 %v5332
        %v5400 = vpop.f32.mrf.mxu0
        %v5401 = vadd.f32 0.0, %v5400
        %v5402 = vpop.f32.mrf.mxu0
        %5403 = vdwg.mxu0
        %v5405 = vsel %vm433, %v5018, 0
        %5407 = vmatprep.subr.mxu0 0.0
        %5408 = vmatpush1.msra.mxu0 0.0
        %5409 = vmatprep.subr.mxu0 0.0
        %5410 = vmatpush1.msra.mxu0 0.0
        %5411 = vmatprep.subr.mxu0 0.0
        %5412 = vmatpush1.msra.mxu0 0.0
        %5413 = vmatprep.subr.mxu0 0.0
        %5414 = vmatpush1.msra.mxu0 0.0
        %5415 = vmatprep.subr.mxu0 0.0
        %5416 = vmatpush1.msra.mxu0 0.0
        %5417 = vmatprep.subr.mxu0 0.0
        %5418 = vmatpush1.msra.mxu0 0.0
        %5419 = vmatprep.subr.mxu0 0.0
        %5420 = vmatpush1.msra.mxu0 0.0
        %5421 = vmatprep.subr.mxu0 0.0
        %5422 = vmatpush1.msra.mxu0 0.0
        %5423 = vmatprep.subr.mxu0 0.0
        %5424 = vmatpush1.msra.mxu0 0.0
        %5425 = vmatprep.subr.mxu0 0.0
        %5426 = vmatpush1.msra.mxu0 0.0
        %5427 = vmatprep.subr.mxu0 0.0
        %5428 = vmatpush1.msra.mxu0 0.0
        %5429 = vmatprep.subr.mxu0 0.0
        %5430 = vmatpush1.msra.mxu0 0.0
        %5431 = vmatprep.subr.mxu0 0.0
        %5432 = vmatpush1.msra.mxu0 %v4498
        %5433 = vmatprep.subr.mxu0 0.0
        %5434 = vmatpush1.msra.mxu0 %v4497
        %5435 = vmatprep.subr.mxu0 0.0
        %5436 = vmatpush1.msra.mxu0 %v4496
        %5437 = vmatprep.subr.mxu0 0.0
        %5438 = vmatpush1.msra.mxu0 %v4495
        %5439 = vmatprep.subr.mxu0 0.0
        %5440 = vmatpush2.msra.mxu0 0.0
        %5441 = vmatprep.subr.mxu0 0.0
        %5442 = vmatpush2.msra.mxu0 0.0
        %5443 = vmatprep.subr.mxu0 0.0
        %5444 = vmatpush2.msra.mxu0 0.0
        %5445 = vmatprep.subr.mxu0 0.0
        %5446 = vmatpush2.msra.mxu0 0.0
        %5447 = vmatprep.subr.mxu0 0.0
        %5448 = vmatpush2.msra.mxu0 0.0
        %5449 = vmatprep.subr.mxu0 0.0
        %5450 = vmatpush2.msra.mxu0 0.0
        %5451 = vmatprep.subr.mxu0 0.0
        %5452 = vmatpush2.msra.mxu0 0.0
        %5453 = vmatprep.subr.mxu0 0.0
        %5454 = vmatpush2.msra.mxu0 0.0
        %5455 = vmatprep.subr.mxu0 0.0
        %5456 = vmatpush2.msra.mxu0 0.0
        %5457 = vmatprep.subr.mxu0 0.0
        %5458 = vmatpush2.msra.mxu0 0.0
        %5459 = vmatprep.subr.mxu0 0.0
        %5460 = vmatpush2.msra.mxu0 0.0
        %5461 = vmatprep.subr.mxu0 0.0
        %5462 = vmatpush2.msra.mxu0 0.0
        %5463 = vmatprep.subr.mxu0 0.0
        %5464 = vmatpush2.msra.mxu0 0.0
        %5465 = vmatprep.subr.mxu0 0.0
        %5466 = vmatpush2.msra.mxu0 0.0
        %5467 = vmatprep.subr.mxu0 0.0
        %5468 = vmatpush2.msra.mxu0 0.0
        %5469 = vmatprep.subr.mxu0 0.0
        %5470 = vmatpush2.msra.mxu0 0.0
        %5471 = vmatprep.mubr.f32.mxu0 0.0
        %5472 = vmatmul.mubr.f32.gmra.mxu0 %v5405
        %v5473 = vpop.f32.mrf.mxu0
        %v5474 = vadd.f32 %v4500, %v5473
        %v5475 = vpop.f32.mrf.mxu0
        %5476 = vdwg.mxu0
        %v5477 = vlaneseq
        %v5478 = vshrl.u32 %v5477, 7
        %v5479 = vsub.s32 0, %v5478
        %v5480 = vrot.slane %v5474, %v5479
        %v5481 = vmul.f32 %v3921, %v5480
        %v5482 = vmul.f32 %v3926, %v5480
        %v5483 = vmul.f32 %v3931, %v5480
        %v5484 = vmul.f32 %v3936, %v5480
        %v5485 = vmul.f32 %v3941, %v5480
        %v5486 = vmul.f32 %v3946, %v5480
        %v5487 = vmul.f32 %v3951, %v5480
        %v5488 = vmul.f32 %v3956, %v5480
        %v5490 = vsel %vm433, %v5481, 0
        %v5493 = vsel %vm433, %v5482, 0
        %v5496 = vsel %vm433, %v5483, 0
        %v5499 = vsel %vm433, %v5484, 0
        %v5502 = vsel %vm433, %v5485, 0
        %v5505 = vsel %vm433, %v5486, 0
        %v5508 = vsel %vm433, %v5487, 0
        %v5511 = vsel %vm433, %v5488, 0
        %5513 = vmatprep.subr.mxu0 0.0
        %5514 = vmatpush1.msra.mxu0 0.0
        %5515 = vmatprep.subr.mxu0 0.0
        %5516 = vmatpush1.msra.mxu0 0.0
        %5517 = vmatprep.subr.mxu0 0.0
        %5518 = vmatpush1.msra.mxu0 0.0
        %5519 = vmatprep.subr.mxu0 0.0
        %5520 = vmatpush1.msra.mxu0 0.0
        %5521 = vmatprep.subr.mxu0 0.0
        %5522 = vmatpush1.msra.mxu0 0.0
        %5523 = vmatprep.subr.mxu0 0.0
        %5524 = vmatpush1.msra.mxu0 0.0
        %5525 = vmatprep.subr.mxu0 0.0
        %5526 = vmatpush1.msra.mxu0 0.0
        %5527 = vmatprep.subr.mxu0 0.0
        %5528 = vmatpush1.msra.mxu0 0.0
        %5529 = vmatprep.subr.mxu0 0.0
        %5530 = vmatpush1.msra.mxu0 0.0
        %5531 = vmatprep.subr.mxu0 0.0
        %5532 = vmatpush1.msra.mxu0 0.0
        %5533 = vmatprep.subr.mxu0 0.0
        %5534 = vmatpush1.msra.mxu0 0.0
        %5535 = vmatprep.subr.mxu0 0.0
        %5536 = vmatpush1.msra.mxu0 0.0
        %5537 = vmatprep.subr.mxu0 0.0
        %5538 = vmatpush1.msra.mxu0 %v4589
        %5539 = vmatprep.subr.mxu0 0.0
        %5540 = vmatpush1.msra.mxu0 %v4588
        %5541 = vmatprep.subr.mxu0 0.0
        %5542 = vmatpush1.msra.mxu0 %v4587
        %5543 = vmatprep.subr.mxu0 0.0
        %5544 = vmatpush1.msra.mxu0 %v4586
        %5545 = vmatprep.subr.mxu0 0.0
        %5546 = vmatpush2.msra.mxu0 0.0
        %5547 = vmatprep.subr.mxu0 0.0
        %5548 = vmatpush2.msra.mxu0 0.0
        %5549 = vmatprep.subr.mxu0 0.0
        %5550 = vmatpush2.msra.mxu0 0.0
        %5551 = vmatprep.subr.mxu0 0.0
        %5552 = vmatpush2.msra.mxu0 0.0
        %5553 = vmatprep.subr.mxu0 0.0
        %5554 = vmatpush2.msra.mxu0 0.0
        %5555 = vmatprep.subr.mxu0 0.0
        %5556 = vmatpush2.msra.mxu0 0.0
        %5557 = vmatprep.subr.mxu0 0.0
        %5558 = vmatpush2.msra.mxu0 0.0
        %5559 = vmatprep.subr.mxu0 0.0
        %5560 = vmatpush2.msra.mxu0 0.0
        %5561 = vmatprep.subr.mxu0 0.0
        %5562 = vmatpush2.msra.mxu0 0.0
        %5563 = vmatprep.subr.mxu0 0.0
        %5564 = vmatpush2.msra.mxu0 0.0
        %5565 = vmatprep.subr.mxu0 0.0
        %5566 = vmatpush2.msra.mxu0 0.0
        %5567 = vmatprep.subr.mxu0 0.0
        %5568 = vmatpush2.msra.mxu0 0.0
        %5569 = vmatprep.subr.mxu0 0.0
        %5570 = vmatpush2.msra.mxu0 0.0
        %5571 = vmatprep.subr.mxu0 0.0
        %5572 = vmatpush2.msra.mxu0 0.0
        %5573 = vmatprep.subr.mxu0 0.0
        %5574 = vmatpush2.msra.mxu0 0.0
        %5575 = vmatprep.subr.mxu0 0.0
        %5576 = vmatpush2.msra.mxu0 0.0
        %5577 = vmatprep.mubr.f32.mxu0 0.0
        %5578 = vmatmul.mubr.f32.gmra.mxu0 %v5490
        %v5579 = vpop.f32.mrf.mxu0
        %v5580 = vadd.f32 %v4054, %v5579
        %v5581 = vpop.f32.mrf.mxu0
        %5582 = vmatprep.mubr.f32.mxu0 0.0
        %5583 = vmatmul.mubr.f32.gmra.mxu0 %v5493
        %v5584 = vpop.f32.mrf.mxu0
        %v5585 = vadd.f32 %v4059, %v5584
        %v5586 = vpop.f32.mrf.mxu0
        %5587 = vmatprep.mubr.f32.mxu0 0.0
        %5588 = vmatmul.mubr.f32.gmra.mxu0 %v5496
        %v5589 = vpop.f32.mrf.mxu0
        %v5590 = vadd.f32 %v4064, %v5589
        %v5591 = vpop.f32.mrf.mxu0
        %5592 = vmatprep.mubr.f32.mxu0 0.0
        %5593 = vmatmul.mubr.f32.gmra.mxu0 %v5499
        %v5594 = vpop.f32.mrf.mxu0
        %v5595 = vadd.f32 %v4069, %v5594
        %v5596 = vpop.f32.mrf.mxu0
        %5597 = vmatprep.mubr.f32.mxu0 0.0
        %5598 = vmatmul.mubr.f32.gmra.mxu0 %v5502
        %v5599 = vpop.f32.mrf.mxu0
        %v5600 = vadd.f32 %v4074, %v5599
        %v5601 = vpop.f32.mrf.mxu0
        %5602 = vmatprep.mubr.f32.mxu0 0.0
        %5603 = vmatmul.mubr.f32.gmra.mxu0 %v5505
        %v5604 = vpop.f32.mrf.mxu0
        %v5605 = vadd.f32 %v4079, %v5604
        %v5606 = vpop.f32.mrf.mxu0
        %5607 = vmatprep.mubr.f32.mxu0 0.0
        %5608 = vmatmul.mubr.f32.gmra.mxu0 %v5508
        %v5609 = vpop.f32.mrf.mxu0
        %v5610 = vadd.f32 %v4084, %v5609
        %v5611 = vpop.f32.mrf.mxu0
        %5612 = vmatprep.mubr.f32.mxu0 0.0
        %5613 = vmatmul.mubr.f32.gmra.mxu0 %v5511
        %v5614 = vpop.f32.mrf.mxu0
        %v5615 = vadd.f32 %v4089, %v5614
        %v5616 = vpop.f32.mrf.mxu0
        %5617 = vdwg.mxu0
        %v5618 = vadd.f32 %v5580, %v4722
        %v5619 = vadd.f32 %v5585, %v4722
        %v5620 = vadd.f32 %v5590, %v4722
        %v5621 = vadd.f32 %v5595, %v4722
        %v5622 = vadd.f32 %v5600, %v4722
        %v5623 = vadd.f32 %v5605, %v4722
        %v5624 = vadd.f32 %v5610, %v4722
        %v5625 = vadd.f32 %v5615, %v4722
        %vm5626 = vcmp.gt.f32.partialorder %v5618, 0.0
        %vm5627 = vcmp.gt.f32.partialorder %v5619, 0.0
        %vm5628 = vcmp.gt.f32.partialorder %v5620, 0.0
        %vm5629 = vcmp.gt.f32.partialorder %v5621, 0.0
        %vm5630 = vcmp.gt.f32.partialorder %v5622, 0.0
        %vm5631 = vcmp.gt.f32.partialorder %v5623, 0.0
        %vm5632 = vcmp.gt.f32.partialorder %v5624, 0.0
        %vm5633 = vcmp.gt.f32.partialorder %v5625, 0.0
        %v5634 = vmin.f32 %v5618, 0.0
        %v5635 = vmin.f32 %v5619, 0.0
        %v5636 = vmin.f32 %v5620, 0.0
        %v5637 = vmin.f32 %v5621, 0.0
        %v5638 = vmin.f32 %v5622, 0.0
        %v5639 = vmin.f32 %v5623, 0.0
        %v5640 = vmin.f32 %v5624, 0.0
        %v5641 = vmin.f32 %v5625, 0.0
        %v5642 = vmul.f32 %v5634, 1.442695
        %v5643 = vpow.pop %v5642
        %v5644 = vmul.f32 %v5635, 1.442695
        %v5645 = vpow.pop %v5644
        %v5646 = vmul.f32 %v5636, 1.442695
        %v5647 = vpow.pop %v5646
        %v5648 = vmul.f32 %v5637, 1.442695
        %v5649 = vpow.pop %v5648
        %v5650 = vmul.f32 %v5638, 1.442695
        %v5651 = vpow.pop %v5650
        %v5652 = vmul.f32 %v5639, 1.442695
        %v5653 = vpow.pop %v5652
        %v5654 = vmul.f32 %v5640, 1.442695
        %v5655 = vpow.pop %v5654
        %v5656 = vmul.f32 %v5641, 1.442695
        %v5657 = vpow.pop %v5656
        %v5658 = vsub.f32 %v5643, 1.0
        %v5659 = vsub.f32 %v5645, 1.0
        %v5660 = vsub.f32 %v5647, 1.0
        %v5661 = vsub.f32 %v5649, 1.0
        %v5662 = vsub.f32 %v5651, 1.0
        %v5663 = vsub.f32 %v5653, 1.0
        %v5664 = vsub.f32 %v5655, 1.0
        %v5665 = vsub.f32 %v5657, 1.0
        %v5666 = vsel %vm5626, %v5618, %v5658
        %v5667 = vsel %vm5627, %v5619, %v5659
        %v5668 = vsel %vm5628, %v5620, %v5660
        %v5669 = vsel %vm5629, %v5621, %v5661
        %v5670 = vsel %vm5630, %v5622, %v5662
        %v5671 = vsel %vm5631, %v5623, %v5663
        %v5672 = vsel %vm5632, %v5624, %v5664
        %v5673 = vsel %vm5633, %v5625, %v5665
        %v5674 = vlaneseq
        %v5675 = vshrl.u32 %v5674, 7
        %v5676 = vsub.s32 0, %v5675
        %v5677 = vrot.slane %v5401, %v5676
        %v5678 = vmul.f32 %v5666, %v5677
        %v5679 = vmul.f32 %v5667, %v5677
        %v5680 = vmul.f32 %v5668, %v5677
        %v5681 = vmul.f32 %v5669, %v5677
        %v5682 = vmul.f32 %v5670, %v5677
        %v5683 = vmul.f32 %v5671, %v5677
        %v5684 = vmul.f32 %v5672, %v5677
        %v5685 = vmul.f32 %v5673, %v5677
        %vm5686 = vcmp.gt.f32.partialorder %v5678, 0.0
        %vm5687 = vcmp.gt.f32.partialorder %v5679, 0.0
        %vm5688 = vcmp.gt.f32.partialorder %v5680, 0.0
        %vm5689 = vcmp.gt.f32.partialorder %v5681, 0.0
        %vm5690 = vcmp.gt.f32.partialorder %v5682, 0.0
        %vm5691 = vcmp.gt.f32.partialorder %v5683, 0.0
        %vm5692 = vcmp.gt.f32.partialorder %v5684, 0.0
        %vm5693 = vcmp.gt.f32.partialorder %v5685, 0.0
        %v5694 = vmin.f32 %v5678, 0.0
        %v5695 = vmin.f32 %v5679, 0.0
        %v5696 = vmin.f32 %v5680, 0.0
        %v5697 = vmin.f32 %v5681, 0.0
        %v5698 = vmin.f32 %v5682, 0.0
        %v5699 = vmin.f32 %v5683, 0.0
        %v5700 = vmin.f32 %v5684, 0.0
        %v5701 = vmin.f32 %v5685, 0.0
        %v5702 = vmul.f32 %v5694, 1.442695
        %v5703 = vpow.pop %v5702
        %v5704 = vmul.f32 %v5695, 1.442695
        %v5705 = vpow.pop %v5704
        %v5706 = vmul.f32 %v5696, 1.442695
        %v5707 = vpow.pop %v5706
        %v5708 = vmul.f32 %v5697, 1.442695
        %v5709 = vpow.pop %v5708
        %v5710 = vmul.f32 %v5698, 1.442695
        %v5711 = vpow.pop %v5710
        %v5712 = vmul.f32 %v5699, 1.442695
        %v5713 = vpow.pop %v5712
        %v5714 = vmul.f32 %v5700, 1.442695
        %v5715 = vpow.pop %v5714
        %v5716 = vmul.f32 %v5701, 1.442695
        %v5717 = vpow.pop %v5716
        %v5718 = vsub.f32 %v5703, 1.0
        %v5719 = vsub.f32 %v5705, 1.0
        %v5720 = vsub.f32 %v5707, 1.0
        %v5721 = vsub.f32 %v5709, 1.0
        %v5722 = vsub.f32 %v5711, 1.0
        %v5723 = vsub.f32 %v5713, 1.0
        %v5724 = vsub.f32 %v5715, 1.0
        %v5725 = vsub.f32 %v5717, 1.0
        %v5726 = vsel %vm5686, %v5678, %v5718
        %v5727 = vsel %vm5687, %v5679, %v5719
        %v5728 = vsel %vm5688, %v5680, %v5720
        %v5729 = vsel %vm5689, %v5681, %v5721
        %v5730 = vsel %vm5690, %v5682, %v5722
        %v5731 = vsel %vm5691, %v5683, %v5723
        %v5732 = vsel %vm5692, %v5684, %v5724
        %v5733 = vsel %vm5693, %v5685, %v5725
        %v5735 = vsel %vm433, %v5726, 0
        %v5738 = vsel %vm433, %v5727, 0
        %v5741 = vsel %vm433, %v5728, 0
        %v5744 = vsel %vm433, %v5729, 0
        %v5747 = vsel %vm433, %v5730, 0
        %v5750 = vsel %vm433, %v5731, 0
        %v5753 = vsel %vm433, %v5732, 0
        %v5756 = vsel %vm433, %v5733, 0
        %5758 = vmatprep.subr.mxu0 0.0
        %5759 = vmatpush1.xpose.msra.mxu0 0.0
        %5760 = vmatprep.subr.mxu0 0.0
        %5761 = vmatpush1.xpose.msra.mxu0 0.0
        %5762 = vmatprep.subr.mxu0 0.0
        %5763 = vmatpush1.xpose.msra.mxu0 0.0
        %5764 = vmatprep.subr.mxu0 0.0
        %5765 = vmatpush1.xpose.msra.mxu0 0.0
        %5766 = vmatprep.subr.mxu0 0.0
        %5767 = vmatpush1.xpose.msra.mxu0 0.0
        %5768 = vmatprep.subr.mxu0 0.0
        %5769 = vmatpush1.xpose.msra.mxu0 0.0
        %5770 = vmatprep.subr.mxu0 0.0
        %5771 = vmatpush1.xpose.msra.mxu0 0.0
        %5772 = vmatprep.subr.mxu0 0.0
        %5773 = vmatpush1.xpose.msra.mxu0 0.0
        %5774 = vmatprep.subr.mxu0 0.0
        %5775 = vmatpush1.xpose.msra.mxu0 %v5756
        %5776 = vmatprep.subr.mxu0 0.0
        %5777 = vmatpush1.xpose.msra.mxu0 %v5753
        %5778 = vmatprep.subr.mxu0 0.0
        %5779 = vmatpush1.xpose.msra.mxu0 %v5750
        %5780 = vmatprep.subr.mxu0 0.0
        %5781 = vmatpush1.xpose.msra.mxu0 %v5747
        %5782 = vmatprep.subr.mxu0 0.0
        %5783 = vmatpush1.xpose.msra.mxu0 %v5744
        %5784 = vmatprep.subr.mxu0 0.0
        %5785 = vmatpush1.xpose.msra.mxu0 %v5741
        %5786 = vmatprep.subr.mxu0 0.0
        %5787 = vmatpush1.xpose.msra.mxu0 %v5738
        %5788 = vmatprep.subr.mxu0 0.0
        %5789 = vmatpush1.xpose.msra.mxu0 %v5735
        %5790 = vmatprep.subr.mxu0 0.0
        %5791 = vmatpush2.xpose.msra.mxu0 0.0
        %5792 = vmatprep.subr.mxu0 0.0
        %5793 = vmatpush2.xpose.msra.mxu0 0.0
        %5794 = vmatprep.subr.mxu0 0.0
        %5795 = vmatpush2.xpose.msra.mxu0 0.0
        %5796 = vmatprep.subr.mxu0 0.0
        %5797 = vmatpush2.xpose.msra.mxu0 0.0
        %5798 = vmatprep.subr.mxu0 0.0
        %5799 = vmatpush2.xpose.msra.mxu0 0.0
        %5800 = vmatprep.subr.mxu0 0.0
        %5801 = vmatpush2.xpose.msra.mxu0 0.0
        %5802 = vmatprep.subr.mxu0 0.0
        %5803 = vmatpush2.xpose.msra.mxu0 0.0
        %5804 = vmatprep.subr.mxu0 0.0
        %5805 = vmatpush2.xpose.msra.mxu0 0.0
        %5806 = vmatprep.subr.mxu0 0.0
        %5807 = vmatpush2.xpose.msra.mxu0 0.0
        %5808 = vmatprep.subr.mxu0 0.0
        %5809 = vmatpush2.xpose.msra.mxu0 0.0
        %5810 = vmatprep.subr.mxu0 0.0
        %5811 = vmatpush2.xpose.msra.mxu0 0.0
        %5812 = vmatprep.subr.mxu0 0.0
        %5813 = vmatpush2.xpose.msra.mxu0 0.0
        %5814 = vmatprep.subr.mxu0 0.0
        %5815 = vmatpush2.xpose.msra.mxu0 0.0
        %5816 = vmatprep.subr.mxu0 0.0
        %5817 = vmatpush2.xpose.msra.mxu0 0.0
        %5818 = vmatprep.subr.mxu0 0.0
        %5819 = vmatpush2.xpose.msra.mxu0 0.0
        %5820 = vmatprep.subr.mxu0 0.0
        %5821 = vmatpush2.xpose.msra.mxu0 0.0
        %5822 = vmatprep.mubr.f32.mxu0 0.0
        %5823 = vmatmul.mubr.f32.gmra.mxu0 %v4839
        %v5824 = vpop.f32.mrf.mxu0
        %v5825 = vadd.f32 0.0, %v5824
        %v5826 = vpop.f32.mrf.mxu0
        %5827 = vdwg.mxu0
        %v5828 = vsel %vm4935, %v5825, -inf
        %5829 = vmax.xlane.f32.xlu0 %v5828
        %v5830 = vpop.xlane.xlu0 %5829
        %v5831 = vsub.f32 %v5825, %v5830
        %v5832 = vmul.f32 %v5831, 1.442695
        %v5833 = vpow.pop %v5832
        %v5834 = vsel %vm4935, %v5833, 0.0
        %5835 = vadd.xlane.f32.xlu0 %v5834
        %v5836 = vpop.xlane.xlu0 %5835
        %v5837 = vrcp.pop %v5836
        %v5838 = vmul.f32 %v5833, %v5837
        %v5840 = vsel %vm4947, %v5838, 0
        %5842 = vmatprep.subr.mxu0 0.0
        %5843 = vmatpush1.msra.mxu0 0.0
        %5844 = vmatprep.subr.mxu0 0.0
        %5845 = vmatpush1.msra.mxu0 0.0
        %5846 = vmatprep.subr.mxu0 0.0
        %5847 = vmatpush1.msra.mxu0 0.0
        %5848 = vmatprep.subr.mxu0 0.0
        %5849 = vmatpush1.msra.mxu0 0.0
        %5850 = vmatprep.subr.mxu0 0.0
        %5851 = vmatpush1.msra.mxu0 0.0
        %5852 = vmatprep.subr.mxu0 0.0
        %5853 = vmatpush1.msra.mxu0 0.0
        %5854 = vmatprep.subr.mxu0 0.0
        %5855 = vmatpush1.msra.mxu0 0.0
        %5856 = vmatprep.subr.mxu0 0.0
        %5857 = vmatpush1.msra.mxu0 0.0
        %5858 = vmatprep.subr.mxu0 0.0
        %5859 = vmatpush1.msra.mxu0 %v2651
        %5860 = vmatprep.subr.mxu0 0.0
        %5861 = vmatpush1.msra.mxu0 %v2650
        %5862 = vmatprep.subr.mxu0 0.0
        %5863 = vmatpush1.msra.mxu0 %v2649
        %5864 = vmatprep.subr.mxu0 0.0
        %5865 = vmatpush1.msra.mxu0 %v2648
        %5866 = vmatprep.subr.mxu0 0.0
        %5867 = vmatpush1.msra.mxu0 %v2647
        %5868 = vmatprep.subr.mxu0 0.0
        %5869 = vmatpush1.msra.mxu0 %v2646
        %5870 = vmatprep.subr.mxu0 0.0
        %5871 = vmatpush1.msra.mxu0 %v2645
        %5872 = vmatprep.subr.mxu0 0.0
        %5873 = vmatpush1.msra.mxu0 %v2644
        %5874 = vmatprep.subr.mxu0 0.0
        %5875 = vmatpush2.msra.mxu0 0.0
        %5876 = vmatprep.subr.mxu0 0.0
        %5877 = vmatpush2.msra.mxu0 0.0
        %5878 = vmatprep.subr.mxu0 0.0
        %5879 = vmatpush2.msra.mxu0 0.0
        %5880 = vmatprep.subr.mxu0 0.0
        %5881 = vmatpush2.msra.mxu0 0.0
        %5882 = vmatprep.subr.mxu0 0.0
        %5883 = vmatpush2.msra.mxu0 0.0
        %5884 = vmatprep.subr.mxu0 0.0
        %5885 = vmatpush2.msra.mxu0 0.0
        %5886 = vmatprep.subr.mxu0 0.0
        %5887 = vmatpush2.msra.mxu0 0.0
        %5888 = vmatprep.subr.mxu0 0.0
        %5889 = vmatpush2.msra.mxu0 0.0
        %5890 = vmatprep.subr.mxu0 0.0
        %5891 = vmatpush2.msra.mxu0 0.0
        %5892 = vmatprep.subr.mxu0 0.0
        %5893 = vmatpush2.msra.mxu0 0.0
        %5894 = vmatprep.subr.mxu0 0.0
        %5895 = vmatpush2.msra.mxu0 0.0
        %5896 = vmatprep.subr.mxu0 0.0
        %5897 = vmatpush2.msra.mxu0 0.0
        %5898 = vmatprep.subr.mxu0 0.0
        %5899 = vmatpush2.msra.mxu0 0.0
        %5900 = vmatprep.subr.mxu0 0.0
        %5901 = vmatpush2.msra.mxu0 0.0
        %5902 = vmatprep.subr.mxu0 0.0
        %5903 = vmatpush2.msra.mxu0 0.0
        %5904 = vmatprep.subr.mxu0 0.0
        %5905 = vmatpush2.msra.mxu0 0.0
        %5906 = vmatprep.mubr.f32.mxu0 0.0
        %5907 = vmatmul.mubr.f32.gmra.mxu0 %v5840
        %v5908 = vpop.f32.mrf.mxu0
        %v5909 = vadd.f32 0.0, %v5908
        %v5910 = vpop.f32.mrf.mxu0
        %5911 = vdwg.mxu0
        %v5912 = vld [vmem:[%s5 + $0x180] sm:$0xff]
        %v5913 = vld [vmem:[%s5 + $0x188] sm:$0xff]
        %v5914 = vld [vmem:[%s5 + $0x190] sm:$0xff]
        %v5915 = vld [vmem:[%s5 + $0x198] sm:$0xff]
        %v5916 = vrot.slane %v303, 6
        %5918 = vmatprep.subr.mxu0 0.0
        %5919 = vmatpush1.msra.mxu0 0.0
        %5920 = vmatprep.subr.mxu0 0.0
        %5921 = vmatpush1.msra.mxu0 0.0
        %5922 = vmatprep.subr.mxu0 0.0
        %5923 = vmatpush1.msra.mxu0 0.0
        %5924 = vmatprep.subr.mxu0 0.0
        %5925 = vmatpush1.msra.mxu0 0.0
        %5926 = vmatprep.subr.mxu0 0.0
        %5927 = vmatpush1.msra.mxu0 0.0
        %5928 = vmatprep.subr.mxu0 0.0
        %5929 = vmatpush1.msra.mxu0 0.0
        %5930 = vmatprep.subr.mxu0 0.0
        %5931 = vmatpush1.msra.mxu0 0.0
        %5932 = vmatprep.subr.mxu0 0.0
        %5933 = vmatpush1.msra.mxu0 0.0
        %5934 = vmatprep.subr.mxu0 0.0
        %5935 = vmatpush1.msra.mxu0 0.0
        %5936 = vmatprep.subr.mxu0 0.0
        %5937 = vmatpush1.msra.mxu0 0.0
        %5938 = vmatprep.subr.mxu0 0.0
        %5939 = vmatpush1.msra.mxu0 0.0
        %5940 = vmatprep.subr.mxu0 0.0
        %5941 = vmatpush1.msra.mxu0 0.0
        %5942 = vmatprep.subr.mxu0 0.0
        %5943 = vmatpush1.msra.mxu0 %v5915
        %5944 = vmatprep.subr.mxu0 0.0
        %5945 = vmatpush1.msra.mxu0 %v5914
        %5946 = vmatprep.subr.mxu0 0.0
        %5947 = vmatpush1.msra.mxu0 %v5913
        %5948 = vmatprep.subr.mxu0 0.0
        %5949 = vmatpush1.msra.mxu0 %v5912
        %5950 = vmatprep.subr.mxu0 0.0
        %5951 = vmatpush2.msra.mxu0 0.0
        %5952 = vmatprep.subr.mxu0 0.0
        %5953 = vmatpush2.msra.mxu0 0.0
        %5954 = vmatprep.subr.mxu0 0.0
        %5955 = vmatpush2.msra.mxu0 0.0
        %5956 = vmatprep.subr.mxu0 0.0
        %5957 = vmatpush2.msra.mxu0 0.0
        %5958 = vmatprep.subr.mxu0 0.0
        %5959 = vmatpush2.msra.mxu0 0.0
        %5960 = vmatprep.subr.mxu0 0.0
        %5961 = vmatpush2.msra.mxu0 0.0
        %5962 = vmatprep.subr.mxu0 0.0
        %5963 = vmatpush2.msra.mxu0 0.0
        %5964 = vmatprep.subr.mxu0 0.0
        %5965 = vmatpush2.msra.mxu0 0.0
        %5966 = vmatprep.subr.mxu0 0.0
        %5967 = vmatpush2.msra.mxu0 0.0
        %5968 = vmatprep.subr.mxu0 0.0
        %5969 = vmatpush2.msra.mxu0 0.0
        %5970 = vmatprep.subr.mxu0 0.0
        %5971 = vmatpush2.msra.mxu0 0.0
        %5972 = vmatprep.subr.mxu0 0.0
        %5973 = vmatpush2.msra.mxu0 0.0
        %5974 = vmatprep.subr.mxu0 0.0
        %5975 = vmatpush2.msra.mxu0 0.0
        %5976 = vmatprep.subr.mxu0 0.0
        %5977 = vmatpush2.msra.mxu0 0.0
        %5978 = vmatprep.subr.mxu0 0.0
        %5979 = vmatpush2.msra.mxu0 0.0
        %5980 = vmatprep.subr.mxu0 0.0
        %5981 = vmatpush2.msra.mxu0 0.0
        %5982 = vmatprep.mubr.f32.mxu0 0.0
        %5983 = vmatmul.mubr.f32.gmra.mxu0 %v4102
        %v5984 = vpop.f32.mrf.mxu0
        %v5985 = vadd.f32 %v5916, %v5984
        %v5986 = vpop.f32.mrf.mxu0
        %5987 = vdwg.mxu0
        %v5989 = vsel %vm433, %v5985, 0
        %5991 = vmatprep.subr.mxu0 0.0
        %5992 = vmatpush1.msra.mxu0 0.0
        %5993 = vmatprep.subr.mxu0 0.0
        %5994 = vmatpush1.msra.mxu0 0.0
        %5995 = vmatprep.subr.mxu0 0.0
        %5996 = vmatpush1.msra.mxu0 0.0
        %5997 = vmatprep.subr.mxu0 0.0
        %5998 = vmatpush1.msra.mxu0 0.0
        %5999 = vmatprep.subr.mxu0 0.0
        %6000 = vmatpush1.msra.mxu0 0.0
        %6001 = vmatprep.subr.mxu0 0.0
        %6002 = vmatpush1.msra.mxu0 0.0
        %6003 = vmatprep.subr.mxu0 0.0
        %6004 = vmatpush1.msra.mxu0 0.0
        %6005 = vmatprep.subr.mxu0 0.0
        %6006 = vmatpush1.msra.mxu0 0.0
        %6007 = vmatprep.subr.mxu0 0.0
        %6008 = vmatpush1.msra.mxu0 0.0
        %6009 = vmatprep.subr.mxu0 0.0
        %6010 = vmatpush1.msra.mxu0 0.0
        %6011 = vmatprep.subr.mxu0 0.0
        %6012 = vmatpush1.msra.mxu0 0.0
        %6013 = vmatprep.subr.mxu0 0.0
        %6014 = vmatpush1.msra.mxu0 0.0
        %6015 = vmatprep.subr.mxu0 0.0
        %6016 = vmatpush1.msra.mxu0 %v4181
        %6017 = vmatprep.subr.mxu0 0.0
        %6018 = vmatpush1.msra.mxu0 %v4180
        %6019 = vmatprep.subr.mxu0 0.0
        %6020 = vmatpush1.msra.mxu0 %v4179
        %6021 = vmatprep.subr.mxu0 0.0
        %6022 = vmatpush1.msra.mxu0 %v4178
        %6023 = vmatprep.subr.mxu0 0.0
        %6024 = vmatpush2.msra.mxu0 0.0
        %6025 = vmatprep.subr.mxu0 0.0
        %6026 = vmatpush2.msra.mxu0 0.0
        %6027 = vmatprep.subr.mxu0 0.0
        %6028 = vmatpush2.msra.mxu0 0.0
        %6029 = vmatprep.subr.mxu0 0.0
        %6030 = vmatpush2.msra.mxu0 0.0
        %6031 = vmatprep.subr.mxu0 0.0
        %6032 = vmatpush2.msra.mxu0 0.0
        %6033 = vmatprep.subr.mxu0 0.0
        %6034 = vmatpush2.msra.mxu0 0.0
        %6035 = vmatprep.subr.mxu0 0.0
        %6036 = vmatpush2.msra.mxu0 0.0
        %6037 = vmatprep.subr.mxu0 0.0
        %6038 = vmatpush2.msra.mxu0 0.0
        %6039 = vmatprep.subr.mxu0 0.0
        %6040 = vmatpush2.msra.mxu0 0.0
        %6041 = vmatprep.subr.mxu0 0.0
        %6042 = vmatpush2.msra.mxu0 0.0
        %6043 = vmatprep.subr.mxu0 0.0
        %6044 = vmatpush2.msra.mxu0 0.0
        %6045 = vmatprep.subr.mxu0 0.0
        %6046 = vmatpush2.msra.mxu0 0.0
        %6047 = vmatprep.subr.mxu0 0.0
        %6048 = vmatpush2.msra.mxu0 0.0
        %6049 = vmatprep.subr.mxu0 0.0
        %6050 = vmatpush2.msra.mxu0 0.0
        %6051 = vmatprep.subr.mxu0 0.0
        %6052 = vmatpush2.msra.mxu0 0.0
        %6053 = vmatprep.subr.mxu0 0.0
        %6054 = vmatpush2.msra.mxu0 0.0
        %6055 = vmatprep.mubr.f32.mxu0 0.0
        %6056 = vmatmul.mubr.f32.gmra.mxu0 %v5989
        %v6057 = vpop.f32.mrf.mxu0
        %v6058 = vadd.f32 0.0, %v6057
        %v6059 = vpop.f32.mrf.mxu0
        %6060 = vdwg.mxu0
        %v6062 = vsel %vm433, %v5401, 0
        %6064 = vmatprep.subr.mxu0 0.0
        %6065 = vmatpush1.msra.mxu0 0.0
        %6066 = vmatprep.subr.mxu0 0.0
        %6067 = vmatpush1.msra.mxu0 0.0
        %6068 = vmatprep.subr.mxu0 0.0
        %6069 = vmatpush1.msra.mxu0 0.0
        %6070 = vmatprep.subr.mxu0 0.0
        %6071 = vmatpush1.msra.mxu0 0.0
        %6072 = vmatprep.subr.mxu0 0.0
        %6073 = vmatpush1.msra.mxu0 0.0
        %6074 = vmatprep.subr.mxu0 0.0
        %6075 = vmatpush1.msra.mxu0 0.0
        %6076 = vmatprep.subr.mxu0 0.0
        %6077 = vmatpush1.msra.mxu0 0.0
        %6078 = vmatprep.subr.mxu0 0.0
        %6079 = vmatpush1.msra.mxu0 0.0
        %6080 = vmatprep.subr.mxu0 0.0
        %6081 = vmatpush1.msra.mxu0 0.0
        %6082 = vmatprep.subr.mxu0 0.0
        %6083 = vmatpush1.msra.mxu0 0.0
        %6084 = vmatprep.subr.mxu0 0.0
        %6085 = vmatpush1.msra.mxu0 0.0
        %6086 = vmatprep.subr.mxu0 0.0
        %6087 = vmatpush1.msra.mxu0 0.0
        %6088 = vmatprep.subr.mxu0 0.0
        %6089 = vmatpush1.msra.mxu0 %v4177
        %6090 = vmatprep.subr.mxu0 0.0
        %6091 = vmatpush1.msra.mxu0 %v4176
        %6092 = vmatprep.subr.mxu0 0.0
        %6093 = vmatpush1.msra.mxu0 %v4175
        %6094 = vmatprep.subr.mxu0 0.0
        %6095 = vmatpush1.msra.mxu0 %v4174
        %6096 = vmatprep.subr.mxu0 0.0
        %6097 = vmatpush2.msra.mxu0 0.0
        %6098 = vmatprep.subr.mxu0 0.0
        %6099 = vmatpush2.msra.mxu0 0.0
        %6100 = vmatprep.subr.mxu0 0.0
        %6101 = vmatpush2.msra.mxu0 0.0
        %6102 = vmatprep.subr.mxu0 0.0
        %6103 = vmatpush2.msra.mxu0 0.0
        %6104 = vmatprep.subr.mxu0 0.0
        %6105 = vmatpush2.msra.mxu0 0.0
        %6106 = vmatprep.subr.mxu0 0.0
        %6107 = vmatpush2.msra.mxu0 0.0
        %6108 = vmatprep.subr.mxu0 0.0
        %6109 = vmatpush2.msra.mxu0 0.0
        %6110 = vmatprep.subr.mxu0 0.0
        %6111 = vmatpush2.msra.mxu0 0.0
        %6112 = vmatprep.subr.mxu0 0.0
        %6113 = vmatpush2.msra.mxu0 0.0
        %6114 = vmatprep.subr.mxu0 0.0
        %6115 = vmatpush2.msra.mxu0 0.0
        %6116 = vmatprep.subr.mxu0 0.0
        %6117 = vmatpush2.msra.mxu0 0.0
        %6118 = vmatprep.subr.mxu0 0.0
        %6119 = vmatpush2.msra.mxu0 0.0
        %6120 = vmatprep.subr.mxu0 0.0
        %6121 = vmatpush2.msra.mxu0 0.0
        %6122 = vmatprep.subr.mxu0 0.0
        %6123 = vmatpush2.msra.mxu0 0.0
        %6124 = vmatprep.subr.mxu0 0.0
        %6125 = vmatpush2.msra.mxu0 0.0
        %6126 = vmatprep.subr.mxu0 0.0
        %6127 = vmatpush2.msra.mxu0 0.0
        %6128 = vmatprep.mubr.f32.mxu0 0.0
        %6129 = vmatmul.mubr.f32.gmra.mxu0 %v6062
        %v6130 = vpop.f32.mrf.mxu0
        %v6131 = vadd.f32 %v6058, %v6130
        %v6132 = vpop.f32.mrf.mxu0
        %6133 = vdwg.mxu0
        %v6134 = vadd.f32 %v6131, %v4325
        %v6135 = vtanh.pop %v6134
        %v6136 = vmul.f32 %v6135, %v4329
        %v6138 = vsel %vm433, %v6136, 0
        %6140 = vmatprep.subr.mxu0 0.0
        %6141 = vmatpush1.xpose.msra.mxu0 0.0
        %6142 = vmatprep.subr.mxu0 0.0
        %6143 = vmatpush1.xpose.msra.mxu0 0.0
        %6144 = vmatprep.subr.mxu0 0.0
        %6145 = vmatpush1.xpose.msra.mxu0 0.0
        %6146 = vmatprep.subr.mxu0 0.0
        %6147 = vmatpush1.xpose.msra.mxu0 0.0
        %6148 = vmatprep.subr.mxu0 0.0
        %6149 = vmatpush1.xpose.msra.mxu0 0.0
        %6150 = vmatprep.subr.mxu0 0.0
        %6151 = vmatpush1.xpose.msra.mxu0 0.0
        %6152 = vmatprep.subr.mxu0 0.0
        %6153 = vmatpush1.xpose.msra.mxu0 0.0
        %6154 = vmatprep.subr.mxu0 0.0
        %6155 = vmatpush1.xpose.msra.mxu0 0.0
        %6156 = vmatprep.subr.mxu0 0.0
        %6157 = vmatpush1.xpose.msra.mxu0 0.0
        %6158 = vmatprep.subr.mxu0 0.0
        %6159 = vmatpush1.xpose.msra.mxu0 0.0
        %6160 = vmatprep.subr.mxu0 0.0
        %6161 = vmatpush1.xpose.msra.mxu0 0.0
        %6162 = vmatprep.subr.mxu0 0.0
        %6163 = vmatpush1.xpose.msra.mxu0 0.0
        %6164 = vmatprep.subr.mxu0 0.0
        %6165 = vmatpush1.xpose.msra.mxu0 0.0
        %6166 = vmatprep.subr.mxu0 0.0
        %6167 = vmatpush1.xpose.msra.mxu0 0.0
        %6168 = vmatprep.subr.mxu0 0.0
        %6169 = vmatpush1.xpose.msra.mxu0 0.0
        %6170 = vmatprep.subr.mxu0 0.0
        %6171 = vmatpush1.xpose.msra.mxu0 %v4336
        %6172 = vmatprep.subr.mxu0 0.0
        %6173 = vmatpush2.xpose.msra.mxu0 0.0
        %6174 = vmatprep.subr.mxu0 0.0
        %6175 = vmatpush2.xpose.msra.mxu0 0.0
        %6176 = vmatprep.subr.mxu0 0.0
        %6177 = vmatpush2.xpose.msra.mxu0 0.0
        %6178 = vmatprep.subr.mxu0 0.0
        %6179 = vmatpush2.xpose.msra.mxu0 0.0
        %6180 = vmatprep.subr.mxu0 0.0
        %6181 = vmatpush2.xpose.msra.mxu0 0.0
        %6182 = vmatprep.subr.mxu0 0.0
        %6183 = vmatpush2.xpose.msra.mxu0 0.0
        %6184 = vmatprep.subr.mxu0 0.0
        %6185 = vmatpush2.xpose.msra.mxu0 0.0
        %6186 = vmatprep.subr.mxu0 0.0
        %6187 = vmatpush2.xpose.msra.mxu0 0.0
        %6188 = vmatprep.subr.mxu0 0.0
        %6189 = vmatpush2.xpose.msra.mxu0 0.0
        %6190 = vmatprep.subr.mxu0 0.0
        %6191 = vmatpush2.xpose.msra.mxu0 0.0
        %6192 = vmatprep.subr.mxu0 0.0
        %6193 = vmatpush2.xpose.msra.mxu0 0.0
        %6194 = vmatprep.subr.mxu0 0.0
        %6195 = vmatpush2.xpose.msra.mxu0 0.0
        %6196 = vmatprep.subr.mxu0 0.0
        %6197 = vmatpush2.xpose.msra.mxu0 0.0
        %6198 = vmatprep.subr.mxu0 0.0
        %6199 = vmatpush2.xpose.msra.mxu0 0.0
        %6200 = vmatprep.subr.mxu0 0.0
        %6201 = vmatpush2.xpose.msra.mxu0 0.0
        %6202 = vmatprep.subr.mxu0 0.0
        %6203 = vmatpush2.xpose.msra.mxu0 0.0
        %6204 = vmatprep.mubr.f32.mxu0 0.0
        %6205 = vmatmul.mubr.f32.gmra.mxu0 %v6138
        %v6206 = vpop.f32.mrf.mxu0
        %v6207 = vadd.f32 0.0, %v6206
        %v6208 = vpop.f32.mrf.mxu0
        %6209 = vdwg.mxu0
        %v6210 = vsel %vm4093, %v6207, -1e+30
        %v6211 = vsel %vm4409, %v6210, -inf
        %6212 = vmax.xlane.f32.xlu0 %v6211
        %v6213 = vpop.xlane.xlu0 %6212
        %v6214 = vsub.f32 %v6210, %v6213
        %v6215 = vmul.f32 %v6214, 1.442695
        %v6216 = vpow.pop %v6215
        %v6217 = vsel %vm4409, %v6216, 0.0
        %6218 = vadd.xlane.f32.xlu0 %v6217
        %v6219 = vpop.xlane.xlu0 %6218
        %v6220 = vrcp.pop %v6219
        %v6221 = vmul.f32 %v6216, %v6220
        %v6223 = vsel %vm4421, %v6221, 0
        %6225 = vmatprep.subr.mxu0 0.0
        %6226 = vmatpush1.msra.mxu0 0.0
        %6227 = vmatprep.subr.mxu0 0.0
        %6228 = vmatpush1.msra.mxu0 0.0
        %6229 = vmatprep.subr.mxu0 0.0
        %6230 = vmatpush1.msra.mxu0 0.0
        %6231 = vmatprep.subr.mxu0 0.0
        %6232 = vmatpush1.msra.mxu0 0.0
        %6233 = vmatprep.subr.mxu0 0.0
        %6234 = vmatpush1.msra.mxu0 0.0
        %6235 = vmatprep.subr.mxu0 0.0
        %6236 = vmatpush1.msra.mxu0 0.0
        %6237 = vmatprep.subr.mxu0 0.0
        %6238 = vmatpush1.msra.mxu0 0.0
        %6239 = vmatprep.subr.mxu0 0.0
        %6240 = vmatpush1.msra.mxu0 0.0
        %6241 = vmatprep.subr.mxu0 0.0
        %6242 = vmatpush1.msra.mxu0 0.0
        %6243 = vmatprep.subr.mxu0 0.0
        %6244 = vmatpush1.msra.mxu0 0.0
        %6245 = vmatprep.subr.mxu0 0.0
        %6246 = vmatpush1.msra.mxu0 0.0
        %6247 = vmatprep.subr.mxu0 0.0
        %6248 = vmatpush1.msra.mxu0 0.0
        %6249 = vmatprep.subr.mxu0 0.0
        %6250 = vmatpush1.msra.mxu0 0.0
        %6251 = vmatprep.subr.mxu0 0.0
        %6252 = vmatpush1.msra.mxu0 0.0
        %6253 = vmatprep.subr.mxu0 0.0
        %6254 = vmatpush1.msra.mxu0 0.0
        %6255 = vmatprep.subr.mxu0 0.0
        %6256 = vmatpush1.msra.mxu0 %v3740
        %6257 = vmatprep.subr.mxu0 0.0
        %6258 = vmatpush2.msra.mxu0 0.0
        %6259 = vmatprep.subr.mxu0 0.0
        %6260 = vmatpush2.msra.mxu0 0.0
        %6261 = vmatprep.subr.mxu0 0.0
        %6262 = vmatpush2.msra.mxu0 0.0
        %6263 = vmatprep.subr.mxu0 0.0
        %6264 = vmatpush2.msra.mxu0 0.0
        %6265 = vmatprep.subr.mxu0 0.0
        %6266 = vmatpush2.msra.mxu0 0.0
        %6267 = vmatprep.subr.mxu0 0.0
        %6268 = vmatpush2.msra.mxu0 0.0
        %6269 = vmatprep.subr.mxu0 0.0
        %6270 = vmatpush2.msra.mxu0 0.0
        %6271 = vmatprep.subr.mxu0 0.0
        %6272 = vmatpush2.msra.mxu0 0.0
        %6273 = vmatprep.subr.mxu0 0.0
        %6274 = vmatpush2.msra.mxu0 0.0
        %6275 = vmatprep.subr.mxu0 0.0
        %6276 = vmatpush2.msra.mxu0 0.0
        %6277 = vmatprep.subr.mxu0 0.0
        %6278 = vmatpush2.msra.mxu0 0.0
        %6279 = vmatprep.subr.mxu0 0.0
        %6280 = vmatpush2.msra.mxu0 0.0
        %6281 = vmatprep.subr.mxu0 0.0
        %6282 = vmatpush2.msra.mxu0 0.0
        %6283 = vmatprep.subr.mxu0 0.0
        %6284 = vmatpush2.msra.mxu0 0.0
        %6285 = vmatprep.subr.mxu0 0.0
        %6286 = vmatpush2.msra.mxu0 0.0
        %6287 = vmatprep.subr.mxu0 0.0
        %6288 = vmatpush2.msra.mxu0 0.0
        %6289 = vmatprep.mubr.f32.mxu0 0.0
        %6290 = vmatmul.mubr.f32.gmra.mxu0 %v6223
        %v6291 = vpop.f32.mrf.mxu0
        %v6292 = vadd.f32 0.0, %v6291
        %v6293 = vpop.f32.mrf.mxu0
        %6294 = vdwg.mxu0
        %v6296 = vsel %vm433, %v5909, 0
        %6298 = vmatprep.subr.mxu0 0.0
        %6299 = vmatpush1.msra.mxu0 0.0
        %6300 = vmatprep.subr.mxu0 0.0
        %6301 = vmatpush1.msra.mxu0 0.0
        %6302 = vmatprep.subr.mxu0 0.0
        %6303 = vmatpush1.msra.mxu0 0.0
        %6304 = vmatprep.subr.mxu0 0.0
        %6305 = vmatpush1.msra.mxu0 0.0
        %6306 = vmatprep.subr.mxu0 0.0
        %6307 = vmatpush1.msra.mxu0 0.0
        %6308 = vmatprep.subr.mxu0 0.0
        %6309 = vmatpush1.msra.mxu0 0.0
        %6310 = vmatprep.subr.mxu0 0.0
        %6311 = vmatpush1.msra.mxu0 0.0
        %6312 = vmatprep.subr.mxu0 0.0
        %6313 = vmatpush1.msra.mxu0 0.0
        %6314 = vmatprep.subr.mxu0 0.0
        %6315 = vmatpush1.msra.mxu0 0.0
        %6316 = vmatprep.subr.mxu0 0.0
        %6317 = vmatpush1.msra.mxu0 0.0
        %6318 = vmatprep.subr.mxu0 0.0
        %6319 = vmatpush1.msra.mxu0 0.0
        %6320 = vmatprep.subr.mxu0 0.0
        %6321 = vmatpush1.msra.mxu0 0.0
        %6322 = vmatprep.subr.mxu0 0.0
        %6323 = vmatpush1.msra.mxu0 %v4498
        %6324 = vmatprep.subr.mxu0 0.0
        %6325 = vmatpush1.msra.mxu0 %v4497
        %6326 = vmatprep.subr.mxu0 0.0
        %6327 = vmatpush1.msra.mxu0 %v4496
        %6328 = vmatprep.subr.mxu0 0.0
        %6329 = vmatpush1.msra.mxu0 %v4495
        %6330 = vmatprep.subr.mxu0 0.0
        %6331 = vmatpush2.msra.mxu0 0.0
        %6332 = vmatprep.subr.mxu0 0.0
        %6333 = vmatpush2.msra.mxu0 0.0
        %6334 = vmatprep.subr.mxu0 0.0
        %6335 = vmatpush2.msra.mxu0 0.0
        %6336 = vmatprep.subr.mxu0 0.0
        %6337 = vmatpush2.msra.mxu0 0.0
        %6338 = vmatprep.subr.mxu0 0.0
        %6339 = vmatpush2.msra.mxu0 0.0
        %6340 = vmatprep.subr.mxu0 0.0
        %6341 = vmatpush2.msra.mxu0 0.0
        %6342 = vmatprep.subr.mxu0 0.0
        %6343 = vmatpush2.msra.mxu0 0.0
        %6344 = vmatprep.subr.mxu0 0.0
        %6345 = vmatpush2.msra.mxu0 0.0
        %6346 = vmatprep.subr.mxu0 0.0
        %6347 = vmatpush2.msra.mxu0 0.0
        %6348 = vmatprep.subr.mxu0 0.0
        %6349 = vmatpush2.msra.mxu0 0.0
        %6350 = vmatprep.subr.mxu0 0.0
        %6351 = vmatpush2.msra.mxu0 0.0
        %6352 = vmatprep.subr.mxu0 0.0
        %6353 = vmatpush2.msra.mxu0 0.0
        %6354 = vmatprep.subr.mxu0 0.0
        %6355 = vmatpush2.msra.mxu0 0.0
        %6356 = vmatprep.subr.mxu0 0.0
        %6357 = vmatpush2.msra.mxu0 0.0
        %6358 = vmatprep.subr.mxu0 0.0
        %6359 = vmatpush2.msra.mxu0 0.0
        %6360 = vmatprep.subr.mxu0 0.0
        %6361 = vmatpush2.msra.mxu0 0.0
        %6362 = vmatprep.mubr.f32.mxu0 0.0
        %6363 = vmatmul.mubr.f32.gmra.mxu0 %v6296
        %v6364 = vpop.f32.mrf.mxu0
        %v6365 = vadd.f32 %v4500, %v6364
        %v6366 = vpop.f32.mrf.mxu0
        %6367 = vdwg.mxu0
        %v6368 = vlaneseq
        %v6369 = vshrl.u32 %v6368, 7
        %v6370 = vsub.s32 0, %v6369
        %v6371 = vrot.slane %v6365, %v6370
        %v6372 = vmul.f32 %v3921, %v6371
        %v6373 = vmul.f32 %v3926, %v6371
        %v6374 = vmul.f32 %v3931, %v6371
        %v6375 = vmul.f32 %v3936, %v6371
        %v6376 = vmul.f32 %v3941, %v6371
        %v6377 = vmul.f32 %v3946, %v6371
        %v6378 = vmul.f32 %v3951, %v6371
        %v6379 = vmul.f32 %v3956, %v6371
        %v6381 = vsel %vm433, %v6372, 0
        %v6384 = vsel %vm433, %v6373, 0
        %v6387 = vsel %vm433, %v6374, 0
        %v6390 = vsel %vm433, %v6375, 0
        %v6393 = vsel %vm433, %v6376, 0
        %v6396 = vsel %vm433, %v6377, 0
        %v6399 = vsel %vm433, %v6378, 0
        %v6402 = vsel %vm433, %v6379, 0
        %6404 = vmatprep.subr.mxu0 0.0
        %6405 = vmatpush1.msra.mxu0 0.0
        %6406 = vmatprep.subr.mxu0 0.0
        %6407 = vmatpush1.msra.mxu0 0.0
        %6408 = vmatprep.subr.mxu0 0.0
        %6409 = vmatpush1.msra.mxu0 0.0
        %6410 = vmatprep.subr.mxu0 0.0
        %6411 = vmatpush1.msra.mxu0 0.0
        %6412 = vmatprep.subr.mxu0 0.0
        %6413 = vmatpush1.msra.mxu0 0.0
        %6414 = vmatprep.subr.mxu0 0.0
        %6415 = vmatpush1.msra.mxu0 0.0
        %6416 = vmatprep.subr.mxu0 0.0
        %6417 = vmatpush1.msra.mxu0 0.0
        %6418 = vmatprep.subr.mxu0 0.0
        %6419 = vmatpush1.msra.mxu0 0.0
        %6420 = vmatprep.subr.mxu0 0.0
        %6421 = vmatpush1.msra.mxu0 0.0
        %6422 = vmatprep.subr.mxu0 0.0
        %6423 = vmatpush1.msra.mxu0 0.0
        %6424 = vmatprep.subr.mxu0 0.0
        %6425 = vmatpush1.msra.mxu0 0.0
        %6426 = vmatprep.subr.mxu0 0.0
        %6427 = vmatpush1.msra.mxu0 0.0
        %6428 = vmatprep.subr.mxu0 0.0
        %6429 = vmatpush1.msra.mxu0 %v4589
        %6430 = vmatprep.subr.mxu0 0.0
        %6431 = vmatpush1.msra.mxu0 %v4588
        %6432 = vmatprep.subr.mxu0 0.0
        %6433 = vmatpush1.msra.mxu0 %v4587
        %6434 = vmatprep.subr.mxu0 0.0
        %6435 = vmatpush1.msra.mxu0 %v4586
        %6436 = vmatprep.subr.mxu0 0.0
        %6437 = vmatpush2.msra.mxu0 0.0
        %6438 = vmatprep.subr.mxu0 0.0
        %6439 = vmatpush2.msra.mxu0 0.0
        %6440 = vmatprep.subr.mxu0 0.0
        %6441 = vmatpush2.msra.mxu0 0.0
        %6442 = vmatprep.subr.mxu0 0.0
        %6443 = vmatpush2.msra.mxu0 0.0
        %6444 = vmatprep.subr.mxu0 0.0
        %6445 = vmatpush2.msra.mxu0 0.0
        %6446 = vmatprep.subr.mxu0 0.0
        %6447 = vmatpush2.msra.mxu0 0.0
        %6448 = vmatprep.subr.mxu0 0.0
        %6449 = vmatpush2.msra.mxu0 0.0
        %6450 = vmatprep.subr.mxu0 0.0
        %6451 = vmatpush2.msra.mxu0 0.0
        %6452 = vmatprep.subr.mxu0 0.0
        %6453 = vmatpush2.msra.mxu0 0.0
        %6454 = vmatprep.subr.mxu0 0.0
        %6455 = vmatpush2.msra.mxu0 0.0
        %6456 = vmatprep.subr.mxu0 0.0
        %6457 = vmatpush2.msra.mxu0 0.0
        %6458 = vmatprep.subr.mxu0 0.0
        %6459 = vmatpush2.msra.mxu0 0.0
        %6460 = vmatprep.subr.mxu0 0.0
        %6461 = vmatpush2.msra.mxu0 0.0
        %6462 = vmatprep.subr.mxu0 0.0
        %6463 = vmatpush2.msra.mxu0 0.0
        %6464 = vmatprep.subr.mxu0 0.0
        %6465 = vmatpush2.msra.mxu0 0.0
        %6466 = vmatprep.subr.mxu0 0.0
        %6467 = vmatpush2.msra.mxu0 0.0
        %6468 = vmatprep.mubr.f32.mxu0 0.0
        %6469 = vmatmul.mubr.f32.gmra.mxu0 %v6381
        %v6470 = vpop.f32.mrf.mxu0
        %v6471 = vadd.f32 %v4054, %v6470
        %v6472 = vpop.f32.mrf.mxu0
        %6473 = vmatprep.mubr.f32.mxu0 0.0
        %6474 = vmatmul.mubr.f32.gmra.mxu0 %v6384
        %v6475 = vpop.f32.mrf.mxu0
        %v6476 = vadd.f32 %v4059, %v6475
        %v6477 = vpop.f32.mrf.mxu0
        %6478 = vmatprep.mubr.f32.mxu0 0.0
        %6479 = vmatmul.mubr.f32.gmra.mxu0 %v6387
        %v6480 = vpop.f32.mrf.mxu0
        %v6481 = vadd.f32 %v4064, %v6480
        %v6482 = vpop.f32.mrf.mxu0
        %6483 = vmatprep.mubr.f32.mxu0 0.0
        %6484 = vmatmul.mubr.f32.gmra.mxu0 %v6390
        %v6485 = vpop.f32.mrf.mxu0
        %v6486 = vadd.f32 %v4069, %v6485
        %v6487 = vpop.f32.mrf.mxu0
        %6488 = vmatprep.mubr.f32.mxu0 0.0
        %6489 = vmatmul.mubr.f32.gmra.mxu0 %v6393
        %v6490 = vpop.f32.mrf.mxu0
        %v6491 = vadd.f32 %v4074, %v6490
        %v6492 = vpop.f32.mrf.mxu0
        %6493 = vmatprep.mubr.f32.mxu0 0.0
        %6494 = vmatmul.mubr.f32.gmra.mxu0 %v6396
        %v6495 = vpop.f32.mrf.mxu0
        %v6496 = vadd.f32 %v4079, %v6495
        %v6497 = vpop.f32.mrf.mxu0
        %6498 = vmatprep.mubr.f32.mxu0 0.0
        %6499 = vmatmul.mubr.f32.gmra.mxu0 %v6399
        %v6500 = vpop.f32.mrf.mxu0
        %v6501 = vadd.f32 %v4084, %v6500
        %v6502 = vpop.f32.mrf.mxu0
        %6503 = vmatprep.mubr.f32.mxu0 0.0
        %6504 = vmatmul.mubr.f32.gmra.mxu0 %v6402
        %v6505 = vpop.f32.mrf.mxu0
        %v6506 = vadd.f32 %v4089, %v6505
        %v6507 = vpop.f32.mrf.mxu0
        %6508 = vdwg.mxu0
        %v6509 = vadd.f32 %v6471, %v4722
        %v6510 = vadd.f32 %v6476, %v4722
        %v6511 = vadd.f32 %v6481, %v4722
        %v6512 = vadd.f32 %v6486, %v4722
        %v6513 = vadd.f32 %v6491, %v4722
        %v6514 = vadd.f32 %v6496, %v4722
        %v6515 = vadd.f32 %v6501, %v4722
        %v6516 = vadd.f32 %v6506, %v4722
        %vm6517 = vcmp.gt.f32.partialorder %v6509, 0.0
        %vm6518 = vcmp.gt.f32.partialorder %v6510, 0.0
        %vm6519 = vcmp.gt.f32.partialorder %v6511, 0.0
        %vm6520 = vcmp.gt.f32.partialorder %v6512, 0.0
        %vm6521 = vcmp.gt.f32.partialorder %v6513, 0.0
        %vm6522 = vcmp.gt.f32.partialorder %v6514, 0.0
        %vm6523 = vcmp.gt.f32.partialorder %v6515, 0.0
        %vm6524 = vcmp.gt.f32.partialorder %v6516, 0.0
        %v6525 = vmin.f32 %v6509, 0.0
        %v6526 = vmin.f32 %v6510, 0.0
        %v6527 = vmin.f32 %v6511, 0.0
        %v6528 = vmin.f32 %v6512, 0.0
        %v6529 = vmin.f32 %v6513, 0.0
        %v6530 = vmin.f32 %v6514, 0.0
        %v6531 = vmin.f32 %v6515, 0.0
        %v6532 = vmin.f32 %v6516, 0.0
        %v6533 = vmul.f32 %v6525, 1.442695
        %v6534 = vpow.pop %v6533
        %v6535 = vmul.f32 %v6526, 1.442695
        %v6536 = vpow.pop %v6535
        %v6537 = vmul.f32 %v6527, 1.442695
        %v6538 = vpow.pop %v6537
        %v6539 = vmul.f32 %v6528, 1.442695
        %v6540 = vpow.pop %v6539
        %v6541 = vmul.f32 %v6529, 1.442695
        %v6542 = vpow.pop %v6541
        %v6543 = vmul.f32 %v6530, 1.442695
        %v6544 = vpow.pop %v6543
        %v6545 = vmul.f32 %v6531, 1.442695
        %v6546 = vpow.pop %v6545
        %v6547 = vmul.f32 %v6532, 1.442695
        %v6548 = vpow.pop %v6547
        %v6549 = vsub.f32 %v6534, 1.0
        %v6550 = vsub.f32 %v6536, 1.0
        %v6551 = vsub.f32 %v6538, 1.0
        %v6552 = vsub.f32 %v6540, 1.0
        %v6553 = vsub.f32 %v6542, 1.0
        %v6554 = vsub.f32 %v6544, 1.0
        %v6555 = vsub.f32 %v6546, 1.0
        %v6556 = vsub.f32 %v6548, 1.0
        %v6557 = vsel %vm6517, %v6509, %v6549
        %v6558 = vsel %vm6518, %v6510, %v6550
        %v6559 = vsel %vm6519, %v6511, %v6551
        %v6560 = vsel %vm6520, %v6512, %v6552
        %v6561 = vsel %vm6521, %v6513, %v6553
        %v6562 = vsel %vm6522, %v6514, %v6554
        %v6563 = vsel %vm6523, %v6515, %v6555
        %v6564 = vsel %vm6524, %v6516, %v6556
        %v6565 = vlaneseq
        %v6566 = vshrl.u32 %v6565, 7
        %v6567 = vsub.s32 0, %v6566
        %v6568 = vrot.slane %v6292, %v6567
        %v6569 = vmul.f32 %v6557, %v6568
        %v6570 = vmul.f32 %v6558, %v6568
        %v6571 = vmul.f32 %v6559, %v6568
        %v6572 = vmul.f32 %v6560, %v6568
        %v6573 = vmul.f32 %v6561, %v6568
        %v6574 = vmul.f32 %v6562, %v6568
        %v6575 = vmul.f32 %v6563, %v6568
        %v6576 = vmul.f32 %v6564, %v6568
        %vm6577 = vcmp.gt.f32.partialorder %v6569, 0.0
        %vm6578 = vcmp.gt.f32.partialorder %v6570, 0.0
        %vm6579 = vcmp.gt.f32.partialorder %v6571, 0.0
        %vm6580 = vcmp.gt.f32.partialorder %v6572, 0.0
        %vm6581 = vcmp.gt.f32.partialorder %v6573, 0.0
        %vm6582 = vcmp.gt.f32.partialorder %v6574, 0.0
        %vm6583 = vcmp.gt.f32.partialorder %v6575, 0.0
        %vm6584 = vcmp.gt.f32.partialorder %v6576, 0.0
        %v6585 = vmin.f32 %v6569, 0.0
        %v6586 = vmin.f32 %v6570, 0.0
        %v6587 = vmin.f32 %v6571, 0.0
        %v6588 = vmin.f32 %v6572, 0.0
        %v6589 = vmin.f32 %v6573, 0.0
        %v6590 = vmin.f32 %v6574, 0.0
        %v6591 = vmin.f32 %v6575, 0.0
        %v6592 = vmin.f32 %v6576, 0.0
        %v6593 = vmul.f32 %v6585, 1.442695
        %v6594 = vpow.pop %v6593
        %v6595 = vmul.f32 %v6586, 1.442695
        %v6596 = vpow.pop %v6595
        %v6597 = vmul.f32 %v6587, 1.442695
        %v6598 = vpow.pop %v6597
        %v6599 = vmul.f32 %v6588, 1.442695
        %v6600 = vpow.pop %v6599
        %v6601 = vmul.f32 %v6589, 1.442695
        %v6602 = vpow.pop %v6601
        %v6603 = vmul.f32 %v6590, 1.442695
        %v6604 = vpow.pop %v6603
        %v6605 = vmul.f32 %v6591, 1.442695
        %v6606 = vpow.pop %v6605
        %v6607 = vmul.f32 %v6592, 1.442695
        %v6608 = vpow.pop %v6607
        %v6609 = vsub.f32 %v6594, 1.0
        %v6610 = vsub.f32 %v6596, 1.0
        %v6611 = vsub.f32 %v6598, 1.0
        %v6612 = vsub.f32 %v6600, 1.0
        %v6613 = vsub.f32 %v6602, 1.0
        %v6614 = vsub.f32 %v6604, 1.0
        %v6615 = vsub.f32 %v6606, 1.0
        %v6616 = vsub.f32 %v6608, 1.0
        %v6617 = vsel %vm6577, %v6569, %v6609
        %v6618 = vsel %vm6578, %v6570, %v6610
        %v6619 = vsel %vm6579, %v6571, %v6611
        %v6620 = vsel %vm6580, %v6572, %v6612
        %v6621 = vsel %vm6581, %v6573, %v6613
        %v6622 = vsel %vm6582, %v6574, %v6614
        %v6623 = vsel %vm6583, %v6575, %v6615
        %v6624 = vsel %vm6584, %v6576, %v6616
        %v6626 = vsel %vm433, %v6617, 0
        %v6629 = vsel %vm433, %v6618, 0
        %v6632 = vsel %vm433, %v6619, 0
        %v6635 = vsel %vm433, %v6620, 0
        %v6638 = vsel %vm433, %v6621, 0
        %v6641 = vsel %vm433, %v6622, 0
        %v6644 = vsel %vm433, %v6623, 0
        %v6647 = vsel %vm433, %v6624, 0
        %6649 = vmatprep.subr.mxu0 0.0
        %6650 = vmatpush1.xpose.msra.mxu0 0.0
        %6651 = vmatprep.subr.mxu0 0.0
        %6652 = vmatpush1.xpose.msra.mxu0 0.0
        %6653 = vmatprep.subr.mxu0 0.0
        %6654 = vmatpush1.xpose.msra.mxu0 0.0
        %6655 = vmatprep.subr.mxu0 0.0
        %6656 = vmatpush1.xpose.msra.mxu0 0.0
        %6657 = vmatprep.subr.mxu0 0.0
        %6658 = vmatpush1.xpose.msra.mxu0 0.0
        %6659 = vmatprep.subr.mxu0 0.0
        %6660 = vmatpush1.xpose.msra.mxu0 0.0
        %6661 = vmatprep.subr.mxu0 0.0
        %6662 = vmatpush1.xpose.msra.mxu0 0.0
        %6663 = vmatprep.subr.mxu0 0.0
        %6664 = vmatpush1.xpose.msra.mxu0 0.0
        %6665 = vmatprep.subr.mxu0 0.0
        %6666 = vmatpush1.xpose.msra.mxu0 %v6647
        %6667 = vmatprep.subr.mxu0 0.0
        %6668 = vmatpush1.xpose.msra.mxu0 %v6644
        %6669 = vmatprep.subr.mxu0 0.0
        %6670 = vmatpush1.xpose.msra.mxu0 %v6641
        %6671 = vmatprep.subr.mxu0 0.0
        %6672 = vmatpush1.xpose.msra.mxu0 %v6638
        %6673 = vmatprep.subr.mxu0 0.0
        %6674 = vmatpush1.xpose.msra.mxu0 %v6635
        %6675 = vmatprep.subr.mxu0 0.0
        %6676 = vmatpush1.xpose.msra.mxu0 %v6632
        %6677 = vmatprep.subr.mxu0 0.0
        %6678 = vmatpush1.xpose.msra.mxu0 %v6629
        %6679 = vmatprep.subr.mxu0 0.0
        %6680 = vmatpush1.xpose.msra.mxu0 %v6626
        %6681 = vmatprep.subr.mxu0 0.0
        %6682 = vmatpush2.xpose.msra.mxu0 0.0
        %6683 = vmatprep.subr.mxu0 0.0
        %6684 = vmatpush2.xpose.msra.mxu0 0.0
        %6685 = vmatprep.subr.mxu0 0.0
        %6686 = vmatpush2.xpose.msra.mxu0 0.0
        %6687 = vmatprep.subr.mxu0 0.0
        %6688 = vmatpush2.xpose.msra.mxu0 0.0
        %6689 = vmatprep.subr.mxu0 0.0
        %6690 = vmatpush2.xpose.msra.mxu0 0.0
        %6691 = vmatprep.subr.mxu0 0.0
        %6692 = vmatpush2.xpose.msra.mxu0 0.0
        %6693 = vmatprep.subr.mxu0 0.0
        %6694 = vmatpush2.xpose.msra.mxu0 0.0
        %6695 = vmatprep.subr.mxu0 0.0
        %6696 = vmatpush2.xpose.msra.mxu0 0.0
        %6697 = vmatprep.subr.mxu0 0.0
        %6698 = vmatpush2.xpose.msra.mxu0 0.0
        %6699 = vmatprep.subr.mxu0 0.0
        %6700 = vmatpush2.xpose.msra.mxu0 0.0
        %6701 = vmatprep.subr.mxu0 0.0
        %6702 = vmatpush2.xpose.msra.mxu0 0.0
        %6703 = vmatprep.subr.mxu0 0.0
        %6704 = vmatpush2.xpose.msra.mxu0 0.0
        %6705 = vmatprep.subr.mxu0 0.0
        %6706 = vmatpush2.xpose.msra.mxu0 0.0
        %6707 = vmatprep.subr.mxu0 0.0
        %6708 = vmatpush2.xpose.msra.mxu0 0.0
        %6709 = vmatprep.subr.mxu0 0.0
        %6710 = vmatpush2.xpose.msra.mxu0 0.0
        %6711 = vmatprep.subr.mxu0 0.0
        %6712 = vmatpush2.xpose.msra.mxu0 0.0
        %6713 = vmatprep.mubr.f32.mxu0 0.0
        %6714 = vmatmul.mubr.f32.gmra.mxu0 %v4839
        %v6715 = vpop.f32.mrf.mxu0
        %v6716 = vadd.f32 0.0, %v6715
        %v6717 = vpop.f32.mrf.mxu0
        %6718 = vdwg.mxu0
        %v6719 = vsel %vm4935, %v6716, -inf
        %6720 = vmax.xlane.f32.xlu0 %v6719
        %v6721 = vpop.xlane.xlu0 %6720
        %v6722 = vsub.f32 %v6716, %v6721
        %v6723 = vmul.f32 %v6722, 1.442695
        %v6724 = vpow.pop %v6723
        %v6725 = vsel %vm4935, %v6724, 0.0
        %6726 = vadd.xlane.f32.xlu0 %v6725
        %v6727 = vpop.xlane.xlu0 %6726
        %v6728 = vrcp.pop %v6727
        %v6729 = vmul.f32 %v6724, %v6728
        %v6731 = vsel %vm4947, %v6729, 0
        %6733 = vmatprep.subr.mxu0 0.0
        %6734 = vmatpush1.msra.mxu0 0.0
        %6735 = vmatprep.subr.mxu0 0.0
        %6736 = vmatpush1.msra.mxu0 0.0
        %6737 = vmatprep.subr.mxu0 0.0
        %6738 = vmatpush1.msra.mxu0 0.0
        %6739 = vmatprep.subr.mxu0 0.0
        %6740 = vmatpush1.msra.mxu0 0.0
        %6741 = vmatprep.subr.mxu0 0.0
        %6742 = vmatpush1.msra.mxu0 0.0
        %6743 = vmatprep.subr.mxu0 0.0
        %6744 = vmatpush1.msra.mxu0 0.0
        %6745 = vmatprep.subr.mxu0 0.0
        %6746 = vmatpush1.msra.mxu0 0.0
        %6747 = vmatprep.subr.mxu0 0.0
        %6748 = vmatpush1.msra.mxu0 0.0
        %6749 = vmatprep.subr.mxu0 0.0
        %6750 = vmatpush1.msra.mxu0 %v2651
        %6751 = vmatprep.subr.mxu0 0.0
        %6752 = vmatpush1.msra.mxu0 %v2650
        %6753 = vmatprep.subr.mxu0 0.0
        %6754 = vmatpush1.msra.mxu0 %v2649
        %6755 = vmatprep.subr.mxu0 0.0
        %6756 = vmatpush1.msra.mxu0 %v2648
        %6757 = vmatprep.subr.mxu0 0.0
        %6758 = vmatpush1.msra.mxu0 %v2647
        %6759 = vmatprep.subr.mxu0 0.0
        %6760 = vmatpush1.msra.mxu0 %v2646
        %6761 = vmatprep.subr.mxu0 0.0
        %6762 = vmatpush1.msra.mxu0 %v2645
        %6763 = vmatprep.subr.mxu0 0.0
        %6764 = vmatpush1.msra.mxu0 %v2644
        %6765 = vmatprep.subr.mxu0 0.0
        %6766 = vmatpush2.msra.mxu0 0.0
        %6767 = vmatprep.subr.mxu0 0.0
        %6768 = vmatpush2.msra.mxu0 0.0
        %6769 = vmatprep.subr.mxu0 0.0
        %6770 = vmatpush2.msra.mxu0 0.0
        %6771 = vmatprep.subr.mxu0 0.0
        %6772 = vmatpush2.msra.mxu0 0.0
        %6773 = vmatprep.subr.mxu0 0.0
        %6774 = vmatpush2.msra.mxu0 0.0
        %6775 = vmatprep.subr.mxu0 0.0
        %6776 = vmatpush2.msra.mxu0 0.0
        %6777 = vmatprep.subr.mxu0 0.0
        %6778 = vmatpush2.msra.mxu0 0.0
        %6779 = vmatprep.subr.mxu0 0.0
        %6780 = vmatpush2.msra.mxu0 0.0
        %6781 = vmatprep.subr.mxu0 0.0
        %6782 = vmatpush2.msra.mxu0 0.0
        %6783 = vmatprep.subr.mxu0 0.0
        %6784 = vmatpush2.msra.mxu0 0.0
        %6785 = vmatprep.subr.mxu0 0.0
        %6786 = vmatpush2.msra.mxu0 0.0
        %6787 = vmatprep.subr.mxu0 0.0
        %6788 = vmatpush2.msra.mxu0 0.0
        %6789 = vmatprep.subr.mxu0 0.0
        %6790 = vmatpush2.msra.mxu0 0.0
        %6791 = vmatprep.subr.mxu0 0.0
        %6792 = vmatpush2.msra.mxu0 0.0
        %6793 = vmatprep.subr.mxu0 0.0
        %6794 = vmatpush2.msra.mxu0 0.0
        %6795 = vmatprep.subr.mxu0 0.0
        %6796 = vmatpush2.msra.mxu0 0.0
        %6797 = vmatprep.mubr.f32.mxu0 0.0
        %6798 = vmatmul.mubr.f32.gmra.mxu0 %v6731
        %v6799 = vpop.f32.mrf.mxu0
        %v6800 = vadd.f32 0.0, %v6799
        %v6801 = vpop.f32.mrf.mxu0
        %6802 = vdwg.mxu0
        %v6803 = vld [vmem:[%s5 + $0x1a0] sm:$0xff]
        %v6804 = vld [vmem:[%s5 + $0x1a8] sm:$0xff]
        %v6805 = vld [vmem:[%s5 + $0x1b0] sm:$0xff]
        %v6806 = vld [vmem:[%s5 + $0x1b8] sm:$0xff]
        %v6807 = vrot.slane %v303, 7
        %6809 = vmatprep.subr.mxu0 0.0
        %6810 = vmatpush1.msra.mxu0 0.0
        %6811 = vmatprep.subr.mxu0 0.0
        %6812 = vmatpush1.msra.mxu0 0.0
        %6813 = vmatprep.subr.mxu0 0.0
        %6814 = vmatpush1.msra.mxu0 0.0
        %6815 = vmatprep.subr.mxu0 0.0
        %6816 = vmatpush1.msra.mxu0 0.0
        %6817 = vmatprep.subr.mxu0 0.0
        %6818 = vmatpush1.msra.mxu0 0.0
        %6819 = vmatprep.subr.mxu0 0.0
        %6820 = vmatpush1.msra.mxu0 0.0
        %6821 = vmatprep.subr.mxu0 0.0
        %6822 = vmatpush1.msra.mxu0 0.0
        %6823 = vmatprep.subr.mxu0 0.0
        %6824 = vmatpush1.msra.mxu0 0.0
        %6825 = vmatprep.subr.mxu0 0.0
        %6826 = vmatpush1.msra.mxu0 0.0
        %6827 = vmatprep.subr.mxu0 0.0
        %6828 = vmatpush1.msra.mxu0 0.0
        %6829 = vmatprep.subr.mxu0 0.0
        %6830 = vmatpush1.msra.mxu0 0.0
        %6831 = vmatprep.subr.mxu0 0.0
        %6832 = vmatpush1.msra.mxu0 0.0
        %6833 = vmatprep.subr.mxu0 0.0
        %6834 = vmatpush1.msra.mxu0 %v6806
        %6835 = vmatprep.subr.mxu0 0.0
        %6836 = vmatpush1.msra.mxu0 %v6805
        %6837 = vmatprep.subr.mxu0 0.0
        %6838 = vmatpush1.msra.mxu0 %v6804
        %6839 = vmatprep.subr.mxu0 0.0
        %6840 = vmatpush1.msra.mxu0 %v6803
        %6841 = vmatprep.subr.mxu0 0.0
        %6842 = vmatpush2.msra.mxu0 0.0
        %6843 = vmatprep.subr.mxu0 0.0
        %6844 = vmatpush2.msra.mxu0 0.0
        %6845 = vmatprep.subr.mxu0 0.0
        %6846 = vmatpush2.msra.mxu0 0.0
        %6847 = vmatprep.subr.mxu0 0.0
        %6848 = vmatpush2.msra.mxu0 0.0
        %6849 = vmatprep.subr.mxu0 0.0
        %6850 = vmatpush2.msra.mxu0 0.0
        %6851 = vmatprep.subr.mxu0 0.0
        %6852 = vmatpush2.msra.mxu0 0.0
        %6853 = vmatprep.subr.mxu0 0.0
        %6854 = vmatpush2.msra.mxu0 0.0
        %6855 = vmatprep.subr.mxu0 0.0
        %6856 = vmatpush2.msra.mxu0 0.0
        %6857 = vmatprep.subr.mxu0 0.0
        %6858 = vmatpush2.msra.mxu0 0.0
        %6859 = vmatprep.subr.mxu0 0.0
        %6860 = vmatpush2.msra.mxu0 0.0
        %6861 = vmatprep.subr.mxu0 0.0
        %6862 = vmatpush2.msra.mxu0 0.0
        %6863 = vmatprep.subr.mxu0 0.0
        %6864 = vmatpush2.msra.mxu0 0.0
        %6865 = vmatprep.subr.mxu0 0.0
        %6866 = vmatpush2.msra.mxu0 0.0
        %6867 = vmatprep.subr.mxu0 0.0
        %6868 = vmatpush2.msra.mxu0 0.0
        %6869 = vmatprep.subr.mxu0 0.0
        %6870 = vmatpush2.msra.mxu0 0.0
        %6871 = vmatprep.subr.mxu0 0.0
        %6872 = vmatpush2.msra.mxu0 0.0
        %6873 = vmatprep.mubr.f32.mxu0 0.0
        %6874 = vmatmul.mubr.f32.gmra.mxu0 %v4102
        %v6875 = vpop.f32.mrf.mxu0
        %v6876 = vadd.f32 %v6807, %v6875
        %v6877 = vpop.f32.mrf.mxu0
        %6878 = vdwg.mxu0
        %v6880 = vsel %vm433, %v6876, 0
        %6882 = vmatprep.subr.mxu0 0.0
        %6883 = vmatpush1.msra.mxu0 0.0
        %6884 = vmatprep.subr.mxu0 0.0
        %6885 = vmatpush1.msra.mxu0 0.0
        %6886 = vmatprep.subr.mxu0 0.0
        %6887 = vmatpush1.msra.mxu0 0.0
        %6888 = vmatprep.subr.mxu0 0.0
        %6889 = vmatpush1.msra.mxu0 0.0
        %6890 = vmatprep.subr.mxu0 0.0
        %6891 = vmatpush1.msra.mxu0 0.0
        %6892 = vmatprep.subr.mxu0 0.0
        %6893 = vmatpush1.msra.mxu0 0.0
        %6894 = vmatprep.subr.mxu0 0.0
        %6895 = vmatpush1.msra.mxu0 0.0
        %6896 = vmatprep.subr.mxu0 0.0
        %6897 = vmatpush1.msra.mxu0 0.0
        %6898 = vmatprep.subr.mxu0 0.0
        %6899 = vmatpush1.msra.mxu0 0.0
        %6900 = vmatprep.subr.mxu0 0.0
        %6901 = vmatpush1.msra.mxu0 0.0
        %6902 = vmatprep.subr.mxu0 0.0
        %6903 = vmatpush1.msra.mxu0 0.0
        %6904 = vmatprep.subr.mxu0 0.0
        %6905 = vmatpush1.msra.mxu0 0.0
        %6906 = vmatprep.subr.mxu0 0.0
        %6907 = vmatpush1.msra.mxu0 %v4181
        %6908 = vmatprep.subr.mxu0 0.0
        %6909 = vmatpush1.msra.mxu0 %v4180
        %6910 = vmatprep.subr.mxu0 0.0
        %6911 = vmatpush1.msra.mxu0 %v4179
        %6912 = vmatprep.subr.mxu0 0.0
        %6913 = vmatpush1.msra.mxu0 %v4178
        %6914 = vmatprep.subr.mxu0 0.0
        %6915 = vmatpush2.msra.mxu0 0.0
        %6916 = vmatprep.subr.mxu0 0.0
        %6917 = vmatpush2.msra.mxu0 0.0
        %6918 = vmatprep.subr.mxu0 0.0
        %6919 = vmatpush2.msra.mxu0 0.0
        %6920 = vmatprep.subr.mxu0 0.0
        %6921 = vmatpush2.msra.mxu0 0.0
        %6922 = vmatprep.subr.mxu0 0.0
        %6923 = vmatpush2.msra.mxu0 0.0
        %6924 = vmatprep.subr.mxu0 0.0
        %6925 = vmatpush2.msra.mxu0 0.0
        %6926 = vmatprep.subr.mxu0 0.0
        %6927 = vmatpush2.msra.mxu0 0.0
        %6928 = vmatprep.subr.mxu0 0.0
        %6929 = vmatpush2.msra.mxu0 0.0
        %6930 = vmatprep.subr.mxu0 0.0
        %6931 = vmatpush2.msra.mxu0 0.0
        %6932 = vmatprep.subr.mxu0 0.0
        %6933 = vmatpush2.msra.mxu0 0.0
        %6934 = vmatprep.subr.mxu0 0.0
        %6935 = vmatpush2.msra.mxu0 0.0
        %6936 = vmatprep.subr.mxu0 0.0
        %6937 = vmatpush2.msra.mxu0 0.0
        %6938 = vmatprep.subr.mxu0 0.0
        %6939 = vmatpush2.msra.mxu0 0.0
        %6940 = vmatprep.subr.mxu0 0.0
        %6941 = vmatpush2.msra.mxu0 0.0
        %6942 = vmatprep.subr.mxu0 0.0
        %6943 = vmatpush2.msra.mxu0 0.0
        %6944 = vmatprep.subr.mxu0 0.0
        %6945 = vmatpush2.msra.mxu0 0.0
        %6946 = vmatprep.mubr.f32.mxu0 0.0
        %6947 = vmatmul.mubr.f32.gmra.mxu0 %v6880
        %v6948 = vpop.f32.mrf.mxu0
        %v6949 = vadd.f32 0.0, %v6948
        %v6950 = vpop.f32.mrf.mxu0
        %6951 = vdwg.mxu0
        %v6953 = vsel %vm433, %v6292, 0
        %6955 = vmatprep.subr.mxu0 0.0
        %6956 = vmatpush1.msra.mxu0 0.0
        %6957 = vmatprep.subr.mxu0 0.0
        %6958 = vmatpush1.msra.mxu0 0.0
        %6959 = vmatprep.subr.mxu0 0.0
        %6960 = vmatpush1.msra.mxu0 0.0
        %6961 = vmatprep.subr.mxu0 0.0
        %6962 = vmatpush1.msra.mxu0 0.0
        %6963 = vmatprep.subr.mxu0 0.0
        %6964 = vmatpush1.msra.mxu0 0.0
        %6965 = vmatprep.subr.mxu0 0.0
        %6966 = vmatpush1.msra.mxu0 0.0
        %6967 = vmatprep.subr.mxu0 0.0
        %6968 = vmatpush1.msra.mxu0 0.0
        %6969 = vmatprep.subr.mxu0 0.0
        %6970 = vmatpush1.msra.mxu0 0.0
        %6971 = vmatprep.subr.mxu0 0.0
        %6972 = vmatpush1.msra.mxu0 0.0
        %6973 = vmatprep.subr.mxu0 0.0
        %6974 = vmatpush1.msra.mxu0 0.0
        %6975 = vmatprep.subr.mxu0 0.0
        %6976 = vmatpush1.msra.mxu0 0.0
        %6977 = vmatprep.subr.mxu0 0.0
        %6978 = vmatpush1.msra.mxu0 0.0
        %6979 = vmatprep.subr.mxu0 0.0
        %6980 = vmatpush1.msra.mxu0 %v4177
        %6981 = vmatprep.subr.mxu0 0.0
        %6982 = vmatpush1.msra.mxu0 %v4176
        %6983 = vmatprep.subr.mxu0 0.0
        %6984 = vmatpush1.msra.mxu0 %v4175
        %6985 = vmatprep.subr.mxu0 0.0
        %6986 = vmatpush1.msra.mxu0 %v4174
        %6987 = vmatprep.subr.mxu0 0.0
        %6988 = vmatpush2.msra.mxu0 0.0
        %6989 = vmatprep.subr.mxu0 0.0
        %6990 = vmatpush2.msra.mxu0 0.0
        %6991 = vmatprep.subr.mxu0 0.0
        %6992 = vmatpush2.msra.mxu0 0.0
        %6993 = vmatprep.subr.mxu0 0.0
        %6994 = vmatpush2.msra.mxu0 0.0
        %6995 = vmatprep.subr.mxu0 0.0
        %6996 = vmatpush2.msra.mxu0 0.0
        %6997 = vmatprep.subr.mxu0 0.0
        %6998 = vmatpush2.msra.mxu0 0.0
        %6999 = vmatprep.subr.mxu0 0.0
        %7000 = vmatpush2.msra.mxu0 0.0
        %7001 = vmatprep.subr.mxu0 0.0
        %7002 = vmatpush2.msra.mxu0 0.0
        %7003 = vmatprep.subr.mxu0 0.0
        %7004 = vmatpush2.msra.mxu0 0.0
        %7005 = vmatprep.subr.mxu0 0.0
        %7006 = vmatpush2.msra.mxu0 0.0
        %7007 = vmatprep.subr.mxu0 0.0
        %7008 = vmatpush2.msra.mxu0 0.0
        %7009 = vmatprep.subr.mxu0 0.0
        %7010 = vmatpush2.msra.mxu0 0.0
        %7011 = vmatprep.subr.mxu0 0.0
        %7012 = vmatpush2.msra.mxu0 0.0
        %7013 = vmatprep.subr.mxu0 0.0
        %7014 = vmatpush2.msra.mxu0 0.0
        %7015 = vmatprep.subr.mxu0 0.0
        %7016 = vmatpush2.msra.mxu0 0.0
        %7017 = vmatprep.subr.mxu0 0.0
        %7018 = vmatpush2.msra.mxu0 0.0
        %7019 = vmatprep.mubr.f32.mxu0 0.0
        %7020 = vmatmul.mubr.f32.gmra.mxu0 %v6953
        %v7021 = vpop.f32.mrf.mxu0
        %v7022 = vadd.f32 %v6949, %v7021
        %v7023 = vpop.f32.mrf.mxu0
        %7024 = vdwg.mxu0
        %v7025 = vadd.f32 %v7022, %v4325
        %v7026 = vtanh.pop %v7025
        %v7027 = vmul.f32 %v7026, %v4329
        %v7029 = vsel %vm433, %v7027, 0
        %7031 = vmatprep.subr.mxu0 0.0
        %7032 = vmatpush1.xpose.msra.mxu0 0.0
        %7033 = vmatprep.subr.mxu0 0.0
        %7034 = vmatpush1.xpose.msra.mxu0 0.0
        %7035 = vmatprep.subr.mxu0 0.0
        %7036 = vmatpush1.xpose.msra.mxu0 0.0
        %7037 = vmatprep.subr.mxu0 0.0
        %7038 = vmatpush1.xpose.msra.mxu0 0.0
        %7039 = vmatprep.subr.mxu0 0.0
        %7040 = vmatpush1.xpose.msra.mxu0 0.0
        %7041 = vmatprep.subr.mxu0 0.0
        %7042 = vmatpush1.xpose.msra.mxu0 0.0
        %7043 = vmatprep.subr.mxu0 0.0
        %7044 = vmatpush1.xpose.msra.mxu0 0.0
        %7045 = vmatprep.subr.mxu0 0.0
        %7046 = vmatpush1.xpose.msra.mxu0 0.0
        %7047 = vmatprep.subr.mxu0 0.0
        %7048 = vmatpush1.xpose.msra.mxu0 0.0
        %7049 = vmatprep.subr.mxu0 0.0
        %7050 = vmatpush1.xpose.msra.mxu0 0.0
        %7051 = vmatprep.subr.mxu0 0.0
        %7052 = vmatpush1.xpose.msra.mxu0 0.0
        %7053 = vmatprep.subr.mxu0 0.0
        %7054 = vmatpush1.xpose.msra.mxu0 0.0
        %7055 = vmatprep.subr.mxu0 0.0
        %7056 = vmatpush1.xpose.msra.mxu0 0.0
        %7057 = vmatprep.subr.mxu0 0.0
        %7058 = vmatpush1.xpose.msra.mxu0 0.0
        %7059 = vmatprep.subr.mxu0 0.0
        %7060 = vmatpush1.xpose.msra.mxu0 0.0
        %7061 = vmatprep.subr.mxu0 0.0
        %7062 = vmatpush1.xpose.msra.mxu0 %v4336
        %7063 = vmatprep.subr.mxu0 0.0
        %7064 = vmatpush2.xpose.msra.mxu0 0.0
        %7065 = vmatprep.subr.mxu0 0.0
        %7066 = vmatpush2.xpose.msra.mxu0 0.0
        %7067 = vmatprep.subr.mxu0 0.0
        %7068 = vmatpush2.xpose.msra.mxu0 0.0
        %7069 = vmatprep.subr.mxu0 0.0
        %7070 = vmatpush2.xpose.msra.mxu0 0.0
        %7071 = vmatprep.subr.mxu0 0.0
        %7072 = vmatpush2.xpose.msra.mxu0 0.0
        %7073 = vmatprep.subr.mxu0 0.0
        %7074 = vmatpush2.xpose.msra.mxu0 0.0
        %7075 = vmatprep.subr.mxu0 0.0
        %7076 = vmatpush2.xpose.msra.mxu0 0.0
        %7077 = vmatprep.subr.mxu0 0.0
        %7078 = vmatpush2.xpose.msra.mxu0 0.0
        %7079 = vmatprep.subr.mxu0 0.0
        %7080 = vmatpush2.xpose.msra.mxu0 0.0
        %7081 = vmatprep.subr.mxu0 0.0
        %7082 = vmatpush2.xpose.msra.mxu0 0.0
        %7083 = vmatprep.subr.mxu0 0.0
        %7084 = vmatpush2.xpose.msra.mxu0 0.0
        %7085 = vmatprep.subr.mxu0 0.0
        %7086 = vmatpush2.xpose.msra.mxu0 0.0
        %7087 = vmatprep.subr.mxu0 0.0
        %7088 = vmatpush2.xpose.msra.mxu0 0.0
        %7089 = vmatprep.subr.mxu0 0.0
        %7090 = vmatpush2.xpose.msra.mxu0 0.0
        %7091 = vmatprep.subr.mxu0 0.0
        %7092 = vmatpush2.xpose.msra.mxu0 0.0
        %7093 = vmatprep.subr.mxu0 0.0
        %7094 = vmatpush2.xpose.msra.mxu0 0.0
        %7095 = vmatprep.mubr.f32.mxu0 0.0
        %7096 = vmatmul.mubr.f32.gmra.mxu0 %v7029
        %v7097 = vpop.f32.mrf.mxu0
        %v7098 = vadd.f32 0.0, %v7097
        %v7099 = vpop.f32.mrf.mxu0
        %7100 = vdwg.mxu0
        %v7101 = vsel %vm4093, %v7098, -1e+30
        %v7102 = vsel %vm4409, %v7101, -inf
        %7103 = vmax.xlane.f32.xlu0 %v7102
        %v7104 = vpop.xlane.xlu0 %7103
        %v7105 = vsub.f32 %v7101, %v7104
        %v7106 = vmul.f32 %v7105, 1.442695
        %v7107 = vpow.pop %v7106
        %v7108 = vsel %vm4409, %v7107, 0.0
        %7109 = vadd.xlane.f32.xlu0 %v7108
        %v7110 = vpop.xlane.xlu0 %7109
        %v7111 = vrcp.pop %v7110
        %v7112 = vmul.f32 %v7107, %v7111
        %v7114 = vsel %vm4421, %v7112, 0
        %7116 = vmatprep.subr.mxu0 0.0
        %7117 = vmatpush1.msra.mxu0 0.0
        %7118 = vmatprep.subr.mxu0 0.0
        %7119 = vmatpush1.msra.mxu0 0.0
        %7120 = vmatprep.subr.mxu0 0.0
        %7121 = vmatpush1.msra.mxu0 0.0
        %7122 = vmatprep.subr.mxu0 0.0
        %7123 = vmatpush1.msra.mxu0 0.0
        %7124 = vmatprep.subr.mxu0 0.0
        %7125 = vmatpush1.msra.mxu0 0.0
        %7126 = vmatprep.subr.mxu0 0.0
        %7127 = vmatpush1.msra.mxu0 0.0
        %7128 = vmatprep.subr.mxu0 0.0
        %7129 = vmatpush1.msra.mxu0 0.0
        %7130 = vmatprep.subr.mxu0 0.0
        %7131 = vmatpush1.msra.mxu0 0.0
        %7132 = vmatprep.subr.mxu0 0.0
        %7133 = vmatpush1.msra.mxu0 0.0
        %7134 = vmatprep.subr.mxu0 0.0
        %7135 = vmatpush1.msra.mxu0 0.0
        %7136 = vmatprep.subr.mxu0 0.0
        %7137 = vmatpush1.msra.mxu0 0.0
        %7138 = vmatprep.subr.mxu0 0.0
        %7139 = vmatpush1.msra.mxu0 0.0
        %7140 = vmatprep.subr.mxu0 0.0
        %7141 = vmatpush1.msra.mxu0 0.0
        %7142 = vmatprep.subr.mxu0 0.0
        %7143 = vmatpush1.msra.mxu0 0.0
        %7144 = vmatprep.subr.mxu0 0.0
        %7145 = vmatpush1.msra.mxu0 0.0
        %7146 = vmatprep.subr.mxu0 0.0
        %7147 = vmatpush1.msra.mxu0 %v3740
        %7148 = vmatprep.subr.mxu0 0.0
        %7149 = vmatpush2.msra.mxu0 0.0
        %7150 = vmatprep.subr.mxu0 0.0
        %7151 = vmatpush2.msra.mxu0 0.0
        %7152 = vmatprep.subr.mxu0 0.0
        %7153 = vmatpush2.msra.mxu0 0.0
        %7154 = vmatprep.subr.mxu0 0.0
        %7155 = vmatpush2.msra.mxu0 0.0
        %7156 = vmatprep.subr.mxu0 0.0
        %7157 = vmatpush2.msra.mxu0 0.0
        %7158 = vmatprep.subr.mxu0 0.0
        %7159 = vmatpush2.msra.mxu0 0.0
        %7160 = vmatprep.subr.mxu0 0.0
        %7161 = vmatpush2.msra.mxu0 0.0
        %7162 = vmatprep.subr.mxu0 0.0
        %7163 = vmatpush2.msra.mxu0 0.0
        %7164 = vmatprep.subr.mxu0 0.0
        %7165 = vmatpush2.msra.mxu0 0.0
        %7166 = vmatprep.subr.mxu0 0.0
        %7167 = vmatpush2.msra.mxu0 0.0
        %7168 = vmatprep.subr.mxu0 0.0
        %7169 = vmatpush2.msra.mxu0 0.0
        %7170 = vmatprep.subr.mxu0 0.0
        %7171 = vmatpush2.msra.mxu0 0.0
        %7172 = vmatprep.subr.mxu0 0.0
        %7173 = vmatpush2.msra.mxu0 0.0
        %7174 = vmatprep.subr.mxu0 0.0
        %7175 = vmatpush2.msra.mxu0 0.0
        %7176 = vmatprep.subr.mxu0 0.0
        %7177 = vmatpush2.msra.mxu0 0.0
        %7178 = vmatprep.subr.mxu0 0.0
        %7179 = vmatpush2.msra.mxu0 0.0
        %7180 = vmatprep.mubr.f32.mxu0 0.0
        %7181 = vmatmul.mubr.f32.gmra.mxu0 %v7114
        %v7182 = vpop.f32.mrf.mxu0
        %v7183 = vadd.f32 0.0, %v7182
        %v7184 = vpop.f32.mrf.mxu0
        %7185 = vdwg.mxu0
        %v7187 = vsel %vm433, %v6800, 0
        %7189 = vmatprep.subr.mxu0 0.0
        %7190 = vmatpush1.msra.mxu0 0.0
        %7191 = vmatprep.subr.mxu0 0.0
        %7192 = vmatpush1.msra.mxu0 0.0
        %7193 = vmatprep.subr.mxu0 0.0
        %7194 = vmatpush1.msra.mxu0 0.0
        %7195 = vmatprep.subr.mxu0 0.0
        %7196 = vmatpush1.msra.mxu0 0.0
        %7197 = vmatprep.subr.mxu0 0.0
        %7198 = vmatpush1.msra.mxu0 0.0
        %7199 = vmatprep.subr.mxu0 0.0
        %7200 = vmatpush1.msra.mxu0 0.0
        %7201 = vmatprep.subr.mxu0 0.0
        %7202 = vmatpush1.msra.mxu0 0.0
        %7203 = vmatprep.subr.mxu0 0.0
        %7204 = vmatpush1.msra.mxu0 0.0
        %7205 = vmatprep.subr.mxu0 0.0
        %7206 = vmatpush1.msra.mxu0 0.0
        %7207 = vmatprep.subr.mxu0 0.0
        %7208 = vmatpush1.msra.mxu0 0.0
        %7209 = vmatprep.subr.mxu0 0.0
        %7210 = vmatpush1.msra.mxu0 0.0
        %7211 = vmatprep.subr.mxu0 0.0
        %7212 = vmatpush1.msra.mxu0 0.0
        %7213 = vmatprep.subr.mxu0 0.0
        %7214 = vmatpush1.msra.mxu0 %v4498
        %7215 = vmatprep.subr.mxu0 0.0
        %7216 = vmatpush1.msra.mxu0 %v4497
        %7217 = vmatprep.subr.mxu0 0.0
        %7218 = vmatpush1.msra.mxu0 %v4496
        %7219 = vmatprep.subr.mxu0 0.0
        %7220 = vmatpush1.msra.mxu0 %v4495
        %7221 = vmatprep.subr.mxu0 0.0
        %7222 = vmatpush2.msra.mxu0 0.0
        %7223 = vmatprep.subr.mxu0 0.0
        %7224 = vmatpush2.msra.mxu0 0.0
        %7225 = vmatprep.subr.mxu0 0.0
        %7226 = vmatpush2.msra.mxu0 0.0
        %7227 = vmatprep.subr.mxu0 0.0
        %7228 = vmatpush2.msra.mxu0 0.0
        %7229 = vmatprep.subr.mxu0 0.0
        %7230 = vmatpush2.msra.mxu0 0.0
        %7231 = vmatprep.subr.mxu0 0.0
        %7232 = vmatpush2.msra.mxu0 0.0
        %7233 = vmatprep.subr.mxu0 0.0
        %7234 = vmatpush2.msra.mxu0 0.0
        %7235 = vmatprep.subr.mxu0 0.0
        %7236 = vmatpush2.msra.mxu0 0.0
        %7237 = vmatprep.subr.mxu0 0.0
        %7238 = vmatpush2.msra.mxu0 0.0
        %7239 = vmatprep.subr.mxu0 0.0
        %7240 = vmatpush2.msra.mxu0 0.0
        %7241 = vmatprep.subr.mxu0 0.0
        %7242 = vmatpush2.msra.mxu0 0.0
        %7243 = vmatprep.subr.mxu0 0.0
        %7244 = vmatpush2.msra.mxu0 0.0
        %7245 = vmatprep.subr.mxu0 0.0
        %7246 = vmatpush2.msra.mxu0 0.0
        %7247 = vmatprep.subr.mxu0 0.0
        %7248 = vmatpush2.msra.mxu0 0.0
        %7249 = vmatprep.subr.mxu0 0.0
        %7250 = vmatpush2.msra.mxu0 0.0
        %7251 = vmatprep.subr.mxu0 0.0
        %7252 = vmatpush2.msra.mxu0 0.0
        %7253 = vmatprep.mubr.f32.mxu0 0.0
        %7254 = vmatmul.mubr.f32.gmra.mxu0 %v7187
        %v7255 = vpop.f32.mrf.mxu0
        %v7256 = vadd.f32 %v4500, %v7255
        %v7257 = vpop.f32.mrf.mxu0
        %7258 = vdwg.mxu0
        %v7259 = vlaneseq
        %v7260 = vshrl.u32 %v7259, 7
        %v7261 = vsub.s32 0, %v7260
        %v7262 = vrot.slane %v7256, %v7261
        %v7263 = vmul.f32 %v3921, %v7262
        %v7264 = vmul.f32 %v3926, %v7262
        %v7265 = vmul.f32 %v3931, %v7262
        %v7266 = vmul.f32 %v3936, %v7262
        %v7267 = vmul.f32 %v3941, %v7262
        %v7268 = vmul.f32 %v3946, %v7262
        %v7269 = vmul.f32 %v3951, %v7262
        %v7270 = vmul.f32 %v3956, %v7262
        %v7272 = vsel %vm433, %v7263, 0
        %v7275 = vsel %vm433, %v7264, 0
        %v7278 = vsel %vm433, %v7265, 0
        %v7281 = vsel %vm433, %v7266, 0
        %v7284 = vsel %vm433, %v7267, 0
        %v7287 = vsel %vm433, %v7268, 0
        %v7290 = vsel %vm433, %v7269, 0
        %v7293 = vsel %vm433, %v7270, 0
        %7295 = vmatprep.subr.mxu0 0.0
        %7296 = vmatpush1.msra.mxu0 0.0
        %7297 = vmatprep.subr.mxu0 0.0
        %7298 = vmatpush1.msra.mxu0 0.0
        %7299 = vmatprep.subr.mxu0 0.0
        %7300 = vmatpush1.msra.mxu0 0.0
        %7301 = vmatprep.subr.mxu0 0.0
        %7302 = vmatpush1.msra.mxu0 0.0
        %7303 = vmatprep.subr.mxu0 0.0
        %7304 = vmatpush1.msra.mxu0 0.0
        %7305 = vmatprep.subr.mxu0 0.0
        %7306 = vmatpush1.msra.mxu0 0.0
        %7307 = vmatprep.subr.mxu0 0.0
        %7308 = vmatpush1.msra.mxu0 0.0
        %7309 = vmatprep.subr.mxu0 0.0
        %7310 = vmatpush1.msra.mxu0 0.0
        %7311 = vmatprep.subr.mxu0 0.0
        %7312 = vmatpush1.msra.mxu0 0.0
        %7313 = vmatprep.subr.mxu0 0.0
        %7314 = vmatpush1.msra.mxu0 0.0
        %7315 = vmatprep.subr.mxu0 0.0
        %7316 = vmatpush1.msra.mxu0 0.0
        %7317 = vmatprep.subr.mxu0 0.0
        %7318 = vmatpush1.msra.mxu0 0.0
        %7319 = vmatprep.subr.mxu0 0.0
        %7320 = vmatpush1.msra.mxu0 %v4589
        %7321 = vmatprep.subr.mxu0 0.0
        %7322 = vmatpush1.msra.mxu0 %v4588
        %7323 = vmatprep.subr.mxu0 0.0
        %7324 = vmatpush1.msra.mxu0 %v4587
        %7325 = vmatprep.subr.mxu0 0.0
        %7326 = vmatpush1.msra.mxu0 %v4586
        %7327 = vmatprep.subr.mxu0 0.0
        %7328 = vmatpush2.msra.mxu0 0.0
        %7329 = vmatprep.subr.mxu0 0.0
        %7330 = vmatpush2.msra.mxu0 0.0
        %7331 = vmatprep.subr.mxu0 0.0
        %7332 = vmatpush2.msra.mxu0 0.0
        %7333 = vmatprep.subr.mxu0 0.0
        %7334 = vmatpush2.msra.mxu0 0.0
        %7335 = vmatprep.subr.mxu0 0.0
        %7336 = vmatpush2.msra.mxu0 0.0
        %7337 = vmatprep.subr.mxu0 0.0
        %7338 = vmatpush2.msra.mxu0 0.0
        %7339 = vmatprep.subr.mxu0 0.0
        %7340 = vmatpush2.msra.mxu0 0.0
        %7341 = vmatprep.subr.mxu0 0.0
        %7342 = vmatpush2.msra.mxu0 0.0
        %7343 = vmatprep.subr.mxu0 0.0
        %7344 = vmatpush2.msra.mxu0 0.0
        %7345 = vmatprep.subr.mxu0 0.0
        %7346 = vmatpush2.msra.mxu0 0.0
        %7347 = vmatprep.subr.mxu0 0.0
        %7348 = vmatpush2.msra.mxu0 0.0
        %7349 = vmatprep.subr.mxu0 0.0
        %7350 = vmatpush2.msra.mxu0 0.0
        %7351 = vmatprep.subr.mxu0 0.0
        %7352 = vmatpush2.msra.mxu0 0.0
        %7353 = vmatprep.subr.mxu0 0.0
        %7354 = vmatpush2.msra.mxu0 0.0
        %7355 = vmatprep.subr.mxu0 0.0
        %7356 = vmatpush2.msra.mxu0 0.0
        %7357 = vmatprep.subr.mxu0 0.0
        %7358 = vmatpush2.msra.mxu0 0.0
        %7359 = vmatprep.mubr.f32.mxu0 0.0
        %7360 = vmatmul.mubr.f32.gmra.mxu0 %v7272
        %v7361 = vpop.f32.mrf.mxu0
        %v7362 = vadd.f32 %v4054, %v7361
        %v7363 = vpop.f32.mrf.mxu0
        %7364 = vmatprep.mubr.f32.mxu0 0.0
        %7365 = vmatmul.mubr.f32.gmra.mxu0 %v7275
        %v7366 = vpop.f32.mrf.mxu0
        %v7367 = vadd.f32 %v4059, %v7366
        %v7368 = vpop.f32.mrf.mxu0
        %7369 = vmatprep.mubr.f32.mxu0 0.0
        %7370 = vmatmul.mubr.f32.gmra.mxu0 %v7278
        %v7371 = vpop.f32.mrf.mxu0
        %v7372 = vadd.f32 %v4064, %v7371
        %v7373 = vpop.f32.mrf.mxu0
        %7374 = vmatprep.mubr.f32.mxu0 0.0
        %7375 = vmatmul.mubr.f32.gmra.mxu0 %v7281
        %v7376 = vpop.f32.mrf.mxu0
        %v7377 = vadd.f32 %v4069, %v7376
        %v7378 = vpop.f32.mrf.mxu0
        %7379 = vmatprep.mubr.f32.mxu0 0.0
        %7380 = vmatmul.mubr.f32.gmra.mxu0 %v7284
        %v7381 = vpop.f32.mrf.mxu0
        %v7382 = vadd.f32 %v4074, %v7381
        %v7383 = vpop.f32.mrf.mxu0
        %7384 = vmatprep.mubr.f32.mxu0 0.0
        %7385 = vmatmul.mubr.f32.gmra.mxu0 %v7287
        %v7386 = vpop.f32.mrf.mxu0
        %v7387 = vadd.f32 %v4079, %v7386
        %v7388 = vpop.f32.mrf.mxu0
        %7389 = vmatprep.mubr.f32.mxu0 0.0
        %7390 = vmatmul.mubr.f32.gmra.mxu0 %v7290
        %v7391 = vpop.f32.mrf.mxu0
        %v7392 = vadd.f32 %v4084, %v7391
        %v7393 = vpop.f32.mrf.mxu0
        %7394 = vmatprep.mubr.f32.mxu0 0.0
        %7395 = vmatmul.mubr.f32.gmra.mxu0 %v7293
        %v7396 = vpop.f32.mrf.mxu0
        %v7397 = vadd.f32 %v4089, %v7396
        %v7398 = vpop.f32.mrf.mxu0
        %7399 = vdwg.mxu0
        %v7400 = vadd.f32 %v7362, %v4722
        %v7401 = vadd.f32 %v7367, %v4722
        %v7402 = vadd.f32 %v7372, %v4722
        %v7403 = vadd.f32 %v7377, %v4722
        %v7404 = vadd.f32 %v7382, %v4722
        %v7405 = vadd.f32 %v7387, %v4722
        %v7406 = vadd.f32 %v7392, %v4722
        %v7407 = vadd.f32 %v7397, %v4722
        %vm7408 = vcmp.gt.f32.partialorder %v7400, 0.0
        %vm7409 = vcmp.gt.f32.partialorder %v7401, 0.0
        %vm7410 = vcmp.gt.f32.partialorder %v7402, 0.0
        %vm7411 = vcmp.gt.f32.partialorder %v7403, 0.0
        %vm7412 = vcmp.gt.f32.partialorder %v7404, 0.0
        %vm7413 = vcmp.gt.f32.partialorder %v7405, 0.0
        %vm7414 = vcmp.gt.f32.partialorder %v7406, 0.0
        %vm7415 = vcmp.gt.f32.partialorder %v7407, 0.0
        %v7416 = vmin.f32 %v7400, 0.0
        %v7417 = vmin.f32 %v7401, 0.0
        %v7418 = vmin.f32 %v7402, 0.0
        %v7419 = vmin.f32 %v7403, 0.0
        %v7420 = vmin.f32 %v7404, 0.0
        %v7421 = vmin.f32 %v7405, 0.0
        %v7422 = vmin.f32 %v7406, 0.0
        %v7423 = vmin.f32 %v7407, 0.0
        %v7424 = vmul.f32 %v7416, 1.442695
        %v7425 = vpow.pop %v7424
        %v7426 = vmul.f32 %v7417, 1.442695
        %v7427 = vpow.pop %v7426
        %v7428 = vmul.f32 %v7418, 1.442695
        %v7429 = vpow.pop %v7428
        %v7430 = vmul.f32 %v7419, 1.442695
        %v7431 = vpow.pop %v7430
        %v7432 = vmul.f32 %v7420, 1.442695
        %v7433 = vpow.pop %v7432
        %v7434 = vmul.f32 %v7421, 1.442695
        %v7435 = vpow.pop %v7434
        %v7436 = vmul.f32 %v7422, 1.442695
        %v7437 = vpow.pop %v7436
        %v7438 = vmul.f32 %v7423, 1.442695
        %v7439 = vpow.pop %v7438
        %v7440 = vsub.f32 %v7425, 1.0
        %v7441 = vsub.f32 %v7427, 1.0
        %v7442 = vsub.f32 %v7429, 1.0
        %v7443 = vsub.f32 %v7431, 1.0
        %v7444 = vsub.f32 %v7433, 1.0
        %v7445 = vsub.f32 %v7435, 1.0
        %v7446 = vsub.f32 %v7437, 1.0
        %v7447 = vsub.f32 %v7439, 1.0
        %v7448 = vsel %vm7408, %v7400, %v7440
        %v7449 = vsel %vm7409, %v7401, %v7441
        %v7450 = vsel %vm7410, %v7402, %v7442
        %v7451 = vsel %vm7411, %v7403, %v7443
        %v7452 = vsel %vm7412, %v7404, %v7444
        %v7453 = vsel %vm7413, %v7405, %v7445
        %v7454 = vsel %vm7414, %v7406, %v7446
        %v7455 = vsel %vm7415, %v7407, %v7447
        %v7456 = vlaneseq
        %v7457 = vshrl.u32 %v7456, 7
        %v7458 = vsub.s32 0, %v7457
        %v7459 = vrot.slane %v7183, %v7458
        %v7460 = vmul.f32 %v7448, %v7459
        %v7461 = vmul.f32 %v7449, %v7459
        %v7462 = vmul.f32 %v7450, %v7459
        %v7463 = vmul.f32 %v7451, %v7459
        %v7464 = vmul.f32 %v7452, %v7459
        %v7465 = vmul.f32 %v7453, %v7459
        %v7466 = vmul.f32 %v7454, %v7459
        %v7467 = vmul.f32 %v7455, %v7459
        %vm7468 = vcmp.gt.f32.partialorder %v7460, 0.0
        %vm7469 = vcmp.gt.f32.partialorder %v7461, 0.0
        %vm7470 = vcmp.gt.f32.partialorder %v7462, 0.0
        %vm7471 = vcmp.gt.f32.partialorder %v7463, 0.0
        %vm7472 = vcmp.gt.f32.partialorder %v7464, 0.0
        %vm7473 = vcmp.gt.f32.partialorder %v7465, 0.0
        %vm7474 = vcmp.gt.f32.partialorder %v7466, 0.0
        %vm7475 = vcmp.gt.f32.partialorder %v7467, 0.0
        %v7476 = vmin.f32 %v7460, 0.0
        %v7477 = vmin.f32 %v7461, 0.0
        %v7478 = vmin.f32 %v7462, 0.0
        %v7479 = vmin.f32 %v7463, 0.0
        %v7480 = vmin.f32 %v7464, 0.0
        %v7481 = vmin.f32 %v7465, 0.0
        %v7482 = vmin.f32 %v7466, 0.0
        %v7483 = vmin.f32 %v7467, 0.0
        %v7484 = vmul.f32 %v7476, 1.442695
        %v7485 = vpow.pop %v7484
        %v7486 = vmul.f32 %v7477, 1.442695
        %v7487 = vpow.pop %v7486
        %v7488 = vmul.f32 %v7478, 1.442695
        %v7489 = vpow.pop %v7488
        %v7490 = vmul.f32 %v7479, 1.442695
        %v7491 = vpow.pop %v7490
        %v7492 = vmul.f32 %v7480, 1.442695
        %v7493 = vpow.pop %v7492
        %v7494 = vmul.f32 %v7481, 1.442695
        %v7495 = vpow.pop %v7494
        %v7496 = vmul.f32 %v7482, 1.442695
        %v7497 = vpow.pop %v7496
        %v7498 = vmul.f32 %v7483, 1.442695
        %v7499 = vpow.pop %v7498
        %v7500 = vsub.f32 %v7485, 1.0
        %v7501 = vsub.f32 %v7487, 1.0
        %v7502 = vsub.f32 %v7489, 1.0
        %v7503 = vsub.f32 %v7491, 1.0
        %v7504 = vsub.f32 %v7493, 1.0
        %v7505 = vsub.f32 %v7495, 1.0
        %v7506 = vsub.f32 %v7497, 1.0
        %v7507 = vsub.f32 %v7499, 1.0
        %v7508 = vsel %vm7468, %v7460, %v7500
        %v7509 = vsel %vm7469, %v7461, %v7501
        %v7510 = vsel %vm7470, %v7462, %v7502
        %v7511 = vsel %vm7471, %v7463, %v7503
        %v7512 = vsel %vm7472, %v7464, %v7504
        %v7513 = vsel %vm7473, %v7465, %v7505
        %v7514 = vsel %vm7474, %v7466, %v7506
        %v7515 = vsel %vm7475, %v7467, %v7507
        %v7517 = vsel %vm433, %v7508, 0
        %v7520 = vsel %vm433, %v7509, 0
        %v7523 = vsel %vm433, %v7510, 0
        %v7526 = vsel %vm433, %v7511, 0
        %v7529 = vsel %vm433, %v7512, 0
        %v7532 = vsel %vm433, %v7513, 0
        %v7535 = vsel %vm433, %v7514, 0
        %v7538 = vsel %vm433, %v7515, 0
        %7540 = vmatprep.subr.mxu0 0.0
        %7541 = vmatpush1.xpose.msra.mxu0 0.0
        %7542 = vmatprep.subr.mxu0 0.0
        %7543 = vmatpush1.xpose.msra.mxu0 0.0
        %7544 = vmatprep.subr.mxu0 0.0
        %7545 = vmatpush1.xpose.msra.mxu0 0.0
        %7546 = vmatprep.subr.mxu0 0.0
        %7547 = vmatpush1.xpose.msra.mxu0 0.0
        %7548 = vmatprep.subr.mxu0 0.0
        %7549 = vmatpush1.xpose.msra.mxu0 0.0
        %7550 = vmatprep.subr.mxu0 0.0
        %7551 = vmatpush1.xpose.msra.mxu0 0.0
        %7552 = vmatprep.subr.mxu0 0.0
        %7553 = vmatpush1.xpose.msra.mxu0 0.0
        %7554 = vmatprep.subr.mxu0 0.0
        %7555 = vmatpush1.xpose.msra.mxu0 0.0
        %7556 = vmatprep.subr.mxu0 0.0
        %7557 = vmatpush1.xpose.msra.mxu0 %v7538
        %7558 = vmatprep.subr.mxu0 0.0
        %7559 = vmatpush1.xpose.msra.mxu0 %v7535
        %7560 = vmatprep.subr.mxu0 0.0
        %7561 = vmatpush1.xpose.msra.mxu0 %v7532
        %7562 = vmatprep.subr.mxu0 0.0
        %7563 = vmatpush1.xpose.msra.mxu0 %v7529
        %7564 = vmatprep.subr.mxu0 0.0
        %7565 = vmatpush1.xpose.msra.mxu0 %v7526
        %7566 = vmatprep.subr.mxu0 0.0
        %7567 = vmatpush1.xpose.msra.mxu0 %v7523
        %7568 = vmatprep.subr.mxu0 0.0
        %7569 = vmatpush1.xpose.msra.mxu0 %v7520
        %7570 = vmatprep.subr.mxu0 0.0
        %7571 = vmatpush1.xpose.msra.mxu0 %v7517
        %7572 = vmatprep.subr.mxu0 0.0
        %7573 = vmatpush2.xpose.msra.mxu0 0.0
        %7574 = vmatprep.subr.mxu0 0.0
        %7575 = vmatpush2.xpose.msra.mxu0 0.0
        %7576 = vmatprep.subr.mxu0 0.0
        %7577 = vmatpush2.xpose.msra.mxu0 0.0
        %7578 = vmatprep.subr.mxu0 0.0
        %7579 = vmatpush2.xpose.msra.mxu0 0.0
        %7580 = vmatprep.subr.mxu0 0.0
        %7581 = vmatpush2.xpose.msra.mxu0 0.0
        %7582 = vmatprep.subr.mxu0 0.0
        %7583 = vmatpush2.xpose.msra.mxu0 0.0
        %7584 = vmatprep.subr.mxu0 0.0
        %7585 = vmatpush2.xpose.msra.mxu0 0.0
        %7586 = vmatprep.subr.mxu0 0.0
        %7587 = vmatpush2.xpose.msra.mxu0 0.0
        %7588 = vmatprep.subr.mxu0 0.0
        %7589 = vmatpush2.xpose.msra.mxu0 0.0
        %7590 = vmatprep.subr.mxu0 0.0
        %7591 = vmatpush2.xpose.msra.mxu0 0.0
        %7592 = vmatprep.subr.mxu0 0.0
        %7593 = vmatpush2.xpose.msra.mxu0 0.0
        %7594 = vmatprep.subr.mxu0 0.0
        %7595 = vmatpush2.xpose.msra.mxu0 0.0
        %7596 = vmatprep.subr.mxu0 0.0
        %7597 = vmatpush2.xpose.msra.mxu0 0.0
        %7598 = vmatprep.subr.mxu0 0.0
        %7599 = vmatpush2.xpose.msra.mxu0 0.0
        %7600 = vmatprep.subr.mxu0 0.0
        %7601 = vmatpush2.xpose.msra.mxu0 0.0
        %7602 = vmatprep.subr.mxu0 0.0
        %7603 = vmatpush2.xpose.msra.mxu0 0.0
        %7604 = vmatprep.mubr.f32.mxu0 0.0
        %7605 = vmatmul.mubr.f32.gmra.mxu0 %v4839
        %v7606 = vpop.f32.mrf.mxu0
        %v7607 = vadd.f32 0.0, %v7606
        %v7608 = vpop.f32.mrf.mxu0
        %7609 = vdwg.mxu0
        %v7610 = vsel %vm4935, %v7607, -inf
        %7611 = vmax.xlane.f32.xlu0 %v7610
        %v7612 = vpop.xlane.xlu0 %7611
        %v7613 = vsub.f32 %v7607, %v7612
        %v7614 = vmul.f32 %v7613, 1.442695
        %v7615 = vpow.pop %v7614
        %v7616 = vsel %vm4935, %v7615, 0.0
        %7617 = vadd.xlane.f32.xlu0 %v7616
        %v7618 = vpop.xlane.xlu0 %7617
        %v7619 = vrcp.pop %v7618
        %v7620 = vmul.f32 %v7615, %v7619
        %v7622 = vsel %vm4947, %v7620, 0
        %7624 = vmatprep.subr.mxu0 0.0
        %7625 = vmatpush1.msra.mxu0 0.0
        %7626 = vmatprep.subr.mxu0 0.0
        %7627 = vmatpush1.msra.mxu0 0.0
        %7628 = vmatprep.subr.mxu0 0.0
        %7629 = vmatpush1.msra.mxu0 0.0
        %7630 = vmatprep.subr.mxu0 0.0
        %7631 = vmatpush1.msra.mxu0 0.0
        %7632 = vmatprep.subr.mxu0 0.0
        %7633 = vmatpush1.msra.mxu0 0.0
        %7634 = vmatprep.subr.mxu0 0.0
        %7635 = vmatpush1.msra.mxu0 0.0
        %7636 = vmatprep.subr.mxu0 0.0
        %7637 = vmatpush1.msra.mxu0 0.0
        %7638 = vmatprep.subr.mxu0 0.0
        %7639 = vmatpush1.msra.mxu0 0.0
        %7640 = vmatprep.subr.mxu0 0.0
        %7641 = vmatpush1.msra.mxu0 %v2651
        %7642 = vmatprep.subr.mxu0 0.0
        %7643 = vmatpush1.msra.mxu0 %v2650
        %7644 = vmatprep.subr.mxu0 0.0
        %7645 = vmatpush1.msra.mxu0 %v2649
        %7646 = vmatprep.subr.mxu0 0.0
        %7647 = vmatpush1.msra.mxu0 %v2648
        %7648 = vmatprep.subr.mxu0 0.0
        %7649 = vmatpush1.msra.mxu0 %v2647
        %7650 = vmatprep.subr.mxu0 0.0
        %7651 = vmatpush1.msra.mxu0 %v2646
        %7652 = vmatprep.subr.mxu0 0.0
        %7653 = vmatpush1.msra.mxu0 %v2645
        %7654 = vmatprep.subr.mxu0 0.0
        %7655 = vmatpush1.msra.mxu0 %v2644
        %7656 = vmatprep.subr.mxu0 0.0
        %7657 = vmatpush2.msra.mxu0 0.0
        %7658 = vmatprep.subr.mxu0 0.0
        %7659 = vmatpush2.msra.mxu0 0.0
        %7660 = vmatprep.subr.mxu0 0.0
        %7661 = vmatpush2.msra.mxu0 0.0
        %7662 = vmatprep.subr.mxu0 0.0
        %7663 = vmatpush2.msra.mxu0 0.0
        %7664 = vmatprep.subr.mxu0 0.0
        %7665 = vmatpush2.msra.mxu0 0.0
        %7666 = vmatprep.subr.mxu0 0.0
        %7667 = vmatpush2.msra.mxu0 0.0
        %7668 = vmatprep.subr.mxu0 0.0
        %7669 = vmatpush2.msra.mxu0 0.0
        %7670 = vmatprep.subr.mxu0 0.0
        %7671 = vmatpush2.msra.mxu0 0.0
        %7672 = vmatprep.subr.mxu0 0.0
        %7673 = vmatpush2.msra.mxu0 0.0
        %7674 = vmatprep.subr.mxu0 0.0
        %7675 = vmatpush2.msra.mxu0 0.0
        %7676 = vmatprep.subr.mxu0 0.0
        %7677 = vmatpush2.msra.mxu0 0.0
        %7678 = vmatprep.subr.mxu0 0.0
        %7679 = vmatpush2.msra.mxu0 0.0
        %7680 = vmatprep.subr.mxu0 0.0
        %7681 = vmatpush2.msra.mxu0 0.0
        %7682 = vmatprep.subr.mxu0 0.0
        %7683 = vmatpush2.msra.mxu0 0.0
        %7684 = vmatprep.subr.mxu0 0.0
        %7685 = vmatpush2.msra.mxu0 0.0
        %7686 = vmatprep.subr.mxu0 0.0
        %7687 = vmatpush2.msra.mxu0 0.0
        %7688 = vmatprep.mubr.f32.mxu0 0.0
        %7689 = vmatmul.mubr.f32.gmra.mxu0 %v7622
        %v7690 = vpop.f32.mrf.mxu0
        %v7691 = vadd.f32 0.0, %v7690
        %v7692 = vpop.f32.mrf.mxu0
        %7693 = vdwg.mxu0
        %v7694 = vld [vmem:[%s5 + $0xe0] sm:$0xff]
        %v7695 = vld [vmem:[%s5 + $0xe8] sm:$0xff]
        %v7696 = vld [vmem:[%s5 + $0xf0] sm:$0xff]
        %v7697 = vld [vmem:[%s5 + $0xf8] sm:$0xff]
        %v7698 = vrot.slane %v303, 2
        %7700 = vmatprep.subr.mxu0 0.0
        %7701 = vmatpush1.msra.mxu0 0.0
        %7702 = vmatprep.subr.mxu0 0.0
        %7703 = vmatpush1.msra.mxu0 0.0
        %7704 = vmatprep.subr.mxu0 0.0
        %7705 = vmatpush1.msra.mxu0 0.0
        %7706 = vmatprep.subr.mxu0 0.0
        %7707 = vmatpush1.msra.mxu0 0.0
        %7708 = vmatprep.subr.mxu0 0.0
        %7709 = vmatpush1.msra.mxu0 0.0
        %7710 = vmatprep.subr.mxu0 0.0
        %7711 = vmatpush1.msra.mxu0 0.0
        %7712 = vmatprep.subr.mxu0 0.0
        %7713 = vmatpush1.msra.mxu0 0.0
        %7714 = vmatprep.subr.mxu0 0.0
        %7715 = vmatpush1.msra.mxu0 0.0
        %7716 = vmatprep.subr.mxu0 0.0
        %7717 = vmatpush1.msra.mxu0 0.0
        %7718 = vmatprep.subr.mxu0 0.0
        %7719 = vmatpush1.msra.mxu0 0.0
        %7720 = vmatprep.subr.mxu0 0.0
        %7721 = vmatpush1.msra.mxu0 0.0
        %7722 = vmatprep.subr.mxu0 0.0
        %7723 = vmatpush1.msra.mxu0 0.0
        %7724 = vmatprep.subr.mxu0 0.0
        %7725 = vmatpush1.msra.mxu0 %v7697
        %7726 = vmatprep.subr.mxu0 0.0
        %7727 = vmatpush1.msra.mxu0 %v7696
        %7728 = vmatprep.subr.mxu0 0.0
        %7729 = vmatpush1.msra.mxu0 %v7695
        %7730 = vmatprep.subr.mxu0 0.0
        %7731 = vmatpush1.msra.mxu0 %v7694
        %7732 = vmatprep.subr.mxu0 0.0
        %7733 = vmatpush2.msra.mxu0 0.0
        %7734 = vmatprep.subr.mxu0 0.0
        %7735 = vmatpush2.msra.mxu0 0.0
        %7736 = vmatprep.subr.mxu0 0.0
        %7737 = vmatpush2.msra.mxu0 0.0
        %7738 = vmatprep.subr.mxu0 0.0
        %7739 = vmatpush2.msra.mxu0 0.0
        %7740 = vmatprep.subr.mxu0 0.0
        %7741 = vmatpush2.msra.mxu0 0.0
        %7742 = vmatprep.subr.mxu0 0.0
        %7743 = vmatpush2.msra.mxu0 0.0
        %7744 = vmatprep.subr.mxu0 0.0
        %7745 = vmatpush2.msra.mxu0 0.0
        %7746 = vmatprep.subr.mxu0 0.0
        %7747 = vmatpush2.msra.mxu0 0.0
        %7748 = vmatprep.subr.mxu0 0.0
        %7749 = vmatpush2.msra.mxu0 0.0
        %7750 = vmatprep.subr.mxu0 0.0
        %7751 = vmatpush2.msra.mxu0 0.0
        %7752 = vmatprep.subr.mxu0 0.0
        %7753 = vmatpush2.msra.mxu0 0.0
        %7754 = vmatprep.subr.mxu0 0.0
        %7755 = vmatpush2.msra.mxu0 0.0
        %7756 = vmatprep.subr.mxu0 0.0
        %7757 = vmatpush2.msra.mxu0 0.0
        %7758 = vmatprep.subr.mxu0 0.0
        %7759 = vmatpush2.msra.mxu0 0.0
        %7760 = vmatprep.subr.mxu0 0.0
        %7761 = vmatpush2.msra.mxu0 0.0
        %7762 = vmatprep.subr.mxu0 0.0
        %7763 = vmatpush2.msra.mxu0 0.0
        %7764 = vmatprep.mubr.f32.mxu0 0.0
        %7765 = vmatmul.mubr.f32.gmra.mxu0 %v3749
        %v7766 = vpop.f32.mrf.mxu0
        %v7767 = vadd.f32 %v7698, %v7766
        %v7768 = vpop.f32.mrf.mxu0
        %7769 = vdwg.mxu0
        %v7770 = vld [vmem:[%s5 + $0x100] sm:$0xff]
        %v7771 = vld [vmem:[%s5 + $0x108] sm:$0xff]
        %v7772 = vld [vmem:[%s5 + $0x110] sm:$0xff]
        %v7773 = vld [vmem:[%s5 + $0x118] sm:$0xff]
        %v7774 = vld [vmem:[%s5 + $0x120] sm:$0xff]
        %v7775 = vld [vmem:[%s5 + $0x128] sm:$0xff]
        %v7776 = vld [vmem:[%s5 + $0x130] sm:$0xff]
        %v7777 = vld [vmem:[%s5 + $0x138] sm:$0xff]
        %v7779 = vsel %vm433, %v7767, 0
        %7781 = vmatprep.subr.mxu0 0.0
        %7782 = vmatpush1.msra.mxu0 0.0
        %7783 = vmatprep.subr.mxu0 0.0
        %7784 = vmatpush1.msra.mxu0 0.0
        %7785 = vmatprep.subr.mxu0 0.0
        %7786 = vmatpush1.msra.mxu0 0.0
        %7787 = vmatprep.subr.mxu0 0.0
        %7788 = vmatpush1.msra.mxu0 0.0
        %7789 = vmatprep.subr.mxu0 0.0
        %7790 = vmatpush1.msra.mxu0 0.0
        %7791 = vmatprep.subr.mxu0 0.0
        %7792 = vmatpush1.msra.mxu0 0.0
        %7793 = vmatprep.subr.mxu0 0.0
        %7794 = vmatpush1.msra.mxu0 0.0
        %7795 = vmatprep.subr.mxu0 0.0
        %7796 = vmatpush1.msra.mxu0 0.0
        %7797 = vmatprep.subr.mxu0 0.0
        %7798 = vmatpush1.msra.mxu0 0.0
        %7799 = vmatprep.subr.mxu0 0.0
        %7800 = vmatpush1.msra.mxu0 0.0
        %7801 = vmatprep.subr.mxu0 0.0
        %7802 = vmatpush1.msra.mxu0 0.0
        %7803 = vmatprep.subr.mxu0 0.0
        %7804 = vmatpush1.msra.mxu0 0.0
        %7805 = vmatprep.subr.mxu0 0.0
        %7806 = vmatpush1.msra.mxu0 %v7777
        %7807 = vmatprep.subr.mxu0 0.0
        %7808 = vmatpush1.msra.mxu0 %v7776
        %7809 = vmatprep.subr.mxu0 0.0
        %7810 = vmatpush1.msra.mxu0 %v7775
        %7811 = vmatprep.subr.mxu0 0.0
        %7812 = vmatpush1.msra.mxu0 %v7774
        %7813 = vmatprep.subr.mxu0 0.0
        %7814 = vmatpush2.msra.mxu0 0.0
        %7815 = vmatprep.subr.mxu0 0.0
        %7816 = vmatpush2.msra.mxu0 0.0
        %7817 = vmatprep.subr.mxu0 0.0
        %7818 = vmatpush2.msra.mxu0 0.0
        %7819 = vmatprep.subr.mxu0 0.0
        %7820 = vmatpush2.msra.mxu0 0.0
        %7821 = vmatprep.subr.mxu0 0.0
        %7822 = vmatpush2.msra.mxu0 0.0
        %7823 = vmatprep.subr.mxu0 0.0
        %7824 = vmatpush2.msra.mxu0 0.0
        %7825 = vmatprep.subr.mxu0 0.0
        %7826 = vmatpush2.msra.mxu0 0.0
        %7827 = vmatprep.subr.mxu0 0.0
        %7828 = vmatpush2.msra.mxu0 0.0
        %7829 = vmatprep.subr.mxu0 0.0
        %7830 = vmatpush2.msra.mxu0 0.0
        %7831 = vmatprep.subr.mxu0 0.0
        %7832 = vmatpush2.msra.mxu0 0.0
        %7833 = vmatprep.subr.mxu0 0.0
        %7834 = vmatpush2.msra.mxu0 0.0
        %7835 = vmatprep.subr.mxu0 0.0
        %7836 = vmatpush2.msra.mxu0 0.0
        %7837 = vmatprep.subr.mxu0 0.0
        %7838 = vmatpush2.msra.mxu0 0.0
        %7839 = vmatprep.subr.mxu0 0.0
        %7840 = vmatpush2.msra.mxu0 0.0
        %7841 = vmatprep.subr.mxu0 0.0
        %7842 = vmatpush2.msra.mxu0 0.0
        %7843 = vmatprep.subr.mxu0 0.0
        %7844 = vmatpush2.msra.mxu0 0.0
        %7845 = vmatprep.mubr.f32.mxu0 0.0
        %7846 = vmatmul.mubr.f32.gmra.mxu0 %v7779
        %v7847 = vpop.f32.mrf.mxu0
        %v7848 = vadd.f32 0.0, %v7847
        %v7849 = vpop.f32.mrf.mxu0
        %7850 = vdwg.mxu0
        %v7852 = vsel %vm433, %v7691, 0
        %7854 = vmatprep.subr.mxu0 0.0
        %7855 = vmatpush1.msra.mxu0 0.0
        %7856 = vmatprep.subr.mxu0 0.0
        %7857 = vmatpush1.msra.mxu0 0.0
        %7858 = vmatprep.subr.mxu0 0.0
        %7859 = vmatpush1.msra.mxu0 0.0
        %7860 = vmatprep.subr.mxu0 0.0
        %7861 = vmatpush1.msra.mxu0 0.0
        %7862 = vmatprep.subr.mxu0 0.0
        %7863 = vmatpush1.msra.mxu0 0.0
        %7864 = vmatprep.subr.mxu0 0.0
        %7865 = vmatpush1.msra.mxu0 0.0
        %7866 = vmatprep.subr.mxu0 0.0
        %7867 = vmatpush1.msra.mxu0 0.0
        %7868 = vmatprep.subr.mxu0 0.0
        %7869 = vmatpush1.msra.mxu0 0.0
        %7870 = vmatprep.subr.mxu0 0.0
        %7871 = vmatpush1.msra.mxu0 0.0
        %7872 = vmatprep.subr.mxu0 0.0
        %7873 = vmatpush1.msra.mxu0 0.0
        %7874 = vmatprep.subr.mxu0 0.0
        %7875 = vmatpush1.msra.mxu0 0.0
        %7876 = vmatprep.subr.mxu0 0.0
        %7877 = vmatpush1.msra.mxu0 0.0
        %7878 = vmatprep.subr.mxu0 0.0
        %7879 = vmatpush1.msra.mxu0 %v7773
        %7880 = vmatprep.subr.mxu0 0.0
        %7881 = vmatpush1.msra.mxu0 %v7772
        %7882 = vmatprep.subr.mxu0 0.0
        %7883 = vmatpush1.msra.mxu0 %v7771
        %7884 = vmatprep.subr.mxu0 0.0
        %7885 = vmatpush1.msra.mxu0 %v7770
        %7886 = vmatprep.subr.mxu0 0.0
        %7887 = vmatpush2.msra.mxu0 0.0
        %7888 = vmatprep.subr.mxu0 0.0
        %7889 = vmatpush2.msra.mxu0 0.0
        %7890 = vmatprep.subr.mxu0 0.0
        %7891 = vmatpush2.msra.mxu0 0.0
        %7892 = vmatprep.subr.mxu0 0.0
        %7893 = vmatpush2.msra.mxu0 0.0
        %7894 = vmatprep.subr.mxu0 0.0
        %7895 = vmatpush2.msra.mxu0 0.0
        %7896 = vmatprep.subr.mxu0 0.0
        %7897 = vmatpush2.msra.mxu0 0.0
        %7898 = vmatprep.subr.mxu0 0.0
        %7899 = vmatpush2.msra.mxu0 0.0
        %7900 = vmatprep.subr.mxu0 0.0
        %7901 = vmatpush2.msra.mxu0 0.0
        %7902 = vmatprep.subr.mxu0 0.0
        %7903 = vmatpush2.msra.mxu0 0.0
        %7904 = vmatprep.subr.mxu0 0.0
        %7905 = vmatpush2.msra.mxu0 0.0
        %7906 = vmatprep.subr.mxu0 0.0
        %7907 = vmatpush2.msra.mxu0 0.0
        %7908 = vmatprep.subr.mxu0 0.0
        %7909 = vmatpush2.msra.mxu0 0.0
        %7910 = vmatprep.subr.mxu0 0.0
        %7911 = vmatpush2.msra.mxu0 0.0
        %7912 = vmatprep.subr.mxu0 0.0
        %7913 = vmatpush2.msra.mxu0 0.0
        %7914 = vmatprep.subr.mxu0 0.0
        %7915 = vmatpush2.msra.mxu0 0.0
        %7916 = vmatprep.subr.mxu0 0.0
        %7917 = vmatpush2.msra.mxu0 0.0
        %7918 = vmatprep.mubr.f32.mxu0 0.0
        %7919 = vmatmul.mubr.f32.gmra.mxu0 %v7852
        %v7920 = vpop.f32.mrf.mxu0
        %v7921 = vadd.f32 %v7848, %v7920
        %v7922 = vpop.f32.mrf.mxu0
        %7923 = vdwg.mxu0
        %v7924 = vrot.slane %v303, 3
        %v7926 = vadd.f32 %v7921, %v7924
        %vm7927 = vcmp.gt.f32.partialorder %v7926, 0.0
        %v7928 = vmin.f32 %v7926, 0.0
        %v7929 = vmul.f32 %v7928, 1.442695
        %v7930 = vpow.pop %v7929
        %v7931 = vsub.f32 %v7930, 1.0
        %v7932 = vsel %vm7927, %v7926, %v7931
        %v7933 = vld [vmem:[%s7] sm:$0xff]
        %v7934 = vld [vmem:[%s7 + $0x8] sm:$0xff]
        %v7935 = vld [vmem:[%s7 + $0x10] sm:$0xff]
        %v7936 = vld [vmem:[%s7 + $0x18] sm:$0xff]
        %v7937 = vld [vmem:[%s7 + $0x20] sm:$0x1]
        %v7939 = vsel %vm433, %v7932, 0
        %7941 = vmatprep.subr.mxu0 0.0
        %7942 = vmatpush1.msra.mxu0 0.0
        %7943 = vmatprep.subr.mxu0 0.0
        %7944 = vmatpush1.msra.mxu0 0.0
        %7945 = vmatprep.subr.mxu0 0.0
        %7946 = vmatpush1.msra.mxu0 0.0
        %7947 = vmatprep.subr.mxu0 0.0
        %7948 = vmatpush1.msra.mxu0 0.0
        %7949 = vmatprep.subr.mxu0 0.0
        %7950 = vmatpush1.msra.mxu0 0.0
        %7951 = vmatprep.subr.mxu0 0.0
        %7952 = vmatpush1.msra.mxu0 0.0
        %7953 = vmatprep.subr.mxu0 0.0
        %7954 = vmatpush1.msra.mxu0 0.0
        %7955 = vmatprep.subr.mxu0 0.0
        %7956 = vmatpush1.msra.mxu0 0.0
        %7957 = vmatprep.subr.mxu0 0.0
        %7958 = vmatpush1.msra.mxu0 0.0
        %7959 = vmatprep.subr.mxu0 0.0
        %7960 = vmatpush1.msra.mxu0 0.0
        %7961 = vmatprep.subr.mxu0 0.0
        %7962 = vmatpush1.msra.mxu0 0.0
        %7963 = vmatprep.subr.mxu0 0.0
        %7964 = vmatpush1.msra.mxu0 0.0
        %7965 = vmatprep.subr.mxu0 0.0
        %7966 = vmatpush1.msra.mxu0 %v7936
        %7967 = vmatprep.subr.mxu0 0.0
        %7968 = vmatpush1.msra.mxu0 %v7935
        %7969 = vmatprep.subr.mxu0 0.0
        %7970 = vmatpush1.msra.mxu0 %v7934
        %7971 = vmatprep.subr.mxu0 0.0
        %7972 = vmatpush1.msra.mxu0 %v7933
        %7973 = vmatprep.subr.mxu0 0.0
        %7974 = vmatpush2.msra.mxu0 0.0
        %7975 = vmatprep.subr.mxu0 0.0
        %7976 = vmatpush2.msra.mxu0 0.0
        %7977 = vmatprep.subr.mxu0 0.0
        %7978 = vmatpush2.msra.mxu0 0.0
        %7979 = vmatprep.subr.mxu0 0.0
        %7980 = vmatpush2.msra.mxu0 0.0
        %7981 = vmatprep.subr.mxu0 0.0
        %7982 = vmatpush2.msra.mxu0 0.0
        %7983 = vmatprep.subr.mxu0 0.0
        %7984 = vmatpush2.msra.mxu0 0.0
        %7985 = vmatprep.subr.mxu0 0.0
        %7986 = vmatpush2.msra.mxu0 0.0
        %7987 = vmatprep.subr.mxu0 0.0
        %7988 = vmatpush2.msra.mxu0 0.0
        %7989 = vmatprep.subr.mxu0 0.0
        %7990 = vmatpush2.msra.mxu0 0.0
        %7991 = vmatprep.subr.mxu0 0.0
        %7992 = vmatpush2.msra.mxu0 0.0
        %7993 = vmatprep.subr.mxu0 0.0
        %7994 = vmatpush2.msra.mxu0 0.0
        %7995 = vmatprep.subr.mxu0 0.0
        %7996 = vmatpush2.msra.mxu0 0.0
        %7997 = vmatprep.subr.mxu0 0.0
        %7998 = vmatpush2.msra.mxu0 0.0
        %7999 = vmatprep.subr.mxu0 0.0
        %8000 = vmatpush2.msra.mxu0 0.0
        %8001 = vmatprep.subr.mxu0 0.0
        %8002 = vmatpush2.msra.mxu0 0.0
        %8003 = vmatprep.subr.mxu0 0.0
        %8004 = vmatpush2.msra.mxu0 0.0
        %8005 = vmatprep.mubr.f32.mxu0 0.0
        %8006 = vmatmul.mubr.f32.gmra.mxu0 %v7939
        %v8007 = vpop.f32.mrf.mxu0
        %v8008 = vadd.f32 %v7937, %v8007
        %v8009 = vpop.f32.mrf.mxu0
        %8010 = vdwg.mxu0
        %8011 = vst [vmem:[%s290] sm:$0x1] %v8008
        %s8012 = sand.u32 %s193, 1
        %s8013 = scalar_lea.sflag [#allocation6], %s8012
        %s8014 = sand.u32 %s193, 1
        %s8015 = scalar_lea.vmem [#allocation5], %s8014
        // Predicated region
        $region49: #{mac_network_forward.1} parent=47 // pred_check
          %p8016 = pneg %p203
        $region50: #{mac_network_forward.1} parent=47 // pred_check_branch
          %8018 = sbr.rel (%p8016) target = $region52
        $region51: #{mac_network_forward.1} parent=47 // pred_region
          %s8020 = ssub.s32 16, 16
          %8021 = vsyncadd %s8013, %s8020
          %s8022 = smul.addr %s28, 16
          %s8023 = scalar_lea.hbm %s8, %s8022
          %s8025 = sshll.u32 %s8015, 4
          %s8026 = int_to_ptr.vmem [resolvable:$true] %s8025
          %8028 = dma.vmem_to_hbm [thread:$0]  %s8026, 16, %s8023, %s8013
        $region52: #{mac_network_forward.1} parent=47 // pred_fallthru
          _
      $region48: #{mac_network_forward.1} parent=5 // pred_fallthru
        _
      %p8029 = scmp.le.s32.totalorder 2, %s23
      // Predicated region
      $region53: #{mac_network_forward.1} parent=5 // pred_check
        %p8030 = pneg %p8029
      $region54: #{mac_network_forward.1} parent=5 // pred_check_branch
        %8032 = sbr.rel (%p8030) target = $region56
      $region55: #{mac_network_forward.1} parent=5 // pred_region
        %s8033 = ssub.s32 %s23, 2
        // Predicated region
        $region57: #{mac_network_forward.1} parent=55 // pred_check
          %p8034 = pneg %p209
        $region58: #{mac_network_forward.1} parent=55 // pred_check_branch
          %8036 = sbr.rel (%p8034) target = $region60
        $region59: #{mac_network_forward.1} parent=55 // pred_region
          %s8037 = sand.u32 %s194, 1
          %s8038 = scalar_lea.sflag [#allocation6], %s8037
          %s8039 = sand.u32 %s194, 1
          %s8040 = scalar_lea.vmem [#allocation5], %s8039
          %8041 = dma.done %s8038, 16
        $region60: #{mac_network_forward.1} parent=55 // pred_fallthru
          _
      $region56: #{mac_network_forward.1} parent=5 // pred_fallthru
        _
    $region6: #{mac_network_forward.1} parent=1 // loop_footer
      %s27 = sadd.s32 1, %s23
    $region7: #{mac_network_forward.1} parent=1 // loop_footer_branch
      %22 = sbr.rel target = $region3
    $region8: #{mac_network_forward.1} parent=1 // loop_exit
      _
    %8042 = vsyncpa [#allocation6], 1
    %s8043 = scalar_lea.sflag [#allocation6], 1
    %8044 = vsyncpa %s8043, 1

</llo_original>
